<compile_context>
chip_gen: v7x
topology: tpu7x:2x2x1
jax: 0.10.0
libtpu: 0.0.40
codegen_flags: <defaults>
</compile_context>

<pallas_src>
import jax
import jax.numpy as jnp
import numpy as np
from jax.experimental import pallas as pl
from jax.experimental.pallas import tpu as pltpu

CIN, COUT, K = 1, 16, 3
H = W = 28
PH = PW = 14            # spatial size after 2x2 max pool
FEAT = PH * PW          # 196
NCLS = 10
NSHIFT = K + 1          # 4 column shifts (even + odd output columns)
ROW_BLK = 16            # sublane-aligned stride of one pooled row in the LHS
LANE_BLOCK = 128        # images per grid step (packed into the lane axis)


def _testnet_kernel(wc_ref, bc_ref, xse_ref, wlT_ref, bl_ref, o_ref, lhs_s):
    # wc_ref : SMEM (144,)           f32  conv weights, index c*9 + ki*3 + kj
    # bc_ref : SMEM (16,)            f32  conv bias
    # xse_ref: VMEM (4, 30, 14, B)   f32  xse[s, r, q, b] = x_pad[b, r, 2q + s]
    # wlT_ref: VMEM (10, 224)        f32  scattered / transposed Linear weight
    # bl_ref : VMEM (10, 1)          f32  Linear bias
    # o_ref  : VMEM (16, 10, B)      f32  lane-dense output (batch on lanes)
    # lhs_s  : VMEM (224, B)         f32  scratch: pooled features, one channel

    # Zero the LHS once per grid step so the 2 never-written pad rows of every
    # 16-row block are exactly 0 (they multiply zero columns of wlT; scratch is
    # otherwise uninitialized and could hold NaNs).
    lhs_s[...] = jnp.zeros_like(lhs_s)

    def channel_body(c, carry):
        # 9 conv taps + bias for this channel (cheap SMEM scalar reads)
        w = [wc_ref[c * (K * K) + t] for t in range(K * K)]
        bcc = bc_ref[c]

        for p in range(PH):                      # 14 pooled output rows (unrolled)
            r0 = 2 * p
            # Four column-parity accumulators, each (14, B):
            #   A/B = conv output rows 2p / 2p+1,  e/o = even / odd output cols
            acc = {"Ae": None, "Ao": None, "Be": None, "Bo": None}

            def fma(key, weight, tile):
                term = weight * tile
                acc[key] = term if acc[key] is None else acc[key] + term

            # Each (shift s, input row r0+dr) tile is loaded exactly once and
            # feeds up to 4 accumulators -> short live ranges, no spills.
            for dr in range(NSHIFT):             # padded input rows r0 .. r0+3
                for s in range(NSHIFT):          # column shift 0 .. 3
                    t = xse_ref[s, r0 + dr, :, :]          # (14, B), aligned
                    if dr < K and s < K:
                        fma("Ae", w[dr * K + s], t)
                    if dr < K and s >= 1:
                        fma("Ao", w[dr * K + (s - 1)], t)
                    if dr >= 1 and s < K:
                        fma("Be", w[(dr - 1) * K + s], t)
                    if dr >= 1 and s >= 1:
                        fma("Bo", w[(dr - 1) * K + (s - 1)], t)

            # fused 2x2 max pool + conv bias -> one dense pooled row (14, B)
            pooled = jnp.maximum(jnp.maximum(acc["Ae"], acc["Ao"]),
                                 jnp.maximum(acc["Be"], acc["Bo"])) + bcc
            lhs_s[pl.ds(ROW_BLK * p, PW), :] = pooled

        # Linear(196 -> 10) for this channel as a single MXU matmul:
        # (10, 224) @ (224, B) -> (10, B); lanes (= batch) stay fully dense.
        y = jnp.dot(wlT_ref[...], lhs_s[...], preferred_element_type=jnp.float32)
        o_ref[c, :, :] = y + bl_ref[...]
        return carry

    jax.lax.fori_loop(0, COUT, channel_body, 0)


def testnet_forward(x, wc, bc, wl, bl, *, lane_block=LANE_BLOCK):
    """x: (N, 1, 28, 28) f32 -> (N, 16, 10) f32."""
    n = x.shape[0]
    n_pad = ((n + lane_block - 1) // lane_block) * lane_block

    # spatial padding=1 and zero-pad the batch up to a full lane block
    x_pad = jnp.pad(x[:, 0].astype(jnp.float32),
                    ((0, n_pad - n), (1, 1), (1, 1)))            # (n_pad, 30, 30)

    # 4 column-shifted, stride-2 views; batch goes to the (last) lane axis.
    #   xse[s, r, q, b] = x_pad[b, r, 2q + s]
    xse = jnp.stack([x_pad[:, :, s:s + 2 * PW:2] for s in range(NSHIFT)], axis=0)
    xse = jnp.transpose(xse, (0, 2, 3, 1))                       # (4, 30, 14, n_pad)

    wc_flat = wc.reshape(COUT * K * K).astype(jnp.float32)       # (144,)

    # Linear weights scattered so pooled row p occupies LHS rows [16p, 16p+14)
    wl_r = wl.reshape(PH, PW, NCLS).astype(jnp.float32)
    wl_sc = jnp.zeros((PH, ROW_BLK, NCLS), jnp.float32).at[:, :PW, :].set(wl_r)
    wlT = wl_sc.reshape(PH * ROW_BLK, NCLS).T                    # (10, 224)
    bl2 = bl.reshape(NCLS, 1).astype(jnp.float32)

    nblk = n_pad // lane_block
    out = pl.pallas_call(
        _testnet_kernel,
        out_shape=jax.ShapeDtypeStruct((COUT, NCLS, n_pad), jnp.float32),
        grid=(nblk,),
        in_specs=[
            pl.BlockSpec(memory_space=pltpu.MemorySpace.SMEM),                      # wc
            pl.BlockSpec(memory_space=pltpu.MemorySpace.SMEM),                      # bc
            pl.BlockSpec((NSHIFT, H + 2, PW, lane_block), lambda i: (0, 0, 0, i)),  # xse
            pl.BlockSpec((NCLS, PH * ROW_BLK), lambda i: (0, 0)),                   # wlT
            pl.BlockSpec((NCLS, 1), lambda i: (0, 0)),                              # bl
        ],
        out_specs=pl.BlockSpec((COUT, NCLS, lane_block), lambda i: (0, 0, i)),
        scratch_shapes=[pltpu.VMEM((PH * ROW_BLK, lane_block), jnp.float32)],
        # Batch blocks are independent; with >= 2 lane blocks this also lets
        # v7x's two TensorCores split the grid.  Per-step VMEM is ~2 MB, well
        # under every generation's limit.
        compiler_params=pltpu.CompilerParams(dimension_semantics=("parallel",)),
    )(wc_flat, bc.astype(jnp.float32), xse, wlT, bl2)

    # back to PyTorch layout (N, 16, 10)
    return jnp.transpose(out, (2, 0, 1))[:n]


def _reference(x, wc, bc, wl, bl):
    conv = jax.lax.conv_general_dilated(
        x, wc, window_strides=(1, 1), padding=((1, 1), (1, 1)),
        dimension_numbers=("NCHW", "OIHW", "NCHW"))
    conv = conv + bc[None, :, None, None]
    pooled = jax.lax.reduce_window(
        conv, -jnp.inf, jax.lax.max,
        window_dimensions=(1, 1, 2, 2), window_strides=(1, 1, 2, 2),
        padding="VALID")
    flat = pooled.reshape(x.shape[0], COUT, FEAT)
    return flat @ wl + bl


if __name__ == "__main__":
    key = jax.random.PRNGKey(0)
    k1, k2, k3, k4, k5 = jax.random.split(key, 5)
    # deterministic parameters (shapes per nn.Conv2d(1,16,3) / nn.Linear(196,10))
    wc = jax.random.normal(k1, (COUT, CIN, K, K), jnp.float32) * 0.1
    bc = jax.random.normal(k2, (COUT,), jnp.float32) * 0.1
    wl = jax.random.normal(k3, (FEAT, NCLS), jnp.float32) * 0.05
    bl = jax.random.normal(k4, (NCLS,), jnp.float32) * 0.1
    x = jax.random.uniform(k5, (2, CIN, H, W), jnp.float32)

    fwd = jax.jit(testnet_forward)
    out = jax.block_until_ready(fwd(x, wc, bc, wl, bl))

    ref = _reference(x, wc, bc, wl, bl)
    np.testing.assert_allclose(np.asarray(out), np.asarray(ref),
                               rtol=1e-4, atol=1e-4)
    print("KERNEL_OK")
</pallas_src>

<mosaic_0001>
module attributes {stable_mosaic.version = 11 : i64} {
  func.func @_testnet_kernel(%arg0: i32, %arg1: memref<144xf32, #tpu.memory_space<smem>>, %arg2: memref<16xf32, #tpu.memory_space<smem>>, %arg3: memref<4x30x14x128xf32, #tpu.memory_space<vmem>>, %arg4: memref<10x224xf32, #tpu.memory_space<vmem>>, %arg5: memref<10x1xf32, #tpu.memory_space<vmem>>, %arg6: memref<16x10x128xf32, #tpu.memory_space<vmem>>, %arg7: memref<224x128xf32, #tpu.memory_space<vmem>>) attributes {dimension_semantics = [#tpu.dimension_semantics<parallel>], iteration_bounds = array<i64: 1>, scalar_prefetch = 0 : i64, scratch_operands = 1 : i64, tpu.core_type = #tpu.core_type<tc>, window_params = [{transform_indices = @transform_0, window_bounds = array<i64: 144>}, {transform_indices = @transform_1, window_bounds = array<i64: 16>}, {transform_indices = @transform_2, window_bounds = array<i64: 4, 30, 14, 128>}, {pipeline_mode = #tpu.pipeline_mode<synchronous>, transform_indices = @transform_3, window_bounds = array<i64: 10, 224>}, {pipeline_mode = #tpu.pipeline_mode<synchronous>, transform_indices = @transform_4, window_bounds = array<i64: 10, 1>}, {transform_indices = @transform_5, window_bounds = array<i64: 16, 10, 128>}]} {
    %cst = arith.constant 0.000000e+00 : f32
    %0 = vector.broadcast %cst : f32 to vector<224x128xf32>
    %c0 = arith.constant 0 : index
    %c0_0 = arith.constant 0 : index
    %1 = vector.load %arg7[%c0, %c0_0] : memref<224x128xf32, #tpu.memory_space<vmem>>, vector<224x128xf32>
    tpu.vector_store %arg7[%c0, %c0_0], %0 {strides = array<i32>} : memref<224x128xf32, #tpu.memory_space<vmem>>, vector<224x128xf32>,
    %c0_i32 = arith.constant 0 : i32
    %c16_i32 = arith.constant 16 : i32
    %2 = arith.addi %c0_i32, %c16_i32 : i32
    %c1_i32 = arith.constant 1 : i32
    scf.for %arg8 = %c0_i32 to %2 step %c1_i32  : i32 {
      %c9_i32 = arith.constant 9 : i32
      %3 = arith.muli %arg8, %c9_i32 : i32
      %c0_i32_2 = arith.constant 0 : i32
      %4 = arith.addi %3, %c0_i32_2 : i32
      %5 = arith.index_cast %4 : i32 to index
      %6 = memref.load %arg1[%5] : memref<144xf32, #tpu.memory_space<smem>>
      %c9_i32_3 = arith.constant 9 : i32
      %7 = arith.muli %arg8, %c9_i32_3 : i32
      %c1_i32_4 = arith.constant 1 : i32
      %8 = arith.addi %7, %c1_i32_4 : i32
      %9 = arith.index_cast %8 : i32 to index
      %10 = memref.load %arg1[%9] : memref<144xf32, #tpu.memory_space<smem>>
      %c9_i32_5 = arith.constant 9 : i32
      %11 = arith.muli %arg8, %c9_i32_5 : i32
      %c2_i32 = arith.constant 2 : i32
      %12 = arith.addi %11, %c2_i32 : i32
      %13 = arith.index_cast %12 : i32 to index
      %14 = memref.load %arg1[%13] : memref<144xf32, #tpu.memory_space<smem>>
      %c9_i32_6 = arith.constant 9 : i32
      %15 = arith.muli %arg8, %c9_i32_6 : i32
      %c3_i32 = arith.constant 3 : i32
      %16 = arith.addi %15, %c3_i32 : i32
      %17 = arith.index_cast %16 : i32 to index
      %18 = memref.load %arg1[%17] : memref<144xf32, #tpu.memory_space<smem>>
      %c9_i32_7 = arith.constant 9 : i32
      %19 = arith.muli %arg8, %c9_i32_7 : i32
      %c4_i32 = arith.constant 4 : i32
      %20 = arith.addi %19, %c4_i32 : i32
      %21 = arith.index_cast %20 : i32 to index
      %22 = memref.load %arg1[%21] : memref<144xf32, #tpu.memory_space<smem>>
      %c9_i32_8 = arith.constant 9 : i32
      %23 = arith.muli %arg8, %c9_i32_8 : i32
      %c5_i32 = arith.constant 5 : i32
      %24 = arith.addi %23, %c5_i32 : i32
      %25 = arith.index_cast %24 : i32 to index
      %26 = memref.load %arg1[%25] : memref<144xf32, #tpu.memory_space<smem>>
      %c9_i32_9 = arith.constant 9 : i32
      %27 = arith.muli %arg8, %c9_i32_9 : i32
      %c6_i32 = arith.constant 6 : i32
      %28 = arith.addi %27, %c6_i32 : i32
      %29 = arith.index_cast %28 : i32 to index
      %30 = memref.load %arg1[%29] : memref<144xf32, #tpu.memory_space<smem>>
      %c9_i32_10 = arith.constant 9 : i32
      %31 = arith.muli %arg8, %c9_i32_10 : i32
      %c7_i32 = arith.constant 7 : i32
      %32 = arith.addi %31, %c7_i32 : i32
      %33 = arith.index_cast %32 : i32 to index
      %34 = memref.load %arg1[%33] : memref<144xf32, #tpu.memory_space<smem>>
      %c9_i32_11 = arith.constant 9 : i32
      %35 = arith.muli %arg8, %c9_i32_11 : i32
      %c8_i32 = arith.constant 8 : i32
      %36 = arith.addi %35, %c8_i32 : i32
      %37 = arith.index_cast %36 : i32 to index
      %38 = memref.load %arg1[%37] : memref<144xf32, #tpu.memory_space<smem>>
      %39 = arith.index_cast %arg8 : i32 to index
      %40 = memref.load %arg2[%39] : memref<16xf32, #tpu.memory_space<smem>>
      %c0_12 = arith.constant 0 : index
      %c0_13 = arith.constant 0 : index
      %c0_14 = arith.constant 0 : index
      %c0_15 = arith.constant 0 : index
      %41 = vector.load %arg3[%c0_12, %c0_13, %c0_14, %c0_15] : memref<4x30x14x128xf32, #tpu.memory_space<vmem>>, vector<1x1x14x128xf32>
      %42 = vector.shape_cast %41 : vector<1x1x14x128xf32> to vector<14x128xf32>
      %43 = vector.broadcast %6 : f32 to vector<14x128xf32>
      %44 = arith.mulf %43, %42 : vector<14x128xf32>
      %c1 = arith.constant 1 : index
      %c0_16 = arith.constant 0 : index
      %c0_17 = arith.constant 0 : index
      %c0_18 = arith.constant 0 : index
      %45 = vector.load %arg3[%c1, %c0_16, %c0_17, %c0_18] : memref<4x30x14x128xf32, #tpu.memory_space<vmem>>, vector<1x1x14x128xf32>
      %46 = vector.shape_cast %45 : vector<1x1x14x128xf32> to vector<14x128xf32>
      %47 = vector.broadcast %10 : f32 to vector<14x128xf32>
      %48 = arith.mulf %47, %46 : vector<14x128xf32>
      %49 = arith.addf %44, %48 : vector<14x128xf32>
      %50 = vector.broadcast %6 : f32 to vector<14x128xf32>
      %51 = arith.mulf %50, %46 : vector<14x128xf32>
      %c2 = arith.constant 2 : index
      %c0_19 = arith.constant 0 : index
      %c0_20 = arith.constant 0 : index
      %c0_21 = arith.constant 0 : index
      %52 = vector.load %arg3[%c2, %c0_19, %c0_20, %c0_21] : memref<4x30x14x128xf32, #tpu.memory_space<vmem>>, vector<1x1x14x128xf32>
      %53 = vector.shape_cast %52 : vector<1x1x14x128xf32> to vector<14x128xf32>
      %54 = vector.broadcast %14 : f32 to vector<14x128xf32>
      %55 = arith.mulf %54, %53 : vector<14x128xf32>
      %56 = arith.addf %49, %55 : vector<14x128xf32>
      %57 = vector.broadcast %10 : f32 to vector<14x128xf32>
      %58 = arith.mulf %57, %53 : vector<14x128xf32>
      %59 = arith.addf %51, %58 : vector<14x128xf32>
      %c3 = arith.constant 3 : index
      %c0_22 = arith.constant 0 : index
      %c0_23 = arith.constant 0 : index
      %c0_24 = arith.constant 0 : index
      %60 = vector.load %arg3[%c3, %c0_22, %c0_23, %c0_24] : memref<4x30x14x128xf32, #tpu.memory_space<vmem>>, vector<1x1x14x128xf32>
      %61 = vector.shape_cast %60 : vector<1x1x14x128xf32> to vector<14x128xf32>
      %62 = vector.broadcast %14 : f32 to vector<14x128xf32>
      %63 = arith.mulf %62, %61 : vector<14x128xf32>
      %64 = arith.addf %59, %63 : vector<14x128xf32>
      %c0_25 = arith.constant 0 : index
      %c1_26 = arith.constant 1 : index
      %c0_27 = arith.constant 0 : index
      %c0_28 = arith.constant 0 : index
      %65 = vector.load %arg3[%c0_25, %c1_26, %c0_27, %c0_28] : memref<4x30x14x128xf32, #tpu.memory_space<vmem>>, vector<1x1x14x128xf32>
      %66 = vector.shape_cast %65 : vector<1x1x14x128xf32> to vector<14x128xf32>
      %67 = vector.broadcast %18 : f32 to vector<14x128xf32>
      %68 = arith.mulf %67, %66 : vector<14x128xf32>
      %69 = arith.addf %56, %68 : vector<14x128xf32>
      %70 = vector.broadcast %6 : f32 to vector<14x128xf32>
      %71 = arith.mulf %70, %66 : vector<14x128xf32>
      %c1_29 = arith.constant 1 : index
      %c1_30 = arith.constant 1 : index
      %c0_31 = arith.constant 0 : index
      %c0_32 = arith.constant 0 : index
      %72 = vector.load %arg3[%c1_29, %c1_30, %c0_31, %c0_32] : memref<4x30x14x128xf32, #tpu.memory_space<vmem>>, vector<1x1x14x128xf32>
      %73 = vector.shape_cast %72 : vector<1x1x14x128xf32> to vector<14x128xf32>
      %74 = vector.broadcast %22 : f32 to vector<14x128xf32>
      %75 = arith.mulf %74, %73 : vector<14x128xf32>
      %76 = arith.addf %69, %75 : vector<14x128xf32>
      %77 = vector.broadcast %18 : f32 to vector<14x128xf32>
      %78 = arith.mulf %77, %73 : vector<14x128xf32>
      %79 = arith.addf %64, %78 : vector<14x128xf32>
      %80 = vector.broadcast %10 : f32 to vector<14x128xf32>
      %81 = arith.mulf %80, %73 : vector<14x128xf32>
      %82 = arith.addf %71, %81 : vector<14x128xf32>
      %83 = vector.broadcast %6 : f32 to vector<14x128xf32>
      %84 = arith.mulf %83, %73 : vector<14x128xf32>
      %c2_33 = arith.constant 2 : index
      %c1_34 = arith.constant 1 : index
      %c0_35 = arith.constant 0 : index
      %c0_36 = arith.constant 0 : index
      %85 = vector.load %arg3[%c2_33, %c1_34, %c0_35, %c0_36] : memref<4x30x14x128xf32, #tpu.memory_space<vmem>>, vector<1x1x14x128xf32>
      %86 = vector.shape_cast %85 : vector<1x1x14x128xf32> to vector<14x128xf32>
      %87 = vector.broadcast %26 : f32 to vector<14x128xf32>
      %88 = arith.mulf %87, %86 : vector<14x128xf32>
      %89 = arith.addf %76, %88 : vector<14x128xf32>
      %90 = vector.broadcast %22 : f32 to vector<14x128xf32>
      %91 = arith.mulf %90, %86 : vector<14x128xf32>
      %92 = arith.addf %79, %91 : vector<14x128xf32>
      %93 = vector.broadcast %14 : f32 to vector<14x128xf32>
      %94 = arith.mulf %93, %86 : vector<14x128xf32>
      %95 = arith.addf %82, %94 : vector<14x128xf32>
      %96 = vector.broadcast %10 : f32 to vector<14x128xf32>
      %97 = arith.mulf %96, %86 : vector<14x128xf32>
      %98 = arith.addf %84, %97 : vector<14x128xf32>
      %c3_37 = arith.constant 3 : index
      %c1_38 = arith.constant 1 : index
      %c0_39 = arith.constant 0 : index
      %c0_40 = arith.constant 0 : index
      %99 = vector.load %arg3[%c3_37, %c1_38, %c0_39, %c0_40] : memref<4x30x14x128xf32, #tpu.memory_space<vmem>>, vector<1x1x14x128xf32>
      %100 = vector.shape_cast %99 : vector<1x1x14x128xf32> to vector<14x128xf32>
      %101 = vector.broadcast %26 : f32 to vector<14x128xf32>
      %102 = arith.mulf %101, %100 : vector<14x128xf32>
      %103 = arith.addf %92, %102 : vector<14x128xf32>
      %104 = vector.broadcast %14 : f32 to vector<14x128xf32>
      %105 = arith.mulf %104, %100 : vector<14x128xf32>
      %106 = arith.addf %98, %105 : vector<14x128xf32>
      %c0_41 = arith.constant 0 : index
      %c2_42 = arith.constant 2 : index
      %c0_43 = arith.constant 0 : index
      %c0_44 = arith.constant 0 : index
      %107 = vector.load %arg3[%c0_41, %c2_42, %c0_43, %c0_44] : memref<4x30x14x128xf32, #tpu.memory_space<vmem>>, vector<1x1x14x128xf32>
      %108 = vector.shape_cast %107 : vector<1x1x14x128xf32> to vector<14x128xf32>
      %109 = vector.broadcast %30 : f32 to vector<14x128xf32>
      %110 = arith.mulf %109, %108 : vector<14x128xf32>
      %111 = arith.addf %89, %110 : vector<14x128xf32>
      %112 = vector.broadcast %18 : f32 to vector<14x128xf32>
      %113 = arith.mulf %112, %108 : vector<14x128xf32>
      %114 = arith.addf %95, %113 : vector<14x128xf32>
      %c1_45 = arith.constant 1 : index
      %c2_46 = arith.constant 2 : index
      %c0_47 = arith.constant 0 : index
      %c0_48 = arith.constant 0 : index
      %115 = vector.load %arg3[%c1_45, %c2_46, %c0_47, %c0_48] : memref<4x30x14x128xf32, #tpu.memory_space<vmem>>, vector<1x1x14x128xf32>
      %116 = vector.shape_cast %115 : vector<1x1x14x128xf32> to vector<14x128xf32>
      %117 = vector.broadcast %34 : f32 to vector<14x128xf32>
      %118 = arith.mulf %117, %116 : vector<14x128xf32>
      %119 = arith.addf %111, %118 : vector<14x128xf32>
      %120 = vector.broadcast %30 : f32 to vector<14x128xf32>
      %121 = arith.mulf %120, %116 : vector<14x128xf32>
      %122 = arith.addf %103, %121 : vector<14x128xf32>
      %123 = vector.broadcast %22 : f32 to vector<14x128xf32>
      %124 = arith.mulf %123, %116 : vector<14x128xf32>
      %125 = arith.addf %114, %124 : vector<14x128xf32>
      %126 = vector.broadcast %18 : f32 to vector<14x128xf32>
      %127 = arith.mulf %126, %116 : vector<14x128xf32>
      %128 = arith.addf %106, %127 : vector<14x128xf32>
      %c2_49 = arith.constant 2 : index
      %c2_50 = arith.constant 2 : index
      %c0_51 = arith.constant 0 : index
      %c0_52 = arith.constant 0 : index
      %129 = vector.load %arg3[%c2_49, %c2_50, %c0_51, %c0_52] : memref<4x30x14x128xf32, #tpu.memory_space<vmem>>, vector<1x1x14x128xf32>
      %130 = vector.shape_cast %129 : vector<1x1x14x128xf32> to vector<14x128xf32>
      %131 = vector.broadcast %38 : f32 to vector<14x128xf32>
      %132 = arith.mulf %131, %130 : vector<14x128xf32>
      %133 = arith.addf %119, %132 : vector<14x128xf32>
      %134 = vector.broadcast %34 : f32 to vector<14x128xf32>
      %135 = arith.mulf %134, %130 : vector<14x128xf32>
      %136 = arith.addf %122, %135 : vector<14x128xf32>
      %137 = vector.broadcast %26 : f32 to vector<14x128xf32>
      %138 = arith.mulf %137, %130 : vector<14x128xf32>
      %139 = arith.addf %125, %138 : vector<14x128xf32>
      %140 = vector.broadcast %22 : f32 to vector<14x128xf32>
      %141 = arith.mulf %140, %130 : vector<14x128xf32>
      %142 = arith.addf %128, %141 : vector<14x128xf32>
      %c3_53 = arith.constant 3 : index
      %c2_54 = arith.constant 2 : index
      %c0_55 = arith.constant 0 : index
      %c0_56 = arith.constant 0 : index
      %143 = vector.load %arg3[%c3_53, %c2_54, %c0_55, %c0_56] : memref<4x30x14x128xf32, #tpu.memory_space<vmem>>, vector<1x1x14x128xf32>
      %144 = vector.shape_cast %143 : vector<1x1x14x128xf32> to vector<14x128xf32>
      %145 = vector.broadcast %38 : f32 to vector<14x128xf32>
      %146 = arith.mulf %145, %144 : vector<14x128xf32>
      %147 = arith.addf %136, %146 : vector<14x128xf32>
      %148 = vector.broadcast %26 : f32 to vector<14x128xf32>
      %149 = arith.mulf %148, %144 : vector<14x128xf32>
      %150 = arith.addf %142, %149 : vector<14x128xf32>
      %c0_57 = arith.constant 0 : index
      %c3_58 = arith.constant 3 : index
      %c0_59 = arith.constant 0 : index
      %c0_60 = arith.constant 0 : index
      %151 = vector.load %arg3[%c0_57, %c3_58, %c0_59, %c0_60] : memref<4x30x14x128xf32, #tpu.memory_space<vmem>>, vector<1x1x14x128xf32>
      %152 = vector.shape_cast %151 : vector<1x1x14x128xf32> to vector<14x128xf32>
      %153 = vector.broadcast %30 : f32 to vector<14x128xf32>
      %154 = arith.mulf %153, %152 : vector<14x128xf32>
      %155 = arith.addf %139, %154 : vector<14x128xf32>
      %c1_61 = arith.constant 1 : index
      %c3_62 = arith.constant 3 : index
      %c0_63 = arith.constant 0 : index
      %c0_64 = arith.constant 0 : index
      %156 = vector.load %arg3[%c1_61, %c3_62, %c0_63, %c0_64] : memref<4x30x14x128xf32, #tpu.memory_space<vmem>>, vector<1x1x14x128xf32>
      %157 = vector.shape_cast %156 : vector<1x1x14x128xf32> to vector<14x128xf32>
      %158 = vector.broadcast %34 : f32 to vector<14x128xf32>
      %159 = arith.mulf %158, %157 : vector<14x128xf32>
      %160 = arith.addf %155, %159 : vector<14x128xf32>
      %161 = vector.broadcast %30 : f32 to vector<14x128xf32>
      %162 = arith.mulf %161, %157 : vector<14x128xf32>
      %163 = arith.addf %150, %162 : vector<14x128xf32>
      %c2_65 = arith.constant 2 : index
      %c3_66 = arith.constant 3 : index
      %c0_67 = arith.constant 0 : index
      %c0_68 = arith.constant 0 : index
      %164 = vector.load %arg3[%c2_65, %c3_66, %c0_67, %c0_68] : memref<4x30x14x128xf32, #tpu.memory_space<vmem>>, vector<1x1x14x128xf32>
      %165 = vector.shape_cast %164 : vector<1x1x14x128xf32> to vector<14x128xf32>
      %166 = vector.broadcast %38 : f32 to vector<14x128xf32>
      %167 = arith.mulf %166, %165 : vector<14x128xf32>
      %168 = arith.addf %160, %167 : vector<14x128xf32>
      %169 = vector.broadcast %34 : f32 to vector<14x128xf32>
      %170 = arith.mulf %169, %165 : vector<14x128xf32>
      %171 = arith.addf %163, %170 : vector<14x128xf32>
      %c3_69 = arith.constant 3 : index
      %c3_70 = arith.constant 3 : index
      %c0_71 = arith.constant 0 : index
      %c0_72 = arith.constant 0 : index
      %172 = vector.load %arg3[%c3_69, %c3_70, %c0_71, %c0_72] : memref<4x30x14x128xf32, #tpu.memory_space<vmem>>, vector<1x1x14x128xf32>
      %173 = vector.shape_cast %172 : vector<1x1x14x128xf32> to vector<14x128xf32>
      %174 = vector.broadcast %38 : f32 to vector<14x128xf32>
      %175 = arith.mulf %174, %173 : vector<14x128xf32>
      %176 = arith.addf %171, %175 : vector<14x128xf32>
      %177 = arith.maximumf %133, %147 : vector<14x128xf32>
      %178 = arith.maximumf %168, %176 : vector<14x128xf32>
      %179 = arith.maximumf %177, %178 : vector<14x128xf32>
      %180 = vector.broadcast %40 : f32 to vector<14x128xf32>
      %181 = arith.addf %179, %180 : vector<14x128xf32>
      %c0_73 = arith.constant 0 : index
      %c0_74 = arith.constant 0 : index
      %182 = vector.load %arg7[%c0_73, %c0_74] : memref<224x128xf32, #tpu.memory_space<vmem>>, vector<14x128xf32>
      tpu.vector_store %arg7[%c0_73, %c0_74], %181 {strides = array<i32>} : memref<224x128xf32, #tpu.memory_space<vmem>>, vector<14x128xf32>,
      %c0_75 = arith.constant 0 : index
      %c2_76 = arith.constant 2 : index
      %c0_77 = arith.constant 0 : index
      %c0_78 = arith.constant 0 : index
      %183 = vector.load %arg3[%c0_75, %c2_76, %c0_77, %c0_78] : memref<4x30x14x128xf32, #tpu.memory_space<vmem>>, vector<1x1x14x128xf32>
      %184 = vector.shape_cast %183 : vector<1x1x14x128xf32> to vector<14x128xf32>
      %185 = vector.broadcast %6 : f32 to vector<14x128xf32>
      %186 = arith.mulf %185, %184 : vector<14x128xf32>
      %c1_79 = arith.constant 1 : index
      %c2_80 = arith.constant 2 : index
      %c0_81 = arith.constant 0 : index
      %c0_82 = arith.constant 0 : index
      %187 = vector.load %arg3[%c1_79, %c2_80, %c0_81, %c0_82] : memref<4x30x14x128xf32, #tpu.memory_space<vmem>>, vector<1x1x14x128xf32>
      %188 = vector.shape_cast %187 : vector<1x1x14x128xf32> to vector<14x128xf32>
      %189 = vector.broadcast %10 : f32 to vector<14x128xf32>
      %190 = arith.mulf %189, %188 : vector<14x128xf32>
      %191 = arith.addf %186, %190 : vector<14x128xf32>
      %192 = vector.broadcast %6 : f32 to vector<14x128xf32>
      %193 = arith.mulf %192, %188 : vector<14x128xf32>
      %c2_83 = arith.constant 2 : index
      %c2_84 = arith.constant 2 : index
      %c0_85 = arith.constant 0 : index
      %c0_86 = arith.constant 0 : index
      %194 = vector.load %arg3[%c2_83, %c2_84, %c0_85, %c0_86] : memref<4x30x14x128xf32, #tpu.memory_space<vmem>>, vector<1x1x14x128xf32>
      %195 = vector.shape_cast %194 : vector<1x1x14x128xf32> to vector<14x128xf32>
      %196 = vector.broadcast %14 : f32 to vector<14x128xf32>
      %197 = arith.mulf %196, %195 : vector<14x128xf32>
      %198 = arith.addf %191, %197 : vector<14x128xf32>
      %199 = vector.broadcast %10 : f32 to vector<14x128xf32>
      %200 = arith.mulf %199, %195 : vector<14x128xf32>
      %201 = arith.addf %193, %200 : vector<14x128xf32>
      %c3_87 = arith.constant 3 : index
      %c2_88 = arith.constant 2 : index
      %c0_89 = arith.constant 0 : index
      %c0_90 = arith.constant 0 : index
      %202 = vector.load %arg3[%c3_87, %c2_88, %c0_89, %c0_90] : memref<4x30x14x128xf32, #tpu.memory_space<vmem>>, vector<1x1x14x128xf32>
      %203 = vector.shape_cast %202 : vector<1x1x14x128xf32> to vector<14x128xf32>
      %204 = vector.broadcast %14 : f32 to vector<14x128xf32>
      %205 = arith.mulf %204, %203 : vector<14x128xf32>
      %206 = arith.addf %201, %205 : vector<14x128xf32>
      %c0_91 = arith.constant 0 : index
      %c3_92 = arith.constant 3 : index
      %c0_93 = arith.constant 0 : index
      %c0_94 = arith.constant 0 : index
      %207 = vector.load %arg3[%c0_91, %c3_92, %c0_93, %c0_94] : memref<4x30x14x128xf32, #tpu.memory_space<vmem>>, vector<1x1x14x128xf32>
      %208 = vector.shape_cast %207 : vector<1x1x14x128xf32> to vector<14x128xf32>
      %209 = vector.broadcast %18 : f32 to vector<14x128xf32>
      %210 = arith.mulf %209, %208 : vector<14x128xf32>
      %211 = arith.addf %198, %210 : vector<14x128xf32>
      %212 = vector.broadcast %6 : f32 to vector<14x128xf32>
      %213 = arith.mulf %212, %208 : vector<14x128xf32>
      %c1_95 = arith.constant 1 : index
      %c3_96 = arith.constant 3 : index
      %c0_97 = arith.constant 0 : index
      %c0_98 = arith.constant 0 : index
      %214 = vector.load %arg3[%c1_95, %c3_96, %c0_97, %c0_98] : memref<4x30x14x128xf32, #tpu.memory_space<vmem>>, vector<1x1x14x128xf32>
      %215 = vector.shape_cast %214 : vector<1x1x14x128xf32> to vector<14x128xf32>
      %216 = vector.broadcast %22 : f32 to vector<14x128xf32>
      %217 = arith.mulf %216, %215 : vector<14x128xf32>
      %218 = arith.addf %211, %217 : vector<14x128xf32>
      %219 = vector.broadcast %18 : f32 to vector<14x128xf32>
      %220 = arith.mulf %219, %215 : vector<14x128xf32>
      %221 = arith.addf %206, %220 : vector<14x128xf32>
      %222 = vector.broadcast %10 : f32 to vector<14x128xf32>
      %223 = arith.mulf %222, %215 : vector<14x128xf32>
      %224 = arith.addf %213, %223 : vector<14x128xf32>
      %225 = vector.broadcast %6 : f32 to vector<14x128xf32>
      %226 = arith.mulf %225, %215 : vector<14x128xf32>
      %c2_99 = arith.constant 2 : index
      %c3_100 = arith.constant 3 : index
      %c0_101 = arith.constant 0 : index
      %c0_102 = arith.constant 0 : index
      %227 = vector.load %arg3[%c2_99, %c3_100, %c0_101, %c0_102] : memref<4x30x14x128xf32, #tpu.memory_space<vmem>>, vector<1x1x14x128xf32>
      %228 = vector.shape_cast %227 : vector<1x1x14x128xf32> to vector<14x128xf32>
      %229 = vector.broadcast %26 : f32 to vector<14x128xf32>
      %230 = arith.mulf %229, %228 : vector<14x128xf32>
      %231 = arith.addf %218, %230 : vector<14x128xf32>
      %232 = vector.broadcast %22 : f32 to vector<14x128xf32>
      %233 = arith.mulf %232, %228 : vector<14x128xf32>
      %234 = arith.addf %221, %233 : vector<14x128xf32>
      %235 = vector.broadcast %14 : f32 to vector<14x128xf32>
      %236 = arith.mulf %235, %228 : vector<14x128xf32>
      %237 = arith.addf %224, %236 : vector<14x128xf32>
      %238 = vector.broadcast %10 : f32 to vector<14x128xf32>
      %239 = arith.mulf %238, %228 : vector<14x128xf32>
      %240 = arith.addf %226, %239 : vector<14x128xf32>
      %c3_103 = arith.constant 3 : index
      %c3_104 = arith.constant 3 : index
      %c0_105 = arith.constant 0 : index
      %c0_106 = arith.constant 0 : index
      %241 = vector.load %arg3[%c3_103, %c3_104, %c0_105, %c0_106] : memref<4x30x14x128xf32, #tpu.memory_space<vmem>>, vector<1x1x14x128xf32>
      %242 = vector.shape_cast %241 : vector<1x1x14x128xf32> to vector<14x128xf32>
      %243 = vector.broadcast %26 : f32 to vector<14x128xf32>
      %244 = arith.mulf %243, %242 : vector<14x128xf32>
      %245 = arith.addf %234, %244 : vector<14x128xf32>
      %246 = vector.broadcast %14 : f32 to vector<14x128xf32>
      %247 = arith.mulf %246, %242 : vector<14x128xf32>
      %248 = arith.addf %240, %247 : vector<14x128xf32>
      %c0_107 = arith.constant 0 : index
      %c4 = arith.constant 4 : index
      %c0_108 = arith.constant 0 : index
      %c0_109 = arith.constant 0 : index
      %249 = vector.load %arg3[%c0_107, %c4, %c0_108, %c0_109] : memref<4x30x14x128xf32, #tpu.memory_space<vmem>>, vector<1x1x14x128xf32>
      %250 = vector.shape_cast %249 : vector<1x1x14x128xf32> to vector<14x128xf32>
      %251 = vector.broadcast %30 : f32 to vector<14x128xf32>
      %252 = arith.mulf %251, %250 : vector<14x128xf32>
      %253 = arith.addf %231, %252 : vector<14x128xf32>
      %254 = vector.broadcast %18 : f32 to vector<14x128xf32>
      %255 = arith.mulf %254, %250 : vector<14x128xf32>
      %256 = arith.addf %237, %255 : vector<14x128xf32>
      %c1_110 = arith.constant 1 : index
      %c4_111 = arith.constant 4 : index
      %c0_112 = arith.constant 0 : index
      %c0_113 = arith.constant 0 : index
      %257 = vector.load %arg3[%c1_110, %c4_111, %c0_112, %c0_113] : memref<4x30x14x128xf32, #tpu.memory_space<vmem>>, vector<1x1x14x128xf32>
      %258 = vector.shape_cast %257 : vector<1x1x14x128xf32> to vector<14x128xf32>
      %259 = vector.broadcast %34 : f32 to vector<14x128xf32>
      %260 = arith.mulf %259, %258 : vector<14x128xf32>
      %261 = arith.addf %253, %260 : vector<14x128xf32>
      %262 = vector.broadcast %30 : f32 to vector<14x128xf32>
      %263 = arith.mulf %262, %258 : vector<14x128xf32>
      %264 = arith.addf %245, %263 : vector<14x128xf32>
      %265 = vector.broadcast %22 : f32 to vector<14x128xf32>
      %266 = arith.mulf %265, %258 : vector<14x128xf32>
      %267 = arith.addf %256, %266 : vector<14x128xf32>
      %268 = vector.broadcast %18 : f32 to vector<14x128xf32>
      %269 = arith.mulf %268, %258 : vector<14x128xf32>
      %270 = arith.addf %248, %269 : vector<14x128xf32>
      %c2_114 = arith.constant 2 : index
      %c4_115 = arith.constant 4 : index
      %c0_116 = arith.constant 0 : index
      %c0_117 = arith.constant 0 : index
      %271 = vector.load %arg3[%c2_114, %c4_115, %c0_116, %c0_117] : memref<4x30x14x128xf32, #tpu.memory_space<vmem>>, vector<1x1x14x128xf32>
      %272 = vector.shape_cast %271 : vector<1x1x14x128xf32> to vector<14x128xf32>
      %273 = vector.broadcast %38 : f32 to vector<14x128xf32>
      %274 = arith.mulf %273, %272 : vector<14x128xf32>
      %275 = arith.addf %261, %274 : vector<14x128xf32>
      %276 = vector.broadcast %34 : f32 to vector<14x128xf32>
      %277 = arith.mulf %276, %272 : vector<14x128xf32>
      %278 = arith.addf %264, %277 : vector<14x128xf32>
      %279 = vector.broadcast %26 : f32 to vector<14x128xf32>
      %280 = arith.mulf %279, %272 : vector<14x128xf32>
      %281 = arith.addf %267, %280 : vector<14x128xf32>
      %282 = vector.broadcast %22 : f32 to vector<14x128xf32>
      %283 = arith.mulf %282, %272 : vector<14x128xf32>
      %284 = arith.addf %270, %283 : vector<14x128xf32>
      %c3_118 = arith.constant 3 : index
      %c4_119 = arith.constant 4 : index
      %c0_120 = arith.constant 0 : index
      %c0_121 = arith.constant 0 : index
      %285 = vector.load %arg3[%c3_118, %c4_119, %c0_120, %c0_121] : memref<4x30x14x128xf32, #tpu.memory_space<vmem>>, vector<1x1x14x128xf32>
      %286 = vector.shape_cast %285 : vector<1x1x14x128xf32> to vector<14x128xf32>
      %287 = vector.broadcast %38 : f32 to vector<14x128xf32>
      %288 = arith.mulf %287, %286 : vector<14x128xf32>
      %289 = arith.addf %278, %288 : vector<14x128xf32>
      %290 = vector.broadcast %26 : f32 to vector<14x128xf32>
      %291 = arith.mulf %290, %286 : vector<14x128xf32>
      %292 = arith.addf %284, %291 : vector<14x128xf32>
      %c0_122 = arith.constant 0 : index
      %c5 = arith.constant 5 : index
      %c0_123 = arith.constant 0 : index
      %c0_124 = arith.constant 0 : index
      %293 = vector.load %arg3[%c0_122, %c5, %c0_123, %c0_124] : memref<4x30x14x128xf32, #tpu.memory_space<vmem>>, vector<1x1x14x128xf32>
      %294 = vector.shape_cast %293 : vector<1x1x14x128xf32> to vector<14x128xf32>
      %295 = vector.broadcast %30 : f32 to vector<14x128xf32>
      %296 = arith.mulf %295, %294 : vector<14x128xf32>
      %297 = arith.addf %281, %296 : vector<14x128xf32>
      %c1_125 = arith.constant 1 : index
      %c5_126 = arith.constant 5 : index
      %c0_127 = arith.constant 0 : index
      %c0_128 = arith.constant 0 : index
      %298 = vector.load %arg3[%c1_125, %c5_126, %c0_127, %c0_128] : memref<4x30x14x128xf32, #tpu.memory_space<vmem>>, vector<1x1x14x128xf32>
      %299 = vector.shape_cast %298 : vector<1x1x14x128xf32> to vector<14x128xf32>
      %300 = vector.broadcast %34 : f32 to vector<14x128xf32>
      %301 = arith.mulf %300, %299 : vector<14x128xf32>
      %302 = arith.addf %297, %301 : vector<14x128xf32>
      %303 = vector.broadcast %30 : f32 to vector<14x128xf32>
      %304 = arith.mulf %303, %299 : vector<14x128xf32>
      %305 = arith.addf %292, %304 : vector<14x128xf32>
      %c2_129 = arith.constant 2 : index
      %c5_130 = arith.constant 5 : index
      %c0_131 = arith.constant 0 : index
      %c0_132 = arith.constant 0 : index
      %306 = vector.load %arg3[%c2_129, %c5_130, %c0_131, %c0_132] : memref<4x30x14x128xf32, #tpu.memory_space<vmem>>, vector<1x1x14x128xf32>
      %307 = vector.shape_cast %306 : vector<1x1x14x128xf32> to vector<14x128xf32>
      %308 = vector.broadcast %38 : f32 to vector<14x128xf32>
      %309 = arith.mulf %308, %307 : vector<14x128xf32>
      %310 = arith.addf %302, %309 : vector<14x128xf32>
      %311 = vector.broadcast %34 : f32 to vector<14x128xf32>
      %312 = arith.mulf %311, %307 : vector<14x128xf32>
      %313 = arith.addf %305, %312 : vector<14x128xf32>
      %c3_133 = arith.constant 3 : index
      %c5_134 = arith.constant 5 : index
      %c0_135 = arith.constant 0 : index
      %c0_136 = arith.constant 0 : index
      %314 = vector.load %arg3[%c3_133, %c5_134, %c0_135, %c0_136] : memref<4x30x14x128xf32, #tpu.memory_space<vmem>>, vector<1x1x14x128xf32>
      %315 = vector.shape_cast %314 : vector<1x1x14x128xf32> to vector<14x128xf32>
      %316 = vector.broadcast %38 : f32 to vector<14x128xf32>
      %317 = arith.mulf %316, %315 : vector<14x128xf32>
      %318 = arith.addf %313, %317 : vector<14x128xf32>
      %319 = arith.maximumf %275, %289 : vector<14x128xf32>
      %320 = arith.maximumf %310, %318 : vector<14x128xf32>
      %321 = arith.maximumf %319, %320 : vector<14x128xf32>
      %322 = vector.broadcast %40 : f32 to vector<14x128xf32>
      %323 = arith.addf %321, %322 : vector<14x128xf32>
      %c16 = arith.constant 16 : index
      %c0_137 = arith.constant 0 : index
      %324 = vector.load %arg7[%c16, %c0_137] : memref<224x128xf32, #tpu.memory_space<vmem>>, vector<14x128xf32>
      tpu.vector_store %arg7[%c16, %c0_137], %323 {strides = array<i32>} : memref<224x128xf32, #tpu.memory_space<vmem>>, vector<14x128xf32>,
      %c0_138 = arith.constant 0 : index
      %c4_139 = arith.constant 4 : index
      %c0_140 = arith.constant 0 : index
      %c0_141 = arith.constant 0 : index
      %325 = vector.load %arg3[%c0_138, %c4_139, %c0_140, %c0_141] : memref<4x30x14x128xf32, #tpu.memory_space<vmem>>, vector<1x1x14x128xf32>
      %326 = vector.shape_cast %325 : vector<1x1x14x128xf32> to vector<14x128xf32>
      %327 = vector.broadcast %6 : f32 to vector<14x128xf32>
      %328 = arith.mulf %327, %326 : vector<14x128xf32>
      %c1_142 = arith.constant 1 : index
      %c4_143 = arith.constant 4 : index
      %c0_144 = arith.constant 0 : index
      %c0_145 = arith.constant 0 : index
      %329 = vector.load %arg3[%c1_142, %c4_143, %c0_144, %c0_145] : memref<4x30x14x128xf32, #tpu.memory_space<vmem>>, vector<1x1x14x128xf32>
      %330 = vector.shape_cast %329 : vector<1x1x14x128xf32> to vector<14x128xf32>
      %331 = vector.broadcast %10 : f32 to vector<14x128xf32>
      %332 = arith.mulf %331, %330 : vector<14x128xf32>
      %333 = arith.addf %328, %332 : vector<14x128xf32>
      %334 = vector.broadcast %6 : f32 to vector<14x128xf32>
      %335 = arith.mulf %334, %330 : vector<14x128xf32>
      %c2_146 = arith.constant 2 : index
      %c4_147 = arith.constant 4 : index
      %c0_148 = arith.constant 0 : index
      %c0_149 = arith.constant 0 : index
      %336 = vector.load %arg3[%c2_146, %c4_147, %c0_148, %c0_149] : memref<4x30x14x128xf32, #tpu.memory_space<vmem>>, vector<1x1x14x128xf32>
      %337 = vector.shape_cast %336 : vector<1x1x14x128xf32> to vector<14x128xf32>
      %338 = vector.broadcast %14 : f32 to vector<14x128xf32>
      %339 = arith.mulf %338, %337 : vector<14x128xf32>
      %340 = arith.addf %333, %339 : vector<14x128xf32>
      %341 = vector.broadcast %10 : f32 to vector<14x128xf32>
      %342 = arith.mulf %341, %337 : vector<14x128xf32>
      %343 = arith.addf %335, %342 : vector<14x128xf32>
      %c3_150 = arith.constant 3 : index
      %c4_151 = arith.constant 4 : index
      %c0_152 = arith.constant 0 : index
      %c0_153 = arith.constant 0 : index
      %344 = vector.load %arg3[%c3_150, %c4_151, %c0_152, %c0_153] : memref<4x30x14x128xf32, #tpu.memory_space<vmem>>, vector<1x1x14x128xf32>
      %345 = vector.shape_cast %344 : vector<1x1x14x128xf32> to vector<14x128xf32>
      %346 = vector.broadcast %14 : f32 to vector<14x128xf32>
      %347 = arith.mulf %346, %345 : vector<14x128xf32>
      %348 = arith.addf %343, %347 : vector<14x128xf32>
      %c0_154 = arith.constant 0 : index
      %c5_155 = arith.constant 5 : index
      %c0_156 = arith.constant 0 : index
      %c0_157 = arith.constant 0 : index
      %349 = vector.load %arg3[%c0_154, %c5_155, %c0_156, %c0_157] : memref<4x30x14x128xf32, #tpu.memory_space<vmem>>, vector<1x1x14x128xf32>
      %350 = vector.shape_cast %349 : vector<1x1x14x128xf32> to vector<14x128xf32>
      %351 = vector.broadcast %18 : f32 to vector<14x128xf32>
      %352 = arith.mulf %351, %350 : vector<14x128xf32>
      %353 = arith.addf %340, %352 : vector<14x128xf32>
      %354 = vector.broadcast %6 : f32 to vector<14x128xf32>
      %355 = arith.mulf %354, %350 : vector<14x128xf32>
      %c1_158 = arith.constant 1 : index
      %c5_159 = arith.constant 5 : index
      %c0_160 = arith.constant 0 : index
      %c0_161 = arith.constant 0 : index
      %356 = vector.load %arg3[%c1_158, %c5_159, %c0_160, %c0_161] : memref<4x30x14x128xf32, #tpu.memory_space<vmem>>, vector<1x1x14x128xf32>
      %357 = vector.shape_cast %356 : vector<1x1x14x128xf32> to vector<14x128xf32>
      %358 = vector.broadcast %22 : f32 to vector<14x128xf32>
      %359 = arith.mulf %358, %357 : vector<14x128xf32>
      %360 = arith.addf %353, %359 : vector<14x128xf32>
      %361 = vector.broadcast %18 : f32 to vector<14x128xf32>
      %362 = arith.mulf %361, %357 : vector<14x128xf32>
      %363 = arith.addf %348, %362 : vector<14x128xf32>
      %364 = vector.broadcast %10 : f32 to vector<14x128xf32>
      %365 = arith.mulf %364, %357 : vector<14x128xf32>
      %366 = arith.addf %355, %365 : vector<14x128xf32>
      %367 = vector.broadcast %6 : f32 to vector<14x128xf32>
      %368 = arith.mulf %367, %357 : vector<14x128xf32>
      %c2_162 = arith.constant 2 : index
      %c5_163 = arith.constant 5 : index
      %c0_164 = arith.constant 0 : index
      %c0_165 = arith.constant 0 : index
      %369 = vector.load %arg3[%c2_162, %c5_163, %c0_164, %c0_165] : memref<4x30x14x128xf32, #tpu.memory_space<vmem>>, vector<1x1x14x128xf32>
      %370 = vector.shape_cast %369 : vector<1x1x14x128xf32> to vector<14x128xf32>
      %371 = vector.broadcast %26 : f32 to vector<14x128xf32>
      %372 = arith.mulf %371, %370 : vector<14x128xf32>
      %373 = arith.addf %360, %372 : vector<14x128xf32>
      %374 = vector.broadcast %22 : f32 to vector<14x128xf32>
      %375 = arith.mulf %374, %370 : vector<14x128xf32>
      %376 = arith.addf %363, %375 : vector<14x128xf32>
      %377 = vector.broadcast %14 : f32 to vector<14x128xf32>
      %378 = arith.mulf %377, %370 : vector<14x128xf32>
      %379 = arith.addf %366, %378 : vector<14x128xf32>
      %380 = vector.broadcast %10 : f32 to vector<14x128xf32>
      %381 = arith.mulf %380, %370 : vector<14x128xf32>
      %382 = arith.addf %368, %381 : vector<14x128xf32>
      %c3_166 = arith.constant 3 : index
      %c5_167 = arith.constant 5 : index
      %c0_168 = arith.constant 0 : index
      %c0_169 = arith.constant 0 : index
      %383 = vector.load %arg3[%c3_166, %c5_167, %c0_168, %c0_169] : memref<4x30x14x128xf32, #tpu.memory_space<vmem>>, vector<1x1x14x128xf32>
      %384 = vector.shape_cast %383 : vector<1x1x14x128xf32> to vector<14x128xf32>
      %385 = vector.broadcast %26 : f32 to vector<14x128xf32>
      %386 = arith.mulf %385, %384 : vector<14x128xf32>
      %387 = arith.addf %376, %386 : vector<14x128xf32>
      %388 = vector.broadcast %14 : f32 to vector<14x128xf32>
      %389 = arith.mulf %388, %384 : vector<14x128xf32>
      %390 = arith.addf %382, %389 : vector<14x128xf32>
      %c0_170 = arith.constant 0 : index
      %c6 = arith.constant 6 : index
      %c0_171 = arith.constant 0 : index
      %c0_172 = arith.constant 0 : index
      %391 = vector.load %arg3[%c0_170, %c6, %c0_171, %c0_172] : memref<4x30x14x128xf32, #tpu.memory_space<vmem>>, vector<1x1x14x128xf32>
      %392 = vector.shape_cast %391 : vector<1x1x14x128xf32> to vector<14x128xf32>
      %393 = vector.broadcast %30 : f32 to vector<14x128xf32>
      %394 = arith.mulf %393, %392 : vector<14x128xf32>
      %395 = arith.addf %373, %394 : vector<14x128xf32>
      %396 = vector.broadcast %18 : f32 to vector<14x128xf32>
      %397 = arith.mulf %396, %392 : vector<14x128xf32>
      %398 = arith.addf %379, %397 : vector<14x128xf32>
      %c1_173 = arith.constant 1 : index
      %c6_174 = arith.constant 6 : index
      %c0_175 = arith.constant 0 : index
      %c0_176 = arith.constant 0 : index
      %399 = vector.load %arg3[%c1_173, %c6_174, %c0_175, %c0_176] : memref<4x30x14x128xf32, #tpu.memory_space<vmem>>, vector<1x1x14x128xf32>
      %400 = vector.shape_cast %399 : vector<1x1x14x128xf32> to vector<14x128xf32>
      %401 = vector.broadcast %34 : f32 to vector<14x128xf32>
      %402 = arith.mulf %401, %400 : vector<14x128xf32>
      %403 = arith.addf %395, %402 : vector<14x128xf32>
      %404 = vector.broadcast %30 : f32 to vector<14x128xf32>
      %405 = arith.mulf %404, %400 : vector<14x128xf32>
      %406 = arith.addf %387, %405 : vector<14x128xf32>
      %407 = vector.broadcast %22 : f32 to vector<14x128xf32>
      %408 = arith.mulf %407, %400 : vector<14x128xf32>
      %409 = arith.addf %398, %408 : vector<14x128xf32>
      %410 = vector.broadcast %18 : f32 to vector<14x128xf32>
      %411 = arith.mulf %410, %400 : vector<14x128xf32>
      %412 = arith.addf %390, %411 : vector<14x128xf32>
      %c2_177 = arith.constant 2 : index
      %c6_178 = arith.constant 6 : index
      %c0_179 = arith.constant 0 : index
      %c0_180 = arith.constant 0 : index
      %413 = vector.load %arg3[%c2_177, %c6_178, %c0_179, %c0_180] : memref<4x30x14x128xf32, #tpu.memory_space<vmem>>, vector<1x1x14x128xf32>
      %414 = vector.shape_cast %413 : vector<1x1x14x128xf32> to vector<14x128xf32>
      %415 = vector.broadcast %38 : f32 to vector<14x128xf32>
      %416 = arith.mulf %415, %414 : vector<14x128xf32>
      %417 = arith.addf %403, %416 : vector<14x128xf32>
      %418 = vector.broadcast %34 : f32 to vector<14x128xf32>
      %419 = arith.mulf %418, %414 : vector<14x128xf32>
      %420 = arith.addf %406, %419 : vector<14x128xf32>
      %421 = vector.broadcast %26 : f32 to vector<14x128xf32>
      %422 = arith.mulf %421, %414 : vector<14x128xf32>
      %423 = arith.addf %409, %422 : vector<14x128xf32>
      %424 = vector.broadcast %22 : f32 to vector<14x128xf32>
      %425 = arith.mulf %424, %414 : vector<14x128xf32>
      %426 = arith.addf %412, %425 : vector<14x128xf32>
      %c3_181 = arith.constant 3 : index
      %c6_182 = arith.constant 6 : index
      %c0_183 = arith.constant 0 : index
      %c0_184 = arith.constant 0 : index
      %427 = vector.load %arg3[%c3_181, %c6_182, %c0_183, %c0_184] : memref<4x30x14x128xf32, #tpu.memory_space<vmem>>, vector<1x1x14x128xf32>
      %428 = vector.shape_cast %427 : vector<1x1x14x128xf32> to vector<14x128xf32>
      %429 = vector.broadcast %38 : f32 to vector<14x128xf32>
      %430 = arith.mulf %429, %428 : vector<14x128xf32>
      %431 = arith.addf %420, %430 : vector<14x128xf32>
      %432 = vector.broadcast %26 : f32 to vector<14x128xf32>
      %433 = arith.mulf %432, %428 : vector<14x128xf32>
      %434 = arith.addf %426, %433 : vector<14x128xf32>
      %c0_185 = arith.constant 0 : index
      %c7 = arith.constant 7 : index
      %c0_186 = arith.constant 0 : index
      %c0_187 = arith.constant 0 : index
      %435 = vector.load %arg3[%c0_185, %c7, %c0_186, %c0_187] : memref<4x30x14x128xf32, #tpu.memory_space<vmem>>, vector<1x1x14x128xf32>
      %436 = vector.shape_cast %435 : vector<1x1x14x128xf32> to vector<14x128xf32>
      %437 = vector.broadcast %30 : f32 to vector<14x128xf32>
      %438 = arith.mulf %437, %436 : vector<14x128xf32>
      %439 = arith.addf %423, %438 : vector<14x128xf32>
      %c1_188 = arith.constant 1 : index
      %c7_189 = arith.constant 7 : index
      %c0_190 = arith.constant 0 : index
      %c0_191 = arith.constant 0 : index
      %440 = vector.load %arg3[%c1_188, %c7_189, %c0_190, %c0_191] : memref<4x30x14x128xf32, #tpu.memory_space<vmem>>, vector<1x1x14x128xf32>
      %441 = vector.shape_cast %440 : vector<1x1x14x128xf32> to vector<14x128xf32>
      %442 = vector.broadcast %34 : f32 to vector<14x128xf32>
      %443 = arith.mulf %442, %441 : vector<14x128xf32>
      %444 = arith.addf %439, %443 : vector<14x128xf32>
      %445 = vector.broadcast %30 : f32 to vector<14x128xf32>
      %446 = arith.mulf %445, %441 : vector<14x128xf32>
      %447 = arith.addf %434, %446 : vector<14x128xf32>
      %c2_192 = arith.constant 2 : index
      %c7_193 = arith.constant 7 : index
      %c0_194 = arith.constant 0 : index
      %c0_195 = arith.constant 0 : index
      %448 = vector.load %arg3[%c2_192, %c7_193, %c0_194, %c0_195] : memref<4x30x14x128xf32, #tpu.memory_space<vmem>>, vector<1x1x14x128xf32>
      %449 = vector.shape_cast %448 : vector<1x1x14x128xf32> to vector<14x128xf32>
      %450 = vector.broadcast %38 : f32 to vector<14x128xf32>
      %451 = arith.mulf %450, %449 : vector<14x128xf32>
      %452 = arith.addf %444, %451 : vector<14x128xf32>
      %453 = vector.broadcast %34 : f32 to vector<14x128xf32>
      %454 = arith.mulf %453, %449 : vector<14x128xf32>
      %455 = arith.addf %447, %454 : vector<14x128xf32>
      %c3_196 = arith.constant 3 : index
      %c7_197 = arith.constant 7 : index
      %c0_198 = arith.constant 0 : index
      %c0_199 = arith.constant 0 : index
      %456 = vector.load %arg3[%c3_196, %c7_197, %c0_198, %c0_199] : memref<4x30x14x128xf32, #tpu.memory_space<vmem>>, vector<1x1x14x128xf32>
      %457 = vector.shape_cast %456 : vector<1x1x14x128xf32> to vector<14x128xf32>
      %458 = vector.broadcast %38 : f32 to vector<14x128xf32>
      %459 = arith.mulf %458, %457 : vector<14x128xf32>
      %460 = arith.addf %455, %459 : vector<14x128xf32>
      %461 = arith.maximumf %417, %431 : vector<14x128xf32>
      %462 = arith.maximumf %452, %460 : vector<14x128xf32>
      %463 = arith.maximumf %461, %462 : vector<14x128xf32>
      %464 = vector.broadcast %40 : f32 to vector<14x128xf32>
      %465 = arith.addf %463, %464 : vector<14x128xf32>
      %c32 = arith.constant 32 : index
      %c0_200 = arith.constant 0 : index
      %466 = vector.load %arg7[%c32, %c0_200] : memref<224x128xf32, #tpu.memory_space<vmem>>, vector<14x128xf32>
      tpu.vector_store %arg7[%c32, %c0_200], %465 {strides = array<i32>} : memref<224x128xf32, #tpu.memory_space<vmem>>, vector<14x128xf32>,
      %c0_201 = arith.constant 0 : index
      %c6_202 = arith.constant 6 : index
      %c0_203 = arith.constant 0 : index
      %c0_204 = arith.constant 0 : index
      %467 = vector.load %arg3[%c0_201, %c6_202, %c0_203, %c0_204] : memref<4x30x14x128xf32, #tpu.memory_space<vmem>>, vector<1x1x14x128xf32>
      %468 = vector.shape_cast %467 : vector<1x1x14x128xf32> to vector<14x128xf32>
      %469 = vector.broadcast %6 : f32 to vector<14x128xf32>
      %470 = arith.mulf %469, %468 : vector<14x128xf32>
      %c1_205 = arith.constant 1 : index
      %c6_206 = arith.constant 6 : index
      %c0_207 = arith.constant 0 : index
      %c0_208 = arith.constant 0 : index
      %471 = vector.load %arg3[%c1_205, %c6_206, %c0_207, %c0_208] : memref<4x30x14x128xf32, #tpu.memory_space<vmem>>, vector<1x1x14x128xf32>
      %472 = vector.shape_cast %471 : vector<1x1x14x128xf32> to vector<14x128xf32>
      %473 = vector.broadcast %10 : f32 to vector<14x128xf32>
      %474 = arith.mulf %473, %472 : vector<14x128xf32>
      %475 = arith.addf %470, %474 : vector<14x128xf32>
      %476 = vector.broadcast %6 : f32 to vector<14x128xf32>
      %477 = arith.mulf %476, %472 : vector<14x128xf32>
      %c2_209 = arith.constant 2 : index
      %c6_210 = arith.constant 6 : index
      %c0_211 = arith.constant 0 : index
      %c0_212 = arith.constant 0 : index
      %478 = vector.load %arg3[%c2_209, %c6_210, %c0_211, %c0_212] : memref<4x30x14x128xf32, #tpu.memory_space<vmem>>, vector<1x1x14x128xf32>
      %479 = vector.shape_cast %478 : vector<1x1x14x128xf32> to vector<14x128xf32>
      %480 = vector.broadcast %14 : f32 to vector<14x128xf32>
      %481 = arith.mulf %480, %479 : vector<14x128xf32>
      %482 = arith.addf %475, %481 : vector<14x128xf32>
      %483 = vector.broadcast %10 : f32 to vector<14x128xf32>
      %484 = arith.mulf %483, %479 : vector<14x128xf32>
      %485 = arith.addf %477, %484 : vector<14x128xf32>
      %c3_213 = arith.constant 3 : index
      %c6_214 = arith.constant 6 : index
      %c0_215 = arith.constant 0 : index
      %c0_216 = arith.constant 0 : index
      %486 = vector.load %arg3[%c3_213, %c6_214, %c0_215, %c0_216] : memref<4x30x14x128xf32, #tpu.memory_space<vmem>>, vector<1x1x14x128xf32>
      %487 = vector.shape_cast %486 : vector<1x1x14x128xf32> to vector<14x128xf32>
      %488 = vector.broadcast %14 : f32 to vector<14x128xf32>
      %489 = arith.mulf %488, %487 : vector<14x128xf32>
      %490 = arith.addf %485, %489 : vector<14x128xf32>
      %c0_217 = arith.constant 0 : index
      %c7_218 = arith.constant 7 : index
      %c0_219 = arith.constant 0 : index
      %c0_220 = arith.constant 0 : index
      %491 = vector.load %arg3[%c0_217, %c7_218, %c0_219, %c0_220] : memref<4x30x14x128xf32, #tpu.memory_space<vmem>>, vector<1x1x14x128xf32>
      %492 = vector.shape_cast %491 : vector<1x1x14x128xf32> to vector<14x128xf32>
      %493 = vector.broadcast %18 : f32 to vector<14x128xf32>
      %494 = arith.mulf %493, %492 : vector<14x128xf32>
      %495 = arith.addf %482, %494 : vector<14x128xf32>
      %496 = vector.broadcast %6 : f32 to vector<14x128xf32>
      %497 = arith.mulf %496, %492 : vector<14x128xf32>
      %c1_221 = arith.constant 1 : index
      %c7_222 = arith.constant 7 : index
      %c0_223 = arith.constant 0 : index
      %c0_224 = arith.constant 0 : index
      %498 = vector.load %arg3[%c1_221, %c7_222, %c0_223, %c0_224] : memref<4x30x14x128xf32, #tpu.memory_space<vmem>>, vector<1x1x14x128xf32>
      %499 = vector.shape_cast %498 : vector<1x1x14x128xf32> to vector<14x128xf32>
      %500 = vector.broadcast %22 : f32 to vector<14x128xf32>
      %501 = arith.mulf %500, %499 : vector<14x128xf32>
      %502 = arith.addf %495, %501 : vector<14x128xf32>
      %503 = vector.broadcast %18 : f32 to vector<14x128xf32>
      %504 = arith.mulf %503, %499 : vector<14x128xf32>
      %505 = arith.addf %490, %504 : vector<14x128xf32>
      %506 = vector.broadcast %10 : f32 to vector<14x128xf32>
      %507 = arith.mulf %506, %499 : vector<14x128xf32>
      %508 = arith.addf %497, %507 : vector<14x128xf32>
      %509 = vector.broadcast %6 : f32 to vector<14x128xf32>
      %510 = arith.mulf %509, %499 : vector<14x128xf32>
      %c2_225 = arith.constant 2 : index
      %c7_226 = arith.constant 7 : index
      %c0_227 = arith.constant 0 : index
      %c0_228 = arith.constant 0 : index
      %511 = vector.load %arg3[%c2_225, %c7_226, %c0_227, %c0_228] : memref<4x30x14x128xf32, #tpu.memory_space<vmem>>, vector<1x1x14x128xf32>
      %512 = vector.shape_cast %511 : vector<1x1x14x128xf32> to vector<14x128xf32>
      %513 = vector.broadcast %26 : f32 to vector<14x128xf32>
      %514 = arith.mulf %513, %512 : vector<14x128xf32>
      %515 = arith.addf %502, %514 : vector<14x128xf32>
      %516 = vector.broadcast %22 : f32 to vector<14x128xf32>
      %517 = arith.mulf %516, %512 : vector<14x128xf32>
      %518 = arith.addf %505, %517 : vector<14x128xf32>
      %519 = vector.broadcast %14 : f32 to vector<14x128xf32>
      %520 = arith.mulf %519, %512 : vector<14x128xf32>
      %521 = arith.addf %508, %520 : vector<14x128xf32>
      %522 = vector.broadcast %10 : f32 to vector<14x128xf32>
      %523 = arith.mulf %522, %512 : vector<14x128xf32>
      %524 = arith.addf %510, %523 : vector<14x128xf32>
      %c3_229 = arith.constant 3 : index
      %c7_230 = arith.constant 7 : index
      %c0_231 = arith.constant 0 : index
      %c0_232 = arith.constant 0 : index
      %525 = vector.load %arg3[%c3_229, %c7_230, %c0_231, %c0_232] : memref<4x30x14x128xf32, #tpu.memory_space<vmem>>, vector<1x1x14x128xf32>
      %526 = vector.shape_cast %525 : vector<1x1x14x128xf32> to vector<14x128xf32>
      %527 = vector.broadcast %26 : f32 to vector<14x128xf32>
      %528 = arith.mulf %527, %526 : vector<14x128xf32>
      %529 = arith.addf %518, %528 : vector<14x128xf32>
      %530 = vector.broadcast %14 : f32 to vector<14x128xf32>
      %531 = arith.mulf %530, %526 : vector<14x128xf32>
      %532 = arith.addf %524, %531 : vector<14x128xf32>
      %c0_233 = arith.constant 0 : index
      %c8 = arith.constant 8 : index
      %c0_234 = arith.constant 0 : index
      %c0_235 = arith.constant 0 : index
      %533 = vector.load %arg3[%c0_233, %c8, %c0_234, %c0_235] : memref<4x30x14x128xf32, #tpu.memory_space<vmem>>, vector<1x1x14x128xf32>
      %534 = vector.shape_cast %533 : vector<1x1x14x128xf32> to vector<14x128xf32>
      %535 = vector.broadcast %30 : f32 to vector<14x128xf32>
      %536 = arith.mulf %535, %534 : vector<14x128xf32>
      %537 = arith.addf %515, %536 : vector<14x128xf32>
      %538 = vector.broadcast %18 : f32 to vector<14x128xf32>
      %539 = arith.mulf %538, %534 : vector<14x128xf32>
      %540 = arith.addf %521, %539 : vector<14x128xf32>
      %c1_236 = arith.constant 1 : index
      %c8_237 = arith.constant 8 : index
      %c0_238 = arith.constant 0 : index
      %c0_239 = arith.constant 0 : index
      %541 = vector.load %arg3[%c1_236, %c8_237, %c0_238, %c0_239] : memref<4x30x14x128xf32, #tpu.memory_space<vmem>>, vector<1x1x14x128xf32>
      %542 = vector.shape_cast %541 : vector<1x1x14x128xf32> to vector<14x128xf32>
      %543 = vector.broadcast %34 : f32 to vector<14x128xf32>
      %544 = arith.mulf %543, %542 : vector<14x128xf32>
      %545 = arith.addf %537, %544 : vector<14x128xf32>
      %546 = vector.broadcast %30 : f32 to vector<14x128xf32>
      %547 = arith.mulf %546, %542 : vector<14x128xf32>
      %548 = arith.addf %529, %547 : vector<14x128xf32>
      %549 = vector.broadcast %22 : f32 to vector<14x128xf32>
      %550 = arith.mulf %549, %542 : vector<14x128xf32>
      %551 = arith.addf %540, %550 : vector<14x128xf32>
      %552 = vector.broadcast %18 : f32 to vector<14x128xf32>
      %553 = arith.mulf %552, %542 : vector<14x128xf32>
      %554 = arith.addf %532, %553 : vector<14x128xf32>
      %c2_240 = arith.constant 2 : index
      %c8_241 = arith.constant 8 : index
      %c0_242 = arith.constant 0 : index
      %c0_243 = arith.constant 0 : index
      %555 = vector.load %arg3[%c2_240, %c8_241, %c0_242, %c0_243] : memref<4x30x14x128xf32, #tpu.memory_space<vmem>>, vector<1x1x14x128xf32>
      %556 = vector.shape_cast %555 : vector<1x1x14x128xf32> to vector<14x128xf32>
      %557 = vector.broadcast %38 : f32 to vector<14x128xf32>
      %558 = arith.mulf %557, %556 : vector<14x128xf32>
      %559 = arith.addf %545, %558 : vector<14x128xf32>
      %560 = vector.broadcast %34 : f32 to vector<14x128xf32>
      %561 = arith.mulf %560, %556 : vector<14x128xf32>
      %562 = arith.addf %548, %561 : vector<14x128xf32>
      %563 = vector.broadcast %26 : f32 to vector<14x128xf32>
      %564 = arith.mulf %563, %556 : vector<14x128xf32>
      %565 = arith.addf %551, %564 : vector<14x128xf32>
      %566 = vector.broadcast %22 : f32 to vector<14x128xf32>
      %567 = arith.mulf %566, %556 : vector<14x128xf32>
      %568 = arith.addf %554, %567 : vector<14x128xf32>
      %c3_244 = arith.constant 3 : index
      %c8_245 = arith.constant 8 : index
      %c0_246 = arith.constant 0 : index
      %c0_247 = arith.constant 0 : index
      %569 = vector.load %arg3[%c3_244, %c8_245, %c0_246, %c0_247] : memref<4x30x14x128xf32, #tpu.memory_space<vmem>>, vector<1x1x14x128xf32>
      %570 = vector.shape_cast %569 : vector<1x1x14x128xf32> to vector<14x128xf32>
      %571 = vector.broadcast %38 : f32 to vector<14x128xf32>
      %572 = arith.mulf %571, %570 : vector<14x128xf32>
      %573 = arith.addf %562, %572 : vector<14x128xf32>
      %574 = vector.broadcast %26 : f32 to vector<14x128xf32>
      %575 = arith.mulf %574, %570 : vector<14x128xf32>
      %576 = arith.addf %568, %575 : vector<14x128xf32>
      %c0_248 = arith.constant 0 : index
      %c9 = arith.constant 9 : index
      %c0_249 = arith.constant 0 : index
      %c0_250 = arith.constant 0 : index
      %577 = vector.load %arg3[%c0_248, %c9, %c0_249, %c0_250] : memref<4x30x14x128xf32, #tpu.memory_space<vmem>>, vector<1x1x14x128xf32>
      %578 = vector.shape_cast %577 : vector<1x1x14x128xf32> to vector<14x128xf32>
      %579 = vector.broadcast %30 : f32 to vector<14x128xf32>
      %580 = arith.mulf %579, %578 : vector<14x128xf32>
      %581 = arith.addf %565, %580 : vector<14x128xf32>
      %c1_251 = arith.constant 1 : index
      %c9_252 = arith.constant 9 : index
      %c0_253 = arith.constant 0 : index
      %c0_254 = arith.constant 0 : index
      %582 = vector.load %arg3[%c1_251, %c9_252, %c0_253, %c0_254] : memref<4x30x14x128xf32, #tpu.memory_space<vmem>>, vector<1x1x14x128xf32>
      %583 = vector.shape_cast %582 : vector<1x1x14x128xf32> to vector<14x128xf32>
      %584 = vector.broadcast %34 : f32 to vector<14x128xf32>
      %585 = arith.mulf %584, %583 : vector<14x128xf32>
      %586 = arith.addf %581, %585 : vector<14x128xf32>
      %587 = vector.broadcast %30 : f32 to vector<14x128xf32>
      %588 = arith.mulf %587, %583 : vector<14x128xf32>
      %589 = arith.addf %576, %588 : vector<14x128xf32>
      %c2_255 = arith.constant 2 : index
      %c9_256 = arith.constant 9 : index
      %c0_257 = arith.constant 0 : index
      %c0_258 = arith.constant 0 : index
      %590 = vector.load %arg3[%c2_255, %c9_256, %c0_257, %c0_258] : memref<4x30x14x128xf32, #tpu.memory_space<vmem>>, vector<1x1x14x128xf32>
      %591 = vector.shape_cast %590 : vector<1x1x14x128xf32> to vector<14x128xf32>
      %592 = vector.broadcast %38 : f32 to vector<14x128xf32>
      %593 = arith.mulf %592, %591 : vector<14x128xf32>
      %594 = arith.addf %586, %593 : vector<14x128xf32>
      %595 = vector.broadcast %34 : f32 to vector<14x128xf32>
      %596 = arith.mulf %595, %591 : vector<14x128xf32>
      %597 = arith.addf %589, %596 : vector<14x128xf32>
      %c3_259 = arith.constant 3 : index
      %c9_260 = arith.constant 9 : index
      %c0_261 = arith.constant 0 : index
      %c0_262 = arith.constant 0 : index
      %598 = vector.load %arg3[%c3_259, %c9_260, %c0_261, %c0_262] : memref<4x30x14x128xf32, #tpu.memory_space<vmem>>, vector<1x1x14x128xf32>
      %599 = vector.shape_cast %598 : vector<1x1x14x128xf32> to vector<14x128xf32>
      %600 = vector.broadcast %38 : f32 to vector<14x128xf32>
      %601 = arith.mulf %600, %599 : vector<14x128xf32>
      %602 = arith.addf %597, %601 : vector<14x128xf32>
      %603 = arith.maximumf %559, %573 : vector<14x128xf32>
      %604 = arith.maximumf %594, %602 : vector<14x128xf32>
      %605 = arith.maximumf %603, %604 : vector<14x128xf32>
      %606 = vector.broadcast %40 : f32 to vector<14x128xf32>
      %607 = arith.addf %605, %606 : vector<14x128xf32>
      %c48 = arith.constant 48 : index
      %c0_263 = arith.constant 0 : index
      %608 = vector.load %arg7[%c48, %c0_263] : memref<224x128xf32, #tpu.memory_space<vmem>>, vector<14x128xf32>
      tpu.vector_store %arg7[%c48, %c0_263], %607 {strides = array<i32>} : memref<224x128xf32, #tpu.memory_space<vmem>>, vector<14x128xf32>,
      %c0_264 = arith.constant 0 : index
      %c8_265 = arith.constant 8 : index
      %c0_266 = arith.constant 0 : index
      %c0_267 = arith.constant 0 : index
      %609 = vector.load %arg3[%c0_264, %c8_265, %c0_266, %c0_267] : memref<4x30x14x128xf32, #tpu.memory_space<vmem>>, vector<1x1x14x128xf32>
      %610 = vector.shape_cast %609 : vector<1x1x14x128xf32> to vector<14x128xf32>
      %611 = vector.broadcast %6 : f32 to vector<14x128xf32>
      %612 = arith.mulf %611, %610 : vector<14x128xf32>
      %c1_268 = arith.constant 1 : index
      %c8_269 = arith.constant 8 : index
      %c0_270 = arith.constant 0 : index
      %c0_271 = arith.constant 0 : index
      %613 = vector.load %arg3[%c1_268, %c8_269, %c0_270, %c0_271] : memref<4x30x14x128xf32, #tpu.memory_space<vmem>>, vector<1x1x14x128xf32>
      %614 = vector.shape_cast %613 : vector<1x1x14x128xf32> to vector<14x128xf32>
      %615 = vector.broadcast %10 : f32 to vector<14x128xf32>
      %616 = arith.mulf %615, %614 : vector<14x128xf32>
      %617 = arith.addf %612, %616 : vector<14x128xf32>
      %618 = vector.broadcast %6 : f32 to vector<14x128xf32>
      %619 = arith.mulf %618, %614 : vector<14x128xf32>
      %c2_272 = arith.constant 2 : index
      %c8_273 = arith.constant 8 : index
      %c0_274 = arith.constant 0 : index
      %c0_275 = arith.constant 0 : index
      %620 = vector.load %arg3[%c2_272, %c8_273, %c0_274, %c0_275] : memref<4x30x14x128xf32, #tpu.memory_space<vmem>>, vector<1x1x14x128xf32>
      %621 = vector.shape_cast %620 : vector<1x1x14x128xf32> to vector<14x128xf32>
      %622 = vector.broadcast %14 : f32 to vector<14x128xf32>
      %623 = arith.mulf %622, %621 : vector<14x128xf32>
      %624 = arith.addf %617, %623 : vector<14x128xf32>
      %625 = vector.broadcast %10 : f32 to vector<14x128xf32>
      %626 = arith.mulf %625, %621 : vector<14x128xf32>
      %627 = arith.addf %619, %626 : vector<14x128xf32>
      %c3_276 = arith.constant 3 : index
      %c8_277 = arith.constant 8 : index
      %c0_278 = arith.constant 0 : index
      %c0_279 = arith.constant 0 : index
      %628 = vector.load %arg3[%c3_276, %c8_277, %c0_278, %c0_279] : memref<4x30x14x128xf32, #tpu.memory_space<vmem>>, vector<1x1x14x128xf32>
      %629 = vector.shape_cast %628 : vector<1x1x14x128xf32> to vector<14x128xf32>
      %630 = vector.broadcast %14 : f32 to vector<14x128xf32>
      %631 = arith.mulf %630, %629 : vector<14x128xf32>
      %632 = arith.addf %627, %631 : vector<14x128xf32>
      %c0_280 = arith.constant 0 : index
      %c9_281 = arith.constant 9 : index
      %c0_282 = arith.constant 0 : index
      %c0_283 = arith.constant 0 : index
      %633 = vector.load %arg3[%c0_280, %c9_281, %c0_282, %c0_283] : memref<4x30x14x128xf32, #tpu.memory_space<vmem>>, vector<1x1x14x128xf32>
      %634 = vector.shape_cast %633 : vector<1x1x14x128xf32> to vector<14x128xf32>
      %635 = vector.broadcast %18 : f32 to vector<14x128xf32>
      %636 = arith.mulf %635, %634 : vector<14x128xf32>
      %637 = arith.addf %624, %636 : vector<14x128xf32>
      %638 = vector.broadcast %6 : f32 to vector<14x128xf32>
      %639 = arith.mulf %638, %634 : vector<14x128xf32>
      %c1_284 = arith.constant 1 : index
      %c9_285 = arith.constant 9 : index
      %c0_286 = arith.constant 0 : index
      %c0_287 = arith.constant 0 : index
      %640 = vector.load %arg3[%c1_284, %c9_285, %c0_286, %c0_287] : memref<4x30x14x128xf32, #tpu.memory_space<vmem>>, vector<1x1x14x128xf32>
      %641 = vector.shape_cast %640 : vector<1x1x14x128xf32> to vector<14x128xf32>
      %642 = vector.broadcast %22 : f32 to vector<14x128xf32>
      %643 = arith.mulf %642, %641 : vector<14x128xf32>
      %644 = arith.addf %637, %643 : vector<14x128xf32>
      %645 = vector.broadcast %18 : f32 to vector<14x128xf32>
      %646 = arith.mulf %645, %641 : vector<14x128xf32>
      %647 = arith.addf %632, %646 : vector<14x128xf32>
      %648 = vector.broadcast %10 : f32 to vector<14x128xf32>
      %649 = arith.mulf %648, %641 : vector<14x128xf32>
      %650 = arith.addf %639, %649 : vector<14x128xf32>
      %651 = vector.broadcast %6 : f32 to vector<14x128xf32>
      %652 = arith.mulf %651, %641 : vector<14x128xf32>
      %c2_288 = arith.constant 2 : index
      %c9_289 = arith.constant 9 : index
      %c0_290 = arith.constant 0 : index
      %c0_291 = arith.constant 0 : index
      %653 = vector.load %arg3[%c2_288, %c9_289, %c0_290, %c0_291] : memref<4x30x14x128xf32, #tpu.memory_space<vmem>>, vector<1x1x14x128xf32>
      %654 = vector.shape_cast %653 : vector<1x1x14x128xf32> to vector<14x128xf32>
      %655 = vector.broadcast %26 : f32 to vector<14x128xf32>
      %656 = arith.mulf %655, %654 : vector<14x128xf32>
      %657 = arith.addf %644, %656 : vector<14x128xf32>
      %658 = vector.broadcast %22 : f32 to vector<14x128xf32>
      %659 = arith.mulf %658, %654 : vector<14x128xf32>
      %660 = arith.addf %647, %659 : vector<14x128xf32>
      %661 = vector.broadcast %14 : f32 to vector<14x128xf32>
      %662 = arith.mulf %661, %654 : vector<14x128xf32>
      %663 = arith.addf %650, %662 : vector<14x128xf32>
      %664 = vector.broadcast %10 : f32 to vector<14x128xf32>
      %665 = arith.mulf %664, %654 : vector<14x128xf32>
      %666 = arith.addf %652, %665 : vector<14x128xf32>
      %c3_292 = arith.constant 3 : index
      %c9_293 = arith.constant 9 : index
      %c0_294 = arith.constant 0 : index
      %c0_295 = arith.constant 0 : index
      %667 = vector.load %arg3[%c3_292, %c9_293, %c0_294, %c0_295] : memref<4x30x14x128xf32, #tpu.memory_space<vmem>>, vector<1x1x14x128xf32>
      %668 = vector.shape_cast %667 : vector<1x1x14x128xf32> to vector<14x128xf32>
      %669 = vector.broadcast %26 : f32 to vector<14x128xf32>
      %670 = arith.mulf %669, %668 : vector<14x128xf32>
      %671 = arith.addf %660, %670 : vector<14x128xf32>
      %672 = vector.broadcast %14 : f32 to vector<14x128xf32>
      %673 = arith.mulf %672, %668 : vector<14x128xf32>
      %674 = arith.addf %666, %673 : vector<14x128xf32>
      %c0_296 = arith.constant 0 : index
      %c10 = arith.constant 10 : index
      %c0_297 = arith.constant 0 : index
      %c0_298 = arith.constant 0 : index
      %675 = vector.load %arg3[%c0_296, %c10, %c0_297, %c0_298] : memref<4x30x14x128xf32, #tpu.memory_space<vmem>>, vector<1x1x14x128xf32>
      %676 = vector.shape_cast %675 : vector<1x1x14x128xf32> to vector<14x128xf32>
      %677 = vector.broadcast %30 : f32 to vector<14x128xf32>
      %678 = arith.mulf %677, %676 : vector<14x128xf32>
      %679 = arith.addf %657, %678 : vector<14x128xf32>
      %680 = vector.broadcast %18 : f32 to vector<14x128xf32>
      %681 = arith.mulf %680, %676 : vector<14x128xf32>
      %682 = arith.addf %663, %681 : vector<14x128xf32>
      %c1_299 = arith.constant 1 : index
      %c10_300 = arith.constant 10 : index
      %c0_301 = arith.constant 0 : index
      %c0_302 = arith.constant 0 : index
      %683 = vector.load %arg3[%c1_299, %c10_300, %c0_301, %c0_302] : memref<4x30x14x128xf32, #tpu.memory_space<vmem>>, vector<1x1x14x128xf32>
      %684 = vector.shape_cast %683 : vector<1x1x14x128xf32> to vector<14x128xf32>
      %685 = vector.broadcast %34 : f32 to vector<14x128xf32>
      %686 = arith.mulf %685, %684 : vector<14x128xf32>
      %687 = arith.addf %679, %686 : vector<14x128xf32>
      %688 = vector.broadcast %30 : f32 to vector<14x128xf32>
      %689 = arith.mulf %688, %684 : vector<14x128xf32>
      %690 = arith.addf %671, %689 : vector<14x128xf32>
      %691 = vector.broadcast %22 : f32 to vector<14x128xf32>
      %692 = arith.mulf %691, %684 : vector<14x128xf32>
      %693 = arith.addf %682, %692 : vector<14x128xf32>
      %694 = vector.broadcast %18 : f32 to vector<14x128xf32>
      %695 = arith.mulf %694, %684 : vector<14x128xf32>
      %696 = arith.addf %674, %695 : vector<14x128xf32>
      %c2_303 = arith.constant 2 : index
      %c10_304 = arith.constant 10 : index
      %c0_305 = arith.constant 0 : index
      %c0_306 = arith.constant 0 : index
      %697 = vector.load %arg3[%c2_303, %c10_304, %c0_305, %c0_306] : memref<4x30x14x128xf32, #tpu.memory_space<vmem>>, vector<1x1x14x128xf32>
      %698 = vector.shape_cast %697 : vector<1x1x14x128xf32> to vector<14x128xf32>
      %699 = vector.broadcast %38 : f32 to vector<14x128xf32>
      %700 = arith.mulf %699, %698 : vector<14x128xf32>
      %701 = arith.addf %687, %700 : vector<14x128xf32>
      %702 = vector.broadcast %34 : f32 to vector<14x128xf32>
      %703 = arith.mulf %702, %698 : vector<14x128xf32>
      %704 = arith.addf %690, %703 : vector<14x128xf32>
      %705 = vector.broadcast %26 : f32 to vector<14x128xf32>
      %706 = arith.mulf %705, %698 : vector<14x128xf32>
      %707 = arith.addf %693, %706 : vector<14x128xf32>
      %708 = vector.broadcast %22 : f32 to vector<14x128xf32>
      %709 = arith.mulf %708, %698 : vector<14x128xf32>
      %710 = arith.addf %696, %709 : vector<14x128xf32>
      %c3_307 = arith.constant 3 : index
      %c10_308 = arith.constant 10 : index
      %c0_309 = arith.constant 0 : index
      %c0_310 = arith.constant 0 : index
      %711 = vector.load %arg3[%c3_307, %c10_308, %c0_309, %c0_310] : memref<4x30x14x128xf32, #tpu.memory_space<vmem>>, vector<1x1x14x128xf32>
      %712 = vector.shape_cast %711 : vector<1x1x14x128xf32> to vector<14x128xf32>
      %713 = vector.broadcast %38 : f32 to vector<14x128xf32>
      %714 = arith.mulf %713, %712 : vector<14x128xf32>
      %715 = arith.addf %704, %714 : vector<14x128xf32>
      %716 = vector.broadcast %26 : f32 to vector<14x128xf32>
      %717 = arith.mulf %716, %712 : vector<14x128xf32>
      %718 = arith.addf %710, %717 : vector<14x128xf32>
      %c0_311 = arith.constant 0 : index
      %c11 = arith.constant 11 : index
      %c0_312 = arith.constant 0 : index
      %c0_313 = arith.constant 0 : index
      %719 = vector.load %arg3[%c0_311, %c11, %c0_312, %c0_313] : memref<4x30x14x128xf32, #tpu.memory_space<vmem>>, vector<1x1x14x128xf32>
      %720 = vector.shape_cast %719 : vector<1x1x14x128xf32> to vector<14x128xf32>
      %721 = vector.broadcast %30 : f32 to vector<14x128xf32>
      %722 = arith.mulf %721, %720 : vector<14x128xf32>
      %723 = arith.addf %707, %722 : vector<14x128xf32>
      %c1_314 = arith.constant 1 : index
      %c11_315 = arith.constant 11 : index
      %c0_316 = arith.constant 0 : index
      %c0_317 = arith.constant 0 : index
      %724 = vector.load %arg3[%c1_314, %c11_315, %c0_316, %c0_317] : memref<4x30x14x128xf32, #tpu.memory_space<vmem>>, vector<1x1x14x128xf32>
      %725 = vector.shape_cast %724 : vector<1x1x14x128xf32> to vector<14x128xf32>
      %726 = vector.broadcast %34 : f32 to vector<14x128xf32>
      %727 = arith.mulf %726, %725 : vector<14x128xf32>
      %728 = arith.addf %723, %727 : vector<14x128xf32>
      %729 = vector.broadcast %30 : f32 to vector<14x128xf32>
      %730 = arith.mulf %729, %725 : vector<14x128xf32>
      %731 = arith.addf %718, %730 : vector<14x128xf32>
      %c2_318 = arith.constant 2 : index
      %c11_319 = arith.constant 11 : index
      %c0_320 = arith.constant 0 : index
      %c0_321 = arith.constant 0 : index
      %732 = vector.load %arg3[%c2_318, %c11_319, %c0_320, %c0_321] : memref<4x30x14x128xf32, #tpu.memory_space<vmem>>, vector<1x1x14x128xf32>
      %733 = vector.shape_cast %732 : vector<1x1x14x128xf32> to vector<14x128xf32>
      %734 = vector.broadcast %38 : f32 to vector<14x128xf32>
      %735 = arith.mulf %734, %733 : vector<14x128xf32>
      %736 = arith.addf %728, %735 : vector<14x128xf32>
      %737 = vector.broadcast %34 : f32 to vector<14x128xf32>
      %738 = arith.mulf %737, %733 : vector<14x128xf32>
      %739 = arith.addf %731, %738 : vector<14x128xf32>
      %c3_322 = arith.constant 3 : index
      %c11_323 = arith.constant 11 : index
      %c0_324 = arith.constant 0 : index
      %c0_325 = arith.constant 0 : index
      %740 = vector.load %arg3[%c3_322, %c11_323, %c0_324, %c0_325] : memref<4x30x14x128xf32, #tpu.memory_space<vmem>>, vector<1x1x14x128xf32>
      %741 = vector.shape_cast %740 : vector<1x1x14x128xf32> to vector<14x128xf32>
      %742 = vector.broadcast %38 : f32 to vector<14x128xf32>
      %743 = arith.mulf %742, %741 : vector<14x128xf32>
      %744 = arith.addf %739, %743 : vector<14x128xf32>
      %745 = arith.maximumf %701, %715 : vector<14x128xf32>
      %746 = arith.maximumf %736, %744 : vector<14x128xf32>
      %747 = arith.maximumf %745, %746 : vector<14x128xf32>
      %748 = vector.broadcast %40 : f32 to vector<14x128xf32>
      %749 = arith.addf %747, %748 : vector<14x128xf32>
      %c64 = arith.constant 64 : index
      %c0_326 = arith.constant 0 : index
      %750 = vector.load %arg7[%c64, %c0_326] : memref<224x128xf32, #tpu.memory_space<vmem>>, vector<14x128xf32>
      tpu.vector_store %arg7[%c64, %c0_326], %749 {strides = array<i32>} : memref<224x128xf32, #tpu.memory_space<vmem>>, vector<14x128xf32>,
      %c0_327 = arith.constant 0 : index
      %c10_328 = arith.constant 10 : index
      %c0_329 = arith.constant 0 : index
      %c0_330 = arith.constant 0 : index
      %751 = vector.load %arg3[%c0_327, %c10_328, %c0_329, %c0_330] : memref<4x30x14x128xf32, #tpu.memory_space<vmem>>, vector<1x1x14x128xf32>
      %752 = vector.shape_cast %751 : vector<1x1x14x128xf32> to vector<14x128xf32>
      %753 = vector.broadcast %6 : f32 to vector<14x128xf32>
      %754 = arith.mulf %753, %752 : vector<14x128xf32>
      %c1_331 = arith.constant 1 : index
      %c10_332 = arith.constant 10 : index
      %c0_333 = arith.constant 0 : index
      %c0_334 = arith.constant 0 : index
      %755 = vector.load %arg3[%c1_331, %c10_332, %c0_333, %c0_334] : memref<4x30x14x128xf32, #tpu.memory_space<vmem>>, vector<1x1x14x128xf32>
      %756 = vector.shape_cast %755 : vector<1x1x14x128xf32> to vector<14x128xf32>
      %757 = vector.broadcast %10 : f32 to vector<14x128xf32>
      %758 = arith.mulf %757, %756 : vector<14x128xf32>
      %759 = arith.addf %754, %758 : vector<14x128xf32>
      %760 = vector.broadcast %6 : f32 to vector<14x128xf32>
      %761 = arith.mulf %760, %756 : vector<14x128xf32>
      %c2_335 = arith.constant 2 : index
      %c10_336 = arith.constant 10 : index
      %c0_337 = arith.constant 0 : index
      %c0_338 = arith.constant 0 : index
      %762 = vector.load %arg3[%c2_335, %c10_336, %c0_337, %c0_338] : memref<4x30x14x128xf32, #tpu.memory_space<vmem>>, vector<1x1x14x128xf32>
      %763 = vector.shape_cast %762 : vector<1x1x14x128xf32> to vector<14x128xf32>
      %764 = vector.broadcast %14 : f32 to vector<14x128xf32>
      %765 = arith.mulf %764, %763 : vector<14x128xf32>
      %766 = arith.addf %759, %765 : vector<14x128xf32>
      %767 = vector.broadcast %10 : f32 to vector<14x128xf32>
      %768 = arith.mulf %767, %763 : vector<14x128xf32>
      %769 = arith.addf %761, %768 : vector<14x128xf32>
      %c3_339 = arith.constant 3 : index
      %c10_340 = arith.constant 10 : index
      %c0_341 = arith.constant 0 : index
      %c0_342 = arith.constant 0 : index
      %770 = vector.load %arg3[%c3_339, %c10_340, %c0_341, %c0_342] : memref<4x30x14x128xf32, #tpu.memory_space<vmem>>, vector<1x1x14x128xf32>
      %771 = vector.shape_cast %770 : vector<1x1x14x128xf32> to vector<14x128xf32>
      %772 = vector.broadcast %14 : f32 to vector<14x128xf32>
      %773 = arith.mulf %772, %771 : vector<14x128xf32>
      %774 = arith.addf %769, %773 : vector<14x128xf32>
      %c0_343 = arith.constant 0 : index
      %c11_344 = arith.constant 11 : index
      %c0_345 = arith.constant 0 : index
      %c0_346 = arith.constant 0 : index
      %775 = vector.load %arg3[%c0_343, %c11_344, %c0_345, %c0_346] : memref<4x30x14x128xf32, #tpu.memory_space<vmem>>, vector<1x1x14x128xf32>
      %776 = vector.shape_cast %775 : vector<1x1x14x128xf32> to vector<14x128xf32>
      %777 = vector.broadcast %18 : f32 to vector<14x128xf32>
      %778 = arith.mulf %777, %776 : vector<14x128xf32>
      %779 = arith.addf %766, %778 : vector<14x128xf32>
      %780 = vector.broadcast %6 : f32 to vector<14x128xf32>
      %781 = arith.mulf %780, %776 : vector<14x128xf32>
      %c1_347 = arith.constant 1 : index
      %c11_348 = arith.constant 11 : index
      %c0_349 = arith.constant 0 : index
      %c0_350 = arith.constant 0 : index
      %782 = vector.load %arg3[%c1_347, %c11_348, %c0_349, %c0_350] : memref<4x30x14x128xf32, #tpu.memory_space<vmem>>, vector<1x1x14x128xf32>
      %783 = vector.shape_cast %782 : vector<1x1x14x128xf32> to vector<14x128xf32>
      %784 = vector.broadcast %22 : f32 to vector<14x128xf32>
      %785 = arith.mulf %784, %783 : vector<14x128xf32>
      %786 = arith.addf %779, %785 : vector<14x128xf32>
      %787 = vector.broadcast %18 : f32 to vector<14x128xf32>
      %788 = arith.mulf %787, %783 : vector<14x128xf32>
      %789 = arith.addf %774, %788 : vector<14x128xf32>
      %790 = vector.broadcast %10 : f32 to vector<14x128xf32>
      %791 = arith.mulf %790, %783 : vector<14x128xf32>
      %792 = arith.addf %781, %791 : vector<14x128xf32>
      %793 = vector.broadcast %6 : f32 to vector<14x128xf32>
      %794 = arith.mulf %793, %783 : vector<14x128xf32>
      %c2_351 = arith.constant 2 : index
      %c11_352 = arith.constant 11 : index
      %c0_353 = arith.constant 0 : index
      %c0_354 = arith.constant 0 : index
      %795 = vector.load %arg3[%c2_351, %c11_352, %c0_353, %c0_354] : memref<4x30x14x128xf32, #tpu.memory_space<vmem>>, vector<1x1x14x128xf32>
      %796 = vector.shape_cast %795 : vector<1x1x14x128xf32> to vector<14x128xf32>
      %797 = vector.broadcast %26 : f32 to vector<14x128xf32>
      %798 = arith.mulf %797, %796 : vector<14x128xf32>
      %799 = arith.addf %786, %798 : vector<14x128xf32>
      %800 = vector.broadcast %22 : f32 to vector<14x128xf32>
      %801 = arith.mulf %800, %796 : vector<14x128xf32>
      %802 = arith.addf %789, %801 : vector<14x128xf32>
      %803 = vector.broadcast %14 : f32 to vector<14x128xf32>
      %804 = arith.mulf %803, %796 : vector<14x128xf32>
      %805 = arith.addf %792, %804 : vector<14x128xf32>
      %806 = vector.broadcast %10 : f32 to vector<14x128xf32>
      %807 = arith.mulf %806, %796 : vector<14x128xf32>
      %808 = arith.addf %794, %807 : vector<14x128xf32>
      %c3_355 = arith.constant 3 : index
      %c11_356 = arith.constant 11 : index
      %c0_357 = arith.constant 0 : index
      %c0_358 = arith.constant 0 : index
      %809 = vector.load %arg3[%c3_355, %c11_356, %c0_357, %c0_358] : memref<4x30x14x128xf32, #tpu.memory_space<vmem>>, vector<1x1x14x128xf32>
      %810 = vector.shape_cast %809 : vector<1x1x14x128xf32> to vector<14x128xf32>
      %811 = vector.broadcast %26 : f32 to vector<14x128xf32>
      %812 = arith.mulf %811, %810 : vector<14x128xf32>
      %813 = arith.addf %802, %812 : vector<14x128xf32>
      %814 = vector.broadcast %14 : f32 to vector<14x128xf32>
      %815 = arith.mulf %814, %810 : vector<14x128xf32>
      %816 = arith.addf %808, %815 : vector<14x128xf32>
      %c0_359 = arith.constant 0 : index
      %c12 = arith.constant 12 : index
      %c0_360 = arith.constant 0 : index
      %c0_361 = arith.constant 0 : index
      %817 = vector.load %arg3[%c0_359, %c12, %c0_360, %c0_361] : memref<4x30x14x128xf32, #tpu.memory_space<vmem>>, vector<1x1x14x128xf32>
      %818 = vector.shape_cast %817 : vector<1x1x14x128xf32> to vector<14x128xf32>
      %819 = vector.broadcast %30 : f32 to vector<14x128xf32>
      %820 = arith.mulf %819, %818 : vector<14x128xf32>
      %821 = arith.addf %799, %820 : vector<14x128xf32>
      %822 = vector.broadcast %18 : f32 to vector<14x128xf32>
      %823 = arith.mulf %822, %818 : vector<14x128xf32>
      %824 = arith.addf %805, %823 : vector<14x128xf32>
      %c1_362 = arith.constant 1 : index
      %c12_363 = arith.constant 12 : index
      %c0_364 = arith.constant 0 : index
      %c0_365 = arith.constant 0 : index
      %825 = vector.load %arg3[%c1_362, %c12_363, %c0_364, %c0_365] : memref<4x30x14x128xf32, #tpu.memory_space<vmem>>, vector<1x1x14x128xf32>
      %826 = vector.shape_cast %825 : vector<1x1x14x128xf32> to vector<14x128xf32>
      %827 = vector.broadcast %34 : f32 to vector<14x128xf32>
      %828 = arith.mulf %827, %826 : vector<14x128xf32>
      %829 = arith.addf %821, %828 : vector<14x128xf32>
      %830 = vector.broadcast %30 : f32 to vector<14x128xf32>
      %831 = arith.mulf %830, %826 : vector<14x128xf32>
      %832 = arith.addf %813, %831 : vector<14x128xf32>
      %833 = vector.broadcast %22 : f32 to vector<14x128xf32>
      %834 = arith.mulf %833, %826 : vector<14x128xf32>
      %835 = arith.addf %824, %834 : vector<14x128xf32>
      %836 = vector.broadcast %18 : f32 to vector<14x128xf32>
      %837 = arith.mulf %836, %826 : vector<14x128xf32>
      %838 = arith.addf %816, %837 : vector<14x128xf32>
      %c2_366 = arith.constant 2 : index
      %c12_367 = arith.constant 12 : index
      %c0_368 = arith.constant 0 : index
      %c0_369 = arith.constant 0 : index
      %839 = vector.load %arg3[%c2_366, %c12_367, %c0_368, %c0_369] : memref<4x30x14x128xf32, #tpu.memory_space<vmem>>, vector<1x1x14x128xf32>
      %840 = vector.shape_cast %839 : vector<1x1x14x128xf32> to vector<14x128xf32>
      %841 = vector.broadcast %38 : f32 to vector<14x128xf32>
      %842 = arith.mulf %841, %840 : vector<14x128xf32>
      %843 = arith.addf %829, %842 : vector<14x128xf32>
      %844 = vector.broadcast %34 : f32 to vector<14x128xf32>
      %845 = arith.mulf %844, %840 : vector<14x128xf32>
      %846 = arith.addf %832, %845 : vector<14x128xf32>
      %847 = vector.broadcast %26 : f32 to vector<14x128xf32>
      %848 = arith.mulf %847, %840 : vector<14x128xf32>
      %849 = arith.addf %835, %848 : vector<14x128xf32>
      %850 = vector.broadcast %22 : f32 to vector<14x128xf32>
      %851 = arith.mulf %850, %840 : vector<14x128xf32>
      %852 = arith.addf %838, %851 : vector<14x128xf32>
      %c3_370 = arith.constant 3 : index
      %c12_371 = arith.constant 12 : index
      %c0_372 = arith.constant 0 : index
      %c0_373 = arith.constant 0 : index
      %853 = vector.load %arg3[%c3_370, %c12_371, %c0_372, %c0_373] : memref<4x30x14x128xf32, #tpu.memory_space<vmem>>, vector<1x1x14x128xf32>
      %854 = vector.shape_cast %853 : vector<1x1x14x128xf32> to vector<14x128xf32>
      %855 = vector.broadcast %38 : f32 to vector<14x128xf32>
      %856 = arith.mulf %855, %854 : vector<14x128xf32>
      %857 = arith.addf %846, %856 : vector<14x128xf32>
      %858 = vector.broadcast %26 : f32 to vector<14x128xf32>
      %859 = arith.mulf %858, %854 : vector<14x128xf32>
      %860 = arith.addf %852, %859 : vector<14x128xf32>
      %c0_374 = arith.constant 0 : index
      %c13 = arith.constant 13 : index
      %c0_375 = arith.constant 0 : index
      %c0_376 = arith.constant 0 : index
      %861 = vector.load %arg3[%c0_374, %c13, %c0_375, %c0_376] : memref<4x30x14x128xf32, #tpu.memory_space<vmem>>, vector<1x1x14x128xf32>
      %862 = vector.shape_cast %861 : vector<1x1x14x128xf32> to vector<14x128xf32>
      %863 = vector.broadcast %30 : f32 to vector<14x128xf32>
      %864 = arith.mulf %863, %862 : vector<14x128xf32>
      %865 = arith.addf %849, %864 : vector<14x128xf32>
      %c1_377 = arith.constant 1 : index
      %c13_378 = arith.constant 13 : index
      %c0_379 = arith.constant 0 : index
      %c0_380 = arith.constant 0 : index
      %866 = vector.load %arg3[%c1_377, %c13_378, %c0_379, %c0_380] : memref<4x30x14x128xf32, #tpu.memory_space<vmem>>, vector<1x1x14x128xf32>
      %867 = vector.shape_cast %866 : vector<1x1x14x128xf32> to vector<14x128xf32>
      %868 = vector.broadcast %34 : f32 to vector<14x128xf32>
      %869 = arith.mulf %868, %867 : vector<14x128xf32>
      %870 = arith.addf %865, %869 : vector<14x128xf32>
      %871 = vector.broadcast %30 : f32 to vector<14x128xf32>
      %872 = arith.mulf %871, %867 : vector<14x128xf32>
      %873 = arith.addf %860, %872 : vector<14x128xf32>
      %c2_381 = arith.constant 2 : index
      %c13_382 = arith.constant 13 : index
      %c0_383 = arith.constant 0 : index
      %c0_384 = arith.constant 0 : index
      %874 = vector.load %arg3[%c2_381, %c13_382, %c0_383, %c0_384] : memref<4x30x14x128xf32, #tpu.memory_space<vmem>>, vector<1x1x14x128xf32>
      %875 = vector.shape_cast %874 : vector<1x1x14x128xf32> to vector<14x128xf32>
      %876 = vector.broadcast %38 : f32 to vector<14x128xf32>
      %877 = arith.mulf %876, %875 : vector<14x128xf32>
      %878 = arith.addf %870, %877 : vector<14x128xf32>
      %879 = vector.broadcast %34 : f32 to vector<14x128xf32>
      %880 = arith.mulf %879, %875 : vector<14x128xf32>
      %881 = arith.addf %873, %880 : vector<14x128xf32>
      %c3_385 = arith.constant 3 : index
      %c13_386 = arith.constant 13 : index
      %c0_387 = arith.constant 0 : index
      %c0_388 = arith.constant 0 : index
      %882 = vector.load %arg3[%c3_385, %c13_386, %c0_387, %c0_388] : memref<4x30x14x128xf32, #tpu.memory_space<vmem>>, vector<1x1x14x128xf32>
      %883 = vector.shape_cast %882 : vector<1x1x14x128xf32> to vector<14x128xf32>
      %884 = vector.broadcast %38 : f32 to vector<14x128xf32>
      %885 = arith.mulf %884, %883 : vector<14x128xf32>
      %886 = arith.addf %881, %885 : vector<14x128xf32>
      %887 = arith.maximumf %843, %857 : vector<14x128xf32>
      %888 = arith.maximumf %878, %886 : vector<14x128xf32>
      %889 = arith.maximumf %887, %888 : vector<14x128xf32>
      %890 = vector.broadcast %40 : f32 to vector<14x128xf32>
      %891 = arith.addf %889, %890 : vector<14x128xf32>
      %c80 = arith.constant 80 : index
      %c0_389 = arith.constant 0 : index
      %892 = vector.load %arg7[%c80, %c0_389] : memref<224x128xf32, #tpu.memory_space<vmem>>, vector<14x128xf32>
      tpu.vector_store %arg7[%c80, %c0_389], %891 {strides = array<i32>} : memref<224x128xf32, #tpu.memory_space<vmem>>, vector<14x128xf32>,
      %c0_390 = arith.constant 0 : index
      %c12_391 = arith.constant 12 : index
      %c0_392 = arith.constant 0 : index
      %c0_393 = arith.constant 0 : index
      %893 = vector.load %arg3[%c0_390, %c12_391, %c0_392, %c0_393] : memref<4x30x14x128xf32, #tpu.memory_space<vmem>>, vector<1x1x14x128xf32>
      %894 = vector.shape_cast %893 : vector<1x1x14x128xf32> to vector<14x128xf32>
      %895 = vector.broadcast %6 : f32 to vector<14x128xf32>
      %896 = arith.mulf %895, %894 : vector<14x128xf32>
      %c1_394 = arith.constant 1 : index
      %c12_395 = arith.constant 12 : index
      %c0_396 = arith.constant 0 : index
      %c0_397 = arith.constant 0 : index
      %897 = vector.load %arg3[%c1_394, %c12_395, %c0_396, %c0_397] : memref<4x30x14x128xf32, #tpu.memory_space<vmem>>, vector<1x1x14x128xf32>
      %898 = vector.shape_cast %897 : vector<1x1x14x128xf32> to vector<14x128xf32>
      %899 = vector.broadcast %10 : f32 to vector<14x128xf32>
      %900 = arith.mulf %899, %898 : vector<14x128xf32>
      %901 = arith.addf %896, %900 : vector<14x128xf32>
      %902 = vector.broadcast %6 : f32 to vector<14x128xf32>
      %903 = arith.mulf %902, %898 : vector<14x128xf32>
      %c2_398 = arith.constant 2 : index
      %c12_399 = arith.constant 12 : index
      %c0_400 = arith.constant 0 : index
      %c0_401 = arith.constant 0 : index
      %904 = vector.load %arg3[%c2_398, %c12_399, %c0_400, %c0_401] : memref<4x30x14x128xf32, #tpu.memory_space<vmem>>, vector<1x1x14x128xf32>
      %905 = vector.shape_cast %904 : vector<1x1x14x128xf32> to vector<14x128xf32>
      %906 = vector.broadcast %14 : f32 to vector<14x128xf32>
      %907 = arith.mulf %906, %905 : vector<14x128xf32>
      %908 = arith.addf %901, %907 : vector<14x128xf32>
      %909 = vector.broadcast %10 : f32 to vector<14x128xf32>
      %910 = arith.mulf %909, %905 : vector<14x128xf32>
      %911 = arith.addf %903, %910 : vector<14x128xf32>
      %c3_402 = arith.constant 3 : index
      %c12_403 = arith.constant 12 : index
      %c0_404 = arith.constant 0 : index
      %c0_405 = arith.constant 0 : index
      %912 = vector.load %arg3[%c3_402, %c12_403, %c0_404, %c0_405] : memref<4x30x14x128xf32, #tpu.memory_space<vmem>>, vector<1x1x14x128xf32>
      %913 = vector.shape_cast %912 : vector<1x1x14x128xf32> to vector<14x128xf32>
      %914 = vector.broadcast %14 : f32 to vector<14x128xf32>
      %915 = arith.mulf %914, %913 : vector<14x128xf32>
      %916 = arith.addf %911, %915 : vector<14x128xf32>
      %c0_406 = arith.constant 0 : index
      %c13_407 = arith.constant 13 : index
      %c0_408 = arith.constant 0 : index
      %c0_409 = arith.constant 0 : index
      %917 = vector.load %arg3[%c0_406, %c13_407, %c0_408, %c0_409] : memref<4x30x14x128xf32, #tpu.memory_space<vmem>>, vector<1x1x14x128xf32>
      %918 = vector.shape_cast %917 : vector<1x1x14x128xf32> to vector<14x128xf32>
      %919 = vector.broadcast %18 : f32 to vector<14x128xf32>
      %920 = arith.mulf %919, %918 : vector<14x128xf32>
      %921 = arith.addf %908, %920 : vector<14x128xf32>
      %922 = vector.broadcast %6 : f32 to vector<14x128xf32>
      %923 = arith.mulf %922, %918 : vector<14x128xf32>
      %c1_410 = arith.constant 1 : index
      %c13_411 = arith.constant 13 : index
      %c0_412 = arith.constant 0 : index
      %c0_413 = arith.constant 0 : index
      %924 = vector.load %arg3[%c1_410, %c13_411, %c0_412, %c0_413] : memref<4x30x14x128xf32, #tpu.memory_space<vmem>>, vector<1x1x14x128xf32>
      %925 = vector.shape_cast %924 : vector<1x1x14x128xf32> to vector<14x128xf32>
      %926 = vector.broadcast %22 : f32 to vector<14x128xf32>
      %927 = arith.mulf %926, %925 : vector<14x128xf32>
      %928 = arith.addf %921, %927 : vector<14x128xf32>
      %929 = vector.broadcast %18 : f32 to vector<14x128xf32>
      %930 = arith.mulf %929, %925 : vector<14x128xf32>
      %931 = arith.addf %916, %930 : vector<14x128xf32>
      %932 = vector.broadcast %10 : f32 to vector<14x128xf32>
      %933 = arith.mulf %932, %925 : vector<14x128xf32>
      %934 = arith.addf %923, %933 : vector<14x128xf32>
      %935 = vector.broadcast %6 : f32 to vector<14x128xf32>
      %936 = arith.mulf %935, %925 : vector<14x128xf32>
      %c2_414 = arith.constant 2 : index
      %c13_415 = arith.constant 13 : index
      %c0_416 = arith.constant 0 : index
      %c0_417 = arith.constant 0 : index
      %937 = vector.load %arg3[%c2_414, %c13_415, %c0_416, %c0_417] : memref<4x30x14x128xf32, #tpu.memory_space<vmem>>, vector<1x1x14x128xf32>
      %938 = vector.shape_cast %937 : vector<1x1x14x128xf32> to vector<14x128xf32>
      %939 = vector.broadcast %26 : f32 to vector<14x128xf32>
      %940 = arith.mulf %939, %938 : vector<14x128xf32>
      %941 = arith.addf %928, %940 : vector<14x128xf32>
      %942 = vector.broadcast %22 : f32 to vector<14x128xf32>
      %943 = arith.mulf %942, %938 : vector<14x128xf32>
      %944 = arith.addf %931, %943 : vector<14x128xf32>
      %945 = vector.broadcast %14 : f32 to vector<14x128xf32>
      %946 = arith.mulf %945, %938 : vector<14x128xf32>
      %947 = arith.addf %934, %946 : vector<14x128xf32>
      %948 = vector.broadcast %10 : f32 to vector<14x128xf32>
      %949 = arith.mulf %948, %938 : vector<14x128xf32>
      %950 = arith.addf %936, %949 : vector<14x128xf32>
      %c3_418 = arith.constant 3 : index
      %c13_419 = arith.constant 13 : index
      %c0_420 = arith.constant 0 : index
      %c0_421 = arith.constant 0 : index
      %951 = vector.load %arg3[%c3_418, %c13_419, %c0_420, %c0_421] : memref<4x30x14x128xf32, #tpu.memory_space<vmem>>, vector<1x1x14x128xf32>
      %952 = vector.shape_cast %951 : vector<1x1x14x128xf32> to vector<14x128xf32>
      %953 = vector.broadcast %26 : f32 to vector<14x128xf32>
      %954 = arith.mulf %953, %952 : vector<14x128xf32>
      %955 = arith.addf %944, %954 : vector<14x128xf32>
      %956 = vector.broadcast %14 : f32 to vector<14x128xf32>
      %957 = arith.mulf %956, %952 : vector<14x128xf32>
      %958 = arith.addf %950, %957 : vector<14x128xf32>
      %c0_422 = arith.constant 0 : index
      %c14 = arith.constant 14 : index
      %c0_423 = arith.constant 0 : index
      %c0_424 = arith.constant 0 : index
      %959 = vector.load %arg3[%c0_422, %c14, %c0_423, %c0_424] : memref<4x30x14x128xf32, #tpu.memory_space<vmem>>, vector<1x1x14x128xf32>
      %960 = vector.shape_cast %959 : vector<1x1x14x128xf32> to vector<14x128xf32>
      %961 = vector.broadcast %30 : f32 to vector<14x128xf32>
      %962 = arith.mulf %961, %960 : vector<14x128xf32>
      %963 = arith.addf %941, %962 : vector<14x128xf32>
      %964 = vector.broadcast %18 : f32 to vector<14x128xf32>
      %965 = arith.mulf %964, %960 : vector<14x128xf32>
      %966 = arith.addf %947, %965 : vector<14x128xf32>
      %c1_425 = arith.constant 1 : index
      %c14_426 = arith.constant 14 : index
      %c0_427 = arith.constant 0 : index
      %c0_428 = arith.constant 0 : index
      %967 = vector.load %arg3[%c1_425, %c14_426, %c0_427, %c0_428] : memref<4x30x14x128xf32, #tpu.memory_space<vmem>>, vector<1x1x14x128xf32>
      %968 = vector.shape_cast %967 : vector<1x1x14x128xf32> to vector<14x128xf32>
      %969 = vector.broadcast %34 : f32 to vector<14x128xf32>
      %970 = arith.mulf %969, %968 : vector<14x128xf32>
      %971 = arith.addf %963, %970 : vector<14x128xf32>
      %972 = vector.broadcast %30 : f32 to vector<14x128xf32>
      %973 = arith.mulf %972, %968 : vector<14x128xf32>
      %974 = arith.addf %955, %973 : vector<14x128xf32>
      %975 = vector.broadcast %22 : f32 to vector<14x128xf32>
      %976 = arith.mulf %975, %968 : vector<14x128xf32>
      %977 = arith.addf %966, %976 : vector<14x128xf32>
      %978 = vector.broadcast %18 : f32 to vector<14x128xf32>
      %979 = arith.mulf %978, %968 : vector<14x128xf32>
      %980 = arith.addf %958, %979 : vector<14x128xf32>
      %c2_429 = arith.constant 2 : index
      %c14_430 = arith.constant 14 : index
      %c0_431 = arith.constant 0 : index
      %c0_432 = arith.constant 0 : index
      %981 = vector.load %arg3[%c2_429, %c14_430, %c0_431, %c0_432] : memref<4x30x14x128xf32, #tpu.memory_space<vmem>>, vector<1x1x14x128xf32>
      %982 = vector.shape_cast %981 : vector<1x1x14x128xf32> to vector<14x128xf32>
      %983 = vector.broadcast %38 : f32 to vector<14x128xf32>
      %984 = arith.mulf %983, %982 : vector<14x128xf32>
      %985 = arith.addf %971, %984 : vector<14x128xf32>
      %986 = vector.broadcast %34 : f32 to vector<14x128xf32>
      %987 = arith.mulf %986, %982 : vector<14x128xf32>
      %988 = arith.addf %974, %987 : vector<14x128xf32>
      %989 = vector.broadcast %26 : f32 to vector<14x128xf32>
      %990 = arith.mulf %989, %982 : vector<14x128xf32>
      %991 = arith.addf %977, %990 : vector<14x128xf32>
      %992 = vector.broadcast %22 : f32 to vector<14x128xf32>
      %993 = arith.mulf %992, %982 : vector<14x128xf32>
      %994 = arith.addf %980, %993 : vector<14x128xf32>
      %c3_433 = arith.constant 3 : index
      %c14_434 = arith.constant 14 : index
      %c0_435 = arith.constant 0 : index
      %c0_436 = arith.constant 0 : index
      %995 = vector.load %arg3[%c3_433, %c14_434, %c0_435, %c0_436] : memref<4x30x14x128xf32, #tpu.memory_space<vmem>>, vector<1x1x14x128xf32>
      %996 = vector.shape_cast %995 : vector<1x1x14x128xf32> to vector<14x128xf32>
      %997 = vector.broadcast %38 : f32 to vector<14x128xf32>
      %998 = arith.mulf %997, %996 : vector<14x128xf32>
      %999 = arith.addf %988, %998 : vector<14x128xf32>
      %1000 = vector.broadcast %26 : f32 to vector<14x128xf32>
      %1001 = arith.mulf %1000, %996 : vector<14x128xf32>
      %1002 = arith.addf %994, %1001 : vector<14x128xf32>
      %c0_437 = arith.constant 0 : index
      %c15 = arith.constant 15 : index
      %c0_438 = arith.constant 0 : index
      %c0_439 = arith.constant 0 : index
      %1003 = vector.load %arg3[%c0_437, %c15, %c0_438, %c0_439] : memref<4x30x14x128xf32, #tpu.memory_space<vmem>>, vector<1x1x14x128xf32>
      %1004 = vector.shape_cast %1003 : vector<1x1x14x128xf32> to vector<14x128xf32>
      %1005 = vector.broadcast %30 : f32 to vector<14x128xf32>
      %1006 = arith.mulf %1005, %1004 : vector<14x128xf32>
      %1007 = arith.addf %991, %1006 : vector<14x128xf32>
      %c1_440 = arith.constant 1 : index
      %c15_441 = arith.constant 15 : index
      %c0_442 = arith.constant 0 : index
      %c0_443 = arith.constant 0 : index
      %1008 = vector.load %arg3[%c1_440, %c15_441, %c0_442, %c0_443] : memref<4x30x14x128xf32, #tpu.memory_space<vmem>>, vector<1x1x14x128xf32>
      %1009 = vector.shape_cast %1008 : vector<1x1x14x128xf32> to vector<14x128xf32>
      %1010 = vector.broadcast %34 : f32 to vector<14x128xf32>
      %1011 = arith.mulf %1010, %1009 : vector<14x128xf32>
      %1012 = arith.addf %1007, %1011 : vector<14x128xf32>
      %1013 = vector.broadcast %30 : f32 to vector<14x128xf32>
      %1014 = arith.mulf %1013, %1009 : vector<14x128xf32>
      %1015 = arith.addf %1002, %1014 : vector<14x128xf32>
      %c2_444 = arith.constant 2 : index
      %c15_445 = arith.constant 15 : index
      %c0_446 = arith.constant 0 : index
      %c0_447 = arith.constant 0 : index
      %1016 = vector.load %arg3[%c2_444, %c15_445, %c0_446, %c0_447] : memref<4x30x14x128xf32, #tpu.memory_space<vmem>>, vector<1x1x14x128xf32>
      %1017 = vector.shape_cast %1016 : vector<1x1x14x128xf32> to vector<14x128xf32>
      %1018 = vector.broadcast %38 : f32 to vector<14x128xf32>
      %1019 = arith.mulf %1018, %1017 : vector<14x128xf32>
      %1020 = arith.addf %1012, %1019 : vector<14x128xf32>
      %1021 = vector.broadcast %34 : f32 to vector<14x128xf32>
      %1022 = arith.mulf %1021, %1017 : vector<14x128xf32>
      %1023 = arith.addf %1015, %1022 : vector<14x128xf32>
      %c3_448 = arith.constant 3 : index
      %c15_449 = arith.constant 15 : index
      %c0_450 = arith.constant 0 : index
      %c0_451 = arith.constant 0 : index
      %1024 = vector.load %arg3[%c3_448, %c15_449, %c0_450, %c0_451] : memref<4x30x14x128xf32, #tpu.memory_space<vmem>>, vector<1x1x14x128xf32>
      %1025 = vector.shape_cast %1024 : vector<1x1x14x128xf32> to vector<14x128xf32>
      %1026 = vector.broadcast %38 : f32 to vector<14x128xf32>
      %1027 = arith.mulf %1026, %1025 : vector<14x128xf32>
      %1028 = arith.addf %1023, %1027 : vector<14x128xf32>
      %1029 = arith.maximumf %985, %999 : vector<14x128xf32>
      %1030 = arith.maximumf %1020, %1028 : vector<14x128xf32>
      %1031 = arith.maximumf %1029, %1030 : vector<14x128xf32>
      %1032 = vector.broadcast %40 : f32 to vector<14x128xf32>
      %1033 = arith.addf %1031, %1032 : vector<14x128xf32>
      %c96 = arith.constant 96 : index
      %c0_452 = arith.constant 0 : index
      %1034 = vector.load %arg7[%c96, %c0_452] : memref<224x128xf32, #tpu.memory_space<vmem>>, vector<14x128xf32>
      tpu.vector_store %arg7[%c96, %c0_452], %1033 {strides = array<i32>} : memref<224x128xf32, #tpu.memory_space<vmem>>, vector<14x128xf32>,
      %c0_453 = arith.constant 0 : index
      %c14_454 = arith.constant 14 : index
      %c0_455 = arith.constant 0 : index
      %c0_456 = arith.constant 0 : index
      %1035 = vector.load %arg3[%c0_453, %c14_454, %c0_455, %c0_456] : memref<4x30x14x128xf32, #tpu.memory_space<vmem>>, vector<1x1x14x128xf32>
      %1036 = vector.shape_cast %1035 : vector<1x1x14x128xf32> to vector<14x128xf32>
      %1037 = vector.broadcast %6 : f32 to vector<14x128xf32>
      %1038 = arith.mulf %1037, %1036 : vector<14x128xf32>
      %c1_457 = arith.constant 1 : index
      %c14_458 = arith.constant 14 : index
      %c0_459 = arith.constant 0 : index
      %c0_460 = arith.constant 0 : index
      %1039 = vector.load %arg3[%c1_457, %c14_458, %c0_459, %c0_460] : memref<4x30x14x128xf32, #tpu.memory_space<vmem>>, vector<1x1x14x128xf32>
      %1040 = vector.shape_cast %1039 : vector<1x1x14x128xf32> to vector<14x128xf32>
      %1041 = vector.broadcast %10 : f32 to vector<14x128xf32>
      %1042 = arith.mulf %1041, %1040 : vector<14x128xf32>
      %1043 = arith.addf %1038, %1042 : vector<14x128xf32>
      %1044 = vector.broadcast %6 : f32 to vector<14x128xf32>
      %1045 = arith.mulf %1044, %1040 : vector<14x128xf32>
      %c2_461 = arith.constant 2 : index
      %c14_462 = arith.constant 14 : index
      %c0_463 = arith.constant 0 : index
      %c0_464 = arith.constant 0 : index
      %1046 = vector.load %arg3[%c2_461, %c14_462, %c0_463, %c0_464] : memref<4x30x14x128xf32, #tpu.memory_space<vmem>>, vector<1x1x14x128xf32>
      %1047 = vector.shape_cast %1046 : vector<1x1x14x128xf32> to vector<14x128xf32>
      %1048 = vector.broadcast %14 : f32 to vector<14x128xf32>
      %1049 = arith.mulf %1048, %1047 : vector<14x128xf32>
      %1050 = arith.addf %1043, %1049 : vector<14x128xf32>
      %1051 = vector.broadcast %10 : f32 to vector<14x128xf32>
      %1052 = arith.mulf %1051, %1047 : vector<14x128xf32>
      %1053 = arith.addf %1045, %1052 : vector<14x128xf32>
      %c3_465 = arith.constant 3 : index
      %c14_466 = arith.constant 14 : index
      %c0_467 = arith.constant 0 : index
      %c0_468 = arith.constant 0 : index
      %1054 = vector.load %arg3[%c3_465, %c14_466, %c0_467, %c0_468] : memref<4x30x14x128xf32, #tpu.memory_space<vmem>>, vector<1x1x14x128xf32>
      %1055 = vector.shape_cast %1054 : vector<1x1x14x128xf32> to vector<14x128xf32>
      %1056 = vector.broadcast %14 : f32 to vector<14x128xf32>
      %1057 = arith.mulf %1056, %1055 : vector<14x128xf32>
      %1058 = arith.addf %1053, %1057 : vector<14x128xf32>
      %c0_469 = arith.constant 0 : index
      %c15_470 = arith.constant 15 : index
      %c0_471 = arith.constant 0 : index
      %c0_472 = arith.constant 0 : index
      %1059 = vector.load %arg3[%c0_469, %c15_470, %c0_471, %c0_472] : memref<4x30x14x128xf32, #tpu.memory_space<vmem>>, vector<1x1x14x128xf32>
      %1060 = vector.shape_cast %1059 : vector<1x1x14x128xf32> to vector<14x128xf32>
      %1061 = vector.broadcast %18 : f32 to vector<14x128xf32>
      %1062 = arith.mulf %1061, %1060 : vector<14x128xf32>
      %1063 = arith.addf %1050, %1062 : vector<14x128xf32>
      %1064 = vector.broadcast %6 : f32 to vector<14x128xf32>
      %1065 = arith.mulf %1064, %1060 : vector<14x128xf32>
      %c1_473 = arith.constant 1 : index
      %c15_474 = arith.constant 15 : index
      %c0_475 = arith.constant 0 : index
      %c0_476 = arith.constant 0 : index
      %1066 = vector.load %arg3[%c1_473, %c15_474, %c0_475, %c0_476] : memref<4x30x14x128xf32, #tpu.memory_space<vmem>>, vector<1x1x14x128xf32>
      %1067 = vector.shape_cast %1066 : vector<1x1x14x128xf32> to vector<14x128xf32>
      %1068 = vector.broadcast %22 : f32 to vector<14x128xf32>
      %1069 = arith.mulf %1068, %1067 : vector<14x128xf32>
      %1070 = arith.addf %1063, %1069 : vector<14x128xf32>
      %1071 = vector.broadcast %18 : f32 to vector<14x128xf32>
      %1072 = arith.mulf %1071, %1067 : vector<14x128xf32>
      %1073 = arith.addf %1058, %1072 : vector<14x128xf32>
      %1074 = vector.broadcast %10 : f32 to vector<14x128xf32>
      %1075 = arith.mulf %1074, %1067 : vector<14x128xf32>
      %1076 = arith.addf %1065, %1075 : vector<14x128xf32>
      %1077 = vector.broadcast %6 : f32 to vector<14x128xf32>
      %1078 = arith.mulf %1077, %1067 : vector<14x128xf32>
      %c2_477 = arith.constant 2 : index
      %c15_478 = arith.constant 15 : index
      %c0_479 = arith.constant 0 : index
      %c0_480 = arith.constant 0 : index
      %1079 = vector.load %arg3[%c2_477, %c15_478, %c0_479, %c0_480] : memref<4x30x14x128xf32, #tpu.memory_space<vmem>>, vector<1x1x14x128xf32>
      %1080 = vector.shape_cast %1079 : vector<1x1x14x128xf32> to vector<14x128xf32>
      %1081 = vector.broadcast %26 : f32 to vector<14x128xf32>
      %1082 = arith.mulf %1081, %1080 : vector<14x128xf32>
      %1083 = arith.addf %1070, %1082 : vector<14x128xf32>
      %1084 = vector.broadcast %22 : f32 to vector<14x128xf32>
      %1085 = arith.mulf %1084, %1080 : vector<14x128xf32>
      %1086 = arith.addf %1073, %1085 : vector<14x128xf32>
      %1087 = vector.broadcast %14 : f32 to vector<14x128xf32>
      %1088 = arith.mulf %1087, %1080 : vector<14x128xf32>
      %1089 = arith.addf %1076, %1088 : vector<14x128xf32>
      %1090 = vector.broadcast %10 : f32 to vector<14x128xf32>
      %1091 = arith.mulf %1090, %1080 : vector<14x128xf32>
      %1092 = arith.addf %1078, %1091 : vector<14x128xf32>
      %c3_481 = arith.constant 3 : index
      %c15_482 = arith.constant 15 : index
      %c0_483 = arith.constant 0 : index
      %c0_484 = arith.constant 0 : index
      %1093 = vector.load %arg3[%c3_481, %c15_482, %c0_483, %c0_484] : memref<4x30x14x128xf32, #tpu.memory_space<vmem>>, vector<1x1x14x128xf32>
      %1094 = vector.shape_cast %1093 : vector<1x1x14x128xf32> to vector<14x128xf32>
      %1095 = vector.broadcast %26 : f32 to vector<14x128xf32>
      %1096 = arith.mulf %1095, %1094 : vector<14x128xf32>
      %1097 = arith.addf %1086, %1096 : vector<14x128xf32>
      %1098 = vector.broadcast %14 : f32 to vector<14x128xf32>
      %1099 = arith.mulf %1098, %1094 : vector<14x128xf32>
      %1100 = arith.addf %1092, %1099 : vector<14x128xf32>
      %c0_485 = arith.constant 0 : index
      %c16_486 = arith.constant 16 : index
      %c0_487 = arith.constant 0 : index
      %c0_488 = arith.constant 0 : index
      %1101 = vector.load %arg3[%c0_485, %c16_486, %c0_487, %c0_488] : memref<4x30x14x128xf32, #tpu.memory_space<vmem>>, vector<1x1x14x128xf32>
      %1102 = vector.shape_cast %1101 : vector<1x1x14x128xf32> to vector<14x128xf32>
      %1103 = vector.broadcast %30 : f32 to vector<14x128xf32>
      %1104 = arith.mulf %1103, %1102 : vector<14x128xf32>
      %1105 = arith.addf %1083, %1104 : vector<14x128xf32>
      %1106 = vector.broadcast %18 : f32 to vector<14x128xf32>
      %1107 = arith.mulf %1106, %1102 : vector<14x128xf32>
      %1108 = arith.addf %1089, %1107 : vector<14x128xf32>
      %c1_489 = arith.constant 1 : index
      %c16_490 = arith.constant 16 : index
      %c0_491 = arith.constant 0 : index
      %c0_492 = arith.constant 0 : index
      %1109 = vector.load %arg3[%c1_489, %c16_490, %c0_491, %c0_492] : memref<4x30x14x128xf32, #tpu.memory_space<vmem>>, vector<1x1x14x128xf32>
      %1110 = vector.shape_cast %1109 : vector<1x1x14x128xf32> to vector<14x128xf32>
      %1111 = vector.broadcast %34 : f32 to vector<14x128xf32>
      %1112 = arith.mulf %1111, %1110 : vector<14x128xf32>
      %1113 = arith.addf %1105, %1112 : vector<14x128xf32>
      %1114 = vector.broadcast %30 : f32 to vector<14x128xf32>
      %1115 = arith.mulf %1114, %1110 : vector<14x128xf32>
      %1116 = arith.addf %1097, %1115 : vector<14x128xf32>
      %1117 = vector.broadcast %22 : f32 to vector<14x128xf32>
      %1118 = arith.mulf %1117, %1110 : vector<14x128xf32>
      %1119 = arith.addf %1108, %1118 : vector<14x128xf32>
      %1120 = vector.broadcast %18 : f32 to vector<14x128xf32>
      %1121 = arith.mulf %1120, %1110 : vector<14x128xf32>
      %1122 = arith.addf %1100, %1121 : vector<14x128xf32>
      %c2_493 = arith.constant 2 : index
      %c16_494 = arith.constant 16 : index
      %c0_495 = arith.constant 0 : index
      %c0_496 = arith.constant 0 : index
      %1123 = vector.load %arg3[%c2_493, %c16_494, %c0_495, %c0_496] : memref<4x30x14x128xf32, #tpu.memory_space<vmem>>, vector<1x1x14x128xf32>
      %1124 = vector.shape_cast %1123 : vector<1x1x14x128xf32> to vector<14x128xf32>
      %1125 = vector.broadcast %38 : f32 to vector<14x128xf32>
      %1126 = arith.mulf %1125, %1124 : vector<14x128xf32>
      %1127 = arith.addf %1113, %1126 : vector<14x128xf32>
      %1128 = vector.broadcast %34 : f32 to vector<14x128xf32>
      %1129 = arith.mulf %1128, %1124 : vector<14x128xf32>
      %1130 = arith.addf %1116, %1129 : vector<14x128xf32>
      %1131 = vector.broadcast %26 : f32 to vector<14x128xf32>
      %1132 = arith.mulf %1131, %1124 : vector<14x128xf32>
      %1133 = arith.addf %1119, %1132 : vector<14x128xf32>
      %1134 = vector.broadcast %22 : f32 to vector<14x128xf32>
      %1135 = arith.mulf %1134, %1124 : vector<14x128xf32>
      %1136 = arith.addf %1122, %1135 : vector<14x128xf32>
      %c3_497 = arith.constant 3 : index
      %c16_498 = arith.constant 16 : index
      %c0_499 = arith.constant 0 : index
      %c0_500 = arith.constant 0 : index
      %1137 = vector.load %arg3[%c3_497, %c16_498, %c0_499, %c0_500] : memref<4x30x14x128xf32, #tpu.memory_space<vmem>>, vector<1x1x14x128xf32>
      %1138 = vector.shape_cast %1137 : vector<1x1x14x128xf32> to vector<14x128xf32>
      %1139 = vector.broadcast %38 : f32 to vector<14x128xf32>
      %1140 = arith.mulf %1139, %1138 : vector<14x128xf32>
      %1141 = arith.addf %1130, %1140 : vector<14x128xf32>
      %1142 = vector.broadcast %26 : f32 to vector<14x128xf32>
      %1143 = arith.mulf %1142, %1138 : vector<14x128xf32>
      %1144 = arith.addf %1136, %1143 : vector<14x128xf32>
      %c0_501 = arith.constant 0 : index
      %c17 = arith.constant 17 : index
      %c0_502 = arith.constant 0 : index
      %c0_503 = arith.constant 0 : index
      %1145 = vector.load %arg3[%c0_501, %c17, %c0_502, %c0_503] : memref<4x30x14x128xf32, #tpu.memory_space<vmem>>, vector<1x1x14x128xf32>
      %1146 = vector.shape_cast %1145 : vector<1x1x14x128xf32> to vector<14x128xf32>
      %1147 = vector.broadcast %30 : f32 to vector<14x128xf32>
      %1148 = arith.mulf %1147, %1146 : vector<14x128xf32>
      %1149 = arith.addf %1133, %1148 : vector<14x128xf32>
      %c1_504 = arith.constant 1 : index
      %c17_505 = arith.constant 17 : index
      %c0_506 = arith.constant 0 : index
      %c0_507 = arith.constant 0 : index
      %1150 = vector.load %arg3[%c1_504, %c17_505, %c0_506, %c0_507] : memref<4x30x14x128xf32, #tpu.memory_space<vmem>>, vector<1x1x14x128xf32>
      %1151 = vector.shape_cast %1150 : vector<1x1x14x128xf32> to vector<14x128xf32>
      %1152 = vector.broadcast %34 : f32 to vector<14x128xf32>
      %1153 = arith.mulf %1152, %1151 : vector<14x128xf32>
      %1154 = arith.addf %1149, %1153 : vector<14x128xf32>
      %1155 = vector.broadcast %30 : f32 to vector<14x128xf32>
      %1156 = arith.mulf %1155, %1151 : vector<14x128xf32>
      %1157 = arith.addf %1144, %1156 : vector<14x128xf32>
      %c2_508 = arith.constant 2 : index
      %c17_509 = arith.constant 17 : index
      %c0_510 = arith.constant 0 : index
      %c0_511 = arith.constant 0 : index
      %1158 = vector.load %arg3[%c2_508, %c17_509, %c0_510, %c0_511] : memref<4x30x14x128xf32, #tpu.memory_space<vmem>>, vector<1x1x14x128xf32>
      %1159 = vector.shape_cast %1158 : vector<1x1x14x128xf32> to vector<14x128xf32>
      %1160 = vector.broadcast %38 : f32 to vector<14x128xf32>
      %1161 = arith.mulf %1160, %1159 : vector<14x128xf32>
      %1162 = arith.addf %1154, %1161 : vector<14x128xf32>
      %1163 = vector.broadcast %34 : f32 to vector<14x128xf32>
      %1164 = arith.mulf %1163, %1159 : vector<14x128xf32>
      %1165 = arith.addf %1157, %1164 : vector<14x128xf32>
      %c3_512 = arith.constant 3 : index
      %c17_513 = arith.constant 17 : index
      %c0_514 = arith.constant 0 : index
      %c0_515 = arith.constant 0 : index
      %1166 = vector.load %arg3[%c3_512, %c17_513, %c0_514, %c0_515] : memref<4x30x14x128xf32, #tpu.memory_space<vmem>>, vector<1x1x14x128xf32>
      %1167 = vector.shape_cast %1166 : vector<1x1x14x128xf32> to vector<14x128xf32>
      %1168 = vector.broadcast %38 : f32 to vector<14x128xf32>
      %1169 = arith.mulf %1168, %1167 : vector<14x128xf32>
      %1170 = arith.addf %1165, %1169 : vector<14x128xf32>
      %1171 = arith.maximumf %1127, %1141 : vector<14x128xf32>
      %1172 = arith.maximumf %1162, %1170 : vector<14x128xf32>
      %1173 = arith.maximumf %1171, %1172 : vector<14x128xf32>
      %1174 = vector.broadcast %40 : f32 to vector<14x128xf32>
      %1175 = arith.addf %1173, %1174 : vector<14x128xf32>
      %c112 = arith.constant 112 : index
      %c0_516 = arith.constant 0 : index
      %1176 = vector.load %arg7[%c112, %c0_516] : memref<224x128xf32, #tpu.memory_space<vmem>>, vector<14x128xf32>
      tpu.vector_store %arg7[%c112, %c0_516], %1175 {strides = array<i32>} : memref<224x128xf32, #tpu.memory_space<vmem>>, vector<14x128xf32>,
      %c0_517 = arith.constant 0 : index
      %c16_518 = arith.constant 16 : index
      %c0_519 = arith.constant 0 : index
      %c0_520 = arith.constant 0 : index
      %1177 = vector.load %arg3[%c0_517, %c16_518, %c0_519, %c0_520] : memref<4x30x14x128xf32, #tpu.memory_space<vmem>>, vector<1x1x14x128xf32>
      %1178 = vector.shape_cast %1177 : vector<1x1x14x128xf32> to vector<14x128xf32>
      %1179 = vector.broadcast %6 : f32 to vector<14x128xf32>
      %1180 = arith.mulf %1179, %1178 : vector<14x128xf32>
      %c1_521 = arith.constant 1 : index
      %c16_522 = arith.constant 16 : index
      %c0_523 = arith.constant 0 : index
      %c0_524 = arith.constant 0 : index
      %1181 = vector.load %arg3[%c1_521, %c16_522, %c0_523, %c0_524] : memref<4x30x14x128xf32, #tpu.memory_space<vmem>>, vector<1x1x14x128xf32>
      %1182 = vector.shape_cast %1181 : vector<1x1x14x128xf32> to vector<14x128xf32>
      %1183 = vector.broadcast %10 : f32 to vector<14x128xf32>
      %1184 = arith.mulf %1183, %1182 : vector<14x128xf32>
      %1185 = arith.addf %1180, %1184 : vector<14x128xf32>
      %1186 = vector.broadcast %6 : f32 to vector<14x128xf32>
      %1187 = arith.mulf %1186, %1182 : vector<14x128xf32>
      %c2_525 = arith.constant 2 : index
      %c16_526 = arith.constant 16 : index
      %c0_527 = arith.constant 0 : index
      %c0_528 = arith.constant 0 : index
      %1188 = vector.load %arg3[%c2_525, %c16_526, %c0_527, %c0_528] : memref<4x30x14x128xf32, #tpu.memory_space<vmem>>, vector<1x1x14x128xf32>
      %1189 = vector.shape_cast %1188 : vector<1x1x14x128xf32> to vector<14x128xf32>
      %1190 = vector.broadcast %14 : f32 to vector<14x128xf32>
      %1191 = arith.mulf %1190, %1189 : vector<14x128xf32>
      %1192 = arith.addf %1185, %1191 : vector<14x128xf32>
      %1193 = vector.broadcast %10 : f32 to vector<14x128xf32>
      %1194 = arith.mulf %1193, %1189 : vector<14x128xf32>
      %1195 = arith.addf %1187, %1194 : vector<14x128xf32>
      %c3_529 = arith.constant 3 : index
      %c16_530 = arith.constant 16 : index
      %c0_531 = arith.constant 0 : index
      %c0_532 = arith.constant 0 : index
      %1196 = vector.load %arg3[%c3_529, %c16_530, %c0_531, %c0_532] : memref<4x30x14x128xf32, #tpu.memory_space<vmem>>, vector<1x1x14x128xf32>
      %1197 = vector.shape_cast %1196 : vector<1x1x14x128xf32> to vector<14x128xf32>
      %1198 = vector.broadcast %14 : f32 to vector<14x128xf32>
      %1199 = arith.mulf %1198, %1197 : vector<14x128xf32>
      %1200 = arith.addf %1195, %1199 : vector<14x128xf32>
      %c0_533 = arith.constant 0 : index
      %c17_534 = arith.constant 17 : index
      %c0_535 = arith.constant 0 : index
      %c0_536 = arith.constant 0 : index
      %1201 = vector.load %arg3[%c0_533, %c17_534, %c0_535, %c0_536] : memref<4x30x14x128xf32, #tpu.memory_space<vmem>>, vector<1x1x14x128xf32>
      %1202 = vector.shape_cast %1201 : vector<1x1x14x128xf32> to vector<14x128xf32>
      %1203 = vector.broadcast %18 : f32 to vector<14x128xf32>
      %1204 = arith.mulf %1203, %1202 : vector<14x128xf32>
      %1205 = arith.addf %1192, %1204 : vector<14x128xf32>
      %1206 = vector.broadcast %6 : f32 to vector<14x128xf32>
      %1207 = arith.mulf %1206, %1202 : vector<14x128xf32>
      %c1_537 = arith.constant 1 : index
      %c17_538 = arith.constant 17 : index
      %c0_539 = arith.constant 0 : index
      %c0_540 = arith.constant 0 : index
      %1208 = vector.load %arg3[%c1_537, %c17_538, %c0_539, %c0_540] : memref<4x30x14x128xf32, #tpu.memory_space<vmem>>, vector<1x1x14x128xf32>
      %1209 = vector.shape_cast %1208 : vector<1x1x14x128xf32> to vector<14x128xf32>
      %1210 = vector.broadcast %22 : f32 to vector<14x128xf32>
      %1211 = arith.mulf %1210, %1209 : vector<14x128xf32>
      %1212 = arith.addf %1205, %1211 : vector<14x128xf32>
      %1213 = vector.broadcast %18 : f32 to vector<14x128xf32>
      %1214 = arith.mulf %1213, %1209 : vector<14x128xf32>
      %1215 = arith.addf %1200, %1214 : vector<14x128xf32>
      %1216 = vector.broadcast %10 : f32 to vector<14x128xf32>
      %1217 = arith.mulf %1216, %1209 : vector<14x128xf32>
      %1218 = arith.addf %1207, %1217 : vector<14x128xf32>
      %1219 = vector.broadcast %6 : f32 to vector<14x128xf32>
      %1220 = arith.mulf %1219, %1209 : vector<14x128xf32>
      %c2_541 = arith.constant 2 : index
      %c17_542 = arith.constant 17 : index
      %c0_543 = arith.constant 0 : index
      %c0_544 = arith.constant 0 : index
      %1221 = vector.load %arg3[%c2_541, %c17_542, %c0_543, %c0_544] : memref<4x30x14x128xf32, #tpu.memory_space<vmem>>, vector<1x1x14x128xf32>
      %1222 = vector.shape_cast %1221 : vector<1x1x14x128xf32> to vector<14x128xf32>
      %1223 = vector.broadcast %26 : f32 to vector<14x128xf32>
      %1224 = arith.mulf %1223, %1222 : vector<14x128xf32>
      %1225 = arith.addf %1212, %1224 : vector<14x128xf32>
      %1226 = vector.broadcast %22 : f32 to vector<14x128xf32>
      %1227 = arith.mulf %1226, %1222 : vector<14x128xf32>
      %1228 = arith.addf %1215, %1227 : vector<14x128xf32>
      %1229 = vector.broadcast %14 : f32 to vector<14x128xf32>
      %1230 = arith.mulf %1229, %1222 : vector<14x128xf32>
      %1231 = arith.addf %1218, %1230 : vector<14x128xf32>
      %1232 = vector.broadcast %10 : f32 to vector<14x128xf32>
      %1233 = arith.mulf %1232, %1222 : vector<14x128xf32>
      %1234 = arith.addf %1220, %1233 : vector<14x128xf32>
      %c3_545 = arith.constant 3 : index
      %c17_546 = arith.constant 17 : index
      %c0_547 = arith.constant 0 : index
      %c0_548 = arith.constant 0 : index
      %1235 = vector.load %arg3[%c3_545, %c17_546, %c0_547, %c0_548] : memref<4x30x14x128xf32, #tpu.memory_space<vmem>>, vector<1x1x14x128xf32>
      %1236 = vector.shape_cast %1235 : vector<1x1x14x128xf32> to vector<14x128xf32>
      %1237 = vector.broadcast %26 : f32 to vector<14x128xf32>
      %1238 = arith.mulf %1237, %1236 : vector<14x128xf32>
      %1239 = arith.addf %1228, %1238 : vector<14x128xf32>
      %1240 = vector.broadcast %14 : f32 to vector<14x128xf32>
      %1241 = arith.mulf %1240, %1236 : vector<14x128xf32>
      %1242 = arith.addf %1234, %1241 : vector<14x128xf32>
      %c0_549 = arith.constant 0 : index
      %c18 = arith.constant 18 : index
      %c0_550 = arith.constant 0 : index
      %c0_551 = arith.constant 0 : index
      %1243 = vector.load %arg3[%c0_549, %c18, %c0_550, %c0_551] : memref<4x30x14x128xf32, #tpu.memory_space<vmem>>, vector<1x1x14x128xf32>
      %1244 = vector.shape_cast %1243 : vector<1x1x14x128xf32> to vector<14x128xf32>
      %1245 = vector.broadcast %30 : f32 to vector<14x128xf32>
      %1246 = arith.mulf %1245, %1244 : vector<14x128xf32>
      %1247 = arith.addf %1225, %1246 : vector<14x128xf32>
      %1248 = vector.broadcast %18 : f32 to vector<14x128xf32>
      %1249 = arith.mulf %1248, %1244 : vector<14x128xf32>
      %1250 = arith.addf %1231, %1249 : vector<14x128xf32>
      %c1_552 = arith.constant 1 : index
      %c18_553 = arith.constant 18 : index
      %c0_554 = arith.constant 0 : index
      %c0_555 = arith.constant 0 : index
      %1251 = vector.load %arg3[%c1_552, %c18_553, %c0_554, %c0_555] : memref<4x30x14x128xf32, #tpu.memory_space<vmem>>, vector<1x1x14x128xf32>
      %1252 = vector.shape_cast %1251 : vector<1x1x14x128xf32> to vector<14x128xf32>
      %1253 = vector.broadcast %34 : f32 to vector<14x128xf32>
      %1254 = arith.mulf %1253, %1252 : vector<14x128xf32>
      %1255 = arith.addf %1247, %1254 : vector<14x128xf32>
      %1256 = vector.broadcast %30 : f32 to vector<14x128xf32>
      %1257 = arith.mulf %1256, %1252 : vector<14x128xf32>
      %1258 = arith.addf %1239, %1257 : vector<14x128xf32>
      %1259 = vector.broadcast %22 : f32 to vector<14x128xf32>
      %1260 = arith.mulf %1259, %1252 : vector<14x128xf32>
      %1261 = arith.addf %1250, %1260 : vector<14x128xf32>
      %1262 = vector.broadcast %18 : f32 to vector<14x128xf32>
      %1263 = arith.mulf %1262, %1252 : vector<14x128xf32>
      %1264 = arith.addf %1242, %1263 : vector<14x128xf32>
      %c2_556 = arith.constant 2 : index
      %c18_557 = arith.constant 18 : index
      %c0_558 = arith.constant 0 : index
      %c0_559 = arith.constant 0 : index
      %1265 = vector.load %arg3[%c2_556, %c18_557, %c0_558, %c0_559] : memref<4x30x14x128xf32, #tpu.memory_space<vmem>>, vector<1x1x14x128xf32>
      %1266 = vector.shape_cast %1265 : vector<1x1x14x128xf32> to vector<14x128xf32>
      %1267 = vector.broadcast %38 : f32 to vector<14x128xf32>
      %1268 = arith.mulf %1267, %1266 : vector<14x128xf32>
      %1269 = arith.addf %1255, %1268 : vector<14x128xf32>
      %1270 = vector.broadcast %34 : f32 to vector<14x128xf32>
      %1271 = arith.mulf %1270, %1266 : vector<14x128xf32>
      %1272 = arith.addf %1258, %1271 : vector<14x128xf32>
      %1273 = vector.broadcast %26 : f32 to vector<14x128xf32>
      %1274 = arith.mulf %1273, %1266 : vector<14x128xf32>
      %1275 = arith.addf %1261, %1274 : vector<14x128xf32>
      %1276 = vector.broadcast %22 : f32 to vector<14x128xf32>
      %1277 = arith.mulf %1276, %1266 : vector<14x128xf32>
      %1278 = arith.addf %1264, %1277 : vector<14x128xf32>
      %c3_560 = arith.constant 3 : index
      %c18_561 = arith.constant 18 : index
      %c0_562 = arith.constant 0 : index
      %c0_563 = arith.constant 0 : index
      %1279 = vector.load %arg3[%c3_560, %c18_561, %c0_562, %c0_563] : memref<4x30x14x128xf32, #tpu.memory_space<vmem>>, vector<1x1x14x128xf32>
      %1280 = vector.shape_cast %1279 : vector<1x1x14x128xf32> to vector<14x128xf32>
      %1281 = vector.broadcast %38 : f32 to vector<14x128xf32>
      %1282 = arith.mulf %1281, %1280 : vector<14x128xf32>
      %1283 = arith.addf %1272, %1282 : vector<14x128xf32>
      %1284 = vector.broadcast %26 : f32 to vector<14x128xf32>
      %1285 = arith.mulf %1284, %1280 : vector<14x128xf32>
      %1286 = arith.addf %1278, %1285 : vector<14x128xf32>
      %c0_564 = arith.constant 0 : index
      %c19 = arith.constant 19 : index
      %c0_565 = arith.constant 0 : index
      %c0_566 = arith.constant 0 : index
      %1287 = vector.load %arg3[%c0_564, %c19, %c0_565, %c0_566] : memref<4x30x14x128xf32, #tpu.memory_space<vmem>>, vector<1x1x14x128xf32>
      %1288 = vector.shape_cast %1287 : vector<1x1x14x128xf32> to vector<14x128xf32>
      %1289 = vector.broadcast %30 : f32 to vector<14x128xf32>
      %1290 = arith.mulf %1289, %1288 : vector<14x128xf32>
      %1291 = arith.addf %1275, %1290 : vector<14x128xf32>
      %c1_567 = arith.constant 1 : index
      %c19_568 = arith.constant 19 : index
      %c0_569 = arith.constant 0 : index
      %c0_570 = arith.constant 0 : index
      %1292 = vector.load %arg3[%c1_567, %c19_568, %c0_569, %c0_570] : memref<4x30x14x128xf32, #tpu.memory_space<vmem>>, vector<1x1x14x128xf32>
      %1293 = vector.shape_cast %1292 : vector<1x1x14x128xf32> to vector<14x128xf32>
      %1294 = vector.broadcast %34 : f32 to vector<14x128xf32>
      %1295 = arith.mulf %1294, %1293 : vector<14x128xf32>
      %1296 = arith.addf %1291, %1295 : vector<14x128xf32>
      %1297 = vector.broadcast %30 : f32 to vector<14x128xf32>
      %1298 = arith.mulf %1297, %1293 : vector<14x128xf32>
      %1299 = arith.addf %1286, %1298 : vector<14x128xf32>
      %c2_571 = arith.constant 2 : index
      %c19_572 = arith.constant 19 : index
      %c0_573 = arith.constant 0 : index
      %c0_574 = arith.constant 0 : index
      %1300 = vector.load %arg3[%c2_571, %c19_572, %c0_573, %c0_574] : memref<4x30x14x128xf32, #tpu.memory_space<vmem>>, vector<1x1x14x128xf32>
      %1301 = vector.shape_cast %1300 : vector<1x1x14x128xf32> to vector<14x128xf32>
      %1302 = vector.broadcast %38 : f32 to vector<14x128xf32>
      %1303 = arith.mulf %1302, %1301 : vector<14x128xf32>
      %1304 = arith.addf %1296, %1303 : vector<14x128xf32>
      %1305 = vector.broadcast %34 : f32 to vector<14x128xf32>
      %1306 = arith.mulf %1305, %1301 : vector<14x128xf32>
      %1307 = arith.addf %1299, %1306 : vector<14x128xf32>
      %c3_575 = arith.constant 3 : index
      %c19_576 = arith.constant 19 : index
      %c0_577 = arith.constant 0 : index
      %c0_578 = arith.constant 0 : index
      %1308 = vector.load %arg3[%c3_575, %c19_576, %c0_577, %c0_578] : memref<4x30x14x128xf32, #tpu.memory_space<vmem>>, vector<1x1x14x128xf32>
      %1309 = vector.shape_cast %1308 : vector<1x1x14x128xf32> to vector<14x128xf32>
      %1310 = vector.broadcast %38 : f32 to vector<14x128xf32>
      %1311 = arith.mulf %1310, %1309 : vector<14x128xf32>
      %1312 = arith.addf %1307, %1311 : vector<14x128xf32>
      %1313 = arith.maximumf %1269, %1283 : vector<14x128xf32>
      %1314 = arith.maximumf %1304, %1312 : vector<14x128xf32>
      %1315 = arith.maximumf %1313, %1314 : vector<14x128xf32>
      %1316 = vector.broadcast %40 : f32 to vector<14x128xf32>
      %1317 = arith.addf %1315, %1316 : vector<14x128xf32>
      %c128 = arith.constant 128 : index
      %c0_579 = arith.constant 0 : index
      %1318 = vector.load %arg7[%c128, %c0_579] : memref<224x128xf32, #tpu.memory_space<vmem>>, vector<14x128xf32>
      tpu.vector_store %arg7[%c128, %c0_579], %1317 {strides = array<i32>} : memref<224x128xf32, #tpu.memory_space<vmem>>, vector<14x128xf32>,
      %c0_580 = arith.constant 0 : index
      %c18_581 = arith.constant 18 : index
      %c0_582 = arith.constant 0 : index
      %c0_583 = arith.constant 0 : index
      %1319 = vector.load %arg3[%c0_580, %c18_581, %c0_582, %c0_583] : memref<4x30x14x128xf32, #tpu.memory_space<vmem>>, vector<1x1x14x128xf32>
      %1320 = vector.shape_cast %1319 : vector<1x1x14x128xf32> to vector<14x128xf32>
      %1321 = vector.broadcast %6 : f32 to vector<14x128xf32>
      %1322 = arith.mulf %1321, %1320 : vector<14x128xf32>
      %c1_584 = arith.constant 1 : index
      %c18_585 = arith.constant 18 : index
      %c0_586 = arith.constant 0 : index
      %c0_587 = arith.constant 0 : index
      %1323 = vector.load %arg3[%c1_584, %c18_585, %c0_586, %c0_587] : memref<4x30x14x128xf32, #tpu.memory_space<vmem>>, vector<1x1x14x128xf32>
      %1324 = vector.shape_cast %1323 : vector<1x1x14x128xf32> to vector<14x128xf32>
      %1325 = vector.broadcast %10 : f32 to vector<14x128xf32>
      %1326 = arith.mulf %1325, %1324 : vector<14x128xf32>
      %1327 = arith.addf %1322, %1326 : vector<14x128xf32>
      %1328 = vector.broadcast %6 : f32 to vector<14x128xf32>
      %1329 = arith.mulf %1328, %1324 : vector<14x128xf32>
      %c2_588 = arith.constant 2 : index
      %c18_589 = arith.constant 18 : index
      %c0_590 = arith.constant 0 : index
      %c0_591 = arith.constant 0 : index
      %1330 = vector.load %arg3[%c2_588, %c18_589, %c0_590, %c0_591] : memref<4x30x14x128xf32, #tpu.memory_space<vmem>>, vector<1x1x14x128xf32>
      %1331 = vector.shape_cast %1330 : vector<1x1x14x128xf32> to vector<14x128xf32>
      %1332 = vector.broadcast %14 : f32 to vector<14x128xf32>
      %1333 = arith.mulf %1332, %1331 : vector<14x128xf32>
      %1334 = arith.addf %1327, %1333 : vector<14x128xf32>
      %1335 = vector.broadcast %10 : f32 to vector<14x128xf32>
      %1336 = arith.mulf %1335, %1331 : vector<14x128xf32>
      %1337 = arith.addf %1329, %1336 : vector<14x128xf32>
      %c3_592 = arith.constant 3 : index
      %c18_593 = arith.constant 18 : index
      %c0_594 = arith.constant 0 : index
      %c0_595 = arith.constant 0 : index
      %1338 = vector.load %arg3[%c3_592, %c18_593, %c0_594, %c0_595] : memref<4x30x14x128xf32, #tpu.memory_space<vmem>>, vector<1x1x14x128xf32>
      %1339 = vector.shape_cast %1338 : vector<1x1x14x128xf32> to vector<14x128xf32>
      %1340 = vector.broadcast %14 : f32 to vector<14x128xf32>
      %1341 = arith.mulf %1340, %1339 : vector<14x128xf32>
      %1342 = arith.addf %1337, %1341 : vector<14x128xf32>
      %c0_596 = arith.constant 0 : index
      %c19_597 = arith.constant 19 : index
      %c0_598 = arith.constant 0 : index
      %c0_599 = arith.constant 0 : index
      %1343 = vector.load %arg3[%c0_596, %c19_597, %c0_598, %c0_599] : memref<4x30x14x128xf32, #tpu.memory_space<vmem>>, vector<1x1x14x128xf32>
      %1344 = vector.shape_cast %1343 : vector<1x1x14x128xf32> to vector<14x128xf32>
      %1345 = vector.broadcast %18 : f32 to vector<14x128xf32>
      %1346 = arith.mulf %1345, %1344 : vector<14x128xf32>
      %1347 = arith.addf %1334, %1346 : vector<14x128xf32>
      %1348 = vector.broadcast %6 : f32 to vector<14x128xf32>
      %1349 = arith.mulf %1348, %1344 : vector<14x128xf32>
      %c1_600 = arith.constant 1 : index
      %c19_601 = arith.constant 19 : index
      %c0_602 = arith.constant 0 : index
      %c0_603 = arith.constant 0 : index
      %1350 = vector.load %arg3[%c1_600, %c19_601, %c0_602, %c0_603] : memref<4x30x14x128xf32, #tpu.memory_space<vmem>>, vector<1x1x14x128xf32>
      %1351 = vector.shape_cast %1350 : vector<1x1x14x128xf32> to vector<14x128xf32>
      %1352 = vector.broadcast %22 : f32 to vector<14x128xf32>
      %1353 = arith.mulf %1352, %1351 : vector<14x128xf32>
      %1354 = arith.addf %1347, %1353 : vector<14x128xf32>
      %1355 = vector.broadcast %18 : f32 to vector<14x128xf32>
      %1356 = arith.mulf %1355, %1351 : vector<14x128xf32>
      %1357 = arith.addf %1342, %1356 : vector<14x128xf32>
      %1358 = vector.broadcast %10 : f32 to vector<14x128xf32>
      %1359 = arith.mulf %1358, %1351 : vector<14x128xf32>
      %1360 = arith.addf %1349, %1359 : vector<14x128xf32>
      %1361 = vector.broadcast %6 : f32 to vector<14x128xf32>
      %1362 = arith.mulf %1361, %1351 : vector<14x128xf32>
      %c2_604 = arith.constant 2 : index
      %c19_605 = arith.constant 19 : index
      %c0_606 = arith.constant 0 : index
      %c0_607 = arith.constant 0 : index
      %1363 = vector.load %arg3[%c2_604, %c19_605, %c0_606, %c0_607] : memref<4x30x14x128xf32, #tpu.memory_space<vmem>>, vector<1x1x14x128xf32>
      %1364 = vector.shape_cast %1363 : vector<1x1x14x128xf32> to vector<14x128xf32>
      %1365 = vector.broadcast %26 : f32 to vector<14x128xf32>
      %1366 = arith.mulf %1365, %1364 : vector<14x128xf32>
      %1367 = arith.addf %1354, %1366 : vector<14x128xf32>
      %1368 = vector.broadcast %22 : f32 to vector<14x128xf32>
      %1369 = arith.mulf %1368, %1364 : vector<14x128xf32>
      %1370 = arith.addf %1357, %1369 : vector<14x128xf32>
      %1371 = vector.broadcast %14 : f32 to vector<14x128xf32>
      %1372 = arith.mulf %1371, %1364 : vector<14x128xf32>
      %1373 = arith.addf %1360, %1372 : vector<14x128xf32>
      %1374 = vector.broadcast %10 : f32 to vector<14x128xf32>
      %1375 = arith.mulf %1374, %1364 : vector<14x128xf32>
      %1376 = arith.addf %1362, %1375 : vector<14x128xf32>
      %c3_608 = arith.constant 3 : index
      %c19_609 = arith.constant 19 : index
      %c0_610 = arith.constant 0 : index
      %c0_611 = arith.constant 0 : index
      %1377 = vector.load %arg3[%c3_608, %c19_609, %c0_610, %c0_611] : memref<4x30x14x128xf32, #tpu.memory_space<vmem>>, vector<1x1x14x128xf32>
      %1378 = vector.shape_cast %1377 : vector<1x1x14x128xf32> to vector<14x128xf32>
      %1379 = vector.broadcast %26 : f32 to vector<14x128xf32>
      %1380 = arith.mulf %1379, %1378 : vector<14x128xf32>
      %1381 = arith.addf %1370, %1380 : vector<14x128xf32>
      %1382 = vector.broadcast %14 : f32 to vector<14x128xf32>
      %1383 = arith.mulf %1382, %1378 : vector<14x128xf32>
      %1384 = arith.addf %1376, %1383 : vector<14x128xf32>
      %c0_612 = arith.constant 0 : index
      %c20 = arith.constant 20 : index
      %c0_613 = arith.constant 0 : index
      %c0_614 = arith.constant 0 : index
      %1385 = vector.load %arg3[%c0_612, %c20, %c0_613, %c0_614] : memref<4x30x14x128xf32, #tpu.memory_space<vmem>>, vector<1x1x14x128xf32>
      %1386 = vector.shape_cast %1385 : vector<1x1x14x128xf32> to vector<14x128xf32>
      %1387 = vector.broadcast %30 : f32 to vector<14x128xf32>
      %1388 = arith.mulf %1387, %1386 : vector<14x128xf32>
      %1389 = arith.addf %1367, %1388 : vector<14x128xf32>
      %1390 = vector.broadcast %18 : f32 to vector<14x128xf32>
      %1391 = arith.mulf %1390, %1386 : vector<14x128xf32>
      %1392 = arith.addf %1373, %1391 : vector<14x128xf32>
      %c1_615 = arith.constant 1 : index
      %c20_616 = arith.constant 20 : index
      %c0_617 = arith.constant 0 : index
      %c0_618 = arith.constant 0 : index
      %1393 = vector.load %arg3[%c1_615, %c20_616, %c0_617, %c0_618] : memref<4x30x14x128xf32, #tpu.memory_space<vmem>>, vector<1x1x14x128xf32>
      %1394 = vector.shape_cast %1393 : vector<1x1x14x128xf32> to vector<14x128xf32>
      %1395 = vector.broadcast %34 : f32 to vector<14x128xf32>
      %1396 = arith.mulf %1395, %1394 : vector<14x128xf32>
      %1397 = arith.addf %1389, %1396 : vector<14x128xf32>
      %1398 = vector.broadcast %30 : f32 to vector<14x128xf32>
      %1399 = arith.mulf %1398, %1394 : vector<14x128xf32>
      %1400 = arith.addf %1381, %1399 : vector<14x128xf32>
      %1401 = vector.broadcast %22 : f32 to vector<14x128xf32>
      %1402 = arith.mulf %1401, %1394 : vector<14x128xf32>
      %1403 = arith.addf %1392, %1402 : vector<14x128xf32>
      %1404 = vector.broadcast %18 : f32 to vector<14x128xf32>
      %1405 = arith.mulf %1404, %1394 : vector<14x128xf32>
      %1406 = arith.addf %1384, %1405 : vector<14x128xf32>
      %c2_619 = arith.constant 2 : index
      %c20_620 = arith.constant 20 : index
      %c0_621 = arith.constant 0 : index
      %c0_622 = arith.constant 0 : index
      %1407 = vector.load %arg3[%c2_619, %c20_620, %c0_621, %c0_622] : memref<4x30x14x128xf32, #tpu.memory_space<vmem>>, vector<1x1x14x128xf32>
      %1408 = vector.shape_cast %1407 : vector<1x1x14x128xf32> to vector<14x128xf32>
      %1409 = vector.broadcast %38 : f32 to vector<14x128xf32>
      %1410 = arith.mulf %1409, %1408 : vector<14x128xf32>
      %1411 = arith.addf %1397, %1410 : vector<14x128xf32>
      %1412 = vector.broadcast %34 : f32 to vector<14x128xf32>
      %1413 = arith.mulf %1412, %1408 : vector<14x128xf32>
      %1414 = arith.addf %1400, %1413 : vector<14x128xf32>
      %1415 = vector.broadcast %26 : f32 to vector<14x128xf32>
      %1416 = arith.mulf %1415, %1408 : vector<14x128xf32>
      %1417 = arith.addf %1403, %1416 : vector<14x128xf32>
      %1418 = vector.broadcast %22 : f32 to vector<14x128xf32>
      %1419 = arith.mulf %1418, %1408 : vector<14x128xf32>
      %1420 = arith.addf %1406, %1419 : vector<14x128xf32>
      %c3_623 = arith.constant 3 : index
      %c20_624 = arith.constant 20 : index
      %c0_625 = arith.constant 0 : index
      %c0_626 = arith.constant 0 : index
      %1421 = vector.load %arg3[%c3_623, %c20_624, %c0_625, %c0_626] : memref<4x30x14x128xf32, #tpu.memory_space<vmem>>, vector<1x1x14x128xf32>
      %1422 = vector.shape_cast %1421 : vector<1x1x14x128xf32> to vector<14x128xf32>
      %1423 = vector.broadcast %38 : f32 to vector<14x128xf32>
      %1424 = arith.mulf %1423, %1422 : vector<14x128xf32>
      %1425 = arith.addf %1414, %1424 : vector<14x128xf32>
      %1426 = vector.broadcast %26 : f32 to vector<14x128xf32>
      %1427 = arith.mulf %1426, %1422 : vector<14x128xf32>
      %1428 = arith.addf %1420, %1427 : vector<14x128xf32>
      %c0_627 = arith.constant 0 : index
      %c21 = arith.constant 21 : index
      %c0_628 = arith.constant 0 : index
      %c0_629 = arith.constant 0 : index
      %1429 = vector.load %arg3[%c0_627, %c21, %c0_628, %c0_629] : memref<4x30x14x128xf32, #tpu.memory_space<vmem>>, vector<1x1x14x128xf32>
      %1430 = vector.shape_cast %1429 : vector<1x1x14x128xf32> to vector<14x128xf32>
      %1431 = vector.broadcast %30 : f32 to vector<14x128xf32>
      %1432 = arith.mulf %1431, %1430 : vector<14x128xf32>
      %1433 = arith.addf %1417, %1432 : vector<14x128xf32>
      %c1_630 = arith.constant 1 : index
      %c21_631 = arith.constant 21 : index
      %c0_632 = arith.constant 0 : index
      %c0_633 = arith.constant 0 : index
      %1434 = vector.load %arg3[%c1_630, %c21_631, %c0_632, %c0_633] : memref<4x30x14x128xf32, #tpu.memory_space<vmem>>, vector<1x1x14x128xf32>
      %1435 = vector.shape_cast %1434 : vector<1x1x14x128xf32> to vector<14x128xf32>
      %1436 = vector.broadcast %34 : f32 to vector<14x128xf32>
      %1437 = arith.mulf %1436, %1435 : vector<14x128xf32>
      %1438 = arith.addf %1433, %1437 : vector<14x128xf32>
      %1439 = vector.broadcast %30 : f32 to vector<14x128xf32>
      %1440 = arith.mulf %1439, %1435 : vector<14x128xf32>
      %1441 = arith.addf %1428, %1440 : vector<14x128xf32>
      %c2_634 = arith.constant 2 : index
      %c21_635 = arith.constant 21 : index
      %c0_636 = arith.constant 0 : index
      %c0_637 = arith.constant 0 : index
      %1442 = vector.load %arg3[%c2_634, %c21_635, %c0_636, %c0_637] : memref<4x30x14x128xf32, #tpu.memory_space<vmem>>, vector<1x1x14x128xf32>
      %1443 = vector.shape_cast %1442 : vector<1x1x14x128xf32> to vector<14x128xf32>
      %1444 = vector.broadcast %38 : f32 to vector<14x128xf32>
      %1445 = arith.mulf %1444, %1443 : vector<14x128xf32>
      %1446 = arith.addf %1438, %1445 : vector<14x128xf32>
      %1447 = vector.broadcast %34 : f32 to vector<14x128xf32>
      %1448 = arith.mulf %1447, %1443 : vector<14x128xf32>
      %1449 = arith.addf %1441, %1448 : vector<14x128xf32>
      %c3_638 = arith.constant 3 : index
      %c21_639 = arith.constant 21 : index
      %c0_640 = arith.constant 0 : index
      %c0_641 = arith.constant 0 : index
      %1450 = vector.load %arg3[%c3_638, %c21_639, %c0_640, %c0_641] : memref<4x30x14x128xf32, #tpu.memory_space<vmem>>, vector<1x1x14x128xf32>
      %1451 = vector.shape_cast %1450 : vector<1x1x14x128xf32> to vector<14x128xf32>
      %1452 = vector.broadcast %38 : f32 to vector<14x128xf32>
      %1453 = arith.mulf %1452, %1451 : vector<14x128xf32>
      %1454 = arith.addf %1449, %1453 : vector<14x128xf32>
      %1455 = arith.maximumf %1411, %1425 : vector<14x128xf32>
      %1456 = arith.maximumf %1446, %1454 : vector<14x128xf32>
      %1457 = arith.maximumf %1455, %1456 : vector<14x128xf32>
      %1458 = vector.broadcast %40 : f32 to vector<14x128xf32>
      %1459 = arith.addf %1457, %1458 : vector<14x128xf32>
      %c144 = arith.constant 144 : index
      %c0_642 = arith.constant 0 : index
      %1460 = vector.load %arg7[%c144, %c0_642] : memref<224x128xf32, #tpu.memory_space<vmem>>, vector<14x128xf32>
      tpu.vector_store %arg7[%c144, %c0_642], %1459 {strides = array<i32>} : memref<224x128xf32, #tpu.memory_space<vmem>>, vector<14x128xf32>,
      %c0_643 = arith.constant 0 : index
      %c20_644 = arith.constant 20 : index
      %c0_645 = arith.constant 0 : index
      %c0_646 = arith.constant 0 : index
      %1461 = vector.load %arg3[%c0_643, %c20_644, %c0_645, %c0_646] : memref<4x30x14x128xf32, #tpu.memory_space<vmem>>, vector<1x1x14x128xf32>
      %1462 = vector.shape_cast %1461 : vector<1x1x14x128xf32> to vector<14x128xf32>
      %1463 = vector.broadcast %6 : f32 to vector<14x128xf32>
      %1464 = arith.mulf %1463, %1462 : vector<14x128xf32>
      %c1_647 = arith.constant 1 : index
      %c20_648 = arith.constant 20 : index
      %c0_649 = arith.constant 0 : index
      %c0_650 = arith.constant 0 : index
      %1465 = vector.load %arg3[%c1_647, %c20_648, %c0_649, %c0_650] : memref<4x30x14x128xf32, #tpu.memory_space<vmem>>, vector<1x1x14x128xf32>
      %1466 = vector.shape_cast %1465 : vector<1x1x14x128xf32> to vector<14x128xf32>
      %1467 = vector.broadcast %10 : f32 to vector<14x128xf32>
      %1468 = arith.mulf %1467, %1466 : vector<14x128xf32>
      %1469 = arith.addf %1464, %1468 : vector<14x128xf32>
      %1470 = vector.broadcast %6 : f32 to vector<14x128xf32>
      %1471 = arith.mulf %1470, %1466 : vector<14x128xf32>
      %c2_651 = arith.constant 2 : index
      %c20_652 = arith.constant 20 : index
      %c0_653 = arith.constant 0 : index
      %c0_654 = arith.constant 0 : index
      %1472 = vector.load %arg3[%c2_651, %c20_652, %c0_653, %c0_654] : memref<4x30x14x128xf32, #tpu.memory_space<vmem>>, vector<1x1x14x128xf32>
      %1473 = vector.shape_cast %1472 : vector<1x1x14x128xf32> to vector<14x128xf32>
      %1474 = vector.broadcast %14 : f32 to vector<14x128xf32>
      %1475 = arith.mulf %1474, %1473 : vector<14x128xf32>
      %1476 = arith.addf %1469, %1475 : vector<14x128xf32>
      %1477 = vector.broadcast %10 : f32 to vector<14x128xf32>
      %1478 = arith.mulf %1477, %1473 : vector<14x128xf32>
      %1479 = arith.addf %1471, %1478 : vector<14x128xf32>
      %c3_655 = arith.constant 3 : index
      %c20_656 = arith.constant 20 : index
      %c0_657 = arith.constant 0 : index
      %c0_658 = arith.constant 0 : index
      %1480 = vector.load %arg3[%c3_655, %c20_656, %c0_657, %c0_658] : memref<4x30x14x128xf32, #tpu.memory_space<vmem>>, vector<1x1x14x128xf32>
      %1481 = vector.shape_cast %1480 : vector<1x1x14x128xf32> to vector<14x128xf32>
      %1482 = vector.broadcast %14 : f32 to vector<14x128xf32>
      %1483 = arith.mulf %1482, %1481 : vector<14x128xf32>
      %1484 = arith.addf %1479, %1483 : vector<14x128xf32>
      %c0_659 = arith.constant 0 : index
      %c21_660 = arith.constant 21 : index
      %c0_661 = arith.constant 0 : index
      %c0_662 = arith.constant 0 : index
      %1485 = vector.load %arg3[%c0_659, %c21_660, %c0_661, %c0_662] : memref<4x30x14x128xf32, #tpu.memory_space<vmem>>, vector<1x1x14x128xf32>
      %1486 = vector.shape_cast %1485 : vector<1x1x14x128xf32> to vector<14x128xf32>
      %1487 = vector.broadcast %18 : f32 to vector<14x128xf32>
      %1488 = arith.mulf %1487, %1486 : vector<14x128xf32>
      %1489 = arith.addf %1476, %1488 : vector<14x128xf32>
      %1490 = vector.broadcast %6 : f32 to vector<14x128xf32>
      %1491 = arith.mulf %1490, %1486 : vector<14x128xf32>
      %c1_663 = arith.constant 1 : index
      %c21_664 = arith.constant 21 : index
      %c0_665 = arith.constant 0 : index
      %c0_666 = arith.constant 0 : index
      %1492 = vector.load %arg3[%c1_663, %c21_664, %c0_665, %c0_666] : memref<4x30x14x128xf32, #tpu.memory_space<vmem>>, vector<1x1x14x128xf32>
      %1493 = vector.shape_cast %1492 : vector<1x1x14x128xf32> to vector<14x128xf32>
      %1494 = vector.broadcast %22 : f32 to vector<14x128xf32>
      %1495 = arith.mulf %1494, %1493 : vector<14x128xf32>
      %1496 = arith.addf %1489, %1495 : vector<14x128xf32>
      %1497 = vector.broadcast %18 : f32 to vector<14x128xf32>
      %1498 = arith.mulf %1497, %1493 : vector<14x128xf32>
      %1499 = arith.addf %1484, %1498 : vector<14x128xf32>
      %1500 = vector.broadcast %10 : f32 to vector<14x128xf32>
      %1501 = arith.mulf %1500, %1493 : vector<14x128xf32>
      %1502 = arith.addf %1491, %1501 : vector<14x128xf32>
      %1503 = vector.broadcast %6 : f32 to vector<14x128xf32>
      %1504 = arith.mulf %1503, %1493 : vector<14x128xf32>
      %c2_667 = arith.constant 2 : index
      %c21_668 = arith.constant 21 : index
      %c0_669 = arith.constant 0 : index
      %c0_670 = arith.constant 0 : index
      %1505 = vector.load %arg3[%c2_667, %c21_668, %c0_669, %c0_670] : memref<4x30x14x128xf32, #tpu.memory_space<vmem>>, vector<1x1x14x128xf32>
      %1506 = vector.shape_cast %1505 : vector<1x1x14x128xf32> to vector<14x128xf32>
      %1507 = vector.broadcast %26 : f32 to vector<14x128xf32>
      %1508 = arith.mulf %1507, %1506 : vector<14x128xf32>
      %1509 = arith.addf %1496, %1508 : vector<14x128xf32>
      %1510 = vector.broadcast %22 : f32 to vector<14x128xf32>
      %1511 = arith.mulf %1510, %1506 : vector<14x128xf32>
      %1512 = arith.addf %1499, %1511 : vector<14x128xf32>
      %1513 = vector.broadcast %14 : f32 to vector<14x128xf32>
      %1514 = arith.mulf %1513, %1506 : vector<14x128xf32>
      %1515 = arith.addf %1502, %1514 : vector<14x128xf32>
      %1516 = vector.broadcast %10 : f32 to vector<14x128xf32>
      %1517 = arith.mulf %1516, %1506 : vector<14x128xf32>
      %1518 = arith.addf %1504, %1517 : vector<14x128xf32>
      %c3_671 = arith.constant 3 : index
      %c21_672 = arith.constant 21 : index
      %c0_673 = arith.constant 0 : index
      %c0_674 = arith.constant 0 : index
      %1519 = vector.load %arg3[%c3_671, %c21_672, %c0_673, %c0_674] : memref<4x30x14x128xf32, #tpu.memory_space<vmem>>, vector<1x1x14x128xf32>
      %1520 = vector.shape_cast %1519 : vector<1x1x14x128xf32> to vector<14x128xf32>
      %1521 = vector.broadcast %26 : f32 to vector<14x128xf32>
      %1522 = arith.mulf %1521, %1520 : vector<14x128xf32>
      %1523 = arith.addf %1512, %1522 : vector<14x128xf32>
      %1524 = vector.broadcast %14 : f32 to vector<14x128xf32>
      %1525 = arith.mulf %1524, %1520 : vector<14x128xf32>
      %1526 = arith.addf %1518, %1525 : vector<14x128xf32>
      %c0_675 = arith.constant 0 : index
      %c22 = arith.constant 22 : index
      %c0_676 = arith.constant 0 : index
      %c0_677 = arith.constant 0 : index
      %1527 = vector.load %arg3[%c0_675, %c22, %c0_676, %c0_677] : memref<4x30x14x128xf32, #tpu.memory_space<vmem>>, vector<1x1x14x128xf32>
      %1528 = vector.shape_cast %1527 : vector<1x1x14x128xf32> to vector<14x128xf32>
      %1529 = vector.broadcast %30 : f32 to vector<14x128xf32>
      %1530 = arith.mulf %1529, %1528 : vector<14x128xf32>
      %1531 = arith.addf %1509, %1530 : vector<14x128xf32>
      %1532 = vector.broadcast %18 : f32 to vector<14x128xf32>
      %1533 = arith.mulf %1532, %1528 : vector<14x128xf32>
      %1534 = arith.addf %1515, %1533 : vector<14x128xf32>
      %c1_678 = arith.constant 1 : index
      %c22_679 = arith.constant 22 : index
      %c0_680 = arith.constant 0 : index
      %c0_681 = arith.constant 0 : index
      %1535 = vector.load %arg3[%c1_678, %c22_679, %c0_680, %c0_681] : memref<4x30x14x128xf32, #tpu.memory_space<vmem>>, vector<1x1x14x128xf32>
      %1536 = vector.shape_cast %1535 : vector<1x1x14x128xf32> to vector<14x128xf32>
      %1537 = vector.broadcast %34 : f32 to vector<14x128xf32>
      %1538 = arith.mulf %1537, %1536 : vector<14x128xf32>
      %1539 = arith.addf %1531, %1538 : vector<14x128xf32>
      %1540 = vector.broadcast %30 : f32 to vector<14x128xf32>
      %1541 = arith.mulf %1540, %1536 : vector<14x128xf32>
      %1542 = arith.addf %1523, %1541 : vector<14x128xf32>
      %1543 = vector.broadcast %22 : f32 to vector<14x128xf32>
      %1544 = arith.mulf %1543, %1536 : vector<14x128xf32>
      %1545 = arith.addf %1534, %1544 : vector<14x128xf32>
      %1546 = vector.broadcast %18 : f32 to vector<14x128xf32>
      %1547 = arith.mulf %1546, %1536 : vector<14x128xf32>
      %1548 = arith.addf %1526, %1547 : vector<14x128xf32>
      %c2_682 = arith.constant 2 : index
      %c22_683 = arith.constant 22 : index
      %c0_684 = arith.constant 0 : index
      %c0_685 = arith.constant 0 : index
      %1549 = vector.load %arg3[%c2_682, %c22_683, %c0_684, %c0_685] : memref<4x30x14x128xf32, #tpu.memory_space<vmem>>, vector<1x1x14x128xf32>
      %1550 = vector.shape_cast %1549 : vector<1x1x14x128xf32> to vector<14x128xf32>
      %1551 = vector.broadcast %38 : f32 to vector<14x128xf32>
      %1552 = arith.mulf %1551, %1550 : vector<14x128xf32>
      %1553 = arith.addf %1539, %1552 : vector<14x128xf32>
      %1554 = vector.broadcast %34 : f32 to vector<14x128xf32>
      %1555 = arith.mulf %1554, %1550 : vector<14x128xf32>
      %1556 = arith.addf %1542, %1555 : vector<14x128xf32>
      %1557 = vector.broadcast %26 : f32 to vector<14x128xf32>
      %1558 = arith.mulf %1557, %1550 : vector<14x128xf32>
      %1559 = arith.addf %1545, %1558 : vector<14x128xf32>
      %1560 = vector.broadcast %22 : f32 to vector<14x128xf32>
      %1561 = arith.mulf %1560, %1550 : vector<14x128xf32>
      %1562 = arith.addf %1548, %1561 : vector<14x128xf32>
      %c3_686 = arith.constant 3 : index
      %c22_687 = arith.constant 22 : index
      %c0_688 = arith.constant 0 : index
      %c0_689 = arith.constant 0 : index
      %1563 = vector.load %arg3[%c3_686, %c22_687, %c0_688, %c0_689] : memref<4x30x14x128xf32, #tpu.memory_space<vmem>>, vector<1x1x14x128xf32>
      %1564 = vector.shape_cast %1563 : vector<1x1x14x128xf32> to vector<14x128xf32>
      %1565 = vector.broadcast %38 : f32 to vector<14x128xf32>
      %1566 = arith.mulf %1565, %1564 : vector<14x128xf32>
      %1567 = arith.addf %1556, %1566 : vector<14x128xf32>
      %1568 = vector.broadcast %26 : f32 to vector<14x128xf32>
      %1569 = arith.mulf %1568, %1564 : vector<14x128xf32>
      %1570 = arith.addf %1562, %1569 : vector<14x128xf32>
      %c0_690 = arith.constant 0 : index
      %c23 = arith.constant 23 : index
      %c0_691 = arith.constant 0 : index
      %c0_692 = arith.constant 0 : index
      %1571 = vector.load %arg3[%c0_690, %c23, %c0_691, %c0_692] : memref<4x30x14x128xf32, #tpu.memory_space<vmem>>, vector<1x1x14x128xf32>
      %1572 = vector.shape_cast %1571 : vector<1x1x14x128xf32> to vector<14x128xf32>
      %1573 = vector.broadcast %30 : f32 to vector<14x128xf32>
      %1574 = arith.mulf %1573, %1572 : vector<14x128xf32>
      %1575 = arith.addf %1559, %1574 : vector<14x128xf32>
      %c1_693 = arith.constant 1 : index
      %c23_694 = arith.constant 23 : index
      %c0_695 = arith.constant 0 : index
      %c0_696 = arith.constant 0 : index
      %1576 = vector.load %arg3[%c1_693, %c23_694, %c0_695, %c0_696] : memref<4x30x14x128xf32, #tpu.memory_space<vmem>>, vector<1x1x14x128xf32>
      %1577 = vector.shape_cast %1576 : vector<1x1x14x128xf32> to vector<14x128xf32>
      %1578 = vector.broadcast %34 : f32 to vector<14x128xf32>
      %1579 = arith.mulf %1578, %1577 : vector<14x128xf32>
      %1580 = arith.addf %1575, %1579 : vector<14x128xf32>
      %1581 = vector.broadcast %30 : f32 to vector<14x128xf32>
      %1582 = arith.mulf %1581, %1577 : vector<14x128xf32>
      %1583 = arith.addf %1570, %1582 : vector<14x128xf32>
      %c2_697 = arith.constant 2 : index
      %c23_698 = arith.constant 23 : index
      %c0_699 = arith.constant 0 : index
      %c0_700 = arith.constant 0 : index
      %1584 = vector.load %arg3[%c2_697, %c23_698, %c0_699, %c0_700] : memref<4x30x14x128xf32, #tpu.memory_space<vmem>>, vector<1x1x14x128xf32>
      %1585 = vector.shape_cast %1584 : vector<1x1x14x128xf32> to vector<14x128xf32>
      %1586 = vector.broadcast %38 : f32 to vector<14x128xf32>
      %1587 = arith.mulf %1586, %1585 : vector<14x128xf32>
      %1588 = arith.addf %1580, %1587 : vector<14x128xf32>
      %1589 = vector.broadcast %34 : f32 to vector<14x128xf32>
      %1590 = arith.mulf %1589, %1585 : vector<14x128xf32>
      %1591 = arith.addf %1583, %1590 : vector<14x128xf32>
      %c3_701 = arith.constant 3 : index
      %c23_702 = arith.constant 23 : index
      %c0_703 = arith.constant 0 : index
      %c0_704 = arith.constant 0 : index
      %1592 = vector.load %arg3[%c3_701, %c23_702, %c0_703, %c0_704] : memref<4x30x14x128xf32, #tpu.memory_space<vmem>>, vector<1x1x14x128xf32>
      %1593 = vector.shape_cast %1592 : vector<1x1x14x128xf32> to vector<14x128xf32>
      %1594 = vector.broadcast %38 : f32 to vector<14x128xf32>
      %1595 = arith.mulf %1594, %1593 : vector<14x128xf32>
      %1596 = arith.addf %1591, %1595 : vector<14x128xf32>
      %1597 = arith.maximumf %1553, %1567 : vector<14x128xf32>
      %1598 = arith.maximumf %1588, %1596 : vector<14x128xf32>
      %1599 = arith.maximumf %1597, %1598 : vector<14x128xf32>
      %1600 = vector.broadcast %40 : f32 to vector<14x128xf32>
      %1601 = arith.addf %1599, %1600 : vector<14x128xf32>
      %c160 = arith.constant 160 : index
      %c0_705 = arith.constant 0 : index
      %1602 = vector.load %arg7[%c160, %c0_705] : memref<224x128xf32, #tpu.memory_space<vmem>>, vector<14x128xf32>
      tpu.vector_store %arg7[%c160, %c0_705], %1601 {strides = array<i32>} : memref<224x128xf32, #tpu.memory_space<vmem>>, vector<14x128xf32>,
      %c0_706 = arith.constant 0 : index
      %c22_707 = arith.constant 22 : index
      %c0_708 = arith.constant 0 : index
      %c0_709 = arith.constant 0 : index
      %1603 = vector.load %arg3[%c0_706, %c22_707, %c0_708, %c0_709] : memref<4x30x14x128xf32, #tpu.memory_space<vmem>>, vector<1x1x14x128xf32>
      %1604 = vector.shape_cast %1603 : vector<1x1x14x128xf32> to vector<14x128xf32>
      %1605 = vector.broadcast %6 : f32 to vector<14x128xf32>
      %1606 = arith.mulf %1605, %1604 : vector<14x128xf32>
      %c1_710 = arith.constant 1 : index
      %c22_711 = arith.constant 22 : index
      %c0_712 = arith.constant 0 : index
      %c0_713 = arith.constant 0 : index
      %1607 = vector.load %arg3[%c1_710, %c22_711, %c0_712, %c0_713] : memref<4x30x14x128xf32, #tpu.memory_space<vmem>>, vector<1x1x14x128xf32>
      %1608 = vector.shape_cast %1607 : vector<1x1x14x128xf32> to vector<14x128xf32>
      %1609 = vector.broadcast %10 : f32 to vector<14x128xf32>
      %1610 = arith.mulf %1609, %1608 : vector<14x128xf32>
      %1611 = arith.addf %1606, %1610 : vector<14x128xf32>
      %1612 = vector.broadcast %6 : f32 to vector<14x128xf32>
      %1613 = arith.mulf %1612, %1608 : vector<14x128xf32>
      %c2_714 = arith.constant 2 : index
      %c22_715 = arith.constant 22 : index
      %c0_716 = arith.constant 0 : index
      %c0_717 = arith.constant 0 : index
      %1614 = vector.load %arg3[%c2_714, %c22_715, %c0_716, %c0_717] : memref<4x30x14x128xf32, #tpu.memory_space<vmem>>, vector<1x1x14x128xf32>
      %1615 = vector.shape_cast %1614 : vector<1x1x14x128xf32> to vector<14x128xf32>
      %1616 = vector.broadcast %14 : f32 to vector<14x128xf32>
      %1617 = arith.mulf %1616, %1615 : vector<14x128xf32>
      %1618 = arith.addf %1611, %1617 : vector<14x128xf32>
      %1619 = vector.broadcast %10 : f32 to vector<14x128xf32>
      %1620 = arith.mulf %1619, %1615 : vector<14x128xf32>
      %1621 = arith.addf %1613, %1620 : vector<14x128xf32>
      %c3_718 = arith.constant 3 : index
      %c22_719 = arith.constant 22 : index
      %c0_720 = arith.constant 0 : index
      %c0_721 = arith.constant 0 : index
      %1622 = vector.load %arg3[%c3_718, %c22_719, %c0_720, %c0_721] : memref<4x30x14x128xf32, #tpu.memory_space<vmem>>, vector<1x1x14x128xf32>
      %1623 = vector.shape_cast %1622 : vector<1x1x14x128xf32> to vector<14x128xf32>
      %1624 = vector.broadcast %14 : f32 to vector<14x128xf32>
      %1625 = arith.mulf %1624, %1623 : vector<14x128xf32>
      %1626 = arith.addf %1621, %1625 : vector<14x128xf32>
      %c0_722 = arith.constant 0 : index
      %c23_723 = arith.constant 23 : index
      %c0_724 = arith.constant 0 : index
      %c0_725 = arith.constant 0 : index
      %1627 = vector.load %arg3[%c0_722, %c23_723, %c0_724, %c0_725] : memref<4x30x14x128xf32, #tpu.memory_space<vmem>>, vector<1x1x14x128xf32>
      %1628 = vector.shape_cast %1627 : vector<1x1x14x128xf32> to vector<14x128xf32>
      %1629 = vector.broadcast %18 : f32 to vector<14x128xf32>
      %1630 = arith.mulf %1629, %1628 : vector<14x128xf32>
      %1631 = arith.addf %1618, %1630 : vector<14x128xf32>
      %1632 = vector.broadcast %6 : f32 to vector<14x128xf32>
      %1633 = arith.mulf %1632, %1628 : vector<14x128xf32>
      %c1_726 = arith.constant 1 : index
      %c23_727 = arith.constant 23 : index
      %c0_728 = arith.constant 0 : index
      %c0_729 = arith.constant 0 : index
      %1634 = vector.load %arg3[%c1_726, %c23_727, %c0_728, %c0_729] : memref<4x30x14x128xf32, #tpu.memory_space<vmem>>, vector<1x1x14x128xf32>
      %1635 = vector.shape_cast %1634 : vector<1x1x14x128xf32> to vector<14x128xf32>
      %1636 = vector.broadcast %22 : f32 to vector<14x128xf32>
      %1637 = arith.mulf %1636, %1635 : vector<14x128xf32>
      %1638 = arith.addf %1631, %1637 : vector<14x128xf32>
      %1639 = vector.broadcast %18 : f32 to vector<14x128xf32>
      %1640 = arith.mulf %1639, %1635 : vector<14x128xf32>
      %1641 = arith.addf %1626, %1640 : vector<14x128xf32>
      %1642 = vector.broadcast %10 : f32 to vector<14x128xf32>
      %1643 = arith.mulf %1642, %1635 : vector<14x128xf32>
      %1644 = arith.addf %1633, %1643 : vector<14x128xf32>
      %1645 = vector.broadcast %6 : f32 to vector<14x128xf32>
      %1646 = arith.mulf %1645, %1635 : vector<14x128xf32>
      %c2_730 = arith.constant 2 : index
      %c23_731 = arith.constant 23 : index
      %c0_732 = arith.constant 0 : index
      %c0_733 = arith.constant 0 : index
      %1647 = vector.load %arg3[%c2_730, %c23_731, %c0_732, %c0_733] : memref<4x30x14x128xf32, #tpu.memory_space<vmem>>, vector<1x1x14x128xf32>
      %1648 = vector.shape_cast %1647 : vector<1x1x14x128xf32> to vector<14x128xf32>
      %1649 = vector.broadcast %26 : f32 to vector<14x128xf32>
      %1650 = arith.mulf %1649, %1648 : vector<14x128xf32>
      %1651 = arith.addf %1638, %1650 : vector<14x128xf32>
      %1652 = vector.broadcast %22 : f32 to vector<14x128xf32>
      %1653 = arith.mulf %1652, %1648 : vector<14x128xf32>
      %1654 = arith.addf %1641, %1653 : vector<14x128xf32>
      %1655 = vector.broadcast %14 : f32 to vector<14x128xf32>
      %1656 = arith.mulf %1655, %1648 : vector<14x128xf32>
      %1657 = arith.addf %1644, %1656 : vector<14x128xf32>
      %1658 = vector.broadcast %10 : f32 to vector<14x128xf32>
      %1659 = arith.mulf %1658, %1648 : vector<14x128xf32>
      %1660 = arith.addf %1646, %1659 : vector<14x128xf32>
      %c3_734 = arith.constant 3 : index
      %c23_735 = arith.constant 23 : index
      %c0_736 = arith.constant 0 : index
      %c0_737 = arith.constant 0 : index
      %1661 = vector.load %arg3[%c3_734, %c23_735, %c0_736, %c0_737] : memref<4x30x14x128xf32, #tpu.memory_space<vmem>>, vector<1x1x14x128xf32>
      %1662 = vector.shape_cast %1661 : vector<1x1x14x128xf32> to vector<14x128xf32>
      %1663 = vector.broadcast %26 : f32 to vector<14x128xf32>
      %1664 = arith.mulf %1663, %1662 : vector<14x128xf32>
      %1665 = arith.addf %1654, %1664 : vector<14x128xf32>
      %1666 = vector.broadcast %14 : f32 to vector<14x128xf32>
      %1667 = arith.mulf %1666, %1662 : vector<14x128xf32>
      %1668 = arith.addf %1660, %1667 : vector<14x128xf32>
      %c0_738 = arith.constant 0 : index
      %c24 = arith.constant 24 : index
      %c0_739 = arith.constant 0 : index
      %c0_740 = arith.constant 0 : index
      %1669 = vector.load %arg3[%c0_738, %c24, %c0_739, %c0_740] : memref<4x30x14x128xf32, #tpu.memory_space<vmem>>, vector<1x1x14x128xf32>
      %1670 = vector.shape_cast %1669 : vector<1x1x14x128xf32> to vector<14x128xf32>
      %1671 = vector.broadcast %30 : f32 to vector<14x128xf32>
      %1672 = arith.mulf %1671, %1670 : vector<14x128xf32>
      %1673 = arith.addf %1651, %1672 : vector<14x128xf32>
      %1674 = vector.broadcast %18 : f32 to vector<14x128xf32>
      %1675 = arith.mulf %1674, %1670 : vector<14x128xf32>
      %1676 = arith.addf %1657, %1675 : vector<14x128xf32>
      %c1_741 = arith.constant 1 : index
      %c24_742 = arith.constant 24 : index
      %c0_743 = arith.constant 0 : index
      %c0_744 = arith.constant 0 : index
      %1677 = vector.load %arg3[%c1_741, %c24_742, %c0_743, %c0_744] : memref<4x30x14x128xf32, #tpu.memory_space<vmem>>, vector<1x1x14x128xf32>
      %1678 = vector.shape_cast %1677 : vector<1x1x14x128xf32> to vector<14x128xf32>
      %1679 = vector.broadcast %34 : f32 to vector<14x128xf32>
      %1680 = arith.mulf %1679, %1678 : vector<14x128xf32>
      %1681 = arith.addf %1673, %1680 : vector<14x128xf32>
      %1682 = vector.broadcast %30 : f32 to vector<14x128xf32>
      %1683 = arith.mulf %1682, %1678 : vector<14x128xf32>
      %1684 = arith.addf %1665, %1683 : vector<14x128xf32>
      %1685 = vector.broadcast %22 : f32 to vector<14x128xf32>
      %1686 = arith.mulf %1685, %1678 : vector<14x128xf32>
      %1687 = arith.addf %1676, %1686 : vector<14x128xf32>
      %1688 = vector.broadcast %18 : f32 to vector<14x128xf32>
      %1689 = arith.mulf %1688, %1678 : vector<14x128xf32>
      %1690 = arith.addf %1668, %1689 : vector<14x128xf32>
      %c2_745 = arith.constant 2 : index
      %c24_746 = arith.constant 24 : index
      %c0_747 = arith.constant 0 : index
      %c0_748 = arith.constant 0 : index
      %1691 = vector.load %arg3[%c2_745, %c24_746, %c0_747, %c0_748] : memref<4x30x14x128xf32, #tpu.memory_space<vmem>>, vector<1x1x14x128xf32>
      %1692 = vector.shape_cast %1691 : vector<1x1x14x128xf32> to vector<14x128xf32>
      %1693 = vector.broadcast %38 : f32 to vector<14x128xf32>
      %1694 = arith.mulf %1693, %1692 : vector<14x128xf32>
      %1695 = arith.addf %1681, %1694 : vector<14x128xf32>
      %1696 = vector.broadcast %34 : f32 to vector<14x128xf32>
      %1697 = arith.mulf %1696, %1692 : vector<14x128xf32>
      %1698 = arith.addf %1684, %1697 : vector<14x128xf32>
      %1699 = vector.broadcast %26 : f32 to vector<14x128xf32>
      %1700 = arith.mulf %1699, %1692 : vector<14x128xf32>
      %1701 = arith.addf %1687, %1700 : vector<14x128xf32>
      %1702 = vector.broadcast %22 : f32 to vector<14x128xf32>
      %1703 = arith.mulf %1702, %1692 : vector<14x128xf32>
      %1704 = arith.addf %1690, %1703 : vector<14x128xf32>
      %c3_749 = arith.constant 3 : index
      %c24_750 = arith.constant 24 : index
      %c0_751 = arith.constant 0 : index
      %c0_752 = arith.constant 0 : index
      %1705 = vector.load %arg3[%c3_749, %c24_750, %c0_751, %c0_752] : memref<4x30x14x128xf32, #tpu.memory_space<vmem>>, vector<1x1x14x128xf32>
      %1706 = vector.shape_cast %1705 : vector<1x1x14x128xf32> to vector<14x128xf32>
      %1707 = vector.broadcast %38 : f32 to vector<14x128xf32>
      %1708 = arith.mulf %1707, %1706 : vector<14x128xf32>
      %1709 = arith.addf %1698, %1708 : vector<14x128xf32>
      %1710 = vector.broadcast %26 : f32 to vector<14x128xf32>
      %1711 = arith.mulf %1710, %1706 : vector<14x128xf32>
      %1712 = arith.addf %1704, %1711 : vector<14x128xf32>
      %c0_753 = arith.constant 0 : index
      %c25 = arith.constant 25 : index
      %c0_754 = arith.constant 0 : index
      %c0_755 = arith.constant 0 : index
      %1713 = vector.load %arg3[%c0_753, %c25, %c0_754, %c0_755] : memref<4x30x14x128xf32, #tpu.memory_space<vmem>>, vector<1x1x14x128xf32>
      %1714 = vector.shape_cast %1713 : vector<1x1x14x128xf32> to vector<14x128xf32>
      %1715 = vector.broadcast %30 : f32 to vector<14x128xf32>
      %1716 = arith.mulf %1715, %1714 : vector<14x128xf32>
      %1717 = arith.addf %1701, %1716 : vector<14x128xf32>
      %c1_756 = arith.constant 1 : index
      %c25_757 = arith.constant 25 : index
      %c0_758 = arith.constant 0 : index
      %c0_759 = arith.constant 0 : index
      %1718 = vector.load %arg3[%c1_756, %c25_757, %c0_758, %c0_759] : memref<4x30x14x128xf32, #tpu.memory_space<vmem>>, vector<1x1x14x128xf32>
      %1719 = vector.shape_cast %1718 : vector<1x1x14x128xf32> to vector<14x128xf32>
      %1720 = vector.broadcast %34 : f32 to vector<14x128xf32>
      %1721 = arith.mulf %1720, %1719 : vector<14x128xf32>
      %1722 = arith.addf %1717, %1721 : vector<14x128xf32>
      %1723 = vector.broadcast %30 : f32 to vector<14x128xf32>
      %1724 = arith.mulf %1723, %1719 : vector<14x128xf32>
      %1725 = arith.addf %1712, %1724 : vector<14x128xf32>
      %c2_760 = arith.constant 2 : index
      %c25_761 = arith.constant 25 : index
      %c0_762 = arith.constant 0 : index
      %c0_763 = arith.constant 0 : index
      %1726 = vector.load %arg3[%c2_760, %c25_761, %c0_762, %c0_763] : memref<4x30x14x128xf32, #tpu.memory_space<vmem>>, vector<1x1x14x128xf32>
      %1727 = vector.shape_cast %1726 : vector<1x1x14x128xf32> to vector<14x128xf32>
      %1728 = vector.broadcast %38 : f32 to vector<14x128xf32>
      %1729 = arith.mulf %1728, %1727 : vector<14x128xf32>
      %1730 = arith.addf %1722, %1729 : vector<14x128xf32>
      %1731 = vector.broadcast %34 : f32 to vector<14x128xf32>
      %1732 = arith.mulf %1731, %1727 : vector<14x128xf32>
      %1733 = arith.addf %1725, %1732 : vector<14x128xf32>
      %c3_764 = arith.constant 3 : index
      %c25_765 = arith.constant 25 : index
      %c0_766 = arith.constant 0 : index
      %c0_767 = arith.constant 0 : index
      %1734 = vector.load %arg3[%c3_764, %c25_765, %c0_766, %c0_767] : memref<4x30x14x128xf32, #tpu.memory_space<vmem>>, vector<1x1x14x128xf32>
      %1735 = vector.shape_cast %1734 : vector<1x1x14x128xf32> to vector<14x128xf32>
      %1736 = vector.broadcast %38 : f32 to vector<14x128xf32>
      %1737 = arith.mulf %1736, %1735 : vector<14x128xf32>
      %1738 = arith.addf %1733, %1737 : vector<14x128xf32>
      %1739 = arith.maximumf %1695, %1709 : vector<14x128xf32>
      %1740 = arith.maximumf %1730, %1738 : vector<14x128xf32>
      %1741 = arith.maximumf %1739, %1740 : vector<14x128xf32>
      %1742 = vector.broadcast %40 : f32 to vector<14x128xf32>
      %1743 = arith.addf %1741, %1742 : vector<14x128xf32>
      %c176 = arith.constant 176 : index
      %c0_768 = arith.constant 0 : index
      %1744 = vector.load %arg7[%c176, %c0_768] : memref<224x128xf32, #tpu.memory_space<vmem>>, vector<14x128xf32>
      tpu.vector_store %arg7[%c176, %c0_768], %1743 {strides = array<i32>} : memref<224x128xf32, #tpu.memory_space<vmem>>, vector<14x128xf32>,
      %c0_769 = arith.constant 0 : index
      %c24_770 = arith.constant 24 : index
      %c0_771 = arith.constant 0 : index
      %c0_772 = arith.constant 0 : index
      %1745 = vector.load %arg3[%c0_769, %c24_770, %c0_771, %c0_772] : memref<4x30x14x128xf32, #tpu.memory_space<vmem>>, vector<1x1x14x128xf32>
      %1746 = vector.shape_cast %1745 : vector<1x1x14x128xf32> to vector<14x128xf32>
      %1747 = vector.broadcast %6 : f32 to vector<14x128xf32>
      %1748 = arith.mulf %1747, %1746 : vector<14x128xf32>
      %c1_773 = arith.constant 1 : index
      %c24_774 = arith.constant 24 : index
      %c0_775 = arith.constant 0 : index
      %c0_776 = arith.constant 0 : index
      %1749 = vector.load %arg3[%c1_773, %c24_774, %c0_775, %c0_776] : memref<4x30x14x128xf32, #tpu.memory_space<vmem>>, vector<1x1x14x128xf32>
      %1750 = vector.shape_cast %1749 : vector<1x1x14x128xf32> to vector<14x128xf32>
      %1751 = vector.broadcast %10 : f32 to vector<14x128xf32>
      %1752 = arith.mulf %1751, %1750 : vector<14x128xf32>
      %1753 = arith.addf %1748, %1752 : vector<14x128xf32>
      %1754 = vector.broadcast %6 : f32 to vector<14x128xf32>
      %1755 = arith.mulf %1754, %1750 : vector<14x128xf32>
      %c2_777 = arith.constant 2 : index
      %c24_778 = arith.constant 24 : index
      %c0_779 = arith.constant 0 : index
      %c0_780 = arith.constant 0 : index
      %1756 = vector.load %arg3[%c2_777, %c24_778, %c0_779, %c0_780] : memref<4x30x14x128xf32, #tpu.memory_space<vmem>>, vector<1x1x14x128xf32>
      %1757 = vector.shape_cast %1756 : vector<1x1x14x128xf32> to vector<14x128xf32>
      %1758 = vector.broadcast %14 : f32 to vector<14x128xf32>
      %1759 = arith.mulf %1758, %1757 : vector<14x128xf32>
      %1760 = arith.addf %1753, %1759 : vector<14x128xf32>
      %1761 = vector.broadcast %10 : f32 to vector<14x128xf32>
      %1762 = arith.mulf %1761, %1757 : vector<14x128xf32>
      %1763 = arith.addf %1755, %1762 : vector<14x128xf32>
      %c3_781 = arith.constant 3 : index
      %c24_782 = arith.constant 24 : index
      %c0_783 = arith.constant 0 : index
      %c0_784 = arith.constant 0 : index
      %1764 = vector.load %arg3[%c3_781, %c24_782, %c0_783, %c0_784] : memref<4x30x14x128xf32, #tpu.memory_space<vmem>>, vector<1x1x14x128xf32>
      %1765 = vector.shape_cast %1764 : vector<1x1x14x128xf32> to vector<14x128xf32>
      %1766 = vector.broadcast %14 : f32 to vector<14x128xf32>
      %1767 = arith.mulf %1766, %1765 : vector<14x128xf32>
      %1768 = arith.addf %1763, %1767 : vector<14x128xf32>
      %c0_785 = arith.constant 0 : index
      %c25_786 = arith.constant 25 : index
      %c0_787 = arith.constant 0 : index
      %c0_788 = arith.constant 0 : index
      %1769 = vector.load %arg3[%c0_785, %c25_786, %c0_787, %c0_788] : memref<4x30x14x128xf32, #tpu.memory_space<vmem>>, vector<1x1x14x128xf32>
      %1770 = vector.shape_cast %1769 : vector<1x1x14x128xf32> to vector<14x128xf32>
      %1771 = vector.broadcast %18 : f32 to vector<14x128xf32>
      %1772 = arith.mulf %1771, %1770 : vector<14x128xf32>
      %1773 = arith.addf %1760, %1772 : vector<14x128xf32>
      %1774 = vector.broadcast %6 : f32 to vector<14x128xf32>
      %1775 = arith.mulf %1774, %1770 : vector<14x128xf32>
      %c1_789 = arith.constant 1 : index
      %c25_790 = arith.constant 25 : index
      %c0_791 = arith.constant 0 : index
      %c0_792 = arith.constant 0 : index
      %1776 = vector.load %arg3[%c1_789, %c25_790, %c0_791, %c0_792] : memref<4x30x14x128xf32, #tpu.memory_space<vmem>>, vector<1x1x14x128xf32>
      %1777 = vector.shape_cast %1776 : vector<1x1x14x128xf32> to vector<14x128xf32>
      %1778 = vector.broadcast %22 : f32 to vector<14x128xf32>
      %1779 = arith.mulf %1778, %1777 : vector<14x128xf32>
      %1780 = arith.addf %1773, %1779 : vector<14x128xf32>
      %1781 = vector.broadcast %18 : f32 to vector<14x128xf32>
      %1782 = arith.mulf %1781, %1777 : vector<14x128xf32>
      %1783 = arith.addf %1768, %1782 : vector<14x128xf32>
      %1784 = vector.broadcast %10 : f32 to vector<14x128xf32>
      %1785 = arith.mulf %1784, %1777 : vector<14x128xf32>
      %1786 = arith.addf %1775, %1785 : vector<14x128xf32>
      %1787 = vector.broadcast %6 : f32 to vector<14x128xf32>
      %1788 = arith.mulf %1787, %1777 : vector<14x128xf32>
      %c2_793 = arith.constant 2 : index
      %c25_794 = arith.constant 25 : index
      %c0_795 = arith.constant 0 : index
      %c0_796 = arith.constant 0 : index
      %1789 = vector.load %arg3[%c2_793, %c25_794, %c0_795, %c0_796] : memref<4x30x14x128xf32, #tpu.memory_space<vmem>>, vector<1x1x14x128xf32>
      %1790 = vector.shape_cast %1789 : vector<1x1x14x128xf32> to vector<14x128xf32>
      %1791 = vector.broadcast %26 : f32 to vector<14x128xf32>
      %1792 = arith.mulf %1791, %1790 : vector<14x128xf32>
      %1793 = arith.addf %1780, %1792 : vector<14x128xf32>
      %1794 = vector.broadcast %22 : f32 to vector<14x128xf32>
      %1795 = arith.mulf %1794, %1790 : vector<14x128xf32>
      %1796 = arith.addf %1783, %1795 : vector<14x128xf32>
      %1797 = vector.broadcast %14 : f32 to vector<14x128xf32>
      %1798 = arith.mulf %1797, %1790 : vector<14x128xf32>
      %1799 = arith.addf %1786, %1798 : vector<14x128xf32>
      %1800 = vector.broadcast %10 : f32 to vector<14x128xf32>
      %1801 = arith.mulf %1800, %1790 : vector<14x128xf32>
      %1802 = arith.addf %1788, %1801 : vector<14x128xf32>
      %c3_797 = arith.constant 3 : index
      %c25_798 = arith.constant 25 : index
      %c0_799 = arith.constant 0 : index
      %c0_800 = arith.constant 0 : index
      %1803 = vector.load %arg3[%c3_797, %c25_798, %c0_799, %c0_800] : memref<4x30x14x128xf32, #tpu.memory_space<vmem>>, vector<1x1x14x128xf32>
      %1804 = vector.shape_cast %1803 : vector<1x1x14x128xf32> to vector<14x128xf32>
      %1805 = vector.broadcast %26 : f32 to vector<14x128xf32>
      %1806 = arith.mulf %1805, %1804 : vector<14x128xf32>
      %1807 = arith.addf %1796, %1806 : vector<14x128xf32>
      %1808 = vector.broadcast %14 : f32 to vector<14x128xf32>
      %1809 = arith.mulf %1808, %1804 : vector<14x128xf32>
      %1810 = arith.addf %1802, %1809 : vector<14x128xf32>
      %c0_801 = arith.constant 0 : index
      %c26 = arith.constant 26 : index
      %c0_802 = arith.constant 0 : index
      %c0_803 = arith.constant 0 : index
      %1811 = vector.load %arg3[%c0_801, %c26, %c0_802, %c0_803] : memref<4x30x14x128xf32, #tpu.memory_space<vmem>>, vector<1x1x14x128xf32>
      %1812 = vector.shape_cast %1811 : vector<1x1x14x128xf32> to vector<14x128xf32>
      %1813 = vector.broadcast %30 : f32 to vector<14x128xf32>
      %1814 = arith.mulf %1813, %1812 : vector<14x128xf32>
      %1815 = arith.addf %1793, %1814 : vector<14x128xf32>
      %1816 = vector.broadcast %18 : f32 to vector<14x128xf32>
      %1817 = arith.mulf %1816, %1812 : vector<14x128xf32>
      %1818 = arith.addf %1799, %1817 : vector<14x128xf32>
      %c1_804 = arith.constant 1 : index
      %c26_805 = arith.constant 26 : index
      %c0_806 = arith.constant 0 : index
      %c0_807 = arith.constant 0 : index
      %1819 = vector.load %arg3[%c1_804, %c26_805, %c0_806, %c0_807] : memref<4x30x14x128xf32, #tpu.memory_space<vmem>>, vector<1x1x14x128xf32>
      %1820 = vector.shape_cast %1819 : vector<1x1x14x128xf32> to vector<14x128xf32>
      %1821 = vector.broadcast %34 : f32 to vector<14x128xf32>
      %1822 = arith.mulf %1821, %1820 : vector<14x128xf32>
      %1823 = arith.addf %1815, %1822 : vector<14x128xf32>
      %1824 = vector.broadcast %30 : f32 to vector<14x128xf32>
      %1825 = arith.mulf %1824, %1820 : vector<14x128xf32>
      %1826 = arith.addf %1807, %1825 : vector<14x128xf32>
      %1827 = vector.broadcast %22 : f32 to vector<14x128xf32>
      %1828 = arith.mulf %1827, %1820 : vector<14x128xf32>
      %1829 = arith.addf %1818, %1828 : vector<14x128xf32>
      %1830 = vector.broadcast %18 : f32 to vector<14x128xf32>
      %1831 = arith.mulf %1830, %1820 : vector<14x128xf32>
      %1832 = arith.addf %1810, %1831 : vector<14x128xf32>
      %c2_808 = arith.constant 2 : index
      %c26_809 = arith.constant 26 : index
      %c0_810 = arith.constant 0 : index
      %c0_811 = arith.constant 0 : index
      %1833 = vector.load %arg3[%c2_808, %c26_809, %c0_810, %c0_811] : memref<4x30x14x128xf32, #tpu.memory_space<vmem>>, vector<1x1x14x128xf32>
      %1834 = vector.shape_cast %1833 : vector<1x1x14x128xf32> to vector<14x128xf32>
      %1835 = vector.broadcast %38 : f32 to vector<14x128xf32>
      %1836 = arith.mulf %1835, %1834 : vector<14x128xf32>
      %1837 = arith.addf %1823, %1836 : vector<14x128xf32>
      %1838 = vector.broadcast %34 : f32 to vector<14x128xf32>
      %1839 = arith.mulf %1838, %1834 : vector<14x128xf32>
      %1840 = arith.addf %1826, %1839 : vector<14x128xf32>
      %1841 = vector.broadcast %26 : f32 to vector<14x128xf32>
      %1842 = arith.mulf %1841, %1834 : vector<14x128xf32>
      %1843 = arith.addf %1829, %1842 : vector<14x128xf32>
      %1844 = vector.broadcast %22 : f32 to vector<14x128xf32>
      %1845 = arith.mulf %1844, %1834 : vector<14x128xf32>
      %1846 = arith.addf %1832, %1845 : vector<14x128xf32>
      %c3_812 = arith.constant 3 : index
      %c26_813 = arith.constant 26 : index
      %c0_814 = arith.constant 0 : index
      %c0_815 = arith.constant 0 : index
      %1847 = vector.load %arg3[%c3_812, %c26_813, %c0_814, %c0_815] : memref<4x30x14x128xf32, #tpu.memory_space<vmem>>, vector<1x1x14x128xf32>
      %1848 = vector.shape_cast %1847 : vector<1x1x14x128xf32> to vector<14x128xf32>
      %1849 = vector.broadcast %38 : f32 to vector<14x128xf32>
      %1850 = arith.mulf %1849, %1848 : vector<14x128xf32>
      %1851 = arith.addf %1840, %1850 : vector<14x128xf32>
      %1852 = vector.broadcast %26 : f32 to vector<14x128xf32>
      %1853 = arith.mulf %1852, %1848 : vector<14x128xf32>
      %1854 = arith.addf %1846, %1853 : vector<14x128xf32>
      %c0_816 = arith.constant 0 : index
      %c27 = arith.constant 27 : index
      %c0_817 = arith.constant 0 : index
      %c0_818 = arith.constant 0 : index
      %1855 = vector.load %arg3[%c0_816, %c27, %c0_817, %c0_818] : memref<4x30x14x128xf32, #tpu.memory_space<vmem>>, vector<1x1x14x128xf32>
      %1856 = vector.shape_cast %1855 : vector<1x1x14x128xf32> to vector<14x128xf32>
      %1857 = vector.broadcast %30 : f32 to vector<14x128xf32>
      %1858 = arith.mulf %1857, %1856 : vector<14x128xf32>
      %1859 = arith.addf %1843, %1858 : vector<14x128xf32>
      %c1_819 = arith.constant 1 : index
      %c27_820 = arith.constant 27 : index
      %c0_821 = arith.constant 0 : index
      %c0_822 = arith.constant 0 : index
      %1860 = vector.load %arg3[%c1_819, %c27_820, %c0_821, %c0_822] : memref<4x30x14x128xf32, #tpu.memory_space<vmem>>, vector<1x1x14x128xf32>
      %1861 = vector.shape_cast %1860 : vector<1x1x14x128xf32> to vector<14x128xf32>
      %1862 = vector.broadcast %34 : f32 to vector<14x128xf32>
      %1863 = arith.mulf %1862, %1861 : vector<14x128xf32>
      %1864 = arith.addf %1859, %1863 : vector<14x128xf32>
      %1865 = vector.broadcast %30 : f32 to vector<14x128xf32>
      %1866 = arith.mulf %1865, %1861 : vector<14x128xf32>
      %1867 = arith.addf %1854, %1866 : vector<14x128xf32>
      %c2_823 = arith.constant 2 : index
      %c27_824 = arith.constant 27 : index
      %c0_825 = arith.constant 0 : index
      %c0_826 = arith.constant 0 : index
      %1868 = vector.load %arg3[%c2_823, %c27_824, %c0_825, %c0_826] : memref<4x30x14x128xf32, #tpu.memory_space<vmem>>, vector<1x1x14x128xf32>
      %1869 = vector.shape_cast %1868 : vector<1x1x14x128xf32> to vector<14x128xf32>
      %1870 = vector.broadcast %38 : f32 to vector<14x128xf32>
      %1871 = arith.mulf %1870, %1869 : vector<14x128xf32>
      %1872 = arith.addf %1864, %1871 : vector<14x128xf32>
      %1873 = vector.broadcast %34 : f32 to vector<14x128xf32>
      %1874 = arith.mulf %1873, %1869 : vector<14x128xf32>
      %1875 = arith.addf %1867, %1874 : vector<14x128xf32>
      %c3_827 = arith.constant 3 : index
      %c27_828 = arith.constant 27 : index
      %c0_829 = arith.constant 0 : index
      %c0_830 = arith.constant 0 : index
      %1876 = vector.load %arg3[%c3_827, %c27_828, %c0_829, %c0_830] : memref<4x30x14x128xf32, #tpu.memory_space<vmem>>, vector<1x1x14x128xf32>
      %1877 = vector.shape_cast %1876 : vector<1x1x14x128xf32> to vector<14x128xf32>
      %1878 = vector.broadcast %38 : f32 to vector<14x128xf32>
      %1879 = arith.mulf %1878, %1877 : vector<14x128xf32>
      %1880 = arith.addf %1875, %1879 : vector<14x128xf32>
      %1881 = arith.maximumf %1837, %1851 : vector<14x128xf32>
      %1882 = arith.maximumf %1872, %1880 : vector<14x128xf32>
      %1883 = arith.maximumf %1881, %1882 : vector<14x128xf32>
      %1884 = vector.broadcast %40 : f32 to vector<14x128xf32>
      %1885 = arith.addf %1883, %1884 : vector<14x128xf32>
      %c192 = arith.constant 192 : index
      %c0_831 = arith.constant 0 : index
      %1886 = vector.load %arg7[%c192, %c0_831] : memref<224x128xf32, #tpu.memory_space<vmem>>, vector<14x128xf32>
      tpu.vector_store %arg7[%c192, %c0_831], %1885 {strides = array<i32>} : memref<224x128xf32, #tpu.memory_space<vmem>>, vector<14x128xf32>,
      %c0_832 = arith.constant 0 : index
      %c26_833 = arith.constant 26 : index
      %c0_834 = arith.constant 0 : index
      %c0_835 = arith.constant 0 : index
      %1887 = vector.load %arg3[%c0_832, %c26_833, %c0_834, %c0_835] : memref<4x30x14x128xf32, #tpu.memory_space<vmem>>, vector<1x1x14x128xf32>
      %1888 = vector.shape_cast %1887 : vector<1x1x14x128xf32> to vector<14x128xf32>
      %1889 = vector.broadcast %6 : f32 to vector<14x128xf32>
      %1890 = arith.mulf %1889, %1888 : vector<14x128xf32>
      %c1_836 = arith.constant 1 : index
      %c26_837 = arith.constant 26 : index
      %c0_838 = arith.constant 0 : index
      %c0_839 = arith.constant 0 : index
      %1891 = vector.load %arg3[%c1_836, %c26_837, %c0_838, %c0_839] : memref<4x30x14x128xf32, #tpu.memory_space<vmem>>, vector<1x1x14x128xf32>
      %1892 = vector.shape_cast %1891 : vector<1x1x14x128xf32> to vector<14x128xf32>
      %1893 = vector.broadcast %10 : f32 to vector<14x128xf32>
      %1894 = arith.mulf %1893, %1892 : vector<14x128xf32>
      %1895 = arith.addf %1890, %1894 : vector<14x128xf32>
      %1896 = vector.broadcast %6 : f32 to vector<14x128xf32>
      %1897 = arith.mulf %1896, %1892 : vector<14x128xf32>
      %c2_840 = arith.constant 2 : index
      %c26_841 = arith.constant 26 : index
      %c0_842 = arith.constant 0 : index
      %c0_843 = arith.constant 0 : index
      %1898 = vector.load %arg3[%c2_840, %c26_841, %c0_842, %c0_843] : memref<4x30x14x128xf32, #tpu.memory_space<vmem>>, vector<1x1x14x128xf32>
      %1899 = vector.shape_cast %1898 : vector<1x1x14x128xf32> to vector<14x128xf32>
      %1900 = vector.broadcast %14 : f32 to vector<14x128xf32>
      %1901 = arith.mulf %1900, %1899 : vector<14x128xf32>
      %1902 = arith.addf %1895, %1901 : vector<14x128xf32>
      %1903 = vector.broadcast %10 : f32 to vector<14x128xf32>
      %1904 = arith.mulf %1903, %1899 : vector<14x128xf32>
      %1905 = arith.addf %1897, %1904 : vector<14x128xf32>
      %c3_844 = arith.constant 3 : index
      %c26_845 = arith.constant 26 : index
      %c0_846 = arith.constant 0 : index
      %c0_847 = arith.constant 0 : index
      %1906 = vector.load %arg3[%c3_844, %c26_845, %c0_846, %c0_847] : memref<4x30x14x128xf32, #tpu.memory_space<vmem>>, vector<1x1x14x128xf32>
      %1907 = vector.shape_cast %1906 : vector<1x1x14x128xf32> to vector<14x128xf32>
      %1908 = vector.broadcast %14 : f32 to vector<14x128xf32>
      %1909 = arith.mulf %1908, %1907 : vector<14x128xf32>
      %1910 = arith.addf %1905, %1909 : vector<14x128xf32>
      %c0_848 = arith.constant 0 : index
      %c27_849 = arith.constant 27 : index
      %c0_850 = arith.constant 0 : index
      %c0_851 = arith.constant 0 : index
      %1911 = vector.load %arg3[%c0_848, %c27_849, %c0_850, %c0_851] : memref<4x30x14x128xf32, #tpu.memory_space<vmem>>, vector<1x1x14x128xf32>
      %1912 = vector.shape_cast %1911 : vector<1x1x14x128xf32> to vector<14x128xf32>
      %1913 = vector.broadcast %18 : f32 to vector<14x128xf32>
      %1914 = arith.mulf %1913, %1912 : vector<14x128xf32>
      %1915 = arith.addf %1902, %1914 : vector<14x128xf32>
      %1916 = vector.broadcast %6 : f32 to vector<14x128xf32>
      %1917 = arith.mulf %1916, %1912 : vector<14x128xf32>
      %c1_852 = arith.constant 1 : index
      %c27_853 = arith.constant 27 : index
      %c0_854 = arith.constant 0 : index
      %c0_855 = arith.constant 0 : index
      %1918 = vector.load %arg3[%c1_852, %c27_853, %c0_854, %c0_855] : memref<4x30x14x128xf32, #tpu.memory_space<vmem>>, vector<1x1x14x128xf32>
      %1919 = vector.shape_cast %1918 : vector<1x1x14x128xf32> to vector<14x128xf32>
      %1920 = vector.broadcast %22 : f32 to vector<14x128xf32>
      %1921 = arith.mulf %1920, %1919 : vector<14x128xf32>
      %1922 = arith.addf %1915, %1921 : vector<14x128xf32>
      %1923 = vector.broadcast %18 : f32 to vector<14x128xf32>
      %1924 = arith.mulf %1923, %1919 : vector<14x128xf32>
      %1925 = arith.addf %1910, %1924 : vector<14x128xf32>
      %1926 = vector.broadcast %10 : f32 to vector<14x128xf32>
      %1927 = arith.mulf %1926, %1919 : vector<14x128xf32>
      %1928 = arith.addf %1917, %1927 : vector<14x128xf32>
      %1929 = vector.broadcast %6 : f32 to vector<14x128xf32>
      %1930 = arith.mulf %1929, %1919 : vector<14x128xf32>
      %c2_856 = arith.constant 2 : index
      %c27_857 = arith.constant 27 : index
      %c0_858 = arith.constant 0 : index
      %c0_859 = arith.constant 0 : index
      %1931 = vector.load %arg3[%c2_856, %c27_857, %c0_858, %c0_859] : memref<4x30x14x128xf32, #tpu.memory_space<vmem>>, vector<1x1x14x128xf32>
      %1932 = vector.shape_cast %1931 : vector<1x1x14x128xf32> to vector<14x128xf32>
      %1933 = vector.broadcast %26 : f32 to vector<14x128xf32>
      %1934 = arith.mulf %1933, %1932 : vector<14x128xf32>
      %1935 = arith.addf %1922, %1934 : vector<14x128xf32>
      %1936 = vector.broadcast %22 : f32 to vector<14x128xf32>
      %1937 = arith.mulf %1936, %1932 : vector<14x128xf32>
      %1938 = arith.addf %1925, %1937 : vector<14x128xf32>
      %1939 = vector.broadcast %14 : f32 to vector<14x128xf32>
      %1940 = arith.mulf %1939, %1932 : vector<14x128xf32>
      %1941 = arith.addf %1928, %1940 : vector<14x128xf32>
      %1942 = vector.broadcast %10 : f32 to vector<14x128xf32>
      %1943 = arith.mulf %1942, %1932 : vector<14x128xf32>
      %1944 = arith.addf %1930, %1943 : vector<14x128xf32>
      %c3_860 = arith.constant 3 : index
      %c27_861 = arith.constant 27 : index
      %c0_862 = arith.constant 0 : index
      %c0_863 = arith.constant 0 : index
      %1945 = vector.load %arg3[%c3_860, %c27_861, %c0_862, %c0_863] : memref<4x30x14x128xf32, #tpu.memory_space<vmem>>, vector<1x1x14x128xf32>
      %1946 = vector.shape_cast %1945 : vector<1x1x14x128xf32> to vector<14x128xf32>
      %1947 = vector.broadcast %26 : f32 to vector<14x128xf32>
      %1948 = arith.mulf %1947, %1946 : vector<14x128xf32>
      %1949 = arith.addf %1938, %1948 : vector<14x128xf32>
      %1950 = vector.broadcast %14 : f32 to vector<14x128xf32>
      %1951 = arith.mulf %1950, %1946 : vector<14x128xf32>
      %1952 = arith.addf %1944, %1951 : vector<14x128xf32>
      %c0_864 = arith.constant 0 : index
      %c28 = arith.constant 28 : index
      %c0_865 = arith.constant 0 : index
      %c0_866 = arith.constant 0 : index
      %1953 = vector.load %arg3[%c0_864, %c28, %c0_865, %c0_866] : memref<4x30x14x128xf32, #tpu.memory_space<vmem>>, vector<1x1x14x128xf32>
      %1954 = vector.shape_cast %1953 : vector<1x1x14x128xf32> to vector<14x128xf32>
      %1955 = vector.broadcast %30 : f32 to vector<14x128xf32>
      %1956 = arith.mulf %1955, %1954 : vector<14x128xf32>
      %1957 = arith.addf %1935, %1956 : vector<14x128xf32>
      %1958 = vector.broadcast %18 : f32 to vector<14x128xf32>
      %1959 = arith.mulf %1958, %1954 : vector<14x128xf32>
      %1960 = arith.addf %1941, %1959 : vector<14x128xf32>
      %c1_867 = arith.constant 1 : index
      %c28_868 = arith.constant 28 : index
      %c0_869 = arith.constant 0 : index
      %c0_870 = arith.constant 0 : index
      %1961 = vector.load %arg3[%c1_867, %c28_868, %c0_869, %c0_870] : memref<4x30x14x128xf32, #tpu.memory_space<vmem>>, vector<1x1x14x128xf32>
      %1962 = vector.shape_cast %1961 : vector<1x1x14x128xf32> to vector<14x128xf32>
      %1963 = vector.broadcast %34 : f32 to vector<14x128xf32>
      %1964 = arith.mulf %1963, %1962 : vector<14x128xf32>
      %1965 = arith.addf %1957, %1964 : vector<14x128xf32>
      %1966 = vector.broadcast %30 : f32 to vector<14x128xf32>
      %1967 = arith.mulf %1966, %1962 : vector<14x128xf32>
      %1968 = arith.addf %1949, %1967 : vector<14x128xf32>
      %1969 = vector.broadcast %22 : f32 to vector<14x128xf32>
      %1970 = arith.mulf %1969, %1962 : vector<14x128xf32>
      %1971 = arith.addf %1960, %1970 : vector<14x128xf32>
      %1972 = vector.broadcast %18 : f32 to vector<14x128xf32>
      %1973 = arith.mulf %1972, %1962 : vector<14x128xf32>
      %1974 = arith.addf %1952, %1973 : vector<14x128xf32>
      %c2_871 = arith.constant 2 : index
      %c28_872 = arith.constant 28 : index
      %c0_873 = arith.constant 0 : index
      %c0_874 = arith.constant 0 : index
      %1975 = vector.load %arg3[%c2_871, %c28_872, %c0_873, %c0_874] : memref<4x30x14x128xf32, #tpu.memory_space<vmem>>, vector<1x1x14x128xf32>
      %1976 = vector.shape_cast %1975 : vector<1x1x14x128xf32> to vector<14x128xf32>
      %1977 = vector.broadcast %38 : f32 to vector<14x128xf32>
      %1978 = arith.mulf %1977, %1976 : vector<14x128xf32>
      %1979 = arith.addf %1965, %1978 : vector<14x128xf32>
      %1980 = vector.broadcast %34 : f32 to vector<14x128xf32>
      %1981 = arith.mulf %1980, %1976 : vector<14x128xf32>
      %1982 = arith.addf %1968, %1981 : vector<14x128xf32>
      %1983 = vector.broadcast %26 : f32 to vector<14x128xf32>
      %1984 = arith.mulf %1983, %1976 : vector<14x128xf32>
      %1985 = arith.addf %1971, %1984 : vector<14x128xf32>
      %1986 = vector.broadcast %22 : f32 to vector<14x128xf32>
      %1987 = arith.mulf %1986, %1976 : vector<14x128xf32>
      %1988 = arith.addf %1974, %1987 : vector<14x128xf32>
      %c3_875 = arith.constant 3 : index
      %c28_876 = arith.constant 28 : index
      %c0_877 = arith.constant 0 : index
      %c0_878 = arith.constant 0 : index
      %1989 = vector.load %arg3[%c3_875, %c28_876, %c0_877, %c0_878] : memref<4x30x14x128xf32, #tpu.memory_space<vmem>>, vector<1x1x14x128xf32>
      %1990 = vector.shape_cast %1989 : vector<1x1x14x128xf32> to vector<14x128xf32>
      %1991 = vector.broadcast %38 : f32 to vector<14x128xf32>
      %1992 = arith.mulf %1991, %1990 : vector<14x128xf32>
      %1993 = arith.addf %1982, %1992 : vector<14x128xf32>
      %1994 = vector.broadcast %26 : f32 to vector<14x128xf32>
      %1995 = arith.mulf %1994, %1990 : vector<14x128xf32>
      %1996 = arith.addf %1988, %1995 : vector<14x128xf32>
      %c0_879 = arith.constant 0 : index
      %c29 = arith.constant 29 : index
      %c0_880 = arith.constant 0 : index
      %c0_881 = arith.constant 0 : index
      %1997 = vector.load %arg3[%c0_879, %c29, %c0_880, %c0_881] : memref<4x30x14x128xf32, #tpu.memory_space<vmem>>, vector<1x1x14x128xf32>
      %1998 = vector.shape_cast %1997 : vector<1x1x14x128xf32> to vector<14x128xf32>
      %1999 = vector.broadcast %30 : f32 to vector<14x128xf32>
      %2000 = arith.mulf %1999, %1998 : vector<14x128xf32>
      %2001 = arith.addf %1985, %2000 : vector<14x128xf32>
      %c1_882 = arith.constant 1 : index
      %c29_883 = arith.constant 29 : index
      %c0_884 = arith.constant 0 : index
      %c0_885 = arith.constant 0 : index
      %2002 = vector.load %arg3[%c1_882, %c29_883, %c0_884, %c0_885] : memref<4x30x14x128xf32, #tpu.memory_space<vmem>>, vector<1x1x14x128xf32>
      %2003 = vector.shape_cast %2002 : vector<1x1x14x128xf32> to vector<14x128xf32>
      %2004 = vector.broadcast %34 : f32 to vector<14x128xf32>
      %2005 = arith.mulf %2004, %2003 : vector<14x128xf32>
      %2006 = arith.addf %2001, %2005 : vector<14x128xf32>
      %2007 = vector.broadcast %30 : f32 to vector<14x128xf32>
      %2008 = arith.mulf %2007, %2003 : vector<14x128xf32>
      %2009 = arith.addf %1996, %2008 : vector<14x128xf32>
      %c2_886 = arith.constant 2 : index
      %c29_887 = arith.constant 29 : index
      %c0_888 = arith.constant 0 : index
      %c0_889 = arith.constant 0 : index
      %2010 = vector.load %arg3[%c2_886, %c29_887, %c0_888, %c0_889] : memref<4x30x14x128xf32, #tpu.memory_space<vmem>>, vector<1x1x14x128xf32>
      %2011 = vector.shape_cast %2010 : vector<1x1x14x128xf32> to vector<14x128xf32>
      %2012 = vector.broadcast %38 : f32 to vector<14x128xf32>
      %2013 = arith.mulf %2012, %2011 : vector<14x128xf32>
      %2014 = arith.addf %2006, %2013 : vector<14x128xf32>
      %2015 = vector.broadcast %34 : f32 to vector<14x128xf32>
      %2016 = arith.mulf %2015, %2011 : vector<14x128xf32>
      %2017 = arith.addf %2009, %2016 : vector<14x128xf32>
      %c3_890 = arith.constant 3 : index
      %c29_891 = arith.constant 29 : index
      %c0_892 = arith.constant 0 : index
      %c0_893 = arith.constant 0 : index
      %2018 = vector.load %arg3[%c3_890, %c29_891, %c0_892, %c0_893] : memref<4x30x14x128xf32, #tpu.memory_space<vmem>>, vector<1x1x14x128xf32>
      %2019 = vector.shape_cast %2018 : vector<1x1x14x128xf32> to vector<14x128xf32>
      %2020 = vector.broadcast %38 : f32 to vector<14x128xf32>
      %2021 = arith.mulf %2020, %2019 : vector<14x128xf32>
      %2022 = arith.addf %2017, %2021 : vector<14x128xf32>
      %2023 = arith.maximumf %1979, %1993 : vector<14x128xf32>
      %2024 = arith.maximumf %2014, %2022 : vector<14x128xf32>
      %2025 = arith.maximumf %2023, %2024 : vector<14x128xf32>
      %2026 = vector.broadcast %40 : f32 to vector<14x128xf32>
      %2027 = arith.addf %2025, %2026 : vector<14x128xf32>
      %c208 = arith.constant 208 : index
      %c0_894 = arith.constant 0 : index
      %2028 = vector.load %arg7[%c208, %c0_894] : memref<224x128xf32, #tpu.memory_space<vmem>>, vector<14x128xf32>
      tpu.vector_store %arg7[%c208, %c0_894], %2027 {strides = array<i32>} : memref<224x128xf32, #tpu.memory_space<vmem>>, vector<14x128xf32>,
      %c0_895 = arith.constant 0 : index
      %c0_896 = arith.constant 0 : index
      %2029 = vector.load %arg4[%c0_895, %c0_896] : memref<10x224xf32, #tpu.memory_space<vmem>>, vector<10x224xf32>
      %c0_897 = arith.constant 0 : index
      %c0_898 = arith.constant 0 : index
      %2030 = vector.load %arg7[%c0_897, %c0_898] : memref<224x128xf32, #tpu.memory_space<vmem>>, vector<224x128xf32>
      %cst_899 = arith.constant dense<0.000000e+00> : vector<10x128xf32>
      %2031 = tpu.matmul %2029, %2030, %cst_899 {dimension_numbers = #tpu.dot_dimension_numbers<[1], [0], [0], [1], [0, 0, 1, 1], [], []>} : vector<10x224xf32>, vector<224x128xf32>, vector<10x128xf32> -> vector<10x128xf32>
      %c0_900 = arith.constant 0 : index
      %c0_901 = arith.constant 0 : index
      %2032 = vector.load %arg5[%c0_900, %c0_901] : memref<10x1xf32, #tpu.memory_space<vmem>>, vector<10x1xf32>
      %2033 = vector.broadcast %2032 : vector<10x1xf32> to vector<10x128xf32>
      %2034 = arith.addf %2031, %2033 : vector<10x128xf32>
      %2035 = arith.index_cast %arg8 : i32 to index
      %c0_902 = arith.constant 0 : index
      %c0_903 = arith.constant 0 : index
      %2036 = vector.load %arg6[%2035, %c0_902, %c0_903] : memref<16x10x128xf32, #tpu.memory_space<vmem>>, vector<1x10x128xf32>
      %2037 = vector.shape_cast %2036 : vector<1x10x128xf32> to vector<10x128xf32>
      %2038 = vector.shape_cast %2034 : vector<10x128xf32> to vector<1x10x128xf32>
      tpu.vector_store %arg6[%2035, %c0_902, %c0_903], %2038 {strides = array<i32>} : memref<16x10x128xf32, #tpu.memory_space<vmem>>, vector<1x10x128xf32>,
    }
    %c16_i32_1 = arith.constant 16 : i32
    return
  }
  func.func @transform_0(%arg0: i32) -> i32 {
    %c0_i32 = arith.constant 0 : i32
    %c0_i32_0 = arith.constant 0 : i32
    return %c0_i32 : i32
  }
  func.func @transform_1(%arg0: i32) -> i32 {
    %c0_i32 = arith.constant 0 : i32
    %c0_i32_0 = arith.constant 0 : i32
    return %c0_i32 : i32
  }
  func.func @transform_2(%arg0: i32) -> (i32, i32, i32, i32) {
    %c0_i32 = arith.constant 0 : i32
    %c0_i32_0 = arith.constant 0 : i32
    %c0_i32_1 = arith.constant 0 : i32
    %c0_i32_2 = arith.constant 0 : i32
    return %c0_i32, %c0_i32_0, %c0_i32_1, %arg0 : i32, i32, i32, i32
  }
  func.func @transform_3(%arg0: i32) -> (i32, i32) {
    %c0_i32 = arith.constant 0 : i32
    %c0_i32_0 = arith.constant 0 : i32
    %c0_i32_1 = arith.constant 0 : i32
    return %c0_i32, %c0_i32_0 : i32, i32
  }
  func.func @transform_4(%arg0: i32) -> (i32, i32) {
    %c0_i32 = arith.constant 0 : i32
    %c0_i32_0 = arith.constant 0 : i32
    %c0_i32_1 = arith.constant 0 : i32
    return %c0_i32, %c0_i32_0 : i32, i32
  }
  func.func @transform_5(%arg0: i32) -> (i32, i32, i32) {
    %c0_i32 = arith.constant 0 : i32
    %c0_i32_0 = arith.constant 0 : i32
    %c0_i32_1 = arith.constant 0 : i32
    return %c0_i32, %c0_i32_0, %arg0 : i32, i32, i32
  }
}

</mosaic_0001>

<llo_original>
// kernel: testnet_forward.1
$region0: #{testnet_forward.1}
  #allocation0 [shape = 'u32[]', space=smem, size = 0x4, offset = 0x4, fixed_abs, tag = 'smem constant byte address 0x4 - core index']
  #allocation1 [shape = 'u32[144,128]{1,0:T(1,128)}', space=vmem, size = 0x12000, scoped, tag = 'internal scratch']
  #allocation2 [shape = 'f32[224,128]{1,0:T(8,128)}', space=vmem, size = 0x1c000, scoped, tag = 'scratch operand']
  %s0 = inlined_call_operand.vmem [shape: f32[144], index: 0, kind: input, shape index: {}]
  %s1 = inlined_call_operand.vmem [shape: f32[16], index: 1, kind: input, shape index: {}]
  %s2 = inlined_call_operand.vmem [shape: f32[4,30,14,128], index: 2, kind: input, shape index: {}]
  %s3 = inlined_call_operand.vmem [shape: f32[10,224], index: 3, kind: input, shape index: {}]
  %s4 = inlined_call_operand.vmem [shape: f32[10,1], index: 4, kind: input, shape index: {}]
  %s5 = inlined_call_operand.vmem [shape: f32[16,10,128], index: 5, kind: output, shape index: {}]
  %s6 = sld [smem:[#allocation0]]
  $region45: #{testnet_forward.1} parent=0
    _
  %s8 = ssub.s32 1, %s6
  %s9 = scalar_select 0, %s8, %s6
  $region1: #{testnet_forward.1} parent=0
    #allocation3 [shape = 'u8[1024]{0}', space=smem, size = 0x400, scoped, tag = 'input window, operand 0, single buffered']
    #allocation4 [shape = 's32[1]{0}', space=sflag, size = 0x4, scoped, tag = 'scoped memory for testnet_forward.1']
    #allocation5 [shape = 'u8[512]{0}', space=smem, size = 0x200, scoped, tag = 'input window, operand 1, single buffered']
    #allocation6 [shape = 's32[1]{0}', space=sflag, size = 0x4, scoped, tag = 'scoped memory for testnet_forward.1']
    %10 = vsyncpa [#allocation4], 0
    %11 = vsyncpa [#allocation6], 0
    // Predicated region
    $region2: #{testnet_forward.1} parent=1 // pred_check
      _
    $region3: #{testnet_forward.1} parent=1 // pred_check_branch
      %13 = sbr.rel (0) target = $region5
    $region4: #{testnet_forward.1} parent=1 // pred_region
      %s15 = ssub.s32 32, 32
      %16 = vsyncadd [#allocation4], %s15
      %s18 = sshll.u32 %s0, 4
      %s19 = int_to_ptr.vmem [resolvable:$true] %s18
      %21 = dma.vmem_to_smem %s19, 32, [#allocation3], [#allocation4]
    $region5: #{testnet_forward.1} parent=1 // pred_fallthru
      _
    // Predicated region
    $region6: #{testnet_forward.1} parent=1 // pred_check
      _
    $region7: #{testnet_forward.1} parent=1 // pred_check_branch
      %23 = sbr.rel (0) target = $region9
    $region8: #{testnet_forward.1} parent=1 // pred_region
      %s25 = ssub.s32 16, 16
      %26 = vsyncadd [#allocation6], %s25
      %s28 = sshll.u32 %s1, 4
      %s29 = int_to_ptr.vmem [resolvable:$true] %s28
      %31 = dma.vmem_to_smem %s29, 16, [#allocation5], [#allocation6]
    $region9: #{testnet_forward.1} parent=1 // pred_fallthru
      _
    // Predicated region
    $region10: #{testnet_forward.1} parent=1 // pred_check
      _
    $region11: #{testnet_forward.1} parent=1 // pred_check_branch
      %33 = sbr.rel (0) target = $region13
    $region12: #{testnet_forward.1} parent=1 // pred_region
      _
    $region13: #{testnet_forward.1} parent=1 // pred_fallthru
      _
    // Predicated region
    $region14: #{testnet_forward.1} parent=1 // pred_check
      _
    $region15: #{testnet_forward.1} parent=1 // pred_check_branch
      %35 = sbr.rel (0) target = $region17
    $region16: #{testnet_forward.1} parent=1 // pred_region
      _
    $region17: #{testnet_forward.1} parent=1 // pred_fallthru
      _
    // Predicated region
    $region18: #{testnet_forward.1} parent=1 // pred_check
      _
    $region19: #{testnet_forward.1} parent=1 // pred_check_branch
      %37 = sbr.rel (0) target = $region21
    $region20: #{testnet_forward.1} parent=1 // pred_region
      _
    $region21: #{testnet_forward.1} parent=1 // pred_fallthru
      _
    // Predicated region
    $region22: #{testnet_forward.1} parent=1 // pred_check
      _
    $region23: #{testnet_forward.1} parent=1 // pred_check_branch
      %39 = sbr.rel (0) target = $region25
    $region24: #{testnet_forward.1} parent=1 // pred_region
      %40 = dma.done [#allocation4], 32
    $region25: #{testnet_forward.1} parent=1 // pred_fallthru
      _
    // Predicated region
    $region26: #{testnet_forward.1} parent=1 // pred_check
      _
    $region27: #{testnet_forward.1} parent=1 // pred_check_branch
      %42 = sbr.rel (0) target = $region29
    $region28: #{testnet_forward.1} parent=1 // pred_region
      %43 = dma.done [#allocation6], 16
    $region29: #{testnet_forward.1} parent=1 // pred_fallthru
      _
    %44 = sfence
    %45 = vst [vmem:[#allocation2] sm:$0xff] 0.0
    %46 = vst [vmem:[#allocation2 + $0x8] sm:$0xff] 0.0
    %47 = vst [vmem:[#allocation2 + $0x10] sm:$0xff] 0.0
    %48 = vst [vmem:[#allocation2 + $0x18] sm:$0xff] 0.0
    %49 = vst [vmem:[#allocation2 + $0x20] sm:$0xff] 0.0
    %50 = vst [vmem:[#allocation2 + $0x28] sm:$0xff] 0.0
    %51 = vst [vmem:[#allocation2 + $0x30] sm:$0xff] 0.0
    %52 = vst [vmem:[#allocation2 + $0x38] sm:$0xff] 0.0
    %53 = vst [vmem:[#allocation2 + $0x40] sm:$0xff] 0.0
    %54 = vst [vmem:[#allocation2 + $0x48] sm:$0xff] 0.0
    %55 = vst [vmem:[#allocation2 + $0x50] sm:$0xff] 0.0
    %56 = vst [vmem:[#allocation2 + $0x58] sm:$0xff] 0.0
    %57 = vst [vmem:[#allocation2 + $0x60] sm:$0xff] 0.0
    %58 = vst [vmem:[#allocation2 + $0x68] sm:$0xff] 0.0
    %59 = vst [vmem:[#allocation2 + $0x70] sm:$0xff] 0.0
    %60 = vst [vmem:[#allocation2 + $0x78] sm:$0xff] 0.0
    %61 = vst [vmem:[#allocation2 + $0x80] sm:$0xff] 0.0
    %62 = vst [vmem:[#allocation2 + $0x88] sm:$0xff] 0.0
    %63 = vst [vmem:[#allocation2 + $0x90] sm:$0xff] 0.0
    %64 = vst [vmem:[#allocation2 + $0x98] sm:$0xff] 0.0
    %65 = vst [vmem:[#allocation2 + $0xa0] sm:$0xff] 0.0
    %66 = vst [vmem:[#allocation2 + $0xa8] sm:$0xff] 0.0
    %67 = vst [vmem:[#allocation2 + $0xb0] sm:$0xff] 0.0
    %68 = vst [vmem:[#allocation2 + $0xb8] sm:$0xff] 0.0
    %69 = vst [vmem:[#allocation2 + $0xc0] sm:$0xff] 0.0
    %70 = vst [vmem:[#allocation2 + $0xc8] sm:$0xff] 0.0
    %71 = vst [vmem:[#allocation2 + $0xd0] sm:$0xff] 0.0
    %72 = vst [vmem:[#allocation2 + $0xd8] sm:$0xff] 0.0
    loop: start=0, step=1, limit=16
    $region30: #{testnet_forward.1} parent=1 // loop_pre_header
      _
    $region31: #{testnet_forward.1} parent=1 // loop_header
      %s74 = sphi 0, %s78
      %p75 = scmp.ge.s32.totalorder %s74, 16
    $region32: #{testnet_forward.1} parent=1 // loop_header_branch
      %77 = sbr.rel (%p75) target = $region36
    $region33: #{testnet_forward.1} parent=1 // loop_body
      %s79 = smul.u32 %s74, 9
      %s80 = sld [smem:[#allocation3 + %s79]]
      %s81 = sadd.s32 %s79, 1
      %s82 = sld [smem:[#allocation3 + %s81]]
      %s83 = sadd.s32 %s79, 2
      %s84 = sld [smem:[#allocation3 + %s83]]
      %s85 = sadd.s32 %s79, 3
      %s86 = sld [smem:[#allocation3 + %s85]]
      %s87 = sadd.s32 %s79, 4
      %s88 = sld [smem:[#allocation3 + %s87]]
      %s89 = sadd.s32 %s79, 5
      %s90 = sld [smem:[#allocation3 + %s89]]
      %s91 = sadd.s32 %s79, 6
      %s92 = sld [smem:[#allocation3 + %s91]]
      %s93 = sadd.s32 %s79, 7
      %s94 = sld [smem:[#allocation3 + %s93]]
      %s95 = sadd.s32 %s79, 8
      %s96 = sld [smem:[#allocation3 + %s95]]
      %s97 = sld [smem:[#allocation5 + %s74]]
      %v98 = vld [vmem:[%s2] sm:$0xff]
      %v99 = vld [vmem:[%s2 + $0x8] sm:$0x3f]
      %v100 = vstv %s80
      %v101 = vmul.f32 %v100, %v98
      %v102 = vmul.f32 %v100, %v99
      %s103 = scalar_lea.vmem %s2, 480
      %v104 = vld [vmem:[%s103] sm:$0xff]
      %v105 = vld [vmem:[%s103 + $0x8] sm:$0x3f]
      %v106 = vstv %s82
      %v107 = vmul.f32 %v106, %v104
      %v108 = vmul.f32 %v106, %v105
      %v109 = vadd.f32 %v101, %v107
      %v110 = vadd.f32 %v102, %v108
      %v111 = vmul.f32 %v100, %v104
      %v112 = vmul.f32 %v100, %v105
      %s113 = scalar_lea.vmem %s2, 960
      %v114 = vld [vmem:[%s113] sm:$0xff]
      %v115 = vld [vmem:[%s113 + $0x8] sm:$0x3f]
      %v116 = vstv %s84
      %v117 = vmul.f32 %v116, %v114
      %v118 = vmul.f32 %v116, %v115
      %v119 = vadd.f32 %v109, %v117
      %v120 = vadd.f32 %v110, %v118
      %v121 = vmul.f32 %v106, %v114
      %v122 = vmul.f32 %v106, %v115
      %v123 = vadd.f32 %v111, %v121
      %v124 = vadd.f32 %v112, %v122
      %s125 = scalar_lea.vmem %s2, 1440
      %v126 = vld [vmem:[%s125] sm:$0xff]
      %v127 = vld [vmem:[%s125 + $0x8] sm:$0x3f]
      %v128 = vmul.f32 %v116, %v126
      %v129 = vmul.f32 %v116, %v127
      %v130 = vadd.f32 %v123, %v128
      %v131 = vadd.f32 %v124, %v129
      %s132 = scalar_lea.vmem %s2, 16
      %v133 = vld [vmem:[%s132] sm:$0xff]
      %v134 = vld [vmem:[%s132 + $0x8] sm:$0x3f]
      %v135 = vstv %s86
      %v136 = vmul.f32 %v135, %v133
      %v137 = vmul.f32 %v135, %v134
      %v138 = vadd.f32 %v119, %v136
      %v139 = vadd.f32 %v120, %v137
      %v140 = vmul.f32 %v100, %v133
      %v141 = vmul.f32 %v100, %v134
      %s142 = scalar_lea.vmem %s2, 496
      %v143 = vld [vmem:[%s142] sm:$0xff]
      %v144 = vld [vmem:[%s142 + $0x8] sm:$0x3f]
      %v145 = vstv %s88
      %v146 = vmul.f32 %v145, %v143
      %v147 = vmul.f32 %v145, %v144
      %v148 = vadd.f32 %v138, %v146
      %v149 = vadd.f32 %v139, %v147
      %v150 = vmul.f32 %v135, %v143
      %v151 = vmul.f32 %v135, %v144
      %v152 = vadd.f32 %v130, %v150
      %v153 = vadd.f32 %v131, %v151
      %v154 = vmul.f32 %v106, %v143
      %v155 = vmul.f32 %v106, %v144
      %v156 = vadd.f32 %v140, %v154
      %v157 = vadd.f32 %v141, %v155
      %v158 = vmul.f32 %v100, %v143
      %v159 = vmul.f32 %v100, %v144
      %s160 = scalar_lea.vmem %s2, 976
      %v161 = vld [vmem:[%s160] sm:$0xff]
      %v162 = vld [vmem:[%s160 + $0x8] sm:$0x3f]
      %v163 = vstv %s90
      %v164 = vmul.f32 %v163, %v161
      %v165 = vmul.f32 %v163, %v162
      %v166 = vadd.f32 %v148, %v164
      %v167 = vadd.f32 %v149, %v165
      %v168 = vmul.f32 %v145, %v161
      %v169 = vmul.f32 %v145, %v162
      %v170 = vadd.f32 %v152, %v168
      %v171 = vadd.f32 %v153, %v169
      %v172 = vmul.f32 %v116, %v161
      %v173 = vmul.f32 %v116, %v162
      %v174 = vadd.f32 %v156, %v172
      %v175 = vadd.f32 %v157, %v173
      %v176 = vmul.f32 %v106, %v161
      %v177 = vmul.f32 %v106, %v162
      %v178 = vadd.f32 %v158, %v176
      %v179 = vadd.f32 %v159, %v177
      %s180 = scalar_lea.vmem %s2, 1456
      %v181 = vld [vmem:[%s180] sm:$0xff]
      %v182 = vld [vmem:[%s180 + $0x8] sm:$0x3f]
      %v183 = vmul.f32 %v163, %v181
      %v184 = vmul.f32 %v163, %v182
      %v185 = vadd.f32 %v170, %v183
      %v186 = vadd.f32 %v171, %v184
      %v187 = vmul.f32 %v116, %v181
      %v188 = vmul.f32 %v116, %v182
      %v189 = vadd.f32 %v178, %v187
      %v190 = vadd.f32 %v179, %v188
      %s191 = scalar_lea.vmem %s2, 32
      %v192 = vld [vmem:[%s191] sm:$0xff]
      %v193 = vld [vmem:[%s191 + $0x8] sm:$0x3f]
      %v194 = vstv %s92
      %v195 = vmul.f32 %v194, %v192
      %v196 = vmul.f32 %v194, %v193
      %v197 = vadd.f32 %v166, %v195
      %v198 = vadd.f32 %v167, %v196
      %v199 = vmul.f32 %v135, %v192
      %v200 = vmul.f32 %v135, %v193
      %v201 = vadd.f32 %v174, %v199
      %v202 = vadd.f32 %v175, %v200
      %s203 = scalar_lea.vmem %s2, 512
      %v204 = vld [vmem:[%s203] sm:$0xff]
      %v205 = vld [vmem:[%s203 + $0x8] sm:$0x3f]
      %v206 = vstv %s94
      %v207 = vmul.f32 %v206, %v204
      %v208 = vmul.f32 %v206, %v205
      %v209 = vadd.f32 %v197, %v207
      %v210 = vadd.f32 %v198, %v208
      %v211 = vmul.f32 %v194, %v204
      %v212 = vmul.f32 %v194, %v205
      %v213 = vadd.f32 %v185, %v211
      %v214 = vadd.f32 %v186, %v212
      %v215 = vmul.f32 %v145, %v204
      %v216 = vmul.f32 %v145, %v205
      %v217 = vadd.f32 %v201, %v215
      %v218 = vadd.f32 %v202, %v216
      %v219 = vmul.f32 %v135, %v204
      %v220 = vmul.f32 %v135, %v205
      %v221 = vadd.f32 %v189, %v219
      %v222 = vadd.f32 %v190, %v220
      %s223 = scalar_lea.vmem %s2, 992
      %v224 = vld [vmem:[%s223] sm:$0xff]
      %v225 = vld [vmem:[%s223 + $0x8] sm:$0x3f]
      %v226 = vstv %s96
      %v227 = vmul.f32 %v226, %v224
      %v228 = vmul.f32 %v226, %v225
      %v229 = vadd.f32 %v209, %v227
      %v230 = vadd.f32 %v210, %v228
      %v231 = vmul.f32 %v206, %v224
      %v232 = vmul.f32 %v206, %v225
      %v233 = vadd.f32 %v213, %v231
      %v234 = vadd.f32 %v214, %v232
      %v235 = vmul.f32 %v163, %v224
      %v236 = vmul.f32 %v163, %v225
      %v237 = vadd.f32 %v217, %v235
      %v238 = vadd.f32 %v218, %v236
      %v239 = vmul.f32 %v145, %v224
      %v240 = vmul.f32 %v145, %v225
      %v241 = vadd.f32 %v221, %v239
      %v242 = vadd.f32 %v222, %v240
      %s243 = scalar_lea.vmem %s2, 1472
      %v244 = vld [vmem:[%s243] sm:$0xff]
      %v245 = vld [vmem:[%s243 + $0x8] sm:$0x3f]
      %v246 = vmul.f32 %v226, %v244
      %v247 = vmul.f32 %v226, %v245
      %v248 = vadd.f32 %v233, %v246
      %v249 = vadd.f32 %v234, %v247
      %v250 = vmul.f32 %v163, %v244
      %v251 = vmul.f32 %v163, %v245
      %v252 = vadd.f32 %v241, %v250
      %v253 = vadd.f32 %v242, %v251
      %s254 = scalar_lea.vmem %s2, 48
      %v255 = vld [vmem:[%s254] sm:$0xff]
      %v256 = vld [vmem:[%s254 + $0x8] sm:$0x3f]
      %v257 = vmul.f32 %v194, %v255
      %v258 = vmul.f32 %v194, %v256
      %v259 = vadd.f32 %v237, %v257
      %v260 = vadd.f32 %v238, %v258
      %s261 = scalar_lea.vmem %s2, 528
      %v262 = vld [vmem:[%s261] sm:$0xff]
      %v263 = vld [vmem:[%s261 + $0x8] sm:$0x3f]
      %v264 = vmul.f32 %v206, %v262
      %v265 = vmul.f32 %v206, %v263
      %v266 = vadd.f32 %v259, %v264
      %v267 = vadd.f32 %v260, %v265
      %v268 = vmul.f32 %v194, %v262
      %v269 = vmul.f32 %v194, %v263
      %v270 = vadd.f32 %v252, %v268
      %v271 = vadd.f32 %v253, %v269
      %s272 = scalar_lea.vmem %s2, 1008
      %v273 = vld [vmem:[%s272] sm:$0xff]
      %v274 = vld [vmem:[%s272 + $0x8] sm:$0x3f]
      %v275 = vmul.f32 %v226, %v273
      %v276 = vmul.f32 %v226, %v274
      %v277 = vadd.f32 %v266, %v275
      %v278 = vadd.f32 %v267, %v276
      %v279 = vmul.f32 %v206, %v273
      %v280 = vmul.f32 %v206, %v274
      %v281 = vadd.f32 %v270, %v279
      %v282 = vadd.f32 %v271, %v280
      %s283 = scalar_lea.vmem %s2, 1488
      %v284 = vld [vmem:[%s283] sm:$0xff]
      %v285 = vld [vmem:[%s283 + $0x8] sm:$0x3f]
      %v286 = vmul.f32 %v226, %v284
      %v287 = vmul.f32 %v226, %v285
      %v288 = vadd.f32 %v281, %v286
      %v289 = vadd.f32 %v282, %v287
      %v290 = vmax.f32 %v229, %v248
      %v291 = vmax.f32 %v230, %v249
      %v292 = vmax.f32 %v277, %v288
      %v293 = vmax.f32 %v278, %v289
      %v294 = vmax.f32 %v290, %v292
      %v295 = vmax.f32 %v291, %v293
      %v296 = vstv %s97
      %v297 = vadd.f32 %v294, %v296
      %v298 = vadd.f32 %v295, %v296
      %299 = vst [vmem:[#allocation2] sm:$0xff] %v297
      %300 = vst [vmem:[#allocation2 + $0x8] sm:$0x3f] %v298
      %v301 = vld [vmem:[%s191] sm:$0xff]
      %v302 = vld [vmem:[%s191 + $0x8] sm:$0x3f]
      %v303 = vmul.f32 %v100, %v301
      %v304 = vmul.f32 %v100, %v302
      %v305 = vld [vmem:[%s203] sm:$0xff]
      %v306 = vld [vmem:[%s203 + $0x8] sm:$0x3f]
      %v307 = vmul.f32 %v106, %v305
      %v308 = vmul.f32 %v106, %v306
      %v309 = vadd.f32 %v303, %v307
      %v310 = vadd.f32 %v304, %v308
      %v311 = vmul.f32 %v100, %v305
      %v312 = vmul.f32 %v100, %v306
      %v313 = vld [vmem:[%s223] sm:$0xff]
      %v314 = vld [vmem:[%s223 + $0x8] sm:$0x3f]
      %v315 = vmul.f32 %v116, %v313
      %v316 = vmul.f32 %v116, %v314
      %v317 = vadd.f32 %v309, %v315
      %v318 = vadd.f32 %v310, %v316
      %v319 = vmul.f32 %v106, %v313
      %v320 = vmul.f32 %v106, %v314
      %v321 = vadd.f32 %v311, %v319
      %v322 = vadd.f32 %v312, %v320
      %v323 = vld [vmem:[%s243] sm:$0xff]
      %v324 = vld [vmem:[%s243 + $0x8] sm:$0x3f]
      %v325 = vmul.f32 %v116, %v323
      %v326 = vmul.f32 %v116, %v324
      %v327 = vadd.f32 %v321, %v325
      %v328 = vadd.f32 %v322, %v326
      %v329 = vld [vmem:[%s254] sm:$0xff]
      %v330 = vld [vmem:[%s254 + $0x8] sm:$0x3f]
      %v331 = vmul.f32 %v135, %v329
      %v332 = vmul.f32 %v135, %v330
      %v333 = vadd.f32 %v317, %v331
      %v334 = vadd.f32 %v318, %v332
      %v335 = vmul.f32 %v100, %v329
      %v336 = vmul.f32 %v100, %v330
      %v337 = vld [vmem:[%s261] sm:$0xff]
      %v338 = vld [vmem:[%s261 + $0x8] sm:$0x3f]
      %v339 = vmul.f32 %v145, %v337
      %v340 = vmul.f32 %v145, %v338
      %v341 = vadd.f32 %v333, %v339
      %v342 = vadd.f32 %v334, %v340
      %v343 = vmul.f32 %v135, %v337
      %v344 = vmul.f32 %v135, %v338
      %v345 = vadd.f32 %v327, %v343
      %v346 = vadd.f32 %v328, %v344
      %v347 = vmul.f32 %v106, %v337
      %v348 = vmul.f32 %v106, %v338
      %v349 = vadd.f32 %v335, %v347
      %v350 = vadd.f32 %v336, %v348
      %v351 = vmul.f32 %v100, %v337
      %v352 = vmul.f32 %v100, %v338
      %v353 = vld [vmem:[%s272] sm:$0xff]
      %v354 = vld [vmem:[%s272 + $0x8] sm:$0x3f]
      %v355 = vmul.f32 %v163, %v353
      %v356 = vmul.f32 %v163, %v354
      %v357 = vadd.f32 %v341, %v355
      %v358 = vadd.f32 %v342, %v356
      %v359 = vmul.f32 %v145, %v353
      %v360 = vmul.f32 %v145, %v354
      %v361 = vadd.f32 %v345, %v359
      %v362 = vadd.f32 %v346, %v360
      %v363 = vmul.f32 %v116, %v353
      %v364 = vmul.f32 %v116, %v354
      %v365 = vadd.f32 %v349, %v363
      %v366 = vadd.f32 %v350, %v364
      %v367 = vmul.f32 %v106, %v353
      %v368 = vmul.f32 %v106, %v354
      %v369 = vadd.f32 %v351, %v367
      %v370 = vadd.f32 %v352, %v368
      %v371 = vld [vmem:[%s283] sm:$0xff]
      %v372 = vld [vmem:[%s283 + $0x8] sm:$0x3f]
      %v373 = vmul.f32 %v163, %v371
      %v374 = vmul.f32 %v163, %v372
      %v375 = vadd.f32 %v361, %v373
      %v376 = vadd.f32 %v362, %v374
      %v377 = vmul.f32 %v116, %v371
      %v378 = vmul.f32 %v116, %v372
      %v379 = vadd.f32 %v369, %v377
      %v380 = vadd.f32 %v370, %v378
      %s381 = scalar_lea.vmem %s2, 64
      %v382 = vld [vmem:[%s381] sm:$0xff]
      %v383 = vld [vmem:[%s381 + $0x8] sm:$0x3f]
      %v384 = vmul.f32 %v194, %v382
      %v385 = vmul.f32 %v194, %v383
      %v386 = vadd.f32 %v357, %v384
      %v387 = vadd.f32 %v358, %v385
      %v388 = vmul.f32 %v135, %v382
      %v389 = vmul.f32 %v135, %v383
      %v390 = vadd.f32 %v365, %v388
      %v391 = vadd.f32 %v366, %v389
      %s392 = scalar_lea.vmem %s2, 544
      %v393 = vld [vmem:[%s392] sm:$0xff]
      %v394 = vld [vmem:[%s392 + $0x8] sm:$0x3f]
      %v395 = vmul.f32 %v206, %v393
      %v396 = vmul.f32 %v206, %v394
      %v397 = vadd.f32 %v386, %v395
      %v398 = vadd.f32 %v387, %v396
      %v399 = vmul.f32 %v194, %v393
      %v400 = vmul.f32 %v194, %v394
      %v401 = vadd.f32 %v375, %v399
      %v402 = vadd.f32 %v376, %v400
      %v403 = vmul.f32 %v145, %v393
      %v404 = vmul.f32 %v145, %v394
      %v405 = vadd.f32 %v390, %v403
      %v406 = vadd.f32 %v391, %v404
      %v407 = vmul.f32 %v135, %v393
      %v408 = vmul.f32 %v135, %v394
      %v409 = vadd.f32 %v379, %v407
      %v410 = vadd.f32 %v380, %v408
      %s411 = scalar_lea.vmem %s2, 1024
      %v412 = vld [vmem:[%s411] sm:$0xff]
      %v413 = vld [vmem:[%s411 + $0x8] sm:$0x3f]
      %v414 = vmul.f32 %v226, %v412
      %v415 = vmul.f32 %v226, %v413
      %v416 = vadd.f32 %v397, %v414
      %v417 = vadd.f32 %v398, %v415
      %v418 = vmul.f32 %v206, %v412
      %v419 = vmul.f32 %v206, %v413
      %v420 = vadd.f32 %v401, %v418
      %v421 = vadd.f32 %v402, %v419
      %v422 = vmul.f32 %v163, %v412
      %v423 = vmul.f32 %v163, %v413
      %v424 = vadd.f32 %v405, %v422
      %v425 = vadd.f32 %v406, %v423
      %v426 = vmul.f32 %v145, %v412
      %v427 = vmul.f32 %v145, %v413
      %v428 = vadd.f32 %v409, %v426
      %v429 = vadd.f32 %v410, %v427
      %s430 = scalar_lea.vmem %s2, 1504
      %v431 = vld [vmem:[%s430] sm:$0xff]
      %v432 = vld [vmem:[%s430 + $0x8] sm:$0x3f]
      %v433 = vmul.f32 %v226, %v431
      %v434 = vmul.f32 %v226, %v432
      %v435 = vadd.f32 %v420, %v433
      %v436 = vadd.f32 %v421, %v434
      %v437 = vmul.f32 %v163, %v431
      %v438 = vmul.f32 %v163, %v432
      %v439 = vadd.f32 %v428, %v437
      %v440 = vadd.f32 %v429, %v438
      %s441 = scalar_lea.vmem %s2, 80
      %v442 = vld [vmem:[%s441] sm:$0xff]
      %v443 = vld [vmem:[%s441 + $0x8] sm:$0x3f]
      %v444 = vmul.f32 %v194, %v442
      %v445 = vmul.f32 %v194, %v443
      %v446 = vadd.f32 %v424, %v444
      %v447 = vadd.f32 %v425, %v445
      %s448 = scalar_lea.vmem %s2, 560
      %v449 = vld [vmem:[%s448] sm:$0xff]
      %v450 = vld [vmem:[%s448 + $0x8] sm:$0x3f]
      %v451 = vmul.f32 %v206, %v449
      %v452 = vmul.f32 %v206, %v450
      %v453 = vadd.f32 %v446, %v451
      %v454 = vadd.f32 %v447, %v452
      %v455 = vmul.f32 %v194, %v449
      %v456 = vmul.f32 %v194, %v450
      %v457 = vadd.f32 %v439, %v455
      %v458 = vadd.f32 %v440, %v456
      %s459 = scalar_lea.vmem %s2, 1040
      %v460 = vld [vmem:[%s459] sm:$0xff]
      %v461 = vld [vmem:[%s459 + $0x8] sm:$0x3f]
      %v462 = vmul.f32 %v226, %v460
      %v463 = vmul.f32 %v226, %v461
      %v464 = vadd.f32 %v453, %v462
      %v465 = vadd.f32 %v454, %v463
      %v466 = vmul.f32 %v206, %v460
      %v467 = vmul.f32 %v206, %v461
      %v468 = vadd.f32 %v457, %v466
      %v469 = vadd.f32 %v458, %v467
      %s470 = scalar_lea.vmem %s2, 1520
      %v471 = vld [vmem:[%s470] sm:$0xff]
      %v472 = vld [vmem:[%s470 + $0x8] sm:$0x3f]
      %v473 = vmul.f32 %v226, %v471
      %v474 = vmul.f32 %v226, %v472
      %v475 = vadd.f32 %v468, %v473
      %v476 = vadd.f32 %v469, %v474
      %v477 = vmax.f32 %v416, %v435
      %v478 = vmax.f32 %v417, %v436
      %v479 = vmax.f32 %v464, %v475
      %v480 = vmax.f32 %v465, %v476
      %v481 = vmax.f32 %v477, %v479
      %v482 = vmax.f32 %v478, %v480
      %v483 = vadd.f32 %v481, %v296
      %v484 = vadd.f32 %v482, %v296
      %485 = vst [vmem:[#allocation2 + $0x10] sm:$0xff] %v483
      %486 = vst [vmem:[#allocation2 + $0x18] sm:$0x3f] %v484
      %v487 = vld [vmem:[%s381] sm:$0xff]
      %v488 = vld [vmem:[%s381 + $0x8] sm:$0x3f]
      %v489 = vmul.f32 %v100, %v487
      %v490 = vmul.f32 %v100, %v488
      %v491 = vld [vmem:[%s392] sm:$0xff]
      %v492 = vld [vmem:[%s392 + $0x8] sm:$0x3f]
      %v493 = vmul.f32 %v106, %v491
      %v494 = vmul.f32 %v106, %v492
      %v495 = vadd.f32 %v489, %v493
      %v496 = vadd.f32 %v490, %v494
      %v497 = vmul.f32 %v100, %v491
      %v498 = vmul.f32 %v100, %v492
      %v499 = vld [vmem:[%s411] sm:$0xff]
      %v500 = vld [vmem:[%s411 + $0x8] sm:$0x3f]
      %v501 = vmul.f32 %v116, %v499
      %v502 = vmul.f32 %v116, %v500
      %v503 = vadd.f32 %v495, %v501
      %v504 = vadd.f32 %v496, %v502
      %v505 = vmul.f32 %v106, %v499
      %v506 = vmul.f32 %v106, %v500
      %v507 = vadd.f32 %v497, %v505
      %v508 = vadd.f32 %v498, %v506
      %v509 = vld [vmem:[%s430] sm:$0xff]
      %v510 = vld [vmem:[%s430 + $0x8] sm:$0x3f]
      %v511 = vmul.f32 %v116, %v509
      %v512 = vmul.f32 %v116, %v510
      %v513 = vadd.f32 %v507, %v511
      %v514 = vadd.f32 %v508, %v512
      %v515 = vld [vmem:[%s441] sm:$0xff]
      %v516 = vld [vmem:[%s441 + $0x8] sm:$0x3f]
      %v517 = vmul.f32 %v135, %v515
      %v518 = vmul.f32 %v135, %v516
      %v519 = vadd.f32 %v503, %v517
      %v520 = vadd.f32 %v504, %v518
      %v521 = vmul.f32 %v100, %v515
      %v522 = vmul.f32 %v100, %v516
      %v523 = vld [vmem:[%s448] sm:$0xff]
      %v524 = vld [vmem:[%s448 + $0x8] sm:$0x3f]
      %v525 = vmul.f32 %v145, %v523
      %v526 = vmul.f32 %v145, %v524
      %v527 = vadd.f32 %v519, %v525
      %v528 = vadd.f32 %v520, %v526
      %v529 = vmul.f32 %v135, %v523
      %v530 = vmul.f32 %v135, %v524
      %v531 = vadd.f32 %v513, %v529
      %v532 = vadd.f32 %v514, %v530
      %v533 = vmul.f32 %v106, %v523
      %v534 = vmul.f32 %v106, %v524
      %v535 = vadd.f32 %v521, %v533
      %v536 = vadd.f32 %v522, %v534
      %v537 = vmul.f32 %v100, %v523
      %v538 = vmul.f32 %v100, %v524
      %v539 = vld [vmem:[%s459] sm:$0xff]
      %v540 = vld [vmem:[%s459 + $0x8] sm:$0x3f]
      %v541 = vmul.f32 %v163, %v539
      %v542 = vmul.f32 %v163, %v540
      %v543 = vadd.f32 %v527, %v541
      %v544 = vadd.f32 %v528, %v542
      %v545 = vmul.f32 %v145, %v539
      %v546 = vmul.f32 %v145, %v540
      %v547 = vadd.f32 %v531, %v545
      %v548 = vadd.f32 %v532, %v546
      %v549 = vmul.f32 %v116, %v539
      %v550 = vmul.f32 %v116, %v540
      %v551 = vadd.f32 %v535, %v549
      %v552 = vadd.f32 %v536, %v550
      %v553 = vmul.f32 %v106, %v539
      %v554 = vmul.f32 %v106, %v540
      %v555 = vadd.f32 %v537, %v553
      %v556 = vadd.f32 %v538, %v554
      %v557 = vld [vmem:[%s470] sm:$0xff]
      %v558 = vld [vmem:[%s470 + $0x8] sm:$0x3f]
      %v559 = vmul.f32 %v163, %v557
      %v560 = vmul.f32 %v163, %v558
      %v561 = vadd.f32 %v547, %v559
      %v562 = vadd.f32 %v548, %v560
      %v563 = vmul.f32 %v116, %v557
      %v564 = vmul.f32 %v116, %v558
      %v565 = vadd.f32 %v555, %v563
      %v566 = vadd.f32 %v556, %v564
      %s567 = scalar_lea.vmem %s2, 96
      %v568 = vld [vmem:[%s567] sm:$0xff]
      %v569 = vld [vmem:[%s567 + $0x8] sm:$0x3f]
      %v570 = vmul.f32 %v194, %v568
      %v571 = vmul.f32 %v194, %v569
      %v572 = vadd.f32 %v543, %v570
      %v573 = vadd.f32 %v544, %v571
      %v574 = vmul.f32 %v135, %v568
      %v575 = vmul.f32 %v135, %v569
      %v576 = vadd.f32 %v551, %v574
      %v577 = vadd.f32 %v552, %v575
      %s578 = scalar_lea.vmem %s2, 576
      %v579 = vld [vmem:[%s578] sm:$0xff]
      %v580 = vld [vmem:[%s578 + $0x8] sm:$0x3f]
      %v581 = vmul.f32 %v206, %v579
      %v582 = vmul.f32 %v206, %v580
      %v583 = vadd.f32 %v572, %v581
      %v584 = vadd.f32 %v573, %v582
      %v585 = vmul.f32 %v194, %v579
      %v586 = vmul.f32 %v194, %v580
      %v587 = vadd.f32 %v561, %v585
      %v588 = vadd.f32 %v562, %v586
      %v589 = vmul.f32 %v145, %v579
      %v590 = vmul.f32 %v145, %v580
      %v591 = vadd.f32 %v576, %v589
      %v592 = vadd.f32 %v577, %v590
      %v593 = vmul.f32 %v135, %v579
      %v594 = vmul.f32 %v135, %v580
      %v595 = vadd.f32 %v565, %v593
      %v596 = vadd.f32 %v566, %v594
      %s597 = scalar_lea.vmem %s2, 1056
      %v598 = vld [vmem:[%s597] sm:$0xff]
      %v599 = vld [vmem:[%s597 + $0x8] sm:$0x3f]
      %v600 = vmul.f32 %v226, %v598
      %v601 = vmul.f32 %v226, %v599
      %v602 = vadd.f32 %v583, %v600
      %v603 = vadd.f32 %v584, %v601
      %v604 = vmul.f32 %v206, %v598
      %v605 = vmul.f32 %v206, %v599
      %v606 = vadd.f32 %v587, %v604
      %v607 = vadd.f32 %v588, %v605
      %v608 = vmul.f32 %v163, %v598
      %v609 = vmul.f32 %v163, %v599
      %v610 = vadd.f32 %v591, %v608
      %v611 = vadd.f32 %v592, %v609
      %v612 = vmul.f32 %v145, %v598
      %v613 = vmul.f32 %v145, %v599
      %v614 = vadd.f32 %v595, %v612
      %v615 = vadd.f32 %v596, %v613
      %s616 = scalar_lea.vmem %s2, 1536
      %v617 = vld [vmem:[%s616] sm:$0xff]
      %v618 = vld [vmem:[%s616 + $0x8] sm:$0x3f]
      %v619 = vmul.f32 %v226, %v617
      %v620 = vmul.f32 %v226, %v618
      %v621 = vadd.f32 %v606, %v619
      %v622 = vadd.f32 %v607, %v620
      %v623 = vmul.f32 %v163, %v617
      %v624 = vmul.f32 %v163, %v618
      %v625 = vadd.f32 %v614, %v623
      %v626 = vadd.f32 %v615, %v624
      %s627 = scalar_lea.vmem %s2, 112
      %v628 = vld [vmem:[%s627] sm:$0xff]
      %v629 = vld [vmem:[%s627 + $0x8] sm:$0x3f]
      %v630 = vmul.f32 %v194, %v628
      %v631 = vmul.f32 %v194, %v629
      %v632 = vadd.f32 %v610, %v630
      %v633 = vadd.f32 %v611, %v631
      %s634 = scalar_lea.vmem %s2, 592
      %v635 = vld [vmem:[%s634] sm:$0xff]
      %v636 = vld [vmem:[%s634 + $0x8] sm:$0x3f]
      %v637 = vmul.f32 %v206, %v635
      %v638 = vmul.f32 %v206, %v636
      %v639 = vadd.f32 %v632, %v637
      %v640 = vadd.f32 %v633, %v638
      %v641 = vmul.f32 %v194, %v635
      %v642 = vmul.f32 %v194, %v636
      %v643 = vadd.f32 %v625, %v641
      %v644 = vadd.f32 %v626, %v642
      %s645 = scalar_lea.vmem %s2, 1072
      %v646 = vld [vmem:[%s645] sm:$0xff]
      %v647 = vld [vmem:[%s645 + $0x8] sm:$0x3f]
      %v648 = vmul.f32 %v226, %v646
      %v649 = vmul.f32 %v226, %v647
      %v650 = vadd.f32 %v639, %v648
      %v651 = vadd.f32 %v640, %v649
      %v652 = vmul.f32 %v206, %v646
      %v653 = vmul.f32 %v206, %v647
      %v654 = vadd.f32 %v643, %v652
      %v655 = vadd.f32 %v644, %v653
      %s656 = scalar_lea.vmem %s2, 1552
      %v657 = vld [vmem:[%s656] sm:$0xff]
      %v658 = vld [vmem:[%s656 + $0x8] sm:$0x3f]
      %v659 = vmul.f32 %v226, %v657
      %v660 = vmul.f32 %v226, %v658
      %v661 = vadd.f32 %v654, %v659
      %v662 = vadd.f32 %v655, %v660
      %v663 = vmax.f32 %v602, %v621
      %v664 = vmax.f32 %v603, %v622
      %v665 = vmax.f32 %v650, %v661
      %v666 = vmax.f32 %v651, %v662
      %v667 = vmax.f32 %v663, %v665
      %v668 = vmax.f32 %v664, %v666
      %v669 = vadd.f32 %v667, %v296
      %v670 = vadd.f32 %v668, %v296
      %671 = vst [vmem:[#allocation2 + $0x20] sm:$0xff] %v669
      %672 = vst [vmem:[#allocation2 + $0x28] sm:$0x3f] %v670
      %v673 = vld [vmem:[%s567] sm:$0xff]
      %v674 = vld [vmem:[%s567 + $0x8] sm:$0x3f]
      %v675 = vmul.f32 %v100, %v673
      %v676 = vmul.f32 %v100, %v674
      %v677 = vld [vmem:[%s578] sm:$0xff]
      %v678 = vld [vmem:[%s578 + $0x8] sm:$0x3f]
      %v679 = vmul.f32 %v106, %v677
      %v680 = vmul.f32 %v106, %v678
      %v681 = vadd.f32 %v675, %v679
      %v682 = vadd.f32 %v676, %v680
      %v683 = vmul.f32 %v100, %v677
      %v684 = vmul.f32 %v100, %v678
      %v685 = vld [vmem:[%s597] sm:$0xff]
      %v686 = vld [vmem:[%s597 + $0x8] sm:$0x3f]
      %v687 = vmul.f32 %v116, %v685
      %v688 = vmul.f32 %v116, %v686
      %v689 = vadd.f32 %v681, %v687
      %v690 = vadd.f32 %v682, %v688
      %v691 = vmul.f32 %v106, %v685
      %v692 = vmul.f32 %v106, %v686
      %v693 = vadd.f32 %v683, %v691
      %v694 = vadd.f32 %v684, %v692
      %v695 = vld [vmem:[%s616] sm:$0xff]
      %v696 = vld [vmem:[%s616 + $0x8] sm:$0x3f]
      %v697 = vmul.f32 %v116, %v695
      %v698 = vmul.f32 %v116, %v696
      %v699 = vadd.f32 %v693, %v697
      %v700 = vadd.f32 %v694, %v698
      %v701 = vld [vmem:[%s627] sm:$0xff]
      %v702 = vld [vmem:[%s627 + $0x8] sm:$0x3f]
      %v703 = vmul.f32 %v135, %v701
      %v704 = vmul.f32 %v135, %v702
      %v705 = vadd.f32 %v689, %v703
      %v706 = vadd.f32 %v690, %v704
      %v707 = vmul.f32 %v100, %v701
      %v708 = vmul.f32 %v100, %v702
      %v709 = vld [vmem:[%s634] sm:$0xff]
      %v710 = vld [vmem:[%s634 + $0x8] sm:$0x3f]
      %v711 = vmul.f32 %v145, %v709
      %v712 = vmul.f32 %v145, %v710
      %v713 = vadd.f32 %v705, %v711
      %v714 = vadd.f32 %v706, %v712
      %v715 = vmul.f32 %v135, %v709
      %v716 = vmul.f32 %v135, %v710
      %v717 = vadd.f32 %v699, %v715
      %v718 = vadd.f32 %v700, %v716
      %v719 = vmul.f32 %v106, %v709
      %v720 = vmul.f32 %v106, %v710
      %v721 = vadd.f32 %v707, %v719
      %v722 = vadd.f32 %v708, %v720
      %v723 = vmul.f32 %v100, %v709
      %v724 = vmul.f32 %v100, %v710
      %v725 = vld [vmem:[%s645] sm:$0xff]
      %v726 = vld [vmem:[%s645 + $0x8] sm:$0x3f]
      %v727 = vmul.f32 %v163, %v725
      %v728 = vmul.f32 %v163, %v726
      %v729 = vadd.f32 %v713, %v727
      %v730 = vadd.f32 %v714, %v728
      %v731 = vmul.f32 %v145, %v725
      %v732 = vmul.f32 %v145, %v726
      %v733 = vadd.f32 %v717, %v731
      %v734 = vadd.f32 %v718, %v732
      %v735 = vmul.f32 %v116, %v725
      %v736 = vmul.f32 %v116, %v726
      %v737 = vadd.f32 %v721, %v735
      %v738 = vadd.f32 %v722, %v736
      %v739 = vmul.f32 %v106, %v725
      %v740 = vmul.f32 %v106, %v726
      %v741 = vadd.f32 %v723, %v739
      %v742 = vadd.f32 %v724, %v740
      %v743 = vld [vmem:[%s656] sm:$0xff]
      %v744 = vld [vmem:[%s656 + $0x8] sm:$0x3f]
      %v745 = vmul.f32 %v163, %v743
      %v746 = vmul.f32 %v163, %v744
      %v747 = vadd.f32 %v733, %v745
      %v748 = vadd.f32 %v734, %v746
      %v749 = vmul.f32 %v116, %v743
      %v750 = vmul.f32 %v116, %v744
      %v751 = vadd.f32 %v741, %v749
      %v752 = vadd.f32 %v742, %v750
      %s753 = scalar_lea.vmem %s2, 128
      %v754 = vld [vmem:[%s753] sm:$0xff]
      %v755 = vld [vmem:[%s753 + $0x8] sm:$0x3f]
      %v756 = vmul.f32 %v194, %v754
      %v757 = vmul.f32 %v194, %v755
      %v758 = vadd.f32 %v729, %v756
      %v759 = vadd.f32 %v730, %v757
      %v760 = vmul.f32 %v135, %v754
      %v761 = vmul.f32 %v135, %v755
      %v762 = vadd.f32 %v737, %v760
      %v763 = vadd.f32 %v738, %v761
      %s764 = scalar_lea.vmem %s2, 608
      %v765 = vld [vmem:[%s764] sm:$0xff]
      %v766 = vld [vmem:[%s764 + $0x8] sm:$0x3f]
      %v767 = vmul.f32 %v206, %v765
      %v768 = vmul.f32 %v206, %v766
      %v769 = vadd.f32 %v758, %v767
      %v770 = vadd.f32 %v759, %v768
      %v771 = vmul.f32 %v194, %v765
      %v772 = vmul.f32 %v194, %v766
      %v773 = vadd.f32 %v747, %v771
      %v774 = vadd.f32 %v748, %v772
      %v775 = vmul.f32 %v145, %v765
      %v776 = vmul.f32 %v145, %v766
      %v777 = vadd.f32 %v762, %v775
      %v778 = vadd.f32 %v763, %v776
      %v779 = vmul.f32 %v135, %v765
      %v780 = vmul.f32 %v135, %v766
      %v781 = vadd.f32 %v751, %v779
      %v782 = vadd.f32 %v752, %v780
      %s783 = scalar_lea.vmem %s2, 1088
      %v784 = vld [vmem:[%s783] sm:$0xff]
      %v785 = vld [vmem:[%s783 + $0x8] sm:$0x3f]
      %v786 = vmul.f32 %v226, %v784
      %v787 = vmul.f32 %v226, %v785
      %v788 = vadd.f32 %v769, %v786
      %v789 = vadd.f32 %v770, %v787
      %v790 = vmul.f32 %v206, %v784
      %v791 = vmul.f32 %v206, %v785
      %v792 = vadd.f32 %v773, %v790
      %v793 = vadd.f32 %v774, %v791
      %v794 = vmul.f32 %v163, %v784
      %v795 = vmul.f32 %v163, %v785
      %v796 = vadd.f32 %v777, %v794
      %v797 = vadd.f32 %v778, %v795
      %v798 = vmul.f32 %v145, %v784
      %v799 = vmul.f32 %v145, %v785
      %v800 = vadd.f32 %v781, %v798
      %v801 = vadd.f32 %v782, %v799
      %s802 = scalar_lea.vmem %s2, 1568
      %v803 = vld [vmem:[%s802] sm:$0xff]
      %v804 = vld [vmem:[%s802 + $0x8] sm:$0x3f]
      %v805 = vmul.f32 %v226, %v803
      %v806 = vmul.f32 %v226, %v804
      %v807 = vadd.f32 %v792, %v805
      %v808 = vadd.f32 %v793, %v806
      %v809 = vmul.f32 %v163, %v803
      %v810 = vmul.f32 %v163, %v804
      %v811 = vadd.f32 %v800, %v809
      %v812 = vadd.f32 %v801, %v810
      %s813 = scalar_lea.vmem %s2, 144
      %v814 = vld [vmem:[%s813] sm:$0xff]
      %v815 = vld [vmem:[%s813 + $0x8] sm:$0x3f]
      %v816 = vmul.f32 %v194, %v814
      %v817 = vmul.f32 %v194, %v815
      %v818 = vadd.f32 %v796, %v816
      %v819 = vadd.f32 %v797, %v817
      %s820 = scalar_lea.vmem %s2, 624
      %v821 = vld [vmem:[%s820] sm:$0xff]
      %v822 = vld [vmem:[%s820 + $0x8] sm:$0x3f]
      %v823 = vmul.f32 %v206, %v821
      %v824 = vmul.f32 %v206, %v822
      %v825 = vadd.f32 %v818, %v823
      %v826 = vadd.f32 %v819, %v824
      %v827 = vmul.f32 %v194, %v821
      %v828 = vmul.f32 %v194, %v822
      %v829 = vadd.f32 %v811, %v827
      %v830 = vadd.f32 %v812, %v828
      %s831 = scalar_lea.vmem %s2, 1104
      %v832 = vld [vmem:[%s831] sm:$0xff]
      %v833 = vld [vmem:[%s831 + $0x8] sm:$0x3f]
      %v834 = vmul.f32 %v226, %v832
      %v835 = vmul.f32 %v226, %v833
      %v836 = vadd.f32 %v825, %v834
      %v837 = vadd.f32 %v826, %v835
      %v838 = vmul.f32 %v206, %v832
      %v839 = vmul.f32 %v206, %v833
      %v840 = vadd.f32 %v829, %v838
      %v841 = vadd.f32 %v830, %v839
      %s842 = scalar_lea.vmem %s2, 1584
      %v843 = vld [vmem:[%s842] sm:$0xff]
      %v844 = vld [vmem:[%s842 + $0x8] sm:$0x3f]
      %v845 = vmul.f32 %v226, %v843
      %v846 = vmul.f32 %v226, %v844
      %v847 = vadd.f32 %v840, %v845
      %v848 = vadd.f32 %v841, %v846
      %v849 = vmax.f32 %v788, %v807
      %v850 = vmax.f32 %v789, %v808
      %v851 = vmax.f32 %v836, %v847
      %v852 = vmax.f32 %v837, %v848
      %v853 = vmax.f32 %v849, %v851
      %v854 = vmax.f32 %v850, %v852
      %v855 = vadd.f32 %v853, %v296
      %v856 = vadd.f32 %v854, %v296
      %857 = vst [vmem:[#allocation2 + $0x30] sm:$0xff] %v855
      %858 = vst [vmem:[#allocation2 + $0x38] sm:$0x3f] %v856
      %v859 = vld [vmem:[%s753] sm:$0xff]
      %v860 = vld [vmem:[%s753 + $0x8] sm:$0x3f]
      %v861 = vmul.f32 %v100, %v859
      %v862 = vmul.f32 %v100, %v860
      %v863 = vld [vmem:[%s764] sm:$0xff]
      %v864 = vld [vmem:[%s764 + $0x8] sm:$0x3f]
      %v865 = vmul.f32 %v106, %v863
      %v866 = vmul.f32 %v106, %v864
      %v867 = vadd.f32 %v861, %v865
      %v868 = vadd.f32 %v862, %v866
      %v869 = vmul.f32 %v100, %v863
      %v870 = vmul.f32 %v100, %v864
      %v871 = vld [vmem:[%s783] sm:$0xff]
      %v872 = vld [vmem:[%s783 + $0x8] sm:$0x3f]
      %v873 = vmul.f32 %v116, %v871
      %v874 = vmul.f32 %v116, %v872
      %v875 = vadd.f32 %v867, %v873
      %v876 = vadd.f32 %v868, %v874
      %v877 = vmul.f32 %v106, %v871
      %v878 = vmul.f32 %v106, %v872
      %v879 = vadd.f32 %v869, %v877
      %v880 = vadd.f32 %v870, %v878
      %v881 = vld [vmem:[%s802] sm:$0xff]
      %v882 = vld [vmem:[%s802 + $0x8] sm:$0x3f]
      %v883 = vmul.f32 %v116, %v881
      %v884 = vmul.f32 %v116, %v882
      %v885 = vadd.f32 %v879, %v883
      %v886 = vadd.f32 %v880, %v884
      %v887 = vld [vmem:[%s813] sm:$0xff]
      %v888 = vld [vmem:[%s813 + $0x8] sm:$0x3f]
      %v889 = vmul.f32 %v135, %v887
      %v890 = vmul.f32 %v135, %v888
      %v891 = vadd.f32 %v875, %v889
      %v892 = vadd.f32 %v876, %v890
      %v893 = vmul.f32 %v100, %v887
      %v894 = vmul.f32 %v100, %v888
      %v895 = vld [vmem:[%s820] sm:$0xff]
      %v896 = vld [vmem:[%s820 + $0x8] sm:$0x3f]
      %v897 = vmul.f32 %v145, %v895
      %v898 = vmul.f32 %v145, %v896
      %v899 = vadd.f32 %v891, %v897
      %v900 = vadd.f32 %v892, %v898
      %v901 = vmul.f32 %v135, %v895
      %v902 = vmul.f32 %v135, %v896
      %v903 = vadd.f32 %v885, %v901
      %v904 = vadd.f32 %v886, %v902
      %v905 = vmul.f32 %v106, %v895
      %v906 = vmul.f32 %v106, %v896
      %v907 = vadd.f32 %v893, %v905
      %v908 = vadd.f32 %v894, %v906
      %v909 = vmul.f32 %v100, %v895
      %v910 = vmul.f32 %v100, %v896
      %v911 = vld [vmem:[%s831] sm:$0xff]
      %v912 = vld [vmem:[%s831 + $0x8] sm:$0x3f]
      %v913 = vmul.f32 %v163, %v911
      %v914 = vmul.f32 %v163, %v912
      %v915 = vadd.f32 %v899, %v913
      %v916 = vadd.f32 %v900, %v914
      %v917 = vmul.f32 %v145, %v911
      %v918 = vmul.f32 %v145, %v912
      %v919 = vadd.f32 %v903, %v917
      %v920 = vadd.f32 %v904, %v918
      %v921 = vmul.f32 %v116, %v911
      %v922 = vmul.f32 %v116, %v912
      %v923 = vadd.f32 %v907, %v921
      %v924 = vadd.f32 %v908, %v922
      %v925 = vmul.f32 %v106, %v911
      %v926 = vmul.f32 %v106, %v912
      %v927 = vadd.f32 %v909, %v925
      %v928 = vadd.f32 %v910, %v926
      %v929 = vld [vmem:[%s842] sm:$0xff]
      %v930 = vld [vmem:[%s842 + $0x8] sm:$0x3f]
      %v931 = vmul.f32 %v163, %v929
      %v932 = vmul.f32 %v163, %v930
      %v933 = vadd.f32 %v919, %v931
      %v934 = vadd.f32 %v920, %v932
      %v935 = vmul.f32 %v116, %v929
      %v936 = vmul.f32 %v116, %v930
      %v937 = vadd.f32 %v927, %v935
      %v938 = vadd.f32 %v928, %v936
      %s939 = scalar_lea.vmem %s2, 160
      %v940 = vld [vmem:[%s939] sm:$0xff]
      %v941 = vld [vmem:[%s939 + $0x8] sm:$0x3f]
      %v942 = vmul.f32 %v194, %v940
      %v943 = vmul.f32 %v194, %v941
      %v944 = vadd.f32 %v915, %v942
      %v945 = vadd.f32 %v916, %v943
      %v946 = vmul.f32 %v135, %v940
      %v947 = vmul.f32 %v135, %v941
      %v948 = vadd.f32 %v923, %v946
      %v949 = vadd.f32 %v924, %v947
      %s950 = scalar_lea.vmem %s2, 640
      %v951 = vld [vmem:[%s950] sm:$0xff]
      %v952 = vld [vmem:[%s950 + $0x8] sm:$0x3f]
      %v953 = vmul.f32 %v206, %v951
      %v954 = vmul.f32 %v206, %v952
      %v955 = vadd.f32 %v944, %v953
      %v956 = vadd.f32 %v945, %v954
      %v957 = vmul.f32 %v194, %v951
      %v958 = vmul.f32 %v194, %v952
      %v959 = vadd.f32 %v933, %v957
      %v960 = vadd.f32 %v934, %v958
      %v961 = vmul.f32 %v145, %v951
      %v962 = vmul.f32 %v145, %v952
      %v963 = vadd.f32 %v948, %v961
      %v964 = vadd.f32 %v949, %v962
      %v965 = vmul.f32 %v135, %v951
      %v966 = vmul.f32 %v135, %v952
      %v967 = vadd.f32 %v937, %v965
      %v968 = vadd.f32 %v938, %v966
      %s969 = scalar_lea.vmem %s2, 1120
      %v970 = vld [vmem:[%s969] sm:$0xff]
      %v971 = vld [vmem:[%s969 + $0x8] sm:$0x3f]
      %v972 = vmul.f32 %v226, %v970
      %v973 = vmul.f32 %v226, %v971
      %v974 = vadd.f32 %v955, %v972
      %v975 = vadd.f32 %v956, %v973
      %v976 = vmul.f32 %v206, %v970
      %v977 = vmul.f32 %v206, %v971
      %v978 = vadd.f32 %v959, %v976
      %v979 = vadd.f32 %v960, %v977
      %v980 = vmul.f32 %v163, %v970
      %v981 = vmul.f32 %v163, %v971
      %v982 = vadd.f32 %v963, %v980
      %v983 = vadd.f32 %v964, %v981
      %v984 = vmul.f32 %v145, %v970
      %v985 = vmul.f32 %v145, %v971
      %v986 = vadd.f32 %v967, %v984
      %v987 = vadd.f32 %v968, %v985
      %s988 = scalar_lea.vmem %s2, 1600
      %v989 = vld [vmem:[%s988] sm:$0xff]
      %v990 = vld [vmem:[%s988 + $0x8] sm:$0x3f]
      %v991 = vmul.f32 %v226, %v989
      %v992 = vmul.f32 %v226, %v990
      %v993 = vadd.f32 %v978, %v991
      %v994 = vadd.f32 %v979, %v992
      %v995 = vmul.f32 %v163, %v989
      %v996 = vmul.f32 %v163, %v990
      %v997 = vadd.f32 %v986, %v995
      %v998 = vadd.f32 %v987, %v996
      %s999 = scalar_lea.vmem %s2, 176
      %v1000 = vld [vmem:[%s999] sm:$0xff]
      %v1001 = vld [vmem:[%s999 + $0x8] sm:$0x3f]
      %v1002 = vmul.f32 %v194, %v1000
      %v1003 = vmul.f32 %v194, %v1001
      %v1004 = vadd.f32 %v982, %v1002
      %v1005 = vadd.f32 %v983, %v1003
      %s1006 = scalar_lea.vmem %s2, 656
      %v1007 = vld [vmem:[%s1006] sm:$0xff]
      %v1008 = vld [vmem:[%s1006 + $0x8] sm:$0x3f]
      %v1009 = vmul.f32 %v206, %v1007
      %v1010 = vmul.f32 %v206, %v1008
      %v1011 = vadd.f32 %v1004, %v1009
      %v1012 = vadd.f32 %v1005, %v1010
      %v1013 = vmul.f32 %v194, %v1007
      %v1014 = vmul.f32 %v194, %v1008
      %v1015 = vadd.f32 %v997, %v1013
      %v1016 = vadd.f32 %v998, %v1014
      %s1017 = scalar_lea.vmem %s2, 1136
      %v1018 = vld [vmem:[%s1017] sm:$0xff]
      %v1019 = vld [vmem:[%s1017 + $0x8] sm:$0x3f]
      %v1020 = vmul.f32 %v226, %v1018
      %v1021 = vmul.f32 %v226, %v1019
      %v1022 = vadd.f32 %v1011, %v1020
      %v1023 = vadd.f32 %v1012, %v1021
      %v1024 = vmul.f32 %v206, %v1018
      %v1025 = vmul.f32 %v206, %v1019
      %v1026 = vadd.f32 %v1015, %v1024
      %v1027 = vadd.f32 %v1016, %v1025
      %s1028 = scalar_lea.vmem %s2, 1616
      %v1029 = vld [vmem:[%s1028] sm:$0xff]
      %v1030 = vld [vmem:[%s1028 + $0x8] sm:$0x3f]
      %v1031 = vmul.f32 %v226, %v1029
      %v1032 = vmul.f32 %v226, %v1030
      %v1033 = vadd.f32 %v1026, %v1031
      %v1034 = vadd.f32 %v1027, %v1032
      %v1035 = vmax.f32 %v974, %v993
      %v1036 = vmax.f32 %v975, %v994
      %v1037 = vmax.f32 %v1022, %v1033
      %v1038 = vmax.f32 %v1023, %v1034
      %v1039 = vmax.f32 %v1035, %v1037
      %v1040 = vmax.f32 %v1036, %v1038
      %v1041 = vadd.f32 %v1039, %v296
      %v1042 = vadd.f32 %v1040, %v296
      %1043 = vst [vmem:[#allocation2 + $0x40] sm:$0xff] %v1041
      %1044 = vst [vmem:[#allocation2 + $0x48] sm:$0x3f] %v1042
      %v1045 = vld [vmem:[%s939] sm:$0xff]
      %v1046 = vld [vmem:[%s939 + $0x8] sm:$0x3f]
      %v1047 = vmul.f32 %v100, %v1045
      %v1048 = vmul.f32 %v100, %v1046
      %v1049 = vld [vmem:[%s950] sm:$0xff]
      %v1050 = vld [vmem:[%s950 + $0x8] sm:$0x3f]
      %v1051 = vmul.f32 %v106, %v1049
      %v1052 = vmul.f32 %v106, %v1050
      %v1053 = vadd.f32 %v1047, %v1051
      %v1054 = vadd.f32 %v1048, %v1052
      %v1055 = vmul.f32 %v100, %v1049
      %v1056 = vmul.f32 %v100, %v1050
      %v1057 = vld [vmem:[%s969] sm:$0xff]
      %v1058 = vld [vmem:[%s969 + $0x8] sm:$0x3f]
      %v1059 = vmul.f32 %v116, %v1057
      %v1060 = vmul.f32 %v116, %v1058
      %v1061 = vadd.f32 %v1053, %v1059
      %v1062 = vadd.f32 %v1054, %v1060
      %v1063 = vmul.f32 %v106, %v1057
      %v1064 = vmul.f32 %v106, %v1058
      %v1065 = vadd.f32 %v1055, %v1063
      %v1066 = vadd.f32 %v1056, %v1064
      %v1067 = vld [vmem:[%s988] sm:$0xff]
      %v1068 = vld [vmem:[%s988 + $0x8] sm:$0x3f]
      %v1069 = vmul.f32 %v116, %v1067
      %v1070 = vmul.f32 %v116, %v1068
      %v1071 = vadd.f32 %v1065, %v1069
      %v1072 = vadd.f32 %v1066, %v1070
      %v1073 = vld [vmem:[%s999] sm:$0xff]
      %v1074 = vld [vmem:[%s999 + $0x8] sm:$0x3f]
      %v1075 = vmul.f32 %v135, %v1073
      %v1076 = vmul.f32 %v135, %v1074
      %v1077 = vadd.f32 %v1061, %v1075
      %v1078 = vadd.f32 %v1062, %v1076
      %v1079 = vmul.f32 %v100, %v1073
      %v1080 = vmul.f32 %v100, %v1074
      %v1081 = vld [vmem:[%s1006] sm:$0xff]
      %v1082 = vld [vmem:[%s1006 + $0x8] sm:$0x3f]
      %v1083 = vmul.f32 %v145, %v1081
      %v1084 = vmul.f32 %v145, %v1082
      %v1085 = vadd.f32 %v1077, %v1083
      %v1086 = vadd.f32 %v1078, %v1084
      %v1087 = vmul.f32 %v135, %v1081
      %v1088 = vmul.f32 %v135, %v1082
      %v1089 = vadd.f32 %v1071, %v1087
      %v1090 = vadd.f32 %v1072, %v1088
      %v1091 = vmul.f32 %v106, %v1081
      %v1092 = vmul.f32 %v106, %v1082
      %v1093 = vadd.f32 %v1079, %v1091
      %v1094 = vadd.f32 %v1080, %v1092
      %v1095 = vmul.f32 %v100, %v1081
      %v1096 = vmul.f32 %v100, %v1082
      %v1097 = vld [vmem:[%s1017] sm:$0xff]
      %v1098 = vld [vmem:[%s1017 + $0x8] sm:$0x3f]
      %v1099 = vmul.f32 %v163, %v1097
      %v1100 = vmul.f32 %v163, %v1098
      %v1101 = vadd.f32 %v1085, %v1099
      %v1102 = vadd.f32 %v1086, %v1100
      %v1103 = vmul.f32 %v145, %v1097
      %v1104 = vmul.f32 %v145, %v1098
      %v1105 = vadd.f32 %v1089, %v1103
      %v1106 = vadd.f32 %v1090, %v1104
      %v1107 = vmul.f32 %v116, %v1097
      %v1108 = vmul.f32 %v116, %v1098
      %v1109 = vadd.f32 %v1093, %v1107
      %v1110 = vadd.f32 %v1094, %v1108
      %v1111 = vmul.f32 %v106, %v1097
      %v1112 = vmul.f32 %v106, %v1098
      %v1113 = vadd.f32 %v1095, %v1111
      %v1114 = vadd.f32 %v1096, %v1112
      %v1115 = vld [vmem:[%s1028] sm:$0xff]
      %v1116 = vld [vmem:[%s1028 + $0x8] sm:$0x3f]
      %v1117 = vmul.f32 %v163, %v1115
      %v1118 = vmul.f32 %v163, %v1116
      %v1119 = vadd.f32 %v1105, %v1117
      %v1120 = vadd.f32 %v1106, %v1118
      %v1121 = vmul.f32 %v116, %v1115
      %v1122 = vmul.f32 %v116, %v1116
      %v1123 = vadd.f32 %v1113, %v1121
      %v1124 = vadd.f32 %v1114, %v1122
      %s1125 = scalar_lea.vmem %s2, 192
      %v1126 = vld [vmem:[%s1125] sm:$0xff]
      %v1127 = vld [vmem:[%s1125 + $0x8] sm:$0x3f]
      %v1128 = vmul.f32 %v194, %v1126
      %v1129 = vmul.f32 %v194, %v1127
      %v1130 = vadd.f32 %v1101, %v1128
      %v1131 = vadd.f32 %v1102, %v1129
      %v1132 = vmul.f32 %v135, %v1126
      %v1133 = vmul.f32 %v135, %v1127
      %v1134 = vadd.f32 %v1109, %v1132
      %v1135 = vadd.f32 %v1110, %v1133
      %s1136 = scalar_lea.vmem %s2, 672
      %v1137 = vld [vmem:[%s1136] sm:$0xff]
      %v1138 = vld [vmem:[%s1136 + $0x8] sm:$0x3f]
      %v1139 = vmul.f32 %v206, %v1137
      %v1140 = vmul.f32 %v206, %v1138
      %v1141 = vadd.f32 %v1130, %v1139
      %v1142 = vadd.f32 %v1131, %v1140
      %v1143 = vmul.f32 %v194, %v1137
      %v1144 = vmul.f32 %v194, %v1138
      %v1145 = vadd.f32 %v1119, %v1143
      %v1146 = vadd.f32 %v1120, %v1144
      %v1147 = vmul.f32 %v145, %v1137
      %v1148 = vmul.f32 %v145, %v1138
      %v1149 = vadd.f32 %v1134, %v1147
      %v1150 = vadd.f32 %v1135, %v1148
      %v1151 = vmul.f32 %v135, %v1137
      %v1152 = vmul.f32 %v135, %v1138
      %v1153 = vadd.f32 %v1123, %v1151
      %v1154 = vadd.f32 %v1124, %v1152
      %s1155 = scalar_lea.vmem %s2, 1152
      %v1156 = vld [vmem:[%s1155] sm:$0xff]
      %v1157 = vld [vmem:[%s1155 + $0x8] sm:$0x3f]
      %v1158 = vmul.f32 %v226, %v1156
      %v1159 = vmul.f32 %v226, %v1157
      %v1160 = vadd.f32 %v1141, %v1158
      %v1161 = vadd.f32 %v1142, %v1159
      %v1162 = vmul.f32 %v206, %v1156
      %v1163 = vmul.f32 %v206, %v1157
      %v1164 = vadd.f32 %v1145, %v1162
      %v1165 = vadd.f32 %v1146, %v1163
      %v1166 = vmul.f32 %v163, %v1156
      %v1167 = vmul.f32 %v163, %v1157
      %v1168 = vadd.f32 %v1149, %v1166
      %v1169 = vadd.f32 %v1150, %v1167
      %v1170 = vmul.f32 %v145, %v1156
      %v1171 = vmul.f32 %v145, %v1157
      %v1172 = vadd.f32 %v1153, %v1170
      %v1173 = vadd.f32 %v1154, %v1171
      %s1174 = scalar_lea.vmem %s2, 1632
      %v1175 = vld [vmem:[%s1174] sm:$0xff]
      %v1176 = vld [vmem:[%s1174 + $0x8] sm:$0x3f]
      %v1177 = vmul.f32 %v226, %v1175
      %v1178 = vmul.f32 %v226, %v1176
      %v1179 = vadd.f32 %v1164, %v1177
      %v1180 = vadd.f32 %v1165, %v1178
      %v1181 = vmul.f32 %v163, %v1175
      %v1182 = vmul.f32 %v163, %v1176
      %v1183 = vadd.f32 %v1172, %v1181
      %v1184 = vadd.f32 %v1173, %v1182
      %s1185 = scalar_lea.vmem %s2, 208
      %v1186 = vld [vmem:[%s1185] sm:$0xff]
      %v1187 = vld [vmem:[%s1185 + $0x8] sm:$0x3f]
      %v1188 = vmul.f32 %v194, %v1186
      %v1189 = vmul.f32 %v194, %v1187
      %v1190 = vadd.f32 %v1168, %v1188
      %v1191 = vadd.f32 %v1169, %v1189
      %s1192 = scalar_lea.vmem %s2, 688
      %v1193 = vld [vmem:[%s1192] sm:$0xff]
      %v1194 = vld [vmem:[%s1192 + $0x8] sm:$0x3f]
      %v1195 = vmul.f32 %v206, %v1193
      %v1196 = vmul.f32 %v206, %v1194
      %v1197 = vadd.f32 %v1190, %v1195
      %v1198 = vadd.f32 %v1191, %v1196
      %v1199 = vmul.f32 %v194, %v1193
      %v1200 = vmul.f32 %v194, %v1194
      %v1201 = vadd.f32 %v1183, %v1199
      %v1202 = vadd.f32 %v1184, %v1200
      %s1203 = scalar_lea.vmem %s2, 1168
      %v1204 = vld [vmem:[%s1203] sm:$0xff]
      %v1205 = vld [vmem:[%s1203 + $0x8] sm:$0x3f]
      %v1206 = vmul.f32 %v226, %v1204
      %v1207 = vmul.f32 %v226, %v1205
      %v1208 = vadd.f32 %v1197, %v1206
      %v1209 = vadd.f32 %v1198, %v1207
      %v1210 = vmul.f32 %v206, %v1204
      %v1211 = vmul.f32 %v206, %v1205
      %v1212 = vadd.f32 %v1201, %v1210
      %v1213 = vadd.f32 %v1202, %v1211
      %s1214 = scalar_lea.vmem %s2, 1648
      %v1215 = vld [vmem:[%s1214] sm:$0xff]
      %v1216 = vld [vmem:[%s1214 + $0x8] sm:$0x3f]
      %v1217 = vmul.f32 %v226, %v1215
      %v1218 = vmul.f32 %v226, %v1216
      %v1219 = vadd.f32 %v1212, %v1217
      %v1220 = vadd.f32 %v1213, %v1218
      %v1221 = vmax.f32 %v1160, %v1179
      %v1222 = vmax.f32 %v1161, %v1180
      %v1223 = vmax.f32 %v1208, %v1219
      %v1224 = vmax.f32 %v1209, %v1220
      %v1225 = vmax.f32 %v1221, %v1223
      %v1226 = vmax.f32 %v1222, %v1224
      %v1227 = vadd.f32 %v1225, %v296
      %v1228 = vadd.f32 %v1226, %v296
      %1229 = vst [vmem:[#allocation2 + $0x50] sm:$0xff] %v1227
      %1230 = vst [vmem:[#allocation2 + $0x58] sm:$0x3f] %v1228
      %v1231 = vld [vmem:[%s1125] sm:$0xff]
      %v1232 = vld [vmem:[%s1125 + $0x8] sm:$0x3f]
      %v1233 = vmul.f32 %v100, %v1231
      %v1234 = vmul.f32 %v100, %v1232
      %v1235 = vld [vmem:[%s1136] sm:$0xff]
      %v1236 = vld [vmem:[%s1136 + $0x8] sm:$0x3f]
      %v1237 = vmul.f32 %v106, %v1235
      %v1238 = vmul.f32 %v106, %v1236
      %v1239 = vadd.f32 %v1233, %v1237
      %v1240 = vadd.f32 %v1234, %v1238
      %v1241 = vmul.f32 %v100, %v1235
      %v1242 = vmul.f32 %v100, %v1236
      %v1243 = vld [vmem:[%s1155] sm:$0xff]
      %v1244 = vld [vmem:[%s1155 + $0x8] sm:$0x3f]
      %v1245 = vmul.f32 %v116, %v1243
      %v1246 = vmul.f32 %v116, %v1244
      %v1247 = vadd.f32 %v1239, %v1245
      %v1248 = vadd.f32 %v1240, %v1246
      %v1249 = vmul.f32 %v106, %v1243
      %v1250 = vmul.f32 %v106, %v1244
      %v1251 = vadd.f32 %v1241, %v1249
      %v1252 = vadd.f32 %v1242, %v1250
      %v1253 = vld [vmem:[%s1174] sm:$0xff]
      %v1254 = vld [vmem:[%s1174 + $0x8] sm:$0x3f]
      %v1255 = vmul.f32 %v116, %v1253
      %v1256 = vmul.f32 %v116, %v1254
      %v1257 = vadd.f32 %v1251, %v1255
      %v1258 = vadd.f32 %v1252, %v1256
      %v1259 = vld [vmem:[%s1185] sm:$0xff]
      %v1260 = vld [vmem:[%s1185 + $0x8] sm:$0x3f]
      %v1261 = vmul.f32 %v135, %v1259
      %v1262 = vmul.f32 %v135, %v1260
      %v1263 = vadd.f32 %v1247, %v1261
      %v1264 = vadd.f32 %v1248, %v1262
      %v1265 = vmul.f32 %v100, %v1259
      %v1266 = vmul.f32 %v100, %v1260
      %v1267 = vld [vmem:[%s1192] sm:$0xff]
      %v1268 = vld [vmem:[%s1192 + $0x8] sm:$0x3f]
      %v1269 = vmul.f32 %v145, %v1267
      %v1270 = vmul.f32 %v145, %v1268
      %v1271 = vadd.f32 %v1263, %v1269
      %v1272 = vadd.f32 %v1264, %v1270
      %v1273 = vmul.f32 %v135, %v1267
      %v1274 = vmul.f32 %v135, %v1268
      %v1275 = vadd.f32 %v1257, %v1273
      %v1276 = vadd.f32 %v1258, %v1274
      %v1277 = vmul.f32 %v106, %v1267
      %v1278 = vmul.f32 %v106, %v1268
      %v1279 = vadd.f32 %v1265, %v1277
      %v1280 = vadd.f32 %v1266, %v1278
      %v1281 = vmul.f32 %v100, %v1267
      %v1282 = vmul.f32 %v100, %v1268
      %v1283 = vld [vmem:[%s1203] sm:$0xff]
      %v1284 = vld [vmem:[%s1203 + $0x8] sm:$0x3f]
      %v1285 = vmul.f32 %v163, %v1283
      %v1286 = vmul.f32 %v163, %v1284
      %v1287 = vadd.f32 %v1271, %v1285
      %v1288 = vadd.f32 %v1272, %v1286
      %v1289 = vmul.f32 %v145, %v1283
      %v1290 = vmul.f32 %v145, %v1284
      %v1291 = vadd.f32 %v1275, %v1289
      %v1292 = vadd.f32 %v1276, %v1290
      %v1293 = vmul.f32 %v116, %v1283
      %v1294 = vmul.f32 %v116, %v1284
      %v1295 = vadd.f32 %v1279, %v1293
      %v1296 = vadd.f32 %v1280, %v1294
      %v1297 = vmul.f32 %v106, %v1283
      %v1298 = vmul.f32 %v106, %v1284
      %v1299 = vadd.f32 %v1281, %v1297
      %v1300 = vadd.f32 %v1282, %v1298
      %v1301 = vld [vmem:[%s1214] sm:$0xff]
      %v1302 = vld [vmem:[%s1214 + $0x8] sm:$0x3f]
      %v1303 = vmul.f32 %v163, %v1301
      %v1304 = vmul.f32 %v163, %v1302
      %v1305 = vadd.f32 %v1291, %v1303
      %v1306 = vadd.f32 %v1292, %v1304
      %v1307 = vmul.f32 %v116, %v1301
      %v1308 = vmul.f32 %v116, %v1302
      %v1309 = vadd.f32 %v1299, %v1307
      %v1310 = vadd.f32 %v1300, %v1308
      %s1311 = scalar_lea.vmem %s2, 224
      %v1312 = vld [vmem:[%s1311] sm:$0xff]
      %v1313 = vld [vmem:[%s1311 + $0x8] sm:$0x3f]
      %v1314 = vmul.f32 %v194, %v1312
      %v1315 = vmul.f32 %v194, %v1313
      %v1316 = vadd.f32 %v1287, %v1314
      %v1317 = vadd.f32 %v1288, %v1315
      %v1318 = vmul.f32 %v135, %v1312
      %v1319 = vmul.f32 %v135, %v1313
      %v1320 = vadd.f32 %v1295, %v1318
      %v1321 = vadd.f32 %v1296, %v1319
      %s1322 = scalar_lea.vmem %s2, 704
      %v1323 = vld [vmem:[%s1322] sm:$0xff]
      %v1324 = vld [vmem:[%s1322 + $0x8] sm:$0x3f]
      %v1325 = vmul.f32 %v206, %v1323
      %v1326 = vmul.f32 %v206, %v1324
      %v1327 = vadd.f32 %v1316, %v1325
      %v1328 = vadd.f32 %v1317, %v1326
      %v1329 = vmul.f32 %v194, %v1323
      %v1330 = vmul.f32 %v194, %v1324
      %v1331 = vadd.f32 %v1305, %v1329
      %v1332 = vadd.f32 %v1306, %v1330
      %v1333 = vmul.f32 %v145, %v1323
      %v1334 = vmul.f32 %v145, %v1324
      %v1335 = vadd.f32 %v1320, %v1333
      %v1336 = vadd.f32 %v1321, %v1334
      %v1337 = vmul.f32 %v135, %v1323
      %v1338 = vmul.f32 %v135, %v1324
      %v1339 = vadd.f32 %v1309, %v1337
      %v1340 = vadd.f32 %v1310, %v1338
      %s1341 = scalar_lea.vmem %s2, 1184
      %v1342 = vld [vmem:[%s1341] sm:$0xff]
      %v1343 = vld [vmem:[%s1341 + $0x8] sm:$0x3f]
      %v1344 = vmul.f32 %v226, %v1342
      %v1345 = vmul.f32 %v226, %v1343
      %v1346 = vadd.f32 %v1327, %v1344
      %v1347 = vadd.f32 %v1328, %v1345
      %v1348 = vmul.f32 %v206, %v1342
      %v1349 = vmul.f32 %v206, %v1343
      %v1350 = vadd.f32 %v1331, %v1348
      %v1351 = vadd.f32 %v1332, %v1349
      %v1352 = vmul.f32 %v163, %v1342
      %v1353 = vmul.f32 %v163, %v1343
      %v1354 = vadd.f32 %v1335, %v1352
      %v1355 = vadd.f32 %v1336, %v1353
      %v1356 = vmul.f32 %v145, %v1342
      %v1357 = vmul.f32 %v145, %v1343
      %v1358 = vadd.f32 %v1339, %v1356
      %v1359 = vadd.f32 %v1340, %v1357
      %s1360 = scalar_lea.vmem %s2, 1664
      %v1361 = vld [vmem:[%s1360] sm:$0xff]
      %v1362 = vld [vmem:[%s1360 + $0x8] sm:$0x3f]
      %v1363 = vmul.f32 %v226, %v1361
      %v1364 = vmul.f32 %v226, %v1362
      %v1365 = vadd.f32 %v1350, %v1363
      %v1366 = vadd.f32 %v1351, %v1364
      %v1367 = vmul.f32 %v163, %v1361
      %v1368 = vmul.f32 %v163, %v1362
      %v1369 = vadd.f32 %v1358, %v1367
      %v1370 = vadd.f32 %v1359, %v1368
      %s1371 = scalar_lea.vmem %s2, 240
      %v1372 = vld [vmem:[%s1371] sm:$0xff]
      %v1373 = vld [vmem:[%s1371 + $0x8] sm:$0x3f]
      %v1374 = vmul.f32 %v194, %v1372
      %v1375 = vmul.f32 %v194, %v1373
      %v1376 = vadd.f32 %v1354, %v1374
      %v1377 = vadd.f32 %v1355, %v1375
      %s1378 = scalar_lea.vmem %s2, 720
      %v1379 = vld [vmem:[%s1378] sm:$0xff]
      %v1380 = vld [vmem:[%s1378 + $0x8] sm:$0x3f]
      %v1381 = vmul.f32 %v206, %v1379
      %v1382 = vmul.f32 %v206, %v1380
      %v1383 = vadd.f32 %v1376, %v1381
      %v1384 = vadd.f32 %v1377, %v1382
      %v1385 = vmul.f32 %v194, %v1379
      %v1386 = vmul.f32 %v194, %v1380
      %v1387 = vadd.f32 %v1369, %v1385
      %v1388 = vadd.f32 %v1370, %v1386
      %s1389 = scalar_lea.vmem %s2, 1200
      %v1390 = vld [vmem:[%s1389] sm:$0xff]
      %v1391 = vld [vmem:[%s1389 + $0x8] sm:$0x3f]
      %v1392 = vmul.f32 %v226, %v1390
      %v1393 = vmul.f32 %v226, %v1391
      %v1394 = vadd.f32 %v1383, %v1392
      %v1395 = vadd.f32 %v1384, %v1393
      %v1396 = vmul.f32 %v206, %v1390
      %v1397 = vmul.f32 %v206, %v1391
      %v1398 = vadd.f32 %v1387, %v1396
      %v1399 = vadd.f32 %v1388, %v1397
      %s1400 = scalar_lea.vmem %s2, 1680
      %v1401 = vld [vmem:[%s1400] sm:$0xff]
      %v1402 = vld [vmem:[%s1400 + $0x8] sm:$0x3f]
      %v1403 = vmul.f32 %v226, %v1401
      %v1404 = vmul.f32 %v226, %v1402
      %v1405 = vadd.f32 %v1398, %v1403
      %v1406 = vadd.f32 %v1399, %v1404
      %v1407 = vmax.f32 %v1346, %v1365
      %v1408 = vmax.f32 %v1347, %v1366
      %v1409 = vmax.f32 %v1394, %v1405
      %v1410 = vmax.f32 %v1395, %v1406
      %v1411 = vmax.f32 %v1407, %v1409
      %v1412 = vmax.f32 %v1408, %v1410
      %v1413 = vadd.f32 %v1411, %v296
      %v1414 = vadd.f32 %v1412, %v296
      %1415 = vst [vmem:[#allocation2 + $0x60] sm:$0xff] %v1413
      %1416 = vst [vmem:[#allocation2 + $0x68] sm:$0x3f] %v1414
      %v1417 = vld [vmem:[%s1311] sm:$0xff]
      %v1418 = vld [vmem:[%s1311 + $0x8] sm:$0x3f]
      %v1419 = vmul.f32 %v100, %v1417
      %v1420 = vmul.f32 %v100, %v1418
      %v1421 = vld [vmem:[%s1322] sm:$0xff]
      %v1422 = vld [vmem:[%s1322 + $0x8] sm:$0x3f]
      %v1423 = vmul.f32 %v106, %v1421
      %v1424 = vmul.f32 %v106, %v1422
      %v1425 = vadd.f32 %v1419, %v1423
      %v1426 = vadd.f32 %v1420, %v1424
      %v1427 = vmul.f32 %v100, %v1421
      %v1428 = vmul.f32 %v100, %v1422
      %v1429 = vld [vmem:[%s1341] sm:$0xff]
      %v1430 = vld [vmem:[%s1341 + $0x8] sm:$0x3f]
      %v1431 = vmul.f32 %v116, %v1429
      %v1432 = vmul.f32 %v116, %v1430
      %v1433 = vadd.f32 %v1425, %v1431
      %v1434 = vadd.f32 %v1426, %v1432
      %v1435 = vmul.f32 %v106, %v1429
      %v1436 = vmul.f32 %v106, %v1430
      %v1437 = vadd.f32 %v1427, %v1435
      %v1438 = vadd.f32 %v1428, %v1436
      %v1439 = vld [vmem:[%s1360] sm:$0xff]
      %v1440 = vld [vmem:[%s1360 + $0x8] sm:$0x3f]
      %v1441 = vmul.f32 %v116, %v1439
      %v1442 = vmul.f32 %v116, %v1440
      %v1443 = vadd.f32 %v1437, %v1441
      %v1444 = vadd.f32 %v1438, %v1442
      %v1445 = vld [vmem:[%s1371] sm:$0xff]
      %v1446 = vld [vmem:[%s1371 + $0x8] sm:$0x3f]
      %v1447 = vmul.f32 %v135, %v1445
      %v1448 = vmul.f32 %v135, %v1446
      %v1449 = vadd.f32 %v1433, %v1447
      %v1450 = vadd.f32 %v1434, %v1448
      %v1451 = vmul.f32 %v100, %v1445
      %v1452 = vmul.f32 %v100, %v1446
      %v1453 = vld [vmem:[%s1378] sm:$0xff]
      %v1454 = vld [vmem:[%s1378 + $0x8] sm:$0x3f]
      %v1455 = vmul.f32 %v145, %v1453
      %v1456 = vmul.f32 %v145, %v1454
      %v1457 = vadd.f32 %v1449, %v1455
      %v1458 = vadd.f32 %v1450, %v1456
      %v1459 = vmul.f32 %v135, %v1453
      %v1460 = vmul.f32 %v135, %v1454
      %v1461 = vadd.f32 %v1443, %v1459
      %v1462 = vadd.f32 %v1444, %v1460
      %v1463 = vmul.f32 %v106, %v1453
      %v1464 = vmul.f32 %v106, %v1454
      %v1465 = vadd.f32 %v1451, %v1463
      %v1466 = vadd.f32 %v1452, %v1464
      %v1467 = vmul.f32 %v100, %v1453
      %v1468 = vmul.f32 %v100, %v1454
      %v1469 = vld [vmem:[%s1389] sm:$0xff]
      %v1470 = vld [vmem:[%s1389 + $0x8] sm:$0x3f]
      %v1471 = vmul.f32 %v163, %v1469
      %v1472 = vmul.f32 %v163, %v1470
      %v1473 = vadd.f32 %v1457, %v1471
      %v1474 = vadd.f32 %v1458, %v1472
      %v1475 = vmul.f32 %v145, %v1469
      %v1476 = vmul.f32 %v145, %v1470
      %v1477 = vadd.f32 %v1461, %v1475
      %v1478 = vadd.f32 %v1462, %v1476
      %v1479 = vmul.f32 %v116, %v1469
      %v1480 = vmul.f32 %v116, %v1470
      %v1481 = vadd.f32 %v1465, %v1479
      %v1482 = vadd.f32 %v1466, %v1480
      %v1483 = vmul.f32 %v106, %v1469
      %v1484 = vmul.f32 %v106, %v1470
      %v1485 = vadd.f32 %v1467, %v1483
      %v1486 = vadd.f32 %v1468, %v1484
      %v1487 = vld [vmem:[%s1400] sm:$0xff]
      %v1488 = vld [vmem:[%s1400 + $0x8] sm:$0x3f]
      %v1489 = vmul.f32 %v163, %v1487
      %v1490 = vmul.f32 %v163, %v1488
      %v1491 = vadd.f32 %v1477, %v1489
      %v1492 = vadd.f32 %v1478, %v1490
      %v1493 = vmul.f32 %v116, %v1487
      %v1494 = vmul.f32 %v116, %v1488
      %v1495 = vadd.f32 %v1485, %v1493
      %v1496 = vadd.f32 %v1486, %v1494
      %s1497 = scalar_lea.vmem %s2, 256
      %v1498 = vld [vmem:[%s1497] sm:$0xff]
      %v1499 = vld [vmem:[%s1497 + $0x8] sm:$0x3f]
      %v1500 = vmul.f32 %v194, %v1498
      %v1501 = vmul.f32 %v194, %v1499
      %v1502 = vadd.f32 %v1473, %v1500
      %v1503 = vadd.f32 %v1474, %v1501
      %v1504 = vmul.f32 %v135, %v1498
      %v1505 = vmul.f32 %v135, %v1499
      %v1506 = vadd.f32 %v1481, %v1504
      %v1507 = vadd.f32 %v1482, %v1505
      %s1508 = scalar_lea.vmem %s2, 736
      %v1509 = vld [vmem:[%s1508] sm:$0xff]
      %v1510 = vld [vmem:[%s1508 + $0x8] sm:$0x3f]
      %v1511 = vmul.f32 %v206, %v1509
      %v1512 = vmul.f32 %v206, %v1510
      %v1513 = vadd.f32 %v1502, %v1511
      %v1514 = vadd.f32 %v1503, %v1512
      %v1515 = vmul.f32 %v194, %v1509
      %v1516 = vmul.f32 %v194, %v1510
      %v1517 = vadd.f32 %v1491, %v1515
      %v1518 = vadd.f32 %v1492, %v1516
      %v1519 = vmul.f32 %v145, %v1509
      %v1520 = vmul.f32 %v145, %v1510
      %v1521 = vadd.f32 %v1506, %v1519
      %v1522 = vadd.f32 %v1507, %v1520
      %v1523 = vmul.f32 %v135, %v1509
      %v1524 = vmul.f32 %v135, %v1510
      %v1525 = vadd.f32 %v1495, %v1523
      %v1526 = vadd.f32 %v1496, %v1524
      %s1527 = scalar_lea.vmem %s2, 1216
      %v1528 = vld [vmem:[%s1527] sm:$0xff]
      %v1529 = vld [vmem:[%s1527 + $0x8] sm:$0x3f]
      %v1530 = vmul.f32 %v226, %v1528
      %v1531 = vmul.f32 %v226, %v1529
      %v1532 = vadd.f32 %v1513, %v1530
      %v1533 = vadd.f32 %v1514, %v1531
      %v1534 = vmul.f32 %v206, %v1528
      %v1535 = vmul.f32 %v206, %v1529
      %v1536 = vadd.f32 %v1517, %v1534
      %v1537 = vadd.f32 %v1518, %v1535
      %v1538 = vmul.f32 %v163, %v1528
      %v1539 = vmul.f32 %v163, %v1529
      %v1540 = vadd.f32 %v1521, %v1538
      %v1541 = vadd.f32 %v1522, %v1539
      %v1542 = vmul.f32 %v145, %v1528
      %v1543 = vmul.f32 %v145, %v1529
      %v1544 = vadd.f32 %v1525, %v1542
      %v1545 = vadd.f32 %v1526, %v1543
      %s1546 = scalar_lea.vmem %s2, 1696
      %v1547 = vld [vmem:[%s1546] sm:$0xff]
      %v1548 = vld [vmem:[%s1546 + $0x8] sm:$0x3f]
      %v1549 = vmul.f32 %v226, %v1547
      %v1550 = vmul.f32 %v226, %v1548
      %v1551 = vadd.f32 %v1536, %v1549
      %v1552 = vadd.f32 %v1537, %v1550
      %v1553 = vmul.f32 %v163, %v1547
      %v1554 = vmul.f32 %v163, %v1548
      %v1555 = vadd.f32 %v1544, %v1553
      %v1556 = vadd.f32 %v1545, %v1554
      %s1557 = scalar_lea.vmem %s2, 272
      %v1558 = vld [vmem:[%s1557] sm:$0xff]
      %v1559 = vld [vmem:[%s1557 + $0x8] sm:$0x3f]
      %v1560 = vmul.f32 %v194, %v1558
      %v1561 = vmul.f32 %v194, %v1559
      %v1562 = vadd.f32 %v1540, %v1560
      %v1563 = vadd.f32 %v1541, %v1561
      %s1564 = scalar_lea.vmem %s2, 752
      %v1565 = vld [vmem:[%s1564] sm:$0xff]
      %v1566 = vld [vmem:[%s1564 + $0x8] sm:$0x3f]
      %v1567 = vmul.f32 %v206, %v1565
      %v1568 = vmul.f32 %v206, %v1566
      %v1569 = vadd.f32 %v1562, %v1567
      %v1570 = vadd.f32 %v1563, %v1568
      %v1571 = vmul.f32 %v194, %v1565
      %v1572 = vmul.f32 %v194, %v1566
      %v1573 = vadd.f32 %v1555, %v1571
      %v1574 = vadd.f32 %v1556, %v1572
      %s1575 = scalar_lea.vmem %s2, 1232
      %v1576 = vld [vmem:[%s1575] sm:$0xff]
      %v1577 = vld [vmem:[%s1575 + $0x8] sm:$0x3f]
      %v1578 = vmul.f32 %v226, %v1576
      %v1579 = vmul.f32 %v226, %v1577
      %v1580 = vadd.f32 %v1569, %v1578
      %v1581 = vadd.f32 %v1570, %v1579
      %v1582 = vmul.f32 %v206, %v1576
      %v1583 = vmul.f32 %v206, %v1577
      %v1584 = vadd.f32 %v1573, %v1582
      %v1585 = vadd.f32 %v1574, %v1583
      %s1586 = scalar_lea.vmem %s2, 1712
      %v1587 = vld [vmem:[%s1586] sm:$0xff]
      %v1588 = vld [vmem:[%s1586 + $0x8] sm:$0x3f]
      %v1589 = vmul.f32 %v226, %v1587
      %v1590 = vmul.f32 %v226, %v1588
      %v1591 = vadd.f32 %v1584, %v1589
      %v1592 = vadd.f32 %v1585, %v1590
      %v1593 = vmax.f32 %v1532, %v1551
      %v1594 = vmax.f32 %v1533, %v1552
      %v1595 = vmax.f32 %v1580, %v1591
      %v1596 = vmax.f32 %v1581, %v1592
      %v1597 = vmax.f32 %v1593, %v1595
      %v1598 = vmax.f32 %v1594, %v1596
      %v1599 = vadd.f32 %v1597, %v296
      %v1600 = vadd.f32 %v1598, %v296
      %1601 = vst [vmem:[#allocation2 + $0x70] sm:$0xff] %v1599
      %1602 = vst [vmem:[#allocation2 + $0x78] sm:$0x3f] %v1600
      %v1603 = vld [vmem:[%s1497] sm:$0xff]
      %v1604 = vld [vmem:[%s1497 + $0x8] sm:$0x3f]
      %v1605 = vmul.f32 %v100, %v1603
      %v1606 = vmul.f32 %v100, %v1604
      %v1607 = vld [vmem:[%s1508] sm:$0xff]
      %v1608 = vld [vmem:[%s1508 + $0x8] sm:$0x3f]
      %v1609 = vmul.f32 %v106, %v1607
      %v1610 = vmul.f32 %v106, %v1608
      %v1611 = vadd.f32 %v1605, %v1609
      %v1612 = vadd.f32 %v1606, %v1610
      %v1613 = vmul.f32 %v100, %v1607
      %v1614 = vmul.f32 %v100, %v1608
      %v1615 = vld [vmem:[%s1527] sm:$0xff]
      %v1616 = vld [vmem:[%s1527 + $0x8] sm:$0x3f]
      %v1617 = vmul.f32 %v116, %v1615
      %v1618 = vmul.f32 %v116, %v1616
      %v1619 = vadd.f32 %v1611, %v1617
      %v1620 = vadd.f32 %v1612, %v1618
      %v1621 = vmul.f32 %v106, %v1615
      %v1622 = vmul.f32 %v106, %v1616
      %v1623 = vadd.f32 %v1613, %v1621
      %v1624 = vadd.f32 %v1614, %v1622
      %v1625 = vld [vmem:[%s1546] sm:$0xff]
      %v1626 = vld [vmem:[%s1546 + $0x8] sm:$0x3f]
      %v1627 = vmul.f32 %v116, %v1625
      %v1628 = vmul.f32 %v116, %v1626
      %v1629 = vadd.f32 %v1623, %v1627
      %v1630 = vadd.f32 %v1624, %v1628
      %v1631 = vld [vmem:[%s1557] sm:$0xff]
      %v1632 = vld [vmem:[%s1557 + $0x8] sm:$0x3f]
      %v1633 = vmul.f32 %v135, %v1631
      %v1634 = vmul.f32 %v135, %v1632
      %v1635 = vadd.f32 %v1619, %v1633
      %v1636 = vadd.f32 %v1620, %v1634
      %v1637 = vmul.f32 %v100, %v1631
      %v1638 = vmul.f32 %v100, %v1632
      %v1639 = vld [vmem:[%s1564] sm:$0xff]
      %v1640 = vld [vmem:[%s1564 + $0x8] sm:$0x3f]
      %v1641 = vmul.f32 %v145, %v1639
      %v1642 = vmul.f32 %v145, %v1640
      %v1643 = vadd.f32 %v1635, %v1641
      %v1644 = vadd.f32 %v1636, %v1642
      %v1645 = vmul.f32 %v135, %v1639
      %v1646 = vmul.f32 %v135, %v1640
      %v1647 = vadd.f32 %v1629, %v1645
      %v1648 = vadd.f32 %v1630, %v1646
      %v1649 = vmul.f32 %v106, %v1639
      %v1650 = vmul.f32 %v106, %v1640
      %v1651 = vadd.f32 %v1637, %v1649
      %v1652 = vadd.f32 %v1638, %v1650
      %v1653 = vmul.f32 %v100, %v1639
      %v1654 = vmul.f32 %v100, %v1640
      %v1655 = vld [vmem:[%s1575] sm:$0xff]
      %v1656 = vld [vmem:[%s1575 + $0x8] sm:$0x3f]
      %v1657 = vmul.f32 %v163, %v1655
      %v1658 = vmul.f32 %v163, %v1656
      %v1659 = vadd.f32 %v1643, %v1657
      %v1660 = vadd.f32 %v1644, %v1658
      %v1661 = vmul.f32 %v145, %v1655
      %v1662 = vmul.f32 %v145, %v1656
      %v1663 = vadd.f32 %v1647, %v1661
      %v1664 = vadd.f32 %v1648, %v1662
      %v1665 = vmul.f32 %v116, %v1655
      %v1666 = vmul.f32 %v116, %v1656
      %v1667 = vadd.f32 %v1651, %v1665
      %v1668 = vadd.f32 %v1652, %v1666
      %v1669 = vmul.f32 %v106, %v1655
      %v1670 = vmul.f32 %v106, %v1656
      %v1671 = vadd.f32 %v1653, %v1669
      %v1672 = vadd.f32 %v1654, %v1670
      %v1673 = vld [vmem:[%s1586] sm:$0xff]
      %v1674 = vld [vmem:[%s1586 + $0x8] sm:$0x3f]
      %v1675 = vmul.f32 %v163, %v1673
      %v1676 = vmul.f32 %v163, %v1674
      %v1677 = vadd.f32 %v1663, %v1675
      %v1678 = vadd.f32 %v1664, %v1676
      %v1679 = vmul.f32 %v116, %v1673
      %v1680 = vmul.f32 %v116, %v1674
      %v1681 = vadd.f32 %v1671, %v1679
      %v1682 = vadd.f32 %v1672, %v1680
      %s1683 = scalar_lea.vmem %s2, 288
      %v1684 = vld [vmem:[%s1683] sm:$0xff]
      %v1685 = vld [vmem:[%s1683 + $0x8] sm:$0x3f]
      %v1686 = vmul.f32 %v194, %v1684
      %v1687 = vmul.f32 %v194, %v1685
      %v1688 = vadd.f32 %v1659, %v1686
      %v1689 = vadd.f32 %v1660, %v1687
      %v1690 = vmul.f32 %v135, %v1684
      %v1691 = vmul.f32 %v135, %v1685
      %v1692 = vadd.f32 %v1667, %v1690
      %v1693 = vadd.f32 %v1668, %v1691
      %s1694 = scalar_lea.vmem %s2, 768
      %v1695 = vld [vmem:[%s1694] sm:$0xff]
      %v1696 = vld [vmem:[%s1694 + $0x8] sm:$0x3f]
      %v1697 = vmul.f32 %v206, %v1695
      %v1698 = vmul.f32 %v206, %v1696
      %v1699 = vadd.f32 %v1688, %v1697
      %v1700 = vadd.f32 %v1689, %v1698
      %v1701 = vmul.f32 %v194, %v1695
      %v1702 = vmul.f32 %v194, %v1696
      %v1703 = vadd.f32 %v1677, %v1701
      %v1704 = vadd.f32 %v1678, %v1702
      %v1705 = vmul.f32 %v145, %v1695
      %v1706 = vmul.f32 %v145, %v1696
      %v1707 = vadd.f32 %v1692, %v1705
      %v1708 = vadd.f32 %v1693, %v1706
      %v1709 = vmul.f32 %v135, %v1695
      %v1710 = vmul.f32 %v135, %v1696
      %v1711 = vadd.f32 %v1681, %v1709
      %v1712 = vadd.f32 %v1682, %v1710
      %s1713 = scalar_lea.vmem %s2, 1248
      %v1714 = vld [vmem:[%s1713] sm:$0xff]
      %v1715 = vld [vmem:[%s1713 + $0x8] sm:$0x3f]
      %v1716 = vmul.f32 %v226, %v1714
      %v1717 = vmul.f32 %v226, %v1715
      %v1718 = vadd.f32 %v1699, %v1716
      %v1719 = vadd.f32 %v1700, %v1717
      %v1720 = vmul.f32 %v206, %v1714
      %v1721 = vmul.f32 %v206, %v1715
      %v1722 = vadd.f32 %v1703, %v1720
      %v1723 = vadd.f32 %v1704, %v1721
      %v1724 = vmul.f32 %v163, %v1714
      %v1725 = vmul.f32 %v163, %v1715
      %v1726 = vadd.f32 %v1707, %v1724
      %v1727 = vadd.f32 %v1708, %v1725
      %v1728 = vmul.f32 %v145, %v1714
      %v1729 = vmul.f32 %v145, %v1715
      %v1730 = vadd.f32 %v1711, %v1728
      %v1731 = vadd.f32 %v1712, %v1729
      %s1732 = scalar_lea.vmem %s2, 1728
      %v1733 = vld [vmem:[%s1732] sm:$0xff]
      %v1734 = vld [vmem:[%s1732 + $0x8] sm:$0x3f]
      %v1735 = vmul.f32 %v226, %v1733
      %v1736 = vmul.f32 %v226, %v1734
      %v1737 = vadd.f32 %v1722, %v1735
      %v1738 = vadd.f32 %v1723, %v1736
      %v1739 = vmul.f32 %v163, %v1733
      %v1740 = vmul.f32 %v163, %v1734
      %v1741 = vadd.f32 %v1730, %v1739
      %v1742 = vadd.f32 %v1731, %v1740
      %s1743 = scalar_lea.vmem %s2, 304
      %v1744 = vld [vmem:[%s1743] sm:$0xff]
      %v1745 = vld [vmem:[%s1743 + $0x8] sm:$0x3f]
      %v1746 = vmul.f32 %v194, %v1744
      %v1747 = vmul.f32 %v194, %v1745
      %v1748 = vadd.f32 %v1726, %v1746
      %v1749 = vadd.f32 %v1727, %v1747
      %s1750 = scalar_lea.vmem %s2, 784
      %v1751 = vld [vmem:[%s1750] sm:$0xff]
      %v1752 = vld [vmem:[%s1750 + $0x8] sm:$0x3f]
      %v1753 = vmul.f32 %v206, %v1751
      %v1754 = vmul.f32 %v206, %v1752
      %v1755 = vadd.f32 %v1748, %v1753
      %v1756 = vadd.f32 %v1749, %v1754
      %v1757 = vmul.f32 %v194, %v1751
      %v1758 = vmul.f32 %v194, %v1752
      %v1759 = vadd.f32 %v1741, %v1757
      %v1760 = vadd.f32 %v1742, %v1758
      %s1761 = scalar_lea.vmem %s2, 1264
      %v1762 = vld [vmem:[%s1761] sm:$0xff]
      %v1763 = vld [vmem:[%s1761 + $0x8] sm:$0x3f]
      %v1764 = vmul.f32 %v226, %v1762
      %v1765 = vmul.f32 %v226, %v1763
      %v1766 = vadd.f32 %v1755, %v1764
      %v1767 = vadd.f32 %v1756, %v1765
      %v1768 = vmul.f32 %v206, %v1762
      %v1769 = vmul.f32 %v206, %v1763
      %v1770 = vadd.f32 %v1759, %v1768
      %v1771 = vadd.f32 %v1760, %v1769
      %s1772 = scalar_lea.vmem %s2, 1744
      %v1773 = vld [vmem:[%s1772] sm:$0xff]
      %v1774 = vld [vmem:[%s1772 + $0x8] sm:$0x3f]
      %v1775 = vmul.f32 %v226, %v1773
      %v1776 = vmul.f32 %v226, %v1774
      %v1777 = vadd.f32 %v1770, %v1775
      %v1778 = vadd.f32 %v1771, %v1776
      %v1779 = vmax.f32 %v1718, %v1737
      %v1780 = vmax.f32 %v1719, %v1738
      %v1781 = vmax.f32 %v1766, %v1777
      %v1782 = vmax.f32 %v1767, %v1778
      %v1783 = vmax.f32 %v1779, %v1781
      %v1784 = vmax.f32 %v1780, %v1782
      %v1785 = vadd.f32 %v1783, %v296
      %v1786 = vadd.f32 %v1784, %v296
      %1787 = vst [vmem:[#allocation2 + $0x80] sm:$0xff] %v1785
      %1788 = vst [vmem:[#allocation2 + $0x88] sm:$0x3f] %v1786
      %v1789 = vld [vmem:[%s1683] sm:$0xff]
      %v1790 = vld [vmem:[%s1683 + $0x8] sm:$0x3f]
      %v1791 = vmul.f32 %v100, %v1789
      %v1792 = vmul.f32 %v100, %v1790
      %v1793 = vld [vmem:[%s1694] sm:$0xff]
      %v1794 = vld [vmem:[%s1694 + $0x8] sm:$0x3f]
      %v1795 = vmul.f32 %v106, %v1793
      %v1796 = vmul.f32 %v106, %v1794
      %v1797 = vadd.f32 %v1791, %v1795
      %v1798 = vadd.f32 %v1792, %v1796
      %v1799 = vmul.f32 %v100, %v1793
      %v1800 = vmul.f32 %v100, %v1794
      %v1801 = vld [vmem:[%s1713] sm:$0xff]
      %v1802 = vld [vmem:[%s1713 + $0x8] sm:$0x3f]
      %v1803 = vmul.f32 %v116, %v1801
      %v1804 = vmul.f32 %v116, %v1802
      %v1805 = vadd.f32 %v1797, %v1803
      %v1806 = vadd.f32 %v1798, %v1804
      %v1807 = vmul.f32 %v106, %v1801
      %v1808 = vmul.f32 %v106, %v1802
      %v1809 = vadd.f32 %v1799, %v1807
      %v1810 = vadd.f32 %v1800, %v1808
      %v1811 = vld [vmem:[%s1732] sm:$0xff]
      %v1812 = vld [vmem:[%s1732 + $0x8] sm:$0x3f]
      %v1813 = vmul.f32 %v116, %v1811
      %v1814 = vmul.f32 %v116, %v1812
      %v1815 = vadd.f32 %v1809, %v1813
      %v1816 = vadd.f32 %v1810, %v1814
      %v1817 = vld [vmem:[%s1743] sm:$0xff]
      %v1818 = vld [vmem:[%s1743 + $0x8] sm:$0x3f]
      %v1819 = vmul.f32 %v135, %v1817
      %v1820 = vmul.f32 %v135, %v1818
      %v1821 = vadd.f32 %v1805, %v1819
      %v1822 = vadd.f32 %v1806, %v1820
      %v1823 = vmul.f32 %v100, %v1817
      %v1824 = vmul.f32 %v100, %v1818
      %v1825 = vld [vmem:[%s1750] sm:$0xff]
      %v1826 = vld [vmem:[%s1750 + $0x8] sm:$0x3f]
      %v1827 = vmul.f32 %v145, %v1825
      %v1828 = vmul.f32 %v145, %v1826
      %v1829 = vadd.f32 %v1821, %v1827
      %v1830 = vadd.f32 %v1822, %v1828
      %v1831 = vmul.f32 %v135, %v1825
      %v1832 = vmul.f32 %v135, %v1826
      %v1833 = vadd.f32 %v1815, %v1831
      %v1834 = vadd.f32 %v1816, %v1832
      %v1835 = vmul.f32 %v106, %v1825
      %v1836 = vmul.f32 %v106, %v1826
      %v1837 = vadd.f32 %v1823, %v1835
      %v1838 = vadd.f32 %v1824, %v1836
      %v1839 = vmul.f32 %v100, %v1825
      %v1840 = vmul.f32 %v100, %v1826
      %v1841 = vld [vmem:[%s1761] sm:$0xff]
      %v1842 = vld [vmem:[%s1761 + $0x8] sm:$0x3f]
      %v1843 = vmul.f32 %v163, %v1841
      %v1844 = vmul.f32 %v163, %v1842
      %v1845 = vadd.f32 %v1829, %v1843
      %v1846 = vadd.f32 %v1830, %v1844
      %v1847 = vmul.f32 %v145, %v1841
      %v1848 = vmul.f32 %v145, %v1842
      %v1849 = vadd.f32 %v1833, %v1847
      %v1850 = vadd.f32 %v1834, %v1848
      %v1851 = vmul.f32 %v116, %v1841
      %v1852 = vmul.f32 %v116, %v1842
      %v1853 = vadd.f32 %v1837, %v1851
      %v1854 = vadd.f32 %v1838, %v1852
      %v1855 = vmul.f32 %v106, %v1841
      %v1856 = vmul.f32 %v106, %v1842
      %v1857 = vadd.f32 %v1839, %v1855
      %v1858 = vadd.f32 %v1840, %v1856
      %v1859 = vld [vmem:[%s1772] sm:$0xff]
      %v1860 = vld [vmem:[%s1772 + $0x8] sm:$0x3f]
      %v1861 = vmul.f32 %v163, %v1859
      %v1862 = vmul.f32 %v163, %v1860
      %v1863 = vadd.f32 %v1849, %v1861
      %v1864 = vadd.f32 %v1850, %v1862
      %v1865 = vmul.f32 %v116, %v1859
      %v1866 = vmul.f32 %v116, %v1860
      %v1867 = vadd.f32 %v1857, %v1865
      %v1868 = vadd.f32 %v1858, %v1866
      %s1869 = scalar_lea.vmem %s2, 320
      %v1870 = vld [vmem:[%s1869] sm:$0xff]
      %v1871 = vld [vmem:[%s1869 + $0x8] sm:$0x3f]
      %v1872 = vmul.f32 %v194, %v1870
      %v1873 = vmul.f32 %v194, %v1871
      %v1874 = vadd.f32 %v1845, %v1872
      %v1875 = vadd.f32 %v1846, %v1873
      %v1876 = vmul.f32 %v135, %v1870
      %v1877 = vmul.f32 %v135, %v1871
      %v1878 = vadd.f32 %v1853, %v1876
      %v1879 = vadd.f32 %v1854, %v1877
      %s1880 = scalar_lea.vmem %s2, 800
      %v1881 = vld [vmem:[%s1880] sm:$0xff]
      %v1882 = vld [vmem:[%s1880 + $0x8] sm:$0x3f]
      %v1883 = vmul.f32 %v206, %v1881
      %v1884 = vmul.f32 %v206, %v1882
      %v1885 = vadd.f32 %v1874, %v1883
      %v1886 = vadd.f32 %v1875, %v1884
      %v1887 = vmul.f32 %v194, %v1881
      %v1888 = vmul.f32 %v194, %v1882
      %v1889 = vadd.f32 %v1863, %v1887
      %v1890 = vadd.f32 %v1864, %v1888
      %v1891 = vmul.f32 %v145, %v1881
      %v1892 = vmul.f32 %v145, %v1882
      %v1893 = vadd.f32 %v1878, %v1891
      %v1894 = vadd.f32 %v1879, %v1892
      %v1895 = vmul.f32 %v135, %v1881
      %v1896 = vmul.f32 %v135, %v1882
      %v1897 = vadd.f32 %v1867, %v1895
      %v1898 = vadd.f32 %v1868, %v1896
      %s1899 = scalar_lea.vmem %s2, 1280
      %v1900 = vld [vmem:[%s1899] sm:$0xff]
      %v1901 = vld [vmem:[%s1899 + $0x8] sm:$0x3f]
      %v1902 = vmul.f32 %v226, %v1900
      %v1903 = vmul.f32 %v226, %v1901
      %v1904 = vadd.f32 %v1885, %v1902
      %v1905 = vadd.f32 %v1886, %v1903
      %v1906 = vmul.f32 %v206, %v1900
      %v1907 = vmul.f32 %v206, %v1901
      %v1908 = vadd.f32 %v1889, %v1906
      %v1909 = vadd.f32 %v1890, %v1907
      %v1910 = vmul.f32 %v163, %v1900
      %v1911 = vmul.f32 %v163, %v1901
      %v1912 = vadd.f32 %v1893, %v1910
      %v1913 = vadd.f32 %v1894, %v1911
      %v1914 = vmul.f32 %v145, %v1900
      %v1915 = vmul.f32 %v145, %v1901
      %v1916 = vadd.f32 %v1897, %v1914
      %v1917 = vadd.f32 %v1898, %v1915
      %s1918 = scalar_lea.vmem %s2, 1760
      %v1919 = vld [vmem:[%s1918] sm:$0xff]
      %v1920 = vld [vmem:[%s1918 + $0x8] sm:$0x3f]
      %v1921 = vmul.f32 %v226, %v1919
      %v1922 = vmul.f32 %v226, %v1920
      %v1923 = vadd.f32 %v1908, %v1921
      %v1924 = vadd.f32 %v1909, %v1922
      %v1925 = vmul.f32 %v163, %v1919
      %v1926 = vmul.f32 %v163, %v1920
      %v1927 = vadd.f32 %v1916, %v1925
      %v1928 = vadd.f32 %v1917, %v1926
      %s1929 = scalar_lea.vmem %s2, 336
      %v1930 = vld [vmem:[%s1929] sm:$0xff]
      %v1931 = vld [vmem:[%s1929 + $0x8] sm:$0x3f]
      %v1932 = vmul.f32 %v194, %v1930
      %v1933 = vmul.f32 %v194, %v1931
      %v1934 = vadd.f32 %v1912, %v1932
      %v1935 = vadd.f32 %v1913, %v1933
      %s1936 = scalar_lea.vmem %s2, 816
      %v1937 = vld [vmem:[%s1936] sm:$0xff]
      %v1938 = vld [vmem:[%s1936 + $0x8] sm:$0x3f]
      %v1939 = vmul.f32 %v206, %v1937
      %v1940 = vmul.f32 %v206, %v1938
      %v1941 = vadd.f32 %v1934, %v1939
      %v1942 = vadd.f32 %v1935, %v1940
      %v1943 = vmul.f32 %v194, %v1937
      %v1944 = vmul.f32 %v194, %v1938
      %v1945 = vadd.f32 %v1927, %v1943
      %v1946 = vadd.f32 %v1928, %v1944
      %s1947 = scalar_lea.vmem %s2, 1296
      %v1948 = vld [vmem:[%s1947] sm:$0xff]
      %v1949 = vld [vmem:[%s1947 + $0x8] sm:$0x3f]
      %v1950 = vmul.f32 %v226, %v1948
      %v1951 = vmul.f32 %v226, %v1949
      %v1952 = vadd.f32 %v1941, %v1950
      %v1953 = vadd.f32 %v1942, %v1951
      %v1954 = vmul.f32 %v206, %v1948
      %v1955 = vmul.f32 %v206, %v1949
      %v1956 = vadd.f32 %v1945, %v1954
      %v1957 = vadd.f32 %v1946, %v1955
      %s1958 = scalar_lea.vmem %s2, 1776
      %v1959 = vld [vmem:[%s1958] sm:$0xff]
      %v1960 = vld [vmem:[%s1958 + $0x8] sm:$0x3f]
      %v1961 = vmul.f32 %v226, %v1959
      %v1962 = vmul.f32 %v226, %v1960
      %v1963 = vadd.f32 %v1956, %v1961
      %v1964 = vadd.f32 %v1957, %v1962
      %v1965 = vmax.f32 %v1904, %v1923
      %v1966 = vmax.f32 %v1905, %v1924
      %v1967 = vmax.f32 %v1952, %v1963
      %v1968 = vmax.f32 %v1953, %v1964
      %v1969 = vmax.f32 %v1965, %v1967
      %v1970 = vmax.f32 %v1966, %v1968
      %v1971 = vadd.f32 %v1969, %v296
      %v1972 = vadd.f32 %v1970, %v296
      %1973 = vst [vmem:[#allocation2 + $0x90] sm:$0xff] %v1971
      %1974 = vst [vmem:[#allocation2 + $0x98] sm:$0x3f] %v1972
      %v1975 = vld [vmem:[%s1869] sm:$0xff]
      %v1976 = vld [vmem:[%s1869 + $0x8] sm:$0x3f]
      %v1977 = vmul.f32 %v100, %v1975
      %v1978 = vmul.f32 %v100, %v1976
      %v1979 = vld [vmem:[%s1880] sm:$0xff]
      %v1980 = vld [vmem:[%s1880 + $0x8] sm:$0x3f]
      %v1981 = vmul.f32 %v106, %v1979
      %v1982 = vmul.f32 %v106, %v1980
      %v1983 = vadd.f32 %v1977, %v1981
      %v1984 = vadd.f32 %v1978, %v1982
      %v1985 = vmul.f32 %v100, %v1979
      %v1986 = vmul.f32 %v100, %v1980
      %v1987 = vld [vmem:[%s1899] sm:$0xff]
      %v1988 = vld [vmem:[%s1899 + $0x8] sm:$0x3f]
      %v1989 = vmul.f32 %v116, %v1987
      %v1990 = vmul.f32 %v116, %v1988
      %v1991 = vadd.f32 %v1983, %v1989
      %v1992 = vadd.f32 %v1984, %v1990
      %v1993 = vmul.f32 %v106, %v1987
      %v1994 = vmul.f32 %v106, %v1988
      %v1995 = vadd.f32 %v1985, %v1993
      %v1996 = vadd.f32 %v1986, %v1994
      %v1997 = vld [vmem:[%s1918] sm:$0xff]
      %v1998 = vld [vmem:[%s1918 + $0x8] sm:$0x3f]
      %v1999 = vmul.f32 %v116, %v1997
      %v2000 = vmul.f32 %v116, %v1998
      %v2001 = vadd.f32 %v1995, %v1999
      %v2002 = vadd.f32 %v1996, %v2000
      %v2003 = vld [vmem:[%s1929] sm:$0xff]
      %v2004 = vld [vmem:[%s1929 + $0x8] sm:$0x3f]
      %v2005 = vmul.f32 %v135, %v2003
      %v2006 = vmul.f32 %v135, %v2004
      %v2007 = vadd.f32 %v1991, %v2005
      %v2008 = vadd.f32 %v1992, %v2006
      %v2009 = vmul.f32 %v100, %v2003
      %v2010 = vmul.f32 %v100, %v2004
      %v2011 = vld [vmem:[%s1936] sm:$0xff]
      %v2012 = vld [vmem:[%s1936 + $0x8] sm:$0x3f]
      %v2013 = vmul.f32 %v145, %v2011
      %v2014 = vmul.f32 %v145, %v2012
      %v2015 = vadd.f32 %v2007, %v2013
      %v2016 = vadd.f32 %v2008, %v2014
      %v2017 = vmul.f32 %v135, %v2011
      %v2018 = vmul.f32 %v135, %v2012
      %v2019 = vadd.f32 %v2001, %v2017
      %v2020 = vadd.f32 %v2002, %v2018
      %v2021 = vmul.f32 %v106, %v2011
      %v2022 = vmul.f32 %v106, %v2012
      %v2023 = vadd.f32 %v2009, %v2021
      %v2024 = vadd.f32 %v2010, %v2022
      %v2025 = vmul.f32 %v100, %v2011
      %v2026 = vmul.f32 %v100, %v2012
      %v2027 = vld [vmem:[%s1947] sm:$0xff]
      %v2028 = vld [vmem:[%s1947 + $0x8] sm:$0x3f]
      %v2029 = vmul.f32 %v163, %v2027
      %v2030 = vmul.f32 %v163, %v2028
      %v2031 = vadd.f32 %v2015, %v2029
      %v2032 = vadd.f32 %v2016, %v2030
      %v2033 = vmul.f32 %v145, %v2027
      %v2034 = vmul.f32 %v145, %v2028
      %v2035 = vadd.f32 %v2019, %v2033
      %v2036 = vadd.f32 %v2020, %v2034
      %v2037 = vmul.f32 %v116, %v2027
      %v2038 = vmul.f32 %v116, %v2028
      %v2039 = vadd.f32 %v2023, %v2037
      %v2040 = vadd.f32 %v2024, %v2038
      %v2041 = vmul.f32 %v106, %v2027
      %v2042 = vmul.f32 %v106, %v2028
      %v2043 = vadd.f32 %v2025, %v2041
      %v2044 = vadd.f32 %v2026, %v2042
      %v2045 = vld [vmem:[%s1958] sm:$0xff]
      %v2046 = vld [vmem:[%s1958 + $0x8] sm:$0x3f]
      %v2047 = vmul.f32 %v163, %v2045
      %v2048 = vmul.f32 %v163, %v2046
      %v2049 = vadd.f32 %v2035, %v2047
      %v2050 = vadd.f32 %v2036, %v2048
      %v2051 = vmul.f32 %v116, %v2045
      %v2052 = vmul.f32 %v116, %v2046
      %v2053 = vadd.f32 %v2043, %v2051
      %v2054 = vadd.f32 %v2044, %v2052
      %s2055 = scalar_lea.vmem %s2, 352
      %v2056 = vld [vmem:[%s2055] sm:$0xff]
      %v2057 = vld [vmem:[%s2055 + $0x8] sm:$0x3f]
      %v2058 = vmul.f32 %v194, %v2056
      %v2059 = vmul.f32 %v194, %v2057
      %v2060 = vadd.f32 %v2031, %v2058
      %v2061 = vadd.f32 %v2032, %v2059
      %v2062 = vmul.f32 %v135, %v2056
      %v2063 = vmul.f32 %v135, %v2057
      %v2064 = vadd.f32 %v2039, %v2062
      %v2065 = vadd.f32 %v2040, %v2063
      %s2066 = scalar_lea.vmem %s2, 832
      %v2067 = vld [vmem:[%s2066] sm:$0xff]
      %v2068 = vld [vmem:[%s2066 + $0x8] sm:$0x3f]
      %v2069 = vmul.f32 %v206, %v2067
      %v2070 = vmul.f32 %v206, %v2068
      %v2071 = vadd.f32 %v2060, %v2069
      %v2072 = vadd.f32 %v2061, %v2070
      %v2073 = vmul.f32 %v194, %v2067
      %v2074 = vmul.f32 %v194, %v2068
      %v2075 = vadd.f32 %v2049, %v2073
      %v2076 = vadd.f32 %v2050, %v2074
      %v2077 = vmul.f32 %v145, %v2067
      %v2078 = vmul.f32 %v145, %v2068
      %v2079 = vadd.f32 %v2064, %v2077
      %v2080 = vadd.f32 %v2065, %v2078
      %v2081 = vmul.f32 %v135, %v2067
      %v2082 = vmul.f32 %v135, %v2068
      %v2083 = vadd.f32 %v2053, %v2081
      %v2084 = vadd.f32 %v2054, %v2082
      %s2085 = scalar_lea.vmem %s2, 1312
      %v2086 = vld [vmem:[%s2085] sm:$0xff]
      %v2087 = vld [vmem:[%s2085 + $0x8] sm:$0x3f]
      %v2088 = vmul.f32 %v226, %v2086
      %v2089 = vmul.f32 %v226, %v2087
      %v2090 = vadd.f32 %v2071, %v2088
      %v2091 = vadd.f32 %v2072, %v2089
      %v2092 = vmul.f32 %v206, %v2086
      %v2093 = vmul.f32 %v206, %v2087
      %v2094 = vadd.f32 %v2075, %v2092
      %v2095 = vadd.f32 %v2076, %v2093
      %v2096 = vmul.f32 %v163, %v2086
      %v2097 = vmul.f32 %v163, %v2087
      %v2098 = vadd.f32 %v2079, %v2096
      %v2099 = vadd.f32 %v2080, %v2097
      %v2100 = vmul.f32 %v145, %v2086
      %v2101 = vmul.f32 %v145, %v2087
      %v2102 = vadd.f32 %v2083, %v2100
      %v2103 = vadd.f32 %v2084, %v2101
      %s2104 = scalar_lea.vmem %s2, 1792
      %v2105 = vld [vmem:[%s2104] sm:$0xff]
      %v2106 = vld [vmem:[%s2104 + $0x8] sm:$0x3f]
      %v2107 = vmul.f32 %v226, %v2105
      %v2108 = vmul.f32 %v226, %v2106
      %v2109 = vadd.f32 %v2094, %v2107
      %v2110 = vadd.f32 %v2095, %v2108
      %v2111 = vmul.f32 %v163, %v2105
      %v2112 = vmul.f32 %v163, %v2106
      %v2113 = vadd.f32 %v2102, %v2111
      %v2114 = vadd.f32 %v2103, %v2112
      %s2115 = scalar_lea.vmem %s2, 368
      %v2116 = vld [vmem:[%s2115] sm:$0xff]
      %v2117 = vld [vmem:[%s2115 + $0x8] sm:$0x3f]
      %v2118 = vmul.f32 %v194, %v2116
      %v2119 = vmul.f32 %v194, %v2117
      %v2120 = vadd.f32 %v2098, %v2118
      %v2121 = vadd.f32 %v2099, %v2119
      %s2122 = scalar_lea.vmem %s2, 848
      %v2123 = vld [vmem:[%s2122] sm:$0xff]
      %v2124 = vld [vmem:[%s2122 + $0x8] sm:$0x3f]
      %v2125 = vmul.f32 %v206, %v2123
      %v2126 = vmul.f32 %v206, %v2124
      %v2127 = vadd.f32 %v2120, %v2125
      %v2128 = vadd.f32 %v2121, %v2126
      %v2129 = vmul.f32 %v194, %v2123
      %v2130 = vmul.f32 %v194, %v2124
      %v2131 = vadd.f32 %v2113, %v2129
      %v2132 = vadd.f32 %v2114, %v2130
      %s2133 = scalar_lea.vmem %s2, 1328
      %v2134 = vld [vmem:[%s2133] sm:$0xff]
      %v2135 = vld [vmem:[%s2133 + $0x8] sm:$0x3f]
      %v2136 = vmul.f32 %v226, %v2134
      %v2137 = vmul.f32 %v226, %v2135
      %v2138 = vadd.f32 %v2127, %v2136
      %v2139 = vadd.f32 %v2128, %v2137
      %v2140 = vmul.f32 %v206, %v2134
      %v2141 = vmul.f32 %v206, %v2135
      %v2142 = vadd.f32 %v2131, %v2140
      %v2143 = vadd.f32 %v2132, %v2141
      %s2144 = scalar_lea.vmem %s2, 1808
      %v2145 = vld [vmem:[%s2144] sm:$0xff]
      %v2146 = vld [vmem:[%s2144 + $0x8] sm:$0x3f]
      %v2147 = vmul.f32 %v226, %v2145
      %v2148 = vmul.f32 %v226, %v2146
      %v2149 = vadd.f32 %v2142, %v2147
      %v2150 = vadd.f32 %v2143, %v2148
      %v2151 = vmax.f32 %v2090, %v2109
      %v2152 = vmax.f32 %v2091, %v2110
      %v2153 = vmax.f32 %v2138, %v2149
      %v2154 = vmax.f32 %v2139, %v2150
      %v2155 = vmax.f32 %v2151, %v2153
      %v2156 = vmax.f32 %v2152, %v2154
      %v2157 = vadd.f32 %v2155, %v296
      %v2158 = vadd.f32 %v2156, %v296
      %2159 = vst [vmem:[#allocation2 + $0xa0] sm:$0xff] %v2157
      %2160 = vst [vmem:[#allocation2 + $0xa8] sm:$0x3f] %v2158
      %v2161 = vld [vmem:[%s2055] sm:$0xff]
      %v2162 = vld [vmem:[%s2055 + $0x8] sm:$0x3f]
      %v2163 = vmul.f32 %v100, %v2161
      %v2164 = vmul.f32 %v100, %v2162
      %v2165 = vld [vmem:[%s2066] sm:$0xff]
      %v2166 = vld [vmem:[%s2066 + $0x8] sm:$0x3f]
      %v2167 = vmul.f32 %v106, %v2165
      %v2168 = vmul.f32 %v106, %v2166
      %v2169 = vadd.f32 %v2163, %v2167
      %v2170 = vadd.f32 %v2164, %v2168
      %v2171 = vmul.f32 %v100, %v2165
      %v2172 = vmul.f32 %v100, %v2166
      %v2173 = vld [vmem:[%s2085] sm:$0xff]
      %v2174 = vld [vmem:[%s2085 + $0x8] sm:$0x3f]
      %v2175 = vmul.f32 %v116, %v2173
      %v2176 = vmul.f32 %v116, %v2174
      %v2177 = vadd.f32 %v2169, %v2175
      %v2178 = vadd.f32 %v2170, %v2176
      %v2179 = vmul.f32 %v106, %v2173
      %v2180 = vmul.f32 %v106, %v2174
      %v2181 = vadd.f32 %v2171, %v2179
      %v2182 = vadd.f32 %v2172, %v2180
      %v2183 = vld [vmem:[%s2104] sm:$0xff]
      %v2184 = vld [vmem:[%s2104 + $0x8] sm:$0x3f]
      %v2185 = vmul.f32 %v116, %v2183
      %v2186 = vmul.f32 %v116, %v2184
      %v2187 = vadd.f32 %v2181, %v2185
      %v2188 = vadd.f32 %v2182, %v2186
      %v2189 = vld [vmem:[%s2115] sm:$0xff]
      %v2190 = vld [vmem:[%s2115 + $0x8] sm:$0x3f]
      %v2191 = vmul.f32 %v135, %v2189
      %v2192 = vmul.f32 %v135, %v2190
      %v2193 = vadd.f32 %v2177, %v2191
      %v2194 = vadd.f32 %v2178, %v2192
      %v2195 = vmul.f32 %v100, %v2189
      %v2196 = vmul.f32 %v100, %v2190
      %v2197 = vld [vmem:[%s2122] sm:$0xff]
      %v2198 = vld [vmem:[%s2122 + $0x8] sm:$0x3f]
      %v2199 = vmul.f32 %v145, %v2197
      %v2200 = vmul.f32 %v145, %v2198
      %v2201 = vadd.f32 %v2193, %v2199
      %v2202 = vadd.f32 %v2194, %v2200
      %v2203 = vmul.f32 %v135, %v2197
      %v2204 = vmul.f32 %v135, %v2198
      %v2205 = vadd.f32 %v2187, %v2203
      %v2206 = vadd.f32 %v2188, %v2204
      %v2207 = vmul.f32 %v106, %v2197
      %v2208 = vmul.f32 %v106, %v2198
      %v2209 = vadd.f32 %v2195, %v2207
      %v2210 = vadd.f32 %v2196, %v2208
      %v2211 = vmul.f32 %v100, %v2197
      %v2212 = vmul.f32 %v100, %v2198
      %v2213 = vld [vmem:[%s2133] sm:$0xff]
      %v2214 = vld [vmem:[%s2133 + $0x8] sm:$0x3f]
      %v2215 = vmul.f32 %v163, %v2213
      %v2216 = vmul.f32 %v163, %v2214
      %v2217 = vadd.f32 %v2201, %v2215
      %v2218 = vadd.f32 %v2202, %v2216
      %v2219 = vmul.f32 %v145, %v2213
      %v2220 = vmul.f32 %v145, %v2214
      %v2221 = vadd.f32 %v2205, %v2219
      %v2222 = vadd.f32 %v2206, %v2220
      %v2223 = vmul.f32 %v116, %v2213
      %v2224 = vmul.f32 %v116, %v2214
      %v2225 = vadd.f32 %v2209, %v2223
      %v2226 = vadd.f32 %v2210, %v2224
      %v2227 = vmul.f32 %v106, %v2213
      %v2228 = vmul.f32 %v106, %v2214
      %v2229 = vadd.f32 %v2211, %v2227
      %v2230 = vadd.f32 %v2212, %v2228
      %v2231 = vld [vmem:[%s2144] sm:$0xff]
      %v2232 = vld [vmem:[%s2144 + $0x8] sm:$0x3f]
      %v2233 = vmul.f32 %v163, %v2231
      %v2234 = vmul.f32 %v163, %v2232
      %v2235 = vadd.f32 %v2221, %v2233
      %v2236 = vadd.f32 %v2222, %v2234
      %v2237 = vmul.f32 %v116, %v2231
      %v2238 = vmul.f32 %v116, %v2232
      %v2239 = vadd.f32 %v2229, %v2237
      %v2240 = vadd.f32 %v2230, %v2238
      %s2241 = scalar_lea.vmem %s2, 384
      %v2242 = vld [vmem:[%s2241] sm:$0xff]
      %v2243 = vld [vmem:[%s2241 + $0x8] sm:$0x3f]
      %v2244 = vmul.f32 %v194, %v2242
      %v2245 = vmul.f32 %v194, %v2243
      %v2246 = vadd.f32 %v2217, %v2244
      %v2247 = vadd.f32 %v2218, %v2245
      %v2248 = vmul.f32 %v135, %v2242
      %v2249 = vmul.f32 %v135, %v2243
      %v2250 = vadd.f32 %v2225, %v2248
      %v2251 = vadd.f32 %v2226, %v2249
      %s2252 = scalar_lea.vmem %s2, 864
      %v2253 = vld [vmem:[%s2252] sm:$0xff]
      %v2254 = vld [vmem:[%s2252 + $0x8] sm:$0x3f]
      %v2255 = vmul.f32 %v206, %v2253
      %v2256 = vmul.f32 %v206, %v2254
      %v2257 = vadd.f32 %v2246, %v2255
      %v2258 = vadd.f32 %v2247, %v2256
      %v2259 = vmul.f32 %v194, %v2253
      %v2260 = vmul.f32 %v194, %v2254
      %v2261 = vadd.f32 %v2235, %v2259
      %v2262 = vadd.f32 %v2236, %v2260
      %v2263 = vmul.f32 %v145, %v2253
      %v2264 = vmul.f32 %v145, %v2254
      %v2265 = vadd.f32 %v2250, %v2263
      %v2266 = vadd.f32 %v2251, %v2264
      %v2267 = vmul.f32 %v135, %v2253
      %v2268 = vmul.f32 %v135, %v2254
      %v2269 = vadd.f32 %v2239, %v2267
      %v2270 = vadd.f32 %v2240, %v2268
      %s2271 = scalar_lea.vmem %s2, 1344
      %v2272 = vld [vmem:[%s2271] sm:$0xff]
      %v2273 = vld [vmem:[%s2271 + $0x8] sm:$0x3f]
      %v2274 = vmul.f32 %v226, %v2272
      %v2275 = vmul.f32 %v226, %v2273
      %v2276 = vadd.f32 %v2257, %v2274
      %v2277 = vadd.f32 %v2258, %v2275
      %v2278 = vmul.f32 %v206, %v2272
      %v2279 = vmul.f32 %v206, %v2273
      %v2280 = vadd.f32 %v2261, %v2278
      %v2281 = vadd.f32 %v2262, %v2279
      %v2282 = vmul.f32 %v163, %v2272
      %v2283 = vmul.f32 %v163, %v2273
      %v2284 = vadd.f32 %v2265, %v2282
      %v2285 = vadd.f32 %v2266, %v2283
      %v2286 = vmul.f32 %v145, %v2272
      %v2287 = vmul.f32 %v145, %v2273
      %v2288 = vadd.f32 %v2269, %v2286
      %v2289 = vadd.f32 %v2270, %v2287
      %s2290 = scalar_lea.vmem %s2, 1824
      %v2291 = vld [vmem:[%s2290] sm:$0xff]
      %v2292 = vld [vmem:[%s2290 + $0x8] sm:$0x3f]
      %v2293 = vmul.f32 %v226, %v2291
      %v2294 = vmul.f32 %v226, %v2292
      %v2295 = vadd.f32 %v2280, %v2293
      %v2296 = vadd.f32 %v2281, %v2294
      %v2297 = vmul.f32 %v163, %v2291
      %v2298 = vmul.f32 %v163, %v2292
      %v2299 = vadd.f32 %v2288, %v2297
      %v2300 = vadd.f32 %v2289, %v2298
      %s2301 = scalar_lea.vmem %s2, 400
      %v2302 = vld [vmem:[%s2301] sm:$0xff]
      %v2303 = vld [vmem:[%s2301 + $0x8] sm:$0x3f]
      %v2304 = vmul.f32 %v194, %v2302
      %v2305 = vmul.f32 %v194, %v2303
      %v2306 = vadd.f32 %v2284, %v2304
      %v2307 = vadd.f32 %v2285, %v2305
      %s2308 = scalar_lea.vmem %s2, 880
      %v2309 = vld [vmem:[%s2308] sm:$0xff]
      %v2310 = vld [vmem:[%s2308 + $0x8] sm:$0x3f]
      %v2311 = vmul.f32 %v206, %v2309
      %v2312 = vmul.f32 %v206, %v2310
      %v2313 = vadd.f32 %v2306, %v2311
      %v2314 = vadd.f32 %v2307, %v2312
      %v2315 = vmul.f32 %v194, %v2309
      %v2316 = vmul.f32 %v194, %v2310
      %v2317 = vadd.f32 %v2299, %v2315
      %v2318 = vadd.f32 %v2300, %v2316
      %s2319 = scalar_lea.vmem %s2, 1360
      %v2320 = vld [vmem:[%s2319] sm:$0xff]
      %v2321 = vld [vmem:[%s2319 + $0x8] sm:$0x3f]
      %v2322 = vmul.f32 %v226, %v2320
      %v2323 = vmul.f32 %v226, %v2321
      %v2324 = vadd.f32 %v2313, %v2322
      %v2325 = vadd.f32 %v2314, %v2323
      %v2326 = vmul.f32 %v206, %v2320
      %v2327 = vmul.f32 %v206, %v2321
      %v2328 = vadd.f32 %v2317, %v2326
      %v2329 = vadd.f32 %v2318, %v2327
      %s2330 = scalar_lea.vmem %s2, 1840
      %v2331 = vld [vmem:[%s2330] sm:$0xff]
      %v2332 = vld [vmem:[%s2330 + $0x8] sm:$0x3f]
      %v2333 = vmul.f32 %v226, %v2331
      %v2334 = vmul.f32 %v226, %v2332
      %v2335 = vadd.f32 %v2328, %v2333
      %v2336 = vadd.f32 %v2329, %v2334
      %v2337 = vmax.f32 %v2276, %v2295
      %v2338 = vmax.f32 %v2277, %v2296
      %v2339 = vmax.f32 %v2324, %v2335
      %v2340 = vmax.f32 %v2325, %v2336
      %v2341 = vmax.f32 %v2337, %v2339
      %v2342 = vmax.f32 %v2338, %v2340
      %v2343 = vadd.f32 %v2341, %v296
      %v2344 = vadd.f32 %v2342, %v296
      %2345 = vst [vmem:[#allocation2 + $0xb0] sm:$0xff] %v2343
      %2346 = vst [vmem:[#allocation2 + $0xb8] sm:$0x3f] %v2344
      %v2347 = vld [vmem:[%s2241] sm:$0xff]
      %v2348 = vld [vmem:[%s2241 + $0x8] sm:$0x3f]
      %v2349 = vmul.f32 %v100, %v2347
      %v2350 = vmul.f32 %v100, %v2348
      %v2351 = vld [vmem:[%s2252] sm:$0xff]
      %v2352 = vld [vmem:[%s2252 + $0x8] sm:$0x3f]
      %v2353 = vmul.f32 %v106, %v2351
      %v2354 = vmul.f32 %v106, %v2352
      %v2355 = vadd.f32 %v2349, %v2353
      %v2356 = vadd.f32 %v2350, %v2354
      %v2357 = vmul.f32 %v100, %v2351
      %v2358 = vmul.f32 %v100, %v2352
      %v2359 = vld [vmem:[%s2271] sm:$0xff]
      %v2360 = vld [vmem:[%s2271 + $0x8] sm:$0x3f]
      %v2361 = vmul.f32 %v116, %v2359
      %v2362 = vmul.f32 %v116, %v2360
      %v2363 = vadd.f32 %v2355, %v2361
      %v2364 = vadd.f32 %v2356, %v2362
      %v2365 = vmul.f32 %v106, %v2359
      %v2366 = vmul.f32 %v106, %v2360
      %v2367 = vadd.f32 %v2357, %v2365
      %v2368 = vadd.f32 %v2358, %v2366
      %v2369 = vld [vmem:[%s2290] sm:$0xff]
      %v2370 = vld [vmem:[%s2290 + $0x8] sm:$0x3f]
      %v2371 = vmul.f32 %v116, %v2369
      %v2372 = vmul.f32 %v116, %v2370
      %v2373 = vadd.f32 %v2367, %v2371
      %v2374 = vadd.f32 %v2368, %v2372
      %v2375 = vld [vmem:[%s2301] sm:$0xff]
      %v2376 = vld [vmem:[%s2301 + $0x8] sm:$0x3f]
      %v2377 = vmul.f32 %v135, %v2375
      %v2378 = vmul.f32 %v135, %v2376
      %v2379 = vadd.f32 %v2363, %v2377
      %v2380 = vadd.f32 %v2364, %v2378
      %v2381 = vmul.f32 %v100, %v2375
      %v2382 = vmul.f32 %v100, %v2376
      %v2383 = vld [vmem:[%s2308] sm:$0xff]
      %v2384 = vld [vmem:[%s2308 + $0x8] sm:$0x3f]
      %v2385 = vmul.f32 %v145, %v2383
      %v2386 = vmul.f32 %v145, %v2384
      %v2387 = vadd.f32 %v2379, %v2385
      %v2388 = vadd.f32 %v2380, %v2386
      %v2389 = vmul.f32 %v135, %v2383
      %v2390 = vmul.f32 %v135, %v2384
      %v2391 = vadd.f32 %v2373, %v2389
      %v2392 = vadd.f32 %v2374, %v2390
      %v2393 = vmul.f32 %v106, %v2383
      %v2394 = vmul.f32 %v106, %v2384
      %v2395 = vadd.f32 %v2381, %v2393
      %v2396 = vadd.f32 %v2382, %v2394
      %v2397 = vmul.f32 %v100, %v2383
      %v2398 = vmul.f32 %v100, %v2384
      %v2399 = vld [vmem:[%s2319] sm:$0xff]
      %v2400 = vld [vmem:[%s2319 + $0x8] sm:$0x3f]
      %v2401 = vmul.f32 %v163, %v2399
      %v2402 = vmul.f32 %v163, %v2400
      %v2403 = vadd.f32 %v2387, %v2401
      %v2404 = vadd.f32 %v2388, %v2402
      %v2405 = vmul.f32 %v145, %v2399
      %v2406 = vmul.f32 %v145, %v2400
      %v2407 = vadd.f32 %v2391, %v2405
      %v2408 = vadd.f32 %v2392, %v2406
      %v2409 = vmul.f32 %v116, %v2399
      %v2410 = vmul.f32 %v116, %v2400
      %v2411 = vadd.f32 %v2395, %v2409
      %v2412 = vadd.f32 %v2396, %v2410
      %v2413 = vmul.f32 %v106, %v2399
      %v2414 = vmul.f32 %v106, %v2400
      %v2415 = vadd.f32 %v2397, %v2413
      %v2416 = vadd.f32 %v2398, %v2414
      %v2417 = vld [vmem:[%s2330] sm:$0xff]
      %v2418 = vld [vmem:[%s2330 + $0x8] sm:$0x3f]
      %v2419 = vmul.f32 %v163, %v2417
      %v2420 = vmul.f32 %v163, %v2418
      %v2421 = vadd.f32 %v2407, %v2419
      %v2422 = vadd.f32 %v2408, %v2420
      %v2423 = vmul.f32 %v116, %v2417
      %v2424 = vmul.f32 %v116, %v2418
      %v2425 = vadd.f32 %v2415, %v2423
      %v2426 = vadd.f32 %v2416, %v2424
      %s2427 = scalar_lea.vmem %s2, 416
      %v2428 = vld [vmem:[%s2427] sm:$0xff]
      %v2429 = vld [vmem:[%s2427 + $0x8] sm:$0x3f]
      %v2430 = vmul.f32 %v194, %v2428
      %v2431 = vmul.f32 %v194, %v2429
      %v2432 = vadd.f32 %v2403, %v2430
      %v2433 = vadd.f32 %v2404, %v2431
      %v2434 = vmul.f32 %v135, %v2428
      %v2435 = vmul.f32 %v135, %v2429
      %v2436 = vadd.f32 %v2411, %v2434
      %v2437 = vadd.f32 %v2412, %v2435
      %s2438 = scalar_lea.vmem %s2, 896
      %v2439 = vld [vmem:[%s2438] sm:$0xff]
      %v2440 = vld [vmem:[%s2438 + $0x8] sm:$0x3f]
      %v2441 = vmul.f32 %v206, %v2439
      %v2442 = vmul.f32 %v206, %v2440
      %v2443 = vadd.f32 %v2432, %v2441
      %v2444 = vadd.f32 %v2433, %v2442
      %v2445 = vmul.f32 %v194, %v2439
      %v2446 = vmul.f32 %v194, %v2440
      %v2447 = vadd.f32 %v2421, %v2445
      %v2448 = vadd.f32 %v2422, %v2446
      %v2449 = vmul.f32 %v145, %v2439
      %v2450 = vmul.f32 %v145, %v2440
      %v2451 = vadd.f32 %v2436, %v2449
      %v2452 = vadd.f32 %v2437, %v2450
      %v2453 = vmul.f32 %v135, %v2439
      %v2454 = vmul.f32 %v135, %v2440
      %v2455 = vadd.f32 %v2425, %v2453
      %v2456 = vadd.f32 %v2426, %v2454
      %s2457 = scalar_lea.vmem %s2, 1376
      %v2458 = vld [vmem:[%s2457] sm:$0xff]
      %v2459 = vld [vmem:[%s2457 + $0x8] sm:$0x3f]
      %v2460 = vmul.f32 %v226, %v2458
      %v2461 = vmul.f32 %v226, %v2459
      %v2462 = vadd.f32 %v2443, %v2460
      %v2463 = vadd.f32 %v2444, %v2461
      %v2464 = vmul.f32 %v206, %v2458
      %v2465 = vmul.f32 %v206, %v2459
      %v2466 = vadd.f32 %v2447, %v2464
      %v2467 = vadd.f32 %v2448, %v2465
      %v2468 = vmul.f32 %v163, %v2458
      %v2469 = vmul.f32 %v163, %v2459
      %v2470 = vadd.f32 %v2451, %v2468
      %v2471 = vadd.f32 %v2452, %v2469
      %v2472 = vmul.f32 %v145, %v2458
      %v2473 = vmul.f32 %v145, %v2459
      %v2474 = vadd.f32 %v2455, %v2472
      %v2475 = vadd.f32 %v2456, %v2473
      %s2476 = scalar_lea.vmem %s2, 1856
      %v2477 = vld [vmem:[%s2476] sm:$0xff]
      %v2478 = vld [vmem:[%s2476 + $0x8] sm:$0x3f]
      %v2479 = vmul.f32 %v226, %v2477
      %v2480 = vmul.f32 %v226, %v2478
      %v2481 = vadd.f32 %v2466, %v2479
      %v2482 = vadd.f32 %v2467, %v2480
      %v2483 = vmul.f32 %v163, %v2477
      %v2484 = vmul.f32 %v163, %v2478
      %v2485 = vadd.f32 %v2474, %v2483
      %v2486 = vadd.f32 %v2475, %v2484
      %s2487 = scalar_lea.vmem %s2, 432
      %v2488 = vld [vmem:[%s2487] sm:$0xff]
      %v2489 = vld [vmem:[%s2487 + $0x8] sm:$0x3f]
      %v2490 = vmul.f32 %v194, %v2488
      %v2491 = vmul.f32 %v194, %v2489
      %v2492 = vadd.f32 %v2470, %v2490
      %v2493 = vadd.f32 %v2471, %v2491
      %s2494 = scalar_lea.vmem %s2, 912
      %v2495 = vld [vmem:[%s2494] sm:$0xff]
      %v2496 = vld [vmem:[%s2494 + $0x8] sm:$0x3f]
      %v2497 = vmul.f32 %v206, %v2495
      %v2498 = vmul.f32 %v206, %v2496
      %v2499 = vadd.f32 %v2492, %v2497
      %v2500 = vadd.f32 %v2493, %v2498
      %v2501 = vmul.f32 %v194, %v2495
      %v2502 = vmul.f32 %v194, %v2496
      %v2503 = vadd.f32 %v2485, %v2501
      %v2504 = vadd.f32 %v2486, %v2502
      %s2505 = scalar_lea.vmem %s2, 1392
      %v2506 = vld [vmem:[%s2505] sm:$0xff]
      %v2507 = vld [vmem:[%s2505 + $0x8] sm:$0x3f]
      %v2508 = vmul.f32 %v226, %v2506
      %v2509 = vmul.f32 %v226, %v2507
      %v2510 = vadd.f32 %v2499, %v2508
      %v2511 = vadd.f32 %v2500, %v2509
      %v2512 = vmul.f32 %v206, %v2506
      %v2513 = vmul.f32 %v206, %v2507
      %v2514 = vadd.f32 %v2503, %v2512
      %v2515 = vadd.f32 %v2504, %v2513
      %s2516 = scalar_lea.vmem %s2, 1872
      %v2517 = vld [vmem:[%s2516] sm:$0xff]
      %v2518 = vld [vmem:[%s2516 + $0x8] sm:$0x3f]
      %v2519 = vmul.f32 %v226, %v2517
      %v2520 = vmul.f32 %v226, %v2518
      %v2521 = vadd.f32 %v2514, %v2519
      %v2522 = vadd.f32 %v2515, %v2520
      %v2523 = vmax.f32 %v2462, %v2481
      %v2524 = vmax.f32 %v2463, %v2482
      %v2525 = vmax.f32 %v2510, %v2521
      %v2526 = vmax.f32 %v2511, %v2522
      %v2527 = vmax.f32 %v2523, %v2525
      %v2528 = vmax.f32 %v2524, %v2526
      %v2529 = vadd.f32 %v2527, %v296
      %v2530 = vadd.f32 %v2528, %v296
      %2531 = vst [vmem:[#allocation2 + $0xc0] sm:$0xff] %v2529
      %2532 = vst [vmem:[#allocation2 + $0xc8] sm:$0x3f] %v2530
      %v2533 = vld [vmem:[%s2427] sm:$0xff]
      %v2534 = vld [vmem:[%s2427 + $0x8] sm:$0x3f]
      %v2535 = vmul.f32 %v100, %v2533
      %v2536 = vmul.f32 %v100, %v2534
      %v2537 = vld [vmem:[%s2438] sm:$0xff]
      %v2538 = vld [vmem:[%s2438 + $0x8] sm:$0x3f]
      %v2539 = vmul.f32 %v106, %v2537
      %v2540 = vmul.f32 %v106, %v2538
      %v2541 = vadd.f32 %v2535, %v2539
      %v2542 = vadd.f32 %v2536, %v2540
      %v2543 = vmul.f32 %v100, %v2537
      %v2544 = vmul.f32 %v100, %v2538
      %v2545 = vld [vmem:[%s2457] sm:$0xff]
      %v2546 = vld [vmem:[%s2457 + $0x8] sm:$0x3f]
      %v2547 = vmul.f32 %v116, %v2545
      %v2548 = vmul.f32 %v116, %v2546
      %v2549 = vadd.f32 %v2541, %v2547
      %v2550 = vadd.f32 %v2542, %v2548
      %v2551 = vmul.f32 %v106, %v2545
      %v2552 = vmul.f32 %v106, %v2546
      %v2553 = vadd.f32 %v2543, %v2551
      %v2554 = vadd.f32 %v2544, %v2552
      %v2555 = vld [vmem:[%s2476] sm:$0xff]
      %v2556 = vld [vmem:[%s2476 + $0x8] sm:$0x3f]
      %v2557 = vmul.f32 %v116, %v2555
      %v2558 = vmul.f32 %v116, %v2556
      %v2559 = vadd.f32 %v2553, %v2557
      %v2560 = vadd.f32 %v2554, %v2558
      %v2561 = vld [vmem:[%s2487] sm:$0xff]
      %v2562 = vld [vmem:[%s2487 + $0x8] sm:$0x3f]
      %v2563 = vmul.f32 %v135, %v2561
      %v2564 = vmul.f32 %v135, %v2562
      %v2565 = vadd.f32 %v2549, %v2563
      %v2566 = vadd.f32 %v2550, %v2564
      %v2567 = vmul.f32 %v100, %v2561
      %v2568 = vmul.f32 %v100, %v2562
      %v2569 = vld [vmem:[%s2494] sm:$0xff]
      %v2570 = vld [vmem:[%s2494 + $0x8] sm:$0x3f]
      %v2571 = vmul.f32 %v145, %v2569
      %v2572 = vmul.f32 %v145, %v2570
      %v2573 = vadd.f32 %v2565, %v2571
      %v2574 = vadd.f32 %v2566, %v2572
      %v2575 = vmul.f32 %v135, %v2569
      %v2576 = vmul.f32 %v135, %v2570
      %v2577 = vadd.f32 %v2559, %v2575
      %v2578 = vadd.f32 %v2560, %v2576
      %v2579 = vmul.f32 %v106, %v2569
      %v2580 = vmul.f32 %v106, %v2570
      %v2581 = vadd.f32 %v2567, %v2579
      %v2582 = vadd.f32 %v2568, %v2580
      %v2583 = vmul.f32 %v100, %v2569
      %v2584 = vmul.f32 %v100, %v2570
      %v2585 = vld [vmem:[%s2505] sm:$0xff]
      %v2586 = vld [vmem:[%s2505 + $0x8] sm:$0x3f]
      %v2587 = vmul.f32 %v163, %v2585
      %v2588 = vmul.f32 %v163, %v2586
      %v2589 = vadd.f32 %v2573, %v2587
      %v2590 = vadd.f32 %v2574, %v2588
      %v2591 = vmul.f32 %v145, %v2585
      %v2592 = vmul.f32 %v145, %v2586
      %v2593 = vadd.f32 %v2577, %v2591
      %v2594 = vadd.f32 %v2578, %v2592
      %v2595 = vmul.f32 %v116, %v2585
      %v2596 = vmul.f32 %v116, %v2586
      %v2597 = vadd.f32 %v2581, %v2595
      %v2598 = vadd.f32 %v2582, %v2596
      %v2599 = vmul.f32 %v106, %v2585
      %v2600 = vmul.f32 %v106, %v2586
      %v2601 = vadd.f32 %v2583, %v2599
      %v2602 = vadd.f32 %v2584, %v2600
      %v2603 = vld [vmem:[%s2516] sm:$0xff]
      %v2604 = vld [vmem:[%s2516 + $0x8] sm:$0x3f]
      %v2605 = vmul.f32 %v163, %v2603
      %v2606 = vmul.f32 %v163, %v2604
      %v2607 = vadd.f32 %v2593, %v2605
      %v2608 = vadd.f32 %v2594, %v2606
      %v2609 = vmul.f32 %v116, %v2603
      %v2610 = vmul.f32 %v116, %v2604
      %v2611 = vadd.f32 %v2601, %v2609
      %v2612 = vadd.f32 %v2602, %v2610
      %s2613 = scalar_lea.vmem %s2, 448
      %v2614 = vld [vmem:[%s2613] sm:$0xff]
      %v2615 = vld [vmem:[%s2613 + $0x8] sm:$0x3f]
      %v2616 = vmul.f32 %v194, %v2614
      %v2617 = vmul.f32 %v194, %v2615
      %v2618 = vadd.f32 %v2589, %v2616
      %v2619 = vadd.f32 %v2590, %v2617
      %v2620 = vmul.f32 %v135, %v2614
      %v2621 = vmul.f32 %v135, %v2615
      %v2622 = vadd.f32 %v2597, %v2620
      %v2623 = vadd.f32 %v2598, %v2621
      %s2624 = scalar_lea.vmem %s2, 928
      %v2625 = vld [vmem:[%s2624] sm:$0xff]
      %v2626 = vld [vmem:[%s2624 + $0x8] sm:$0x3f]
      %v2627 = vmul.f32 %v206, %v2625
      %v2628 = vmul.f32 %v206, %v2626
      %v2629 = vadd.f32 %v2618, %v2627
      %v2630 = vadd.f32 %v2619, %v2628
      %v2631 = vmul.f32 %v194, %v2625
      %v2632 = vmul.f32 %v194, %v2626
      %v2633 = vadd.f32 %v2607, %v2631
      %v2634 = vadd.f32 %v2608, %v2632
      %v2635 = vmul.f32 %v145, %v2625
      %v2636 = vmul.f32 %v145, %v2626
      %v2637 = vadd.f32 %v2622, %v2635
      %v2638 = vadd.f32 %v2623, %v2636
      %v2639 = vmul.f32 %v135, %v2625
      %v2640 = vmul.f32 %v135, %v2626
      %v2641 = vadd.f32 %v2611, %v2639
      %v2642 = vadd.f32 %v2612, %v2640
      %s2643 = scalar_lea.vmem %s2, 1408
      %v2644 = vld [vmem:[%s2643] sm:$0xff]
      %v2645 = vld [vmem:[%s2643 + $0x8] sm:$0x3f]
      %v2646 = vmul.f32 %v226, %v2644
      %v2647 = vmul.f32 %v226, %v2645
      %v2648 = vadd.f32 %v2629, %v2646
      %v2649 = vadd.f32 %v2630, %v2647
      %v2650 = vmul.f32 %v206, %v2644
      %v2651 = vmul.f32 %v206, %v2645
      %v2652 = vadd.f32 %v2633, %v2650
      %v2653 = vadd.f32 %v2634, %v2651
      %v2654 = vmul.f32 %v163, %v2644
      %v2655 = vmul.f32 %v163, %v2645
      %v2656 = vadd.f32 %v2637, %v2654
      %v2657 = vadd.f32 %v2638, %v2655
      %v2658 = vmul.f32 %v145, %v2644
      %v2659 = vmul.f32 %v145, %v2645
      %v2660 = vadd.f32 %v2641, %v2658
      %v2661 = vadd.f32 %v2642, %v2659
      %s2662 = scalar_lea.vmem %s2, 1888
      %v2663 = vld [vmem:[%s2662] sm:$0xff]
      %v2664 = vld [vmem:[%s2662 + $0x8] sm:$0x3f]
      %v2665 = vmul.f32 %v226, %v2663
      %v2666 = vmul.f32 %v226, %v2664
      %v2667 = vadd.f32 %v2652, %v2665
      %v2668 = vadd.f32 %v2653, %v2666
      %v2669 = vmul.f32 %v163, %v2663
      %v2670 = vmul.f32 %v163, %v2664
      %v2671 = vadd.f32 %v2660, %v2669
      %v2672 = vadd.f32 %v2661, %v2670
      %s2673 = scalar_lea.vmem %s2, 464
      %v2674 = vld [vmem:[%s2673] sm:$0xff]
      %v2675 = vld [vmem:[%s2673 + $0x8] sm:$0x3f]
      %v2676 = vmul.f32 %v194, %v2674
      %v2677 = vmul.f32 %v194, %v2675
      %v2678 = vadd.f32 %v2656, %v2676
      %v2679 = vadd.f32 %v2657, %v2677
      %s2680 = scalar_lea.vmem %s2, 944
      %v2681 = vld [vmem:[%s2680] sm:$0xff]
      %v2682 = vld [vmem:[%s2680 + $0x8] sm:$0x3f]
      %v2683 = vmul.f32 %v206, %v2681
      %v2684 = vmul.f32 %v206, %v2682
      %v2685 = vadd.f32 %v2678, %v2683
      %v2686 = vadd.f32 %v2679, %v2684
      %v2687 = vmul.f32 %v194, %v2681
      %v2688 = vmul.f32 %v194, %v2682
      %v2689 = vadd.f32 %v2671, %v2687
      %v2690 = vadd.f32 %v2672, %v2688
      %s2691 = scalar_lea.vmem %s2, 1424
      %v2692 = vld [vmem:[%s2691] sm:$0xff]
      %v2693 = vld [vmem:[%s2691 + $0x8] sm:$0x3f]
      %v2694 = vmul.f32 %v226, %v2692
      %v2695 = vmul.f32 %v226, %v2693
      %v2696 = vadd.f32 %v2685, %v2694
      %v2697 = vadd.f32 %v2686, %v2695
      %v2698 = vmul.f32 %v206, %v2692
      %v2699 = vmul.f32 %v206, %v2693
      %v2700 = vadd.f32 %v2689, %v2698
      %v2701 = vadd.f32 %v2690, %v2699
      %s2702 = scalar_lea.vmem %s2, 1904
      %v2703 = vld [vmem:[%s2702] sm:$0xff]
      %v2704 = vld [vmem:[%s2702 + $0x8] sm:$0x3f]
      %v2705 = vmul.f32 %v226, %v2703
      %v2706 = vmul.f32 %v226, %v2704
      %v2707 = vadd.f32 %v2700, %v2705
      %v2708 = vadd.f32 %v2701, %v2706
      %v2709 = vmax.f32 %v2648, %v2667
      %v2710 = vmax.f32 %v2649, %v2668
      %v2711 = vmax.f32 %v2696, %v2707
      %v2712 = vmax.f32 %v2697, %v2708
      %v2713 = vmax.f32 %v2709, %v2711
      %v2714 = vmax.f32 %v2710, %v2712
      %v2715 = vadd.f32 %v2713, %v296
      %v2716 = vadd.f32 %v2714, %v296
      %2717 = vst [vmem:[#allocation2 + $0xd0] sm:$0xff] %v2715
      %2718 = vst [vmem:[#allocation2 + $0xd8] sm:$0x3f] %v2716
      %v2719 = vld [vmem:[%s3] sm:$0xff]
      %v2720 = vld [vmem:[%s3 + $0x8] sm:$0xff]
      %v2721 = vld [vmem:[%s3 + $0x10] sm:$0x3]
      %v2722 = vld [vmem:[%s3 + $0x18] sm:$0x3]
      %v2723 = vld [vmem:[#allocation2] sm:$0xff]
      %v2724 = vld [vmem:[#allocation2 + $0x8] sm:$0xff]
      %v2725 = vld [vmem:[#allocation2 + $0x10] sm:$0xff]
      %v2726 = vld [vmem:[#allocation2 + $0x18] sm:$0xff]
      %v2727 = vld [vmem:[#allocation2 + $0x20] sm:$0xff]
      %v2728 = vld [vmem:[#allocation2 + $0x28] sm:$0xff]
      %v2729 = vld [vmem:[#allocation2 + $0x30] sm:$0xff]
      %v2730 = vld [vmem:[#allocation2 + $0x38] sm:$0xff]
      %v2731 = vld [vmem:[#allocation2 + $0x40] sm:$0xff]
      %v2732 = vld [vmem:[#allocation2 + $0x48] sm:$0xff]
      %v2733 = vld [vmem:[#allocation2 + $0x50] sm:$0xff]
      %v2734 = vld [vmem:[#allocation2 + $0x58] sm:$0xff]
      %v2735 = vld [vmem:[#allocation2 + $0x60] sm:$0xff]
      %v2736 = vld [vmem:[#allocation2 + $0x68] sm:$0xff]
      %v2737 = vld [vmem:[#allocation2 + $0x70] sm:$0xff]
      %v2738 = vld [vmem:[#allocation2 + $0x78] sm:$0xff]
      %v2739 = vld [vmem:[#allocation2 + $0x80] sm:$0xff]
      %v2740 = vld [vmem:[#allocation2 + $0x88] sm:$0xff]
      %v2741 = vld [vmem:[#allocation2 + $0x90] sm:$0xff]
      %v2742 = vld [vmem:[#allocation2 + $0x98] sm:$0xff]
      %v2743 = vld [vmem:[#allocation2 + $0xa0] sm:$0xff]
      %v2744 = vld [vmem:[#allocation2 + $0xa8] sm:$0xff]
      %v2745 = vld [vmem:[#allocation2 + $0xb0] sm:$0xff]
      %v2746 = vld [vmem:[#allocation2 + $0xb8] sm:$0xff]
      %v2747 = vld [vmem:[#allocation2 + $0xc0] sm:$0xff]
      %v2748 = vld [vmem:[#allocation2 + $0xc8] sm:$0xff]
      %v2749 = vld [vmem:[#allocation2 + $0xd0] sm:$0xff]
      %v2750 = vld [vmem:[#allocation2 + $0xd8] sm:$0xff]
      %v2751 = vld [vmem:[%s4] sm:$0xff]
      %v2752 = vld [vmem:[%s4 + $0x8] sm:$0x3]
      %2754 = vset.pattern.permute.xlu0 0
      %2755 = vperm.xlu0 %2754, %v2751
      %v2756 = vpop.permute.xlu0 %2755
      %2759 = vset.pattern.permute.xlu0 0
      %2760 = vperm.xlu0 %2759, %v2752
      %v2761 = vpop.permute.xlu0 %2760
      %vm2763 = vcmask 785408
      %v2765 = vsel %vm2763, %v2720, 0
      %v2768 = vsel %vm2763, %v2722, 0
      %2770 = vmatprep.subr.mxu0 0.0
      %2771 = vmatpush1.msra.mxu0 %v2723
      %2772 = vmatprep.subr.mxu0 0.0
      %2773 = vmatpush1.msra.mxu0 %v2724
      %2774 = vmatprep.subr.mxu0 0.0
      %2775 = vmatpush1.msra.mxu0 %v2725
      %2776 = vmatprep.subr.mxu0 0.0
      %2777 = vmatpush1.msra.mxu0 %v2726
      %2778 = vmatprep.subr.mxu0 0.0
      %2779 = vmatpush1.msra.mxu0 %v2727
      %2780 = vmatprep.subr.mxu0 0.0
      %2781 = vmatpush1.msra.mxu0 %v2728
      %2782 = vmatprep.subr.mxu0 0.0
      %2783 = vmatpush1.msra.mxu0 %v2729
      %2784 = vmatprep.subr.mxu0 0.0
      %2785 = vmatpush1.msra.mxu0 %v2730
      %2786 = vmatprep.subr.mxu0 0.0
      %2787 = vmatpush1.msra.mxu0 %v2731
      %2788 = vmatprep.subr.mxu0 0.0
      %2789 = vmatpush1.msra.mxu0 %v2732
      %2790 = vmatprep.subr.mxu0 0.0
      %2791 = vmatpush1.msra.mxu0 %v2733
      %2792 = vmatprep.subr.mxu0 0.0
      %2793 = vmatpush1.msra.mxu0 %v2734
      %2794 = vmatprep.subr.mxu0 0.0
      %2795 = vmatpush1.msra.mxu0 %v2735
      %2796 = vmatprep.subr.mxu0 0.0
      %2797 = vmatpush1.msra.mxu0 %v2736
      %2798 = vmatprep.subr.mxu0 0.0
      %2799 = vmatpush1.msra.mxu0 %v2737
      %2800 = vmatprep.subr.mxu0 0.0
      %2801 = vmatpush1.msra.mxu0 %v2738
      %2802 = vmatprep.subr.mxu0 0.0
      %2803 = vmatpush1.msra.mxu0 %v2739
      %2804 = vmatprep.subr.mxu0 0.0
      %2805 = vmatpush1.msra.mxu0 %v2740
      %2806 = vmatprep.subr.mxu0 0.0
      %2807 = vmatpush1.msra.mxu0 %v2741
      %2808 = vmatprep.subr.mxu0 0.0
      %2809 = vmatpush1.msra.mxu0 %v2742
      %2810 = vmatprep.subr.mxu0 0.0
      %2811 = vmatpush1.msra.mxu0 %v2743
      %2812 = vmatprep.subr.mxu0 0.0
      %2813 = vmatpush1.msra.mxu0 %v2744
      %2814 = vmatprep.subr.mxu0 0.0
      %2815 = vmatpush1.msra.mxu0 %v2745
      %2816 = vmatprep.subr.mxu0 0.0
      %2817 = vmatpush1.msra.mxu0 %v2746
      %2818 = vmatprep.subr.mxu0 0.0
      %2819 = vmatpush1.msra.mxu0 %v2747
      %2820 = vmatprep.subr.mxu0 0.0
      %2821 = vmatpush1.msra.mxu0 %v2748
      %2822 = vmatprep.subr.mxu0 0.0
      %2823 = vmatpush1.msra.mxu0 %v2749
      %2824 = vmatprep.subr.mxu0 0.0
      %2825 = vmatpush1.msra.mxu0 %v2750
      %2826 = vmatprep.subr.mxu0 0.0
      %2827 = vmatpush1.msra.mxu0 0.0
      %2828 = vmatprep.subr.mxu0 0.0
      %2829 = vmatpush1.msra.mxu0 0.0
      %2830 = vmatprep.subr.mxu0 0.0
      %2831 = vmatpush1.msra.mxu0 0.0
      %2832 = vmatprep.subr.mxu0 0.0
      %2833 = vmatpush1.msra.mxu0 0.0
      %2834 = vmatprep.mubr.f32.mxu0 %v2765
      %2835 = vmatmul.mubr.f32.gmra.mrb[0].mxu0 %v2719
      %v2836 = vpop.f32.mrb[0].mxu0
      %v2837 = vadd.f32 %v2756, %v2836
      %v2838 = vpop.f32.mrb[0].mxu0
      %2839 = vmatprep.mubr.f32.mxu0 %v2768
      %2840 = vmatmul.mubr.f32.gmra.mrb[0].mxu0 %v2721
      %v2841 = vpop.f32.mrb[0].mxu0
      %v2842 = vadd.f32 %v2761, %v2841
      %v2843 = vpop.f32.mrb[0].mxu0
      %2844 = vdwg.mxu0
      %s2845 = smul.u32 %s74, 16
      %s2846 = scalar_lea.vmem %s5, %s2845
      %2847 = vst [vmem:[%s2846] sm:$0xff] %v2837
      %2848 = vst [vmem:[%s2846 + $0x8] sm:$0x3] %v2842
    $region34: #{testnet_forward.1} parent=1 // loop_footer
      %s78 = sadd.s32 1, %s74
    $region35: #{testnet_forward.1} parent=1 // loop_footer_branch
      %73 = sbr.rel target = $region31
    $region36: #{testnet_forward.1} parent=1 // loop_exit
      _
    // Predicated region
    $region37: #{testnet_forward.1} parent=1 // pred_check
      _
    $region38: #{testnet_forward.1} parent=1 // pred_check_branch
      %2850 = sbr.rel (0) target = $region40
    $region39: #{testnet_forward.1} parent=1 // pred_region
      _
    $region40: #{testnet_forward.1} parent=1 // pred_fallthru
      _
    // Predicated region
    $region41: #{testnet_forward.1} parent=1 // pred_check
      _
    $region42: #{testnet_forward.1} parent=1 // pred_check_branch
      %2852 = sbr.rel (0) target = $region44
    $region43: #{testnet_forward.1} parent=1 // pred_region
      _
    $region44: #{testnet_forward.1} parent=1 // pred_fallthru
      _
    %2853 = vsyncpa [#allocation4], 1
    %2854 = vsyncpa [#allocation6], 1

</llo_original>
